<compile_context>
chip_gen: v6e
topology: v6e:2x2x1
jax: 0.10.0
libtpu: 0.0.40
codegen_flags: <defaults>
</compile_context>

<pallas_src>
import functools

import jax
import jax.numpy as jnp
from jax import lax
from jax.experimental import pallas as pl
from jax.experimental.pallas import tpu as pltpu


_LANE = 128
_SUBLANE = 8
_NEG_INF = -1e30

# (kernel_size, stride) for the three conv blocks -- fixed by the nn.Module.
_CONV_CFG = (((11, 41), (2, 2)), ((11, 21), (1, 2)), ((11, 21), (1, 2)))


def _round_up(x, m):
    return ((x + m - 1) // m) * m


def _row_tile(m, row_bytes, budget=4 << 20, cap=1024):
    """Largest row tile (multiple of 8 or == m) whose buffer fits the budget."""
    if m <= cap and m * row_bytes <= budget:
        return m
    t = min(cap, m, max(_SUBLANE, budget // max(row_bytes, 1)))
    t = max(_SUBLANE, (t // _SUBLANE) * _SUBLANE)
    return t


def _compiler_params(dims, vmem_need_bytes=0):
    kw = dict(dimension_semantics=dims)
    if vmem_need_bytes > (12 << 20):
        # Only raise the scoped-VMEM limit when the footprint actually needs it
        # (large fc_hidden); capped at v7x's 64 MiB physical VMEM.
        kw["vmem_limit_bytes"] = int(min(max(2 * vmem_need_bytes, 32 << 20), 64 << 20))
    return pltpu.CompilerParams(**kw)


# --------------------------------------------------------------------------
# Kernels
# --------------------------------------------------------------------------
def conv_bn_hardtanh_kernel(p_ref, w_ref, scale_ref, shift_ref, o_ref):
    # bf16 patches @ bf16 weights, f32 MXU accumulation, bf16 output.
    acc = jnp.dot(p_ref[...], w_ref[...], preferred_element_type=jnp.float32)
    y = acc * scale_ref[...] + shift_ref[...]
    o_ref[...] = jnp.clip(y, 0.0, 20.0).astype(o_ref.dtype)


def proj_logsoftmax_kernel(xf_ref, xb_ref, wf_ref, wb_ref, b_ref, o_ref):
    logits = (jnp.dot(xf_ref[...], wf_ref[...], preferred_element_type=jnp.float32)
              + jnp.dot(xb_ref[...], wb_ref[...], preferred_element_type=jnp.float32)
              + b_ref[...])
    m = jnp.max(logits, axis=-1, keepdims=True)
    s = logits - m
    lse = jnp.log(jnp.sum(jnp.exp(s), axis=-1, keepdims=True))
    o_ref[...] = (s - lse).astype(o_ref.dtype)


def gru_layer_kernel(*refs, nx, seg_dims, tc, bp, hp, nc, t_real):
    """One time chunk of a bidirectional GRU layer, both directions interleaved.

    refs layout:
      xf_0..xf_{nx-1} : (tc, Bp, d_i) bf16   forward-chunk view(s) of the input
      xb_0..xb_{nx-1} : (tc, Bp, d_i) bf16   backward-chunk view(s) of the input
      wih             : (sum d_i, 6*Hp) bf16 [fwd gates | bwd gates]
      bih             : (1, 6*Hp) f32
      whh             : (2, Hp, 3*Hp) bf16
      bhh             : (2, 1, 3*Hp) f32
      of, ob          : (tc, Bp, Hp) bf16    output chunks (fwd / bwd half)
      h_scr           : (2, Bp, Hp) f32      persistent hidden states
      gxf_scr, gxb_scr: (tc*Bp, 3*Hp) f32    fused-input-projection scratch
    """
    xf_refs = refs[0:nx]
    xb_refs = refs[nx:2 * nx]
    wih_ref, bih_ref, whh_ref, bhh_ref = refs[2 * nx:2 * nx + 4]
    of_ref, ob_ref = refs[2 * nx + 4:2 * nx + 6]
    h_scr, gxf_scr, gxb_scr = refs[2 * nx + 6:2 * nx + 9]

    c = pl.program_id(0)

    @pl.when(c == 0)
    def _init():
        h_scr[...] = jnp.zeros(h_scr.shape, h_scr.dtype)   # PyTorch h0 = 0

    # ---- fused input projection for this chunk (both directions) ------------
    accf = None
    accb = None
    off = 0
    for i, d in enumerate(seg_dims):
        xf = xf_refs[i][...].reshape(tc * bp, d)
        xb = xb_refs[i][...].reshape(tc * bp, d)
        tf = jnp.dot(xf, wih_ref[off:off + d, 0:3 * hp],
                     preferred_element_type=jnp.float32)
        tb = jnp.dot(xb, wih_ref[off:off + d, 3 * hp:6 * hp],
                     preferred_element_type=jnp.float32)
        accf = tf if accf is None else accf + tf
        accb = tb if accb is None else accb + tb
        off += d
    gxf_scr[...] = accf + bih_ref[0:1, 0:3 * hp]
    gxb_scr[...] = accb + bih_ref[0:1, 3 * hp:6 * hp]

    whh_f = whh_ref[0]
    whh_b = whh_ref[1]
    bhh_f = bhh_ref[0]
    bhh_b = bhh_ref[1]
    t0_f = c * tc                 # forward chain global time  = t0_f + j
    t0_b = (nc - 1 - c) * tc      # backward chain global time = t0_b + (tc-1-j)

    def cell(gx_t, h_prev, whh, bhh):
        gh = jnp.dot(h_prev.astype(whh.dtype), whh,
                     preferred_element_type=jnp.float32) + bhh
        r = jax.nn.sigmoid(gx_t[:, 0:hp] + gh[:, 0:hp])
        z = jax.nn.sigmoid(gx_t[:, hp:2 * hp] + gh[:, hp:2 * hp])
        n = jnp.tanh(gx_t[:, 2 * hp:3 * hp] + r * gh[:, 2 * hp:3 * hp])
        return (1.0 - z) * n + z * h_prev

    def step(j, carry):
        h_f, h_b = carry
        jb = tc - 1 - j
        rf = pl.multiple_of(j * bp, bp)
        rb = pl.multiple_of(jb * bp, bp)
        # forward chain
        hf_new = cell(gxf_scr[pl.ds(rf, bp), :], h_f, whh_f, bhh_f)
        hf_new = jnp.where(t0_f + j < t_real, hf_new, h_f)   # freeze past real T
        of_ref[j] = hf_new.astype(of_ref.dtype)
        # backward chain (decreasing time) -- independent: interleaves for ILP
        hb_new = cell(gxb_scr[pl.ds(rb, bp), :], h_b, whh_b, bhh_b)
        hb_new = jnp.where(t0_b + jb < t_real, hb_new, h_b)
        ob_ref[jb] = hb_new.astype(ob_ref.dtype)
        return hf_new, hb_new

    h_f, h_b = lax.fori_loop(0, tc, step, (h_scr[0], h_scr[1]),
                             unroll=min(8, tc))
    h_scr[0] = h_f
    h_scr[1] = h_b


# --------------------------------------------------------------------------
# Pallas-call wrappers
# --------------------------------------------------------------------------
def _im2col(x, kh, kw, sh, sw, ph, pw):
    """x: (B, H, W, C) -> (B*Ho*Wo, kh*kw*C) patches (pure slicing glue, bf16)."""
    B, H, W, C = x.shape
    xp = jnp.pad(x, ((0, 0), (ph, ph), (pw, pw), (0, 0)))
    Ho = (H + 2 * ph - kh) // sh + 1
    Wo = (W + 2 * pw - kw) // sw + 1
    cols = []
    for i in range(kh):
        for j in range(kw):
            cols.append(xp[:, i:i + Ho * sh:sh, j:j + Wo * sw:sw, :])
    patches = jnp.concatenate(cols, axis=-1)
    return patches.reshape(B * Ho * Wo, kh * kw * C), Ho, Wo


def conv_block(x_nhwc, wmat, scale, shift, kh, kw, stride):
    """Conv2d + BatchNorm2d(eval) + Hardtanh(0,20).  x: (B, H, W, Cin) NHWC bf16."""
    B = x_nhwc.shape[0]
    sh, sw = stride
    ph, pw = kh // 2, kw // 2
    patches, Ho, Wo = _im2col(x_nhwc, kh, kw, sh, sw, ph, pw)
    M, K = patches.shape
    cout = wmat.shape[1]
    tm = _row_tile(M, K * patches.dtype.itemsize)
    # TODO(synk): cout < 128 leaves the output store lane-sparse; revisit once the
    #             im2col HBM traffic is removed and the stage is no longer read-bound.

    out2d = pl.pallas_call(
        conv_bn_hardtanh_kernel,
        out_shape=jax.ShapeDtypeStruct((M, cout), jnp.bfloat16),
        grid_spec=pltpu.PrefetchScalarGridSpec(
            num_scalar_prefetch=0,
            grid=(pl.cdiv(M, tm),),
            in_specs=[
                pl.BlockSpec((tm, K), lambda m: (m, 0)),
                pl.BlockSpec((K, cout), lambda m: (0, 0)),
                pl.BlockSpec((1, cout), lambda m: (0, 0)),
                pl.BlockSpec((1, cout), lambda m: (0, 0)),
            ],
            out_specs=pl.BlockSpec((tm, cout), lambda m: (m, 0)),
        ),
        compiler_params=_compiler_params(("parallel",)),
    )(patches, wmat, scale, shift)
    return out2d.reshape(B, Ho, Wo, cout)


def gru_bidir_layer(xs, w_ih, b_ih, w_hh, b_hh, *, t_real, t_chunk):
    """One bidirectional GRU layer.

    xs       : tuple of bf16 arrays (T_pad, Bp, d_i)  (1 array for layer 0,
               2 arrays [fwd half, bwd half] for later layers)
    w_ih     : (sum d_i, 6*Hp) bf16    [fwd gates | bwd gates]
    b_ih     : (1, 6*Hp) f32
    w_hh     : (2, Hp, 3*Hp) bf16
    b_hh     : (2, 1, 3*Hp) f32
    returns  : (out_fwd, out_bwd) each (T_pad, Bp, Hp) bf16
    """
    t_pad, bp = xs[0].shape[0], xs[0].shape[1]
    seg_dims = tuple(int(x.shape[2]) for x in xs)
    hp = w_hh.shape[1]
    nc = t_pad // t_chunk
    nx = len(xs)

    kern = functools.partial(gru_layer_kernel, nx=nx, seg_dims=seg_dims,
                             tc=t_chunk, bp=bp, hp=hp, nc=nc, t_real=t_real)

    x_specs_f = [pl.BlockSpec((t_chunk, bp, d), lambda c: (c, 0, 0))
                 for d in seg_dims]
    x_specs_b = [pl.BlockSpec((t_chunk, bp, d), lambda c: (nc - 1 - c, 0, 0))
                 for d in seg_dims]
    w_specs = [
        pl.BlockSpec(w_ih.shape, lambda c: (0, 0)),
        pl.BlockSpec(b_ih.shape, lambda c: (0, 0)),
        pl.BlockSpec(w_hh.shape, lambda c: (0, 0, 0)),
        pl.BlockSpec(b_hh.shape, lambda c: (0, 0, 0)),
    ]
    out_sds = jax.ShapeDtypeStruct((t_pad, bp, hp), jnp.bfloat16)

    # Rough resident-VMEM estimate: weights (+double-buffer slack), gx scratch,
    # double-buffered x / output chunk tiles.
    vmem_need = (2 * (w_ih.size + w_hh.size) * 2
                 + 2 * t_chunk * bp * 3 * hp * 4
                 + 4 * t_chunk * bp * (sum(seg_dims) + hp) * 2)

    return pl.pallas_call(
        kern,
        out_shape=(out_sds, out_sds),
        grid_spec=pltpu.PrefetchScalarGridSpec(
            num_scalar_prefetch=0,
            grid=(nc,),
            in_specs=x_specs_f + x_specs_b + w_specs,
            out_specs=(
                pl.BlockSpec((t_chunk, bp, hp), lambda c: (c, 0, 0)),
                pl.BlockSpec((t_chunk, bp, hp), lambda c: (nc - 1 - c, 0, 0)),
            ),
            scratch_shapes=[
                pltpu.VMEM((2, bp, hp), jnp.float32),
                pltpu.VMEM((t_chunk * bp, 3 * hp), jnp.float32),
                pltpu.VMEM((t_chunk * bp, 3 * hp), jnp.float32),
            ],
        ),
        compiler_params=_compiler_params(("arbitrary",), vmem_need),
    )(*xs, *xs, w_ih, b_ih, w_hh, b_hh)


def proj_log_softmax(xf2d, xb2d, wf, wb, b):
    M, hp = xf2d.shape
    n_pad = wf.shape[1]
    tm = _row_tile(M, 2 * hp * 2 + n_pad * 4, cap=512)
    return pl.pallas_call(
        proj_logsoftmax_kernel,
        out_shape=jax.ShapeDtypeStruct((M, n_pad), jnp.float32),
        grid_spec=pltpu.PrefetchScalarGridSpec(
            num_scalar_prefetch=0,
            grid=(pl.cdiv(M, tm),),
            in_specs=[
                pl.BlockSpec((tm, hp), lambda m: (m, 0)),
                pl.BlockSpec((tm, hp), lambda m: (m, 0)),
                pl.BlockSpec((hp, n_pad), lambda m: (0, 0)),
                pl.BlockSpec((hp, n_pad), lambda m: (0, 0)),
                pl.BlockSpec((1, n_pad), lambda m: (0, 0)),
            ],
            out_specs=pl.BlockSpec((tm, n_pad), lambda m: (m, 0)),
        ),
        compiler_params=_compiler_params(("parallel",)),
    )(xf2d, xb2d, wf, wb, b)


# --------------------------------------------------------------------------
# Full forward (mirrors DeepSpeech2.forward).
# --------------------------------------------------------------------------
@functools.partial(jax.jit, static_argnames=("n_tokens",))
def deepspeech2_forward(spectrogram, spectrogram_length, params, *, n_tokens):
    # transform_input_lengths
    log_probs_length = (spectrogram_length + 1) // 2

    # (B, n_feats, T) -> NHWC (B, T, n_feats, 1); bf16 conv front-end.
    x = jnp.transpose(spectrogram, (0, 2, 1))[..., None].astype(jnp.bfloat16)

    for cp, ((kh, kw), stride) in zip(params["convs"], _CONV_CFG):
        x = conv_block(x, cp["wmat"], cp["scale"], cp["shift"], kh, kw, stride)

    # (B, T', F', C) -> (B, T', C*F')  (matches PyTorch transpose + reshape order)
    B, t_out, f_out, c_out = x.shape
    feats = jnp.transpose(x, (0, 1, 3, 2)).reshape(B, t_out, c_out * f_out)

    # Time-major; pad batch to sublane width and time to a chunk multiple
    # (padded steps are masked inside the kernel).
    t_chunk = min(32, t_out)
    t_pad = _round_up(t_out, t_chunk)
    bp = _round_up(B, _SUBLANE)
    xt = jnp.transpose(feats, (1, 0, 2))                     # (T', B, Din) bf16
    xt = jnp.pad(xt, ((0, t_pad - t_out), (0, bp - B), (0, 0)))

    xs = (xt,)
    for lp in params["gru"]:
        xs = gru_bidir_layer(xs, lp["w_ih"], lp["b_ih"], lp["w_hh"], lp["b_hh"],
                             t_real=t_out, t_chunk=t_chunk)

    hp = xs[0].shape[-1]
    logp = proj_log_softmax(xs[0].reshape(t_pad * bp, hp),
                            xs[1].reshape(t_pad * bp, hp),
                            params["proj_wf"], params["proj_wb"], params["proj_b"])
    n_pad = logp.shape[-1]
    logp = logp.reshape(t_pad, bp, n_pad)
    logp = jnp.transpose(logp, (1, 0, 2))[:B, :t_out, :n_tokens]

    return {"log_probs": logp, "log_probs_length": log_probs_length}


# --------------------------------------------------------------------------
# Parameter init (torch layout) + device-layout preparation (padding/packing).
# --------------------------------------------------------------------------
def init_torch_params(key, n_feats, n_tokens, channels, gru_layers, fc_hidden):
    keys = iter(jax.random.split(key, 256))

    def nrm(shape, scale=0.1):
        return scale * jax.random.normal(next(keys), shape, dtype=jnp.float32)

    conv_io = [(1, channels), (channels, channels), (channels, channels)]
    convs = []
    for (cin, cout), ((kh, kw), _) in zip(conv_io, _CONV_CFG):
        convs.append(dict(
            w=nrm((cout, cin, kh, kw)),
            b=nrm((cout,)),
            gamma=1.0 + nrm((cout,), 0.05),
            beta=nrm((cout,), 0.05),
            mean=nrm((cout,), 0.05),
            var=1.0 + jnp.abs(nrm((cout,), 0.05)),
        ))

    gru = []
    d_in = n_feats * channels // (2 ** 3)
    h = fc_hidden
    for _ in range(gru_layers):
        layer = {}
        for dname in ("fwd", "bwd"):
            layer[dname] = dict(
                w_ih=nrm((3 * h, d_in)),
                w_hh=nrm((3 * h, h)),
                b_ih=nrm((3 * h,)),
                b_hh=nrm((3 * h,)),
            )
        gru.append(layer)
        d_in = 2 * h

    return dict(convs=convs, gru=gru,
                proj_w=nrm((n_tokens, 2 * h)), proj_b=nrm((n_tokens,)))


def _embed_gate_weight(w_t, h, hp, row_blocks, din_dev, dtype):
    """Embed torch (3H, Din_real) gate weights into a zero-padded (din_dev, 3*Hp)
    device matrix.  row_blocks = [(dev_row_start, src_col_start, width), ...]."""
    out = jnp.zeros((din_dev, 3 * hp), jnp.float32)
    for g in range(3):
        wg = w_t[g * h:(g + 1) * h, :]                         # (H, Din_real)
        for dev0, src0, width in row_blocks:
            out = out.at[dev0:dev0 + width, g * hp:g * hp + h].set(
                wg[:, src0:src0 + width].T)
    return out.astype(dtype)


def _embed_gate_bias(b_t, h, hp):
    out = jnp.zeros((1, 3 * hp), jnp.float32)
    for g in range(3):
        out = out.at[0, g * hp:g * hp + h].set(b_t[g * h:(g + 1) * h])
    return out


def prepare_params(tp, n_feats, n_tokens, channels, fc_hidden):
    h = fc_hidden
    hp = _round_up(h, _LANE)
    n_pad = _round_up(n_tokens, _LANE)
    eps = 1e-5

    convs = []
    for cp, ((kh, kw), _) in zip(tp["convs"], _CONV_CFG):
        cout, cin = cp["w"].shape[0], cp["w"].shape[1]
        wmat = jnp.transpose(cp["w"], (2, 3, 1, 0)).reshape(kh * kw * cin, cout)
        inv_std = cp["gamma"] / jnp.sqrt(cp["var"] + eps)
        convs.append(dict(
            wmat=wmat.astype(jnp.bfloat16),
            scale=inv_std.reshape(1, cout),
            shift=(cp["beta"] + (cp["b"] - cp["mean"]) * inv_std).reshape(1, cout),
        ))

    gru = []
    d_in0 = n_feats * channels // (2 ** 3)
    for li, layer in enumerate(tp["gru"]):
        if li == 0:
            din_dev, row_blocks = d_in0, [(0, 0, d_in0)]
        else:
            # previous layer output is (fwd(Hp), bwd(Hp)); real units lead each half
            din_dev, row_blocks = 2 * hp, [(0, 0, h), (hp, h, h)]
        w_ih_p, b_ih_p, w_hh_p, b_hh_p = [], [], [], []
        for dname in ("fwd", "bwd"):
            dp = layer[dname]
            w_ih_p.append(_embed_gate_weight(dp["w_ih"], h, hp, row_blocks,
                                             din_dev, jnp.bfloat16))
            b_ih_p.append(_embed_gate_bias(dp["b_ih"], h, hp))
            w_hh_p.append(_embed_gate_weight(dp["w_hh"], h, hp, [(0, 0, h)],
                                             hp, jnp.bfloat16))
            b_hh_p.append(_embed_gate_bias(dp["b_hh"], h, hp))
        gru.append(dict(
            w_ih=jnp.concatenate(w_ih_p, axis=1),    # (Din_dev, 6*Hp) bf16
            b_ih=jnp.concatenate(b_ih_p, axis=1),    # (1, 6*Hp) f32
            w_hh=jnp.stack(w_hh_p, axis=0),          # (2, Hp, 3*Hp) bf16
            b_hh=jnp.stack(b_hh_p, axis=0),          # (2, 1, 3*Hp) f32
        ))

    proj_wf = jnp.zeros((hp, n_pad), jnp.float32)
    proj_wf = proj_wf.at[0:h, 0:n_tokens].set(tp["proj_w"][:, 0:h].T)
    proj_wb = jnp.zeros((hp, n_pad), jnp.float32)
    proj_wb = proj_wb.at[0:h, 0:n_tokens].set(tp["proj_w"][:, h:2 * h].T)
    proj_b = jnp.full((1, n_pad), _NEG_INF, jnp.float32)   # padded logits -> ~exp 0
    proj_b = proj_b.at[0, 0:n_tokens].set(tp["proj_b"])

    return dict(convs=convs, gru=gru,
                proj_wf=proj_wf.astype(jnp.bfloat16),
                proj_wb=proj_wb.astype(jnp.bfloat16),
                proj_b=proj_b)


if __name__ == "__main__":
    # Small shapes consistent with the module's forward.
    B, n_feats, T = 2, 16, 8
    n_tokens, channels, gru_layers, fc_hidden = 10, 8, 2, 32

    key = jax.random.PRNGKey(0)
    k_in, k_param = jax.random.split(key)
    spectrogram = jax.random.normal(k_in, (B, n_feats, T), dtype=jnp.float32)
    spectrogram_length = jnp.array([T, T - 2], dtype=jnp.int32)

    torch_params = init_torch_params(k_param, n_feats, n_tokens, channels,
                                     gru_layers, fc_hidden)
    params = prepare_params(torch_params, n_feats, n_tokens, channels, fc_hidden)

    out = deepspeech2_forward(spectrogram, spectrogram_length, params,
                              n_tokens=n_tokens)
    log_probs = jax.block_until_ready(out["log_probs"])
    log_probs_length = jax.block_until_ready(out["log_probs_length"])

    T_out = (T + 1) // 2
    assert log_probs.shape == (B, T_out, n_tokens), log_probs.shape
    assert log_probs_length.shape == (B,)
    assert bool(jnp.all(jnp.isfinite(log_probs)))
    # log_softmax sanity: rows sum to ~1 in prob space
    assert bool(jnp.allclose(jnp.sum(jnp.exp(log_probs), axis=-1), 1.0, atol=1e-3))

    print("KERNEL_OK")
</pallas_src>

<mosaic_0001>
module attributes {stable_mosaic.version = 11 : i64} {
  func.func @conv_bn_hardtanh_kernel(%arg0: i32, %arg1: memref<64x451xbf16, #tpu.memory_space<vmem>>, %arg2: memref<451x8xbf16, #tpu.memory_space<vmem>>, %arg3: memref<1x8xf32, #tpu.memory_space<vmem>>, %arg4: memref<1x8xf32, #tpu.memory_space<vmem>>, %arg5: memref<64x8xbf16, #tpu.memory_space<vmem>>) attributes {dimension_semantics = [#tpu.dimension_semantics<parallel>], iteration_bounds = array<i64: 1>, scalar_prefetch = 0 : i64, scratch_operands = 0 : i64, tpu.core_type = #tpu.core_type<tc>, window_params = [{transform_indices = @transform_0, window_bounds = array<i64: 64, 451>}, {pipeline_mode = #tpu.pipeline_mode<synchronous>, transform_indices = @transform_1, window_bounds = array<i64: 451, 8>}, {pipeline_mode = #tpu.pipeline_mode<synchronous>, transform_indices = @transform_2, window_bounds = array<i64: 1, 8>}, {pipeline_mode = #tpu.pipeline_mode<synchronous>, transform_indices = @transform_3, window_bounds = array<i64: 1, 8>}, {transform_indices = @transform_4, window_bounds = array<i64: 64, 8>}]} {
    %c0 = arith.constant 0 : index
    %c0_0 = arith.constant 0 : index
    %0 = vector.load %arg1[%c0, %c0_0] : memref<64x451xbf16, #tpu.memory_space<vmem>>, vector<64x451xbf16>
    %c0_1 = arith.constant 0 : index
    %c0_2 = arith.constant 0 : index
    %1 = vector.load %arg2[%c0_1, %c0_2] : memref<451x8xbf16, #tpu.memory_space<vmem>>, vector<451x8xbf16>
    %cst = arith.constant dense<0.000000e+00> : vector<64x8xf32>
    %2 = tpu.matmul %0, %1, %cst {dimension_numbers = #tpu.dot_dimension_numbers<[1], [0], [0], [1], [0, 0, 1, 1], [], []>} : vector<64x451xbf16>, vector<451x8xbf16>, vector<64x8xf32> -> vector<64x8xf32>
    %c0_3 = arith.constant 0 : index
    %c0_4 = arith.constant 0 : index
    %3 = vector.load %arg3[%c0_3, %c0_4] : memref<1x8xf32, #tpu.memory_space<vmem>>, vector<1x8xf32>
    %4 = vector.broadcast %3 : vector<1x8xf32> to vector<64x8xf32>
    %5 = arith.mulf %2, %4 : vector<64x8xf32>
    %c0_5 = arith.constant 0 : index
    %c0_6 = arith.constant 0 : index
    %6 = vector.load %arg4[%c0_5, %c0_6] : memref<1x8xf32, #tpu.memory_space<vmem>>, vector<1x8xf32>
    %7 = vector.broadcast %6 : vector<1x8xf32> to vector<64x8xf32>
    %8 = arith.addf %5, %7 : vector<64x8xf32>
    %cst_7 = arith.constant 0.000000e+00 : f32
    %cst_8 = arith.constant 2.000000e+01 : f32
    %9 = vector.broadcast %cst_7 : f32 to vector<64x8xf32>
    %10 = arith.maximumf %9, %8 : vector<64x8xf32>
    %11 = vector.broadcast %cst_8 : f32 to vector<64x8xf32>
    %12 = arith.minimumf %11, %10 : vector<64x8xf32>
    %13 = arith.truncf %12 : vector<64x8xf32> to vector<64x8xbf16>
    %c0_9 = arith.constant 0 : index
    %c0_10 = arith.constant 0 : index
    %14 = vector.load %arg5[%c0_9, %c0_10] : memref<64x8xbf16, #tpu.memory_space<vmem>>, vector<64x8xbf16>
    tpu.vector_store %arg5[%c0_9, %c0_10], %13 {strides = array<i32>} : memref<64x8xbf16, #tpu.memory_space<vmem>>, vector<64x8xbf16>,
    return
  }
  func.func @transform_0(%arg0: i32) -> (i32, i32) {
    %c0_i32 = arith.constant 0 : i32
    %c0_i32_0 = arith.constant 0 : i32
    return %arg0, %c0_i32 : i32, i32
  }
  func.func @transform_1(%arg0: i32) -> (i32, i32) {
    %c0_i32 = arith.constant 0 : i32
    %c0_i32_0 = arith.constant 0 : i32
    %c0_i32_1 = arith.constant 0 : i32
    return %c0_i32, %c0_i32_0 : i32, i32
  }
  func.func @transform_2(%arg0: i32) -> (i32, i32) {
    %c0_i32 = arith.constant 0 : i32
    %c0_i32_0 = arith.constant 0 : i32
    %c0_i32_1 = arith.constant 0 : i32
    return %c0_i32, %c0_i32_0 : i32, i32
  }
  func.func @transform_3(%arg0: i32) -> (i32, i32) {
    %c0_i32 = arith.constant 0 : i32
    %c0_i32_0 = arith.constant 0 : i32
    %c0_i32_1 = arith.constant 0 : i32
    return %c0_i32, %c0_i32_0 : i32, i32
  }
  func.func @transform_4(%arg0: i32) -> (i32, i32) {
    %c0_i32 = arith.constant 0 : i32
    %c0_i32_0 = arith.constant 0 : i32
    return %arg0, %c0_i32 : i32, i32
  }
}

module attributes {stable_mosaic.version = 11 : i64} {
  func.func @conv_bn_hardtanh_kernel(%arg0: i32, %arg1: memref<32x1848xbf16, #tpu.memory_space<vmem>>, %arg2: memref<1848x8xbf16, #tpu.memory_space<vmem>>, %arg3: memref<1x8xf32, #tpu.memory_space<vmem>>, %arg4: memref<1x8xf32, #tpu.memory_space<vmem>>, %arg5: memref<32x8xbf16, #tpu.memory_space<vmem>>) attributes {dimension_semantics = [#tpu.dimension_semantics<parallel>], iteration_bounds = array<i64: 1>, scalar_prefetch = 0 : i64, scratch_operands = 0 : i64, tpu.core_type = #tpu.core_type<tc>, window_params = [{transform_indices = @transform_0, window_bounds = array<i64: 32, 1848>}, {pipeline_mode = #tpu.pipeline_mode<synchronous>, transform_indices = @transform_1, window_bounds = array<i64: 1848, 8>}, {pipeline_mode = #tpu.pipeline_mode<synchronous>, transform_indices = @transform_2, window_bounds = array<i64: 1, 8>}, {pipeline_mode = #tpu.pipeline_mode<synchronous>, transform_indices = @transform_3, window_bounds = array<i64: 1, 8>}, {transform_indices = @transform_4, window_bounds = array<i64: 32, 8>}]} {
    %c0 = arith.constant 0 : index
    %c0_0 = arith.constant 0 : index
    %0 = vector.load %arg1[%c0, %c0_0] : memref<32x1848xbf16, #tpu.memory_space<vmem>>, vector<32x1848xbf16>
    %c0_1 = arith.constant 0 : index
    %c0_2 = arith.constant 0 : index
    %1 = vector.load %arg2[%c0_1, %c0_2] : memref<1848x8xbf16, #tpu.memory_space<vmem>>, vector<1848x8xbf16>
    %cst = arith.constant dense<0.000000e+00> : vector<32x8xf32>
    %2 = tpu.matmul %0, %1, %cst {dimension_numbers = #tpu.dot_dimension_numbers<[1], [0], [0], [1], [0, 0, 1, 1], [], []>} : vector<32x1848xbf16>, vector<1848x8xbf16>, vector<32x8xf32> -> vector<32x8xf32>
    %c0_3 = arith.constant 0 : index
    %c0_4 = arith.constant 0 : index
    %3 = vector.load %arg3[%c0_3, %c0_4] : memref<1x8xf32, #tpu.memory_space<vmem>>, vector<1x8xf32>
    %4 = vector.broadcast %3 : vector<1x8xf32> to vector<32x8xf32>
    %5 = arith.mulf %2, %4 : vector<32x8xf32>
    %c0_5 = arith.constant 0 : index
    %c0_6 = arith.constant 0 : index
    %6 = vector.load %arg4[%c0_5, %c0_6] : memref<1x8xf32, #tpu.memory_space<vmem>>, vector<1x8xf32>
    %7 = vector.broadcast %6 : vector<1x8xf32> to vector<32x8xf32>
    %8 = arith.addf %5, %7 : vector<32x8xf32>
    %cst_7 = arith.constant 0.000000e+00 : f32
    %cst_8 = arith.constant 2.000000e+01 : f32
    %9 = vector.broadcast %cst_7 : f32 to vector<32x8xf32>
    %10 = arith.maximumf %9, %8 : vector<32x8xf32>
    %11 = vector.broadcast %cst_8 : f32 to vector<32x8xf32>
    %12 = arith.minimumf %11, %10 : vector<32x8xf32>
    %13 = arith.truncf %12 : vector<32x8xf32> to vector<32x8xbf16>
    %c0_9 = arith.constant 0 : index
    %c0_10 = arith.constant 0 : index
    %14 = vector.load %arg5[%c0_9, %c0_10] : memref<32x8xbf16, #tpu.memory_space<vmem>>, vector<32x8xbf16>
    tpu.vector_store %arg5[%c0_9, %c0_10], %13 {strides = array<i32>} : memref<32x8xbf16, #tpu.memory_space<vmem>>, vector<32x8xbf16>,
    return
  }
  func.func @transform_0(%arg0: i32) -> (i32, i32) {
    %c0_i32 = arith.constant 0 : i32
    %c0_i32_0 = arith.constant 0 : i32
    return %arg0, %c0_i32 : i32, i32
  }
  func.func @transform_1(%arg0: i32) -> (i32, i32) {
    %c0_i32 = arith.constant 0 : i32
    %c0_i32_0 = arith.constant 0 : i32
    %c0_i32_1 = arith.constant 0 : i32
    return %c0_i32, %c0_i32_0 : i32, i32
  }
  func.func @transform_2(%arg0: i32) -> (i32, i32) {
    %c0_i32 = arith.constant 0 : i32
    %c0_i32_0 = arith.constant 0 : i32
    %c0_i32_1 = arith.constant 0 : i32
    return %c0_i32, %c0_i32_0 : i32, i32
  }
  func.func @transform_3(%arg0: i32) -> (i32, i32) {
    %c0_i32 = arith.constant 0 : i32
    %c0_i32_0 = arith.constant 0 : i32
    %c0_i32_1 = arith.constant 0 : i32
    return %c0_i32, %c0_i32_0 : i32, i32
  }
  func.func @transform_4(%arg0: i32) -> (i32, i32) {
    %c0_i32 = arith.constant 0 : i32
    %c0_i32_0 = arith.constant 0 : i32
    return %arg0, %c0_i32 : i32, i32
  }
}

module attributes {stable_mosaic.version = 11 : i64} {
  func.func @conv_bn_hardtanh_kernel(%arg0: i32, %arg1: memref<16x1848xbf16, #tpu.memory_space<vmem>>, %arg2: memref<1848x8xbf16, #tpu.memory_space<vmem>>, %arg3: memref<1x8xf32, #tpu.memory_space<vmem>>, %arg4: memref<1x8xf32, #tpu.memory_space<vmem>>, %arg5: memref<16x8xbf16, #tpu.memory_space<vmem>>) attributes {dimension_semantics = [#tpu.dimension_semantics<parallel>], iteration_bounds = array<i64: 1>, scalar_prefetch = 0 : i64, scratch_operands = 0 : i64, tpu.core_type = #tpu.core_type<tc>, window_params = [{transform_indices = @transform_0, window_bounds = array<i64: 16, 1848>}, {pipeline_mode = #tpu.pipeline_mode<synchronous>, transform_indices = @transform_1, window_bounds = array<i64: 1848, 8>}, {pipeline_mode = #tpu.pipeline_mode<synchronous>, transform_indices = @transform_2, window_bounds = array<i64: 1, 8>}, {pipeline_mode = #tpu.pipeline_mode<synchronous>, transform_indices = @transform_3, window_bounds = array<i64: 1, 8>}, {transform_indices = @transform_4, window_bounds = array<i64: 16, 8>}]} {
    %c0 = arith.constant 0 : index
    %c0_0 = arith.constant 0 : index
    %0 = vector.load %arg1[%c0, %c0_0] : memref<16x1848xbf16, #tpu.memory_space<vmem>>, vector<16x1848xbf16>
    %c0_1 = arith.constant 0 : index
    %c0_2 = arith.constant 0 : index
    %1 = vector.load %arg2[%c0_1, %c0_2] : memref<1848x8xbf16, #tpu.memory_space<vmem>>, vector<1848x8xbf16>
    %cst = arith.constant dense<0.000000e+00> : vector<16x8xf32>
    %2 = tpu.matmul %0, %1, %cst {dimension_numbers = #tpu.dot_dimension_numbers<[1], [0], [0], [1], [0, 0, 1, 1], [], []>} : vector<16x1848xbf16>, vector<1848x8xbf16>, vector<16x8xf32> -> vector<16x8xf32>
    %c0_3 = arith.constant 0 : index
    %c0_4 = arith.constant 0 : index
    %3 = vector.load %arg3[%c0_3, %c0_4] : memref<1x8xf32, #tpu.memory_space<vmem>>, vector<1x8xf32>
    %4 = vector.broadcast %3 : vector<1x8xf32> to vector<16x8xf32>
    %5 = arith.mulf %2, %4 : vector<16x8xf32>
    %c0_5 = arith.constant 0 : index
    %c0_6 = arith.constant 0 : index
    %6 = vector.load %arg4[%c0_5, %c0_6] : memref<1x8xf32, #tpu.memory_space<vmem>>, vector<1x8xf32>
    %7 = vector.broadcast %6 : vector<1x8xf32> to vector<16x8xf32>
    %8 = arith.addf %5, %7 : vector<16x8xf32>
    %cst_7 = arith.constant 0.000000e+00 : f32
    %cst_8 = arith.constant 2.000000e+01 : f32
    %9 = vector.broadcast %cst_7 : f32 to vector<16x8xf32>
    %10 = arith.maximumf %9, %8 : vector<16x8xf32>
    %11 = vector.broadcast %cst_8 : f32 to vector<16x8xf32>
    %12 = arith.minimumf %11, %10 : vector<16x8xf32>
    %13 = arith.truncf %12 : vector<16x8xf32> to vector<16x8xbf16>
    %c0_9 = arith.constant 0 : index
    %c0_10 = arith.constant 0 : index
    %14 = vector.load %arg5[%c0_9, %c0_10] : memref<16x8xbf16, #tpu.memory_space<vmem>>, vector<16x8xbf16>
    tpu.vector_store %arg5[%c0_9, %c0_10], %13 {strides = array<i32>} : memref<16x8xbf16, #tpu.memory_space<vmem>>, vector<16x8xbf16>,
    return
  }
  func.func @transform_0(%arg0: i32) -> (i32, i32) {
    %c0_i32 = arith.constant 0 : i32
    %c0_i32_0 = arith.constant 0 : i32
    return %arg0, %c0_i32 : i32, i32
  }
  func.func @transform_1(%arg0: i32) -> (i32, i32) {
    %c0_i32 = arith.constant 0 : i32
    %c0_i32_0 = arith.constant 0 : i32
    %c0_i32_1 = arith.constant 0 : i32
    return %c0_i32, %c0_i32_0 : i32, i32
  }
  func.func @transform_2(%arg0: i32) -> (i32, i32) {
    %c0_i32 = arith.constant 0 : i32
    %c0_i32_0 = arith.constant 0 : i32
    %c0_i32_1 = arith.constant 0 : i32
    return %c0_i32, %c0_i32_0 : i32, i32
  }
  func.func @transform_3(%arg0: i32) -> (i32, i32) {
    %c0_i32 = arith.constant 0 : i32
    %c0_i32_0 = arith.constant 0 : i32
    %c0_i32_1 = arith.constant 0 : i32
    return %c0_i32, %c0_i32_0 : i32, i32
  }
  func.func @transform_4(%arg0: i32) -> (i32, i32) {
    %c0_i32 = arith.constant 0 : i32
    %c0_i32_0 = arith.constant 0 : i32
    return %arg0, %c0_i32 : i32, i32
  }
}

module attributes {stable_mosaic.version = 11 : i64} {
  func.func @gru_layer_kernel(%arg0: i32, %arg1: memref<4x8x16xbf16, #tpu.memory_space<vmem>>, %arg2: memref<4x8x16xbf16, #tpu.memory_space<vmem>>, %arg3: memref<16x768xbf16, #tpu.memory_space<vmem>>, %arg4: memref<1x768xf32, #tpu.memory_space<vmem>>, %arg5: memref<2x128x384xbf16, #tpu.memory_space<vmem>>, %arg6: memref<2x1x384xf32, #tpu.memory_space<vmem>>, %arg7: memref<4x8x128xbf16, #tpu.memory_space<vmem>>, %arg8: memref<4x8x128xbf16, #tpu.memory_space<vmem>>, %arg9: memref<2x8x128xf32, #tpu.memory_space<vmem>>, %arg10: memref<32x384xf32, #tpu.memory_space<vmem>>, %arg11: memref<32x384xf32, #tpu.memory_space<vmem>>) attributes {dimension_semantics = [#tpu.dimension_semantics<arbitrary>], iteration_bounds = array<i64: 1>, scalar_prefetch = 0 : i64, scratch_operands = 3 : i64, tpu.core_type = #tpu.core_type<tc>, window_params = [{transform_indices = @transform_0, window_bounds = array<i64: 4, 8, 16>}, {transform_indices = @transform_1, window_bounds = array<i64: 4, 8, 16>}, {pipeline_mode = #tpu.pipeline_mode<synchronous>, transform_indices = @transform_2, window_bounds = array<i64: 16, 768>}, {pipeline_mode = #tpu.pipeline_mode<synchronous>, transform_indices = @transform_3, window_bounds = array<i64: 1, 768>}, {pipeline_mode = #tpu.pipeline_mode<synchronous>, transform_indices = @transform_4, window_bounds = array<i64: 2, 128, 384>}, {pipeline_mode = #tpu.pipeline_mode<synchronous>, transform_indices = @transform_5, window_bounds = array<i64: 2, 1, 384>}, {transform_indices = @transform_6, window_bounds = array<i64: 4, 8, 128>}, {transform_indices = @transform_7, window_bounds = array<i64: 4, 8, 128>}]} {
    %c0_i32 = arith.constant 0 : i32
    %0 = arith.cmpi eq, %arg0, %c0_i32 : i32
    %1 = arith.extui %0 : i1 to i32
    %c0_i32_0 = arith.constant 0 : i32
    %2 = arith.cmpi ne, %1, %c0_i32_0 : i32
    scf.if %2 {
      %cst_120 = arith.constant 0.000000e+00 : f32
      %380 = vector.broadcast %cst_120 : f32 to vector<2x8x128xf32>
      %c0_121 = arith.constant 0 : index
      %c0_122 = arith.constant 0 : index
      %c0_123 = arith.constant 0 : index
      %381 = vector.load %arg9[%c0_121, %c0_122, %c0_123] : memref<2x8x128xf32, #tpu.memory_space<vmem>>, vector<2x8x128xf32>
      tpu.vector_store %arg9[%c0_121, %c0_122, %c0_123], %380 {strides = array<i32>} : memref<2x8x128xf32, #tpu.memory_space<vmem>>, vector<2x8x128xf32>,
    } else {
    }
    %c0 = arith.constant 0 : index
    %c0_1 = arith.constant 0 : index
    %c0_2 = arith.constant 0 : index
    %3 = vector.load %arg1[%c0, %c0_1, %c0_2] : memref<4x8x16xbf16, #tpu.memory_space<vmem>>, vector<4x8x16xbf16>
    %4 = vector.shape_cast %3 : vector<4x8x16xbf16> to vector<32x16xbf16>
    %c0_3 = arith.constant 0 : index
    %c0_4 = arith.constant 0 : index
    %c0_5 = arith.constant 0 : index
    %5 = vector.load %arg2[%c0_3, %c0_4, %c0_5] : memref<4x8x16xbf16, #tpu.memory_space<vmem>>, vector<4x8x16xbf16>
    %6 = vector.shape_cast %5 : vector<4x8x16xbf16> to vector<32x16xbf16>
    %c0_6 = arith.constant 0 : index
    %c0_7 = arith.constant 0 : index
    %7 = vector.load %arg3[%c0_6, %c0_7] : memref<16x768xbf16, #tpu.memory_space<vmem>>, vector<16x384xbf16>
    %cst = arith.constant dense<0.000000e+00> : vector<32x384xf32>
    %8 = tpu.matmul %4, %7, %cst {dimension_numbers = #tpu.dot_dimension_numbers<[1], [0], [0], [1], [0, 0, 1, 1], [], []>} : vector<32x16xbf16>, vector<16x384xbf16>, vector<32x384xf32> -> vector<32x384xf32>
    %c0_8 = arith.constant 0 : index
    %c384 = arith.constant 384 : index
    %9 = vector.load %arg3[%c0_8, %c384] : memref<16x768xbf16, #tpu.memory_space<vmem>>, vector<16x384xbf16>
    %cst_9 = arith.constant dense<0.000000e+00> : vector<32x384xf32>
    %10 = tpu.matmul %6, %9, %cst_9 {dimension_numbers = #tpu.dot_dimension_numbers<[1], [0], [0], [1], [0, 0, 1, 1], [], []>} : vector<32x16xbf16>, vector<16x384xbf16>, vector<32x384xf32> -> vector<32x384xf32>
    %c0_10 = arith.constant 0 : index
    %c0_11 = arith.constant 0 : index
    %11 = vector.load %arg4[%c0_10, %c0_11] : memref<1x768xf32, #tpu.memory_space<vmem>>, vector<1x384xf32>
    %12 = vector.broadcast %11 : vector<1x384xf32> to vector<32x384xf32>
    %13 = arith.addf %8, %12 : vector<32x384xf32>
    %c0_12 = arith.constant 0 : index
    %c0_13 = arith.constant 0 : index
    %14 = vector.load %arg10[%c0_12, %c0_13] : memref<32x384xf32, #tpu.memory_space<vmem>>, vector<32x384xf32>
    tpu.vector_store %arg10[%c0_12, %c0_13], %13 {strides = array<i32>} : memref<32x384xf32, #tpu.memory_space<vmem>>, vector<32x384xf32>,
    %c0_14 = arith.constant 0 : index
    %c384_15 = arith.constant 384 : index
    %15 = vector.load %arg4[%c0_14, %c384_15] : memref<1x768xf32, #tpu.memory_space<vmem>>, vector<1x384xf32>
    %16 = vector.broadcast %15 : vector<1x384xf32> to vector<32x384xf32>
    %17 = arith.addf %10, %16 : vector<32x384xf32>
    %c0_16 = arith.constant 0 : index
    %c0_17 = arith.constant 0 : index
    %18 = vector.load %arg11[%c0_16, %c0_17] : memref<32x384xf32, #tpu.memory_space<vmem>>, vector<32x384xf32>
    tpu.vector_store %arg11[%c0_16, %c0_17], %17 {strides = array<i32>} : memref<32x384xf32, #tpu.memory_space<vmem>>, vector<32x384xf32>,
    %c0_18 = arith.constant 0 : index
    %c0_19 = arith.constant 0 : index
    %c0_20 = arith.constant 0 : index
    %19 = vector.load %arg5[%c0_18, %c0_19, %c0_20] : memref<2x128x384xbf16, #tpu.memory_space<vmem>>, vector<1x128x384xbf16>
    %20 = vector.shape_cast %19 : vector<1x128x384xbf16> to vector<128x384xbf16>
    %c1 = arith.constant 1 : index
    %c0_21 = arith.constant 0 : index
    %c0_22 = arith.constant 0 : index
    %21 = vector.load %arg5[%c1, %c0_21, %c0_22] : memref<2x128x384xbf16, #tpu.memory_space<vmem>>, vector<1x128x384xbf16>
    %22 = vector.shape_cast %21 : vector<1x128x384xbf16> to vector<128x384xbf16>
    %c0_23 = arith.constant 0 : index
    %c0_24 = arith.constant 0 : index
    %c0_25 = arith.constant 0 : index
    %23 = vector.load %arg6[%c0_23, %c0_24, %c0_25] : memref<2x1x384xf32, #tpu.memory_space<vmem>>, vector<1x1x384xf32>
    %24 = vector.shape_cast %23 : vector<1x1x384xf32> to vector<1x384xf32>
    %c1_26 = arith.constant 1 : index
    %c0_27 = arith.constant 0 : index
    %c0_28 = arith.constant 0 : index
    %25 = vector.load %arg6[%c1_26, %c0_27, %c0_28] : memref<2x1x384xf32, #tpu.memory_space<vmem>>, vector<1x1x384xf32>
    %26 = vector.shape_cast %25 : vector<1x1x384xf32> to vector<1x384xf32>
    %c4_i32 = arith.constant 4 : i32
    %27 = arith.muli %arg0, %c4_i32 : i32
    %c0_i32_29 = arith.constant 0 : i32
    %28 = arith.subi %c0_i32_29, %arg0 : i32
    %c4_i32_30 = arith.constant 4 : i32
    %29 = arith.muli %28, %c4_i32_30 : i32
    %c0_31 = arith.constant 0 : index
    %c0_32 = arith.constant 0 : index
    %c0_33 = arith.constant 0 : index
    %30 = vector.load %arg9[%c0_31, %c0_32, %c0_33] : memref<2x8x128xf32, #tpu.memory_space<vmem>>, vector<1x8x128xf32>
    %31 = vector.shape_cast %30 : vector<1x8x128xf32> to vector<8x128xf32>
    %c1_34 = arith.constant 1 : index
    %c0_35 = arith.constant 0 : index
    %c0_36 = arith.constant 0 : index
    %32 = vector.load %arg9[%c1_34, %c0_35, %c0_36] : memref<2x8x128xf32, #tpu.memory_space<vmem>>, vector<1x8x128xf32>
    %33 = vector.shape_cast %32 : vector<1x8x128xf32> to vector<8x128xf32>
    %c0_i32_37 = arith.constant 0 : i32
    %c3_i32 = arith.constant 3 : i32
    %34 = arith.subi %c3_i32, %c0_i32_37 : i32
    %c8_i32 = arith.constant 8 : i32
    %35 = arith.muli %c0_i32_37, %c8_i32 : i32
    %36 = tpu.assume_multiple %35, 8 : i32
    %c8_i32_38 = arith.constant 8 : i32
    %37 = arith.muli %34, %c8_i32_38 : i32
    %38 = tpu.assume_multiple %37, 8 : i32
    %39 = arith.index_cast %36 : i32 to index
    %c0_39 = arith.constant 0 : index
    %40 = vector.load %arg10[%39, %c0_39] : memref<32x384xf32, #tpu.memory_space<vmem>>, vector<8x384xf32>
    %41 = arith.truncf %31 : vector<8x128xf32> to vector<8x128xbf16>
    %cst_40 = arith.constant dense<0.000000e+00> : vector<8x384xf32>
    %42 = tpu.matmul %41, %20, %cst_40 {dimension_numbers = #tpu.dot_dimension_numbers<[1], [0], [0], [1], [0, 0, 1, 1], [], []>} : vector<8x128xbf16>, vector<128x384xbf16>, vector<8x384xf32> -> vector<8x384xf32>
    %43 = vector.broadcast %24 : vector<1x384xf32> to vector<8x384xf32>
    %44 = arith.addf %42, %43 : vector<8x384xf32>
    %45 = vector.extract_strided_slice %40 {offsets = [0, 0], sizes = [8, 128], strides = [1, 1]} : vector<8x384xf32> to vector<8x128xf32>
    %46 = vector.extract_strided_slice %44 {offsets = [0, 0], sizes = [8, 128], strides = [1, 1]} : vector<8x384xf32> to vector<8x128xf32>
    %47 = arith.addf %45, %46 : vector<8x128xf32>
    %48 = arith.negf %47 : vector<8x128xf32>
    %49 = math.exp %48 : vector<8x128xf32>
    %cst_41 = arith.constant 1.000000e+00 : f32
    %50 = vector.broadcast %cst_41 : f32 to vector<8x128xf32>
    %51 = arith.addf %50, %49 : vector<8x128xf32>
    %52 = arith.divf %50, %51 : vector<8x128xf32>
    %53 = vector.extract_strided_slice %40 {offsets = [0, 128], sizes = [8, 128], strides = [1, 1]} : vector<8x384xf32> to vector<8x128xf32>
    %54 = vector.extract_strided_slice %44 {offsets = [0, 128], sizes = [8, 128], strides = [1, 1]} : vector<8x384xf32> to vector<8x128xf32>
    %55 = arith.addf %53, %54 : vector<8x128xf32>
    %56 = arith.negf %55 : vector<8x128xf32>
    %57 = math.exp %56 : vector<8x128xf32>
    %cst_42 = arith.constant 1.000000e+00 : f32
    %58 = vector.broadcast %cst_42 : f32 to vector<8x128xf32>
    %59 = arith.addf %58, %57 : vector<8x128xf32>
    %60 = arith.divf %58, %59 : vector<8x128xf32>
    %61 = vector.extract_strided_slice %40 {offsets = [0, 256], sizes = [8, 128], strides = [1, 1]} : vector<8x384xf32> to vector<8x128xf32>
    %62 = vector.extract_strided_slice %44 {offsets = [0, 256], sizes = [8, 128], strides = [1, 1]} : vector<8x384xf32> to vector<8x128xf32>
    %63 = arith.mulf %52, %62 : vector<8x128xf32>
    %64 = arith.addf %61, %63 : vector<8x128xf32>
    %65 = math.tanh %64 : vector<8x128xf32>
    %cst_43 = arith.constant 1.000000e+00 : f32
    %66 = vector.broadcast %cst_43 : f32 to vector<8x128xf32>
    %67 = arith.subf %66, %60 : vector<8x128xf32>
    %68 = arith.mulf %67, %65 : vector<8x128xf32>
    %69 = arith.mulf %60, %31 : vector<8x128xf32>
    %70 = arith.addf %68, %69 : vector<8x128xf32>
    %71 = arith.addi %27, %c0_i32_37 : i32
    %c4_i32_44 = arith.constant 4 : i32
    %72 = arith.cmpi slt, %71, %c4_i32_44 : i32
    %73 = arith.select %72, %70, %31 : vector<8x128xf32>
    %74 = arith.truncf %73 : vector<8x128xf32> to vector<8x128xbf16>
    %75 = arith.index_cast %c0_i32_37 : i32 to index
    %c0_45 = arith.constant 0 : index
    %c0_46 = arith.constant 0 : index
    %76 = vector.load %arg7[%75, %c0_45, %c0_46] : memref<4x8x128xbf16, #tpu.memory_space<vmem>>, vector<1x8x128xbf16>
    %77 = vector.shape_cast %76 : vector<1x8x128xbf16> to vector<8x128xbf16>
    %78 = vector.shape_cast %74 : vector<8x128xbf16> to vector<1x8x128xbf16>
    tpu.vector_store %arg7[%75, %c0_45, %c0_46], %78 {strides = array<i32>} : memref<4x8x128xbf16, #tpu.memory_space<vmem>>, vector<1x8x128xbf16>,
    %79 = arith.index_cast %38 : i32 to index
    %c0_47 = arith.constant 0 : index
    %80 = vector.load %arg11[%79, %c0_47] : memref<32x384xf32, #tpu.memory_space<vmem>>, vector<8x384xf32>
    %81 = arith.truncf %33 : vector<8x128xf32> to vector<8x128xbf16>
    %cst_48 = arith.constant dense<0.000000e+00> : vector<8x384xf32>
    %82 = tpu.matmul %81, %22, %cst_48 {dimension_numbers = #tpu.dot_dimension_numbers<[1], [0], [0], [1], [0, 0, 1, 1], [], []>} : vector<8x128xbf16>, vector<128x384xbf16>, vector<8x384xf32> -> vector<8x384xf32>
    %83 = vector.broadcast %26 : vector<1x384xf32> to vector<8x384xf32>
    %84 = arith.addf %82, %83 : vector<8x384xf32>
    %85 = vector.extract_strided_slice %80 {offsets = [0, 0], sizes = [8, 128], strides = [1, 1]} : vector<8x384xf32> to vector<8x128xf32>
    %86 = vector.extract_strided_slice %84 {offsets = [0, 0], sizes = [8, 128], strides = [1, 1]} : vector<8x384xf32> to vector<8x128xf32>
    %87 = arith.addf %85, %86 : vector<8x128xf32>
    %88 = arith.negf %87 : vector<8x128xf32>
    %89 = math.exp %88 : vector<8x128xf32>
    %cst_49 = arith.constant 1.000000e+00 : f32
    %90 = vector.broadcast %cst_49 : f32 to vector<8x128xf32>
    %91 = arith.addf %90, %89 : vector<8x128xf32>
    %92 = arith.divf %90, %91 : vector<8x128xf32>
    %93 = vector.extract_strided_slice %80 {offsets = [0, 128], sizes = [8, 128], strides = [1, 1]} : vector<8x384xf32> to vector<8x128xf32>
    %94 = vector.extract_strided_slice %84 {offsets = [0, 128], sizes = [8, 128], strides = [1, 1]} : vector<8x384xf32> to vector<8x128xf32>
    %95 = arith.addf %93, %94 : vector<8x128xf32>
    %96 = arith.negf %95 : vector<8x128xf32>
    %97 = math.exp %96 : vector<8x128xf32>
    %cst_50 = arith.constant 1.000000e+00 : f32
    %98 = vector.broadcast %cst_50 : f32 to vector<8x128xf32>
    %99 = arith.addf %98, %97 : vector<8x128xf32>
    %100 = arith.divf %98, %99 : vector<8x128xf32>
    %101 = vector.extract_strided_slice %80 {offsets = [0, 256], sizes = [8, 128], strides = [1, 1]} : vector<8x384xf32> to vector<8x128xf32>
    %102 = vector.extract_strided_slice %84 {offsets = [0, 256], sizes = [8, 128], strides = [1, 1]} : vector<8x384xf32> to vector<8x128xf32>
    %103 = arith.mulf %92, %102 : vector<8x128xf32>
    %104 = arith.addf %101, %103 : vector<8x128xf32>
    %105 = math.tanh %104 : vector<8x128xf32>
    %cst_51 = arith.constant 1.000000e+00 : f32
    %106 = vector.broadcast %cst_51 : f32 to vector<8x128xf32>
    %107 = arith.subf %106, %100 : vector<8x128xf32>
    %108 = arith.mulf %107, %105 : vector<8x128xf32>
    %109 = arith.mulf %100, %33 : vector<8x128xf32>
    %110 = arith.addf %108, %109 : vector<8x128xf32>
    %111 = arith.addi %29, %34 : i32
    %c4_i32_52 = arith.constant 4 : i32
    %112 = arith.cmpi slt, %111, %c4_i32_52 : i32
    %113 = arith.select %112, %110, %33 : vector<8x128xf32>
    %114 = arith.truncf %113 : vector<8x128xf32> to vector<8x128xbf16>
    %115 = arith.index_cast %34 : i32 to index
    %c0_53 = arith.constant 0 : index
    %c0_54 = arith.constant 0 : index
    %116 = vector.load %arg8[%115, %c0_53, %c0_54] : memref<4x8x128xbf16, #tpu.memory_space<vmem>>, vector<1x8x128xbf16>
    %117 = vector.shape_cast %116 : vector<1x8x128xbf16> to vector<8x128xbf16>
    %118 = vector.shape_cast %114 : vector<8x128xbf16> to vector<1x8x128xbf16>
    tpu.vector_store %arg8[%115, %c0_53, %c0_54], %118 {strides = array<i32>} : memref<4x8x128xbf16, #tpu.memory_space<vmem>>, vector<1x8x128xbf16>,
    %c1_i32 = arith.constant 1 : i32
    %c3_i32_55 = arith.constant 3 : i32
    %119 = arith.subi %c3_i32_55, %c1_i32 : i32
    %c8_i32_56 = arith.constant 8 : i32
    %120 = arith.muli %c1_i32, %c8_i32_56 : i32
    %121 = tpu.assume_multiple %120, 8 : i32
    %c8_i32_57 = arith.constant 8 : i32
    %122 = arith.muli %119, %c8_i32_57 : i32
    %123 = tpu.assume_multiple %122, 8 : i32
    %124 = arith.index_cast %121 : i32 to index
    %c0_58 = arith.constant 0 : index
    %125 = vector.load %arg10[%124, %c0_58] : memref<32x384xf32, #tpu.memory_space<vmem>>, vector<8x384xf32>
    %126 = arith.truncf %73 : vector<8x128xf32> to vector<8x128xbf16>
    %cst_59 = arith.constant dense<0.000000e+00> : vector<8x384xf32>
    %127 = tpu.matmul %126, %20, %cst_59 {dimension_numbers = #tpu.dot_dimension_numbers<[1], [0], [0], [1], [0, 0, 1, 1], [], []>} : vector<8x128xbf16>, vector<128x384xbf16>, vector<8x384xf32> -> vector<8x384xf32>
    %128 = vector.broadcast %24 : vector<1x384xf32> to vector<8x384xf32>
    %129 = arith.addf %127, %128 : vector<8x384xf32>
    %130 = vector.extract_strided_slice %125 {offsets = [0, 0], sizes = [8, 128], strides = [1, 1]} : vector<8x384xf32> to vector<8x128xf32>
    %131 = vector.extract_strided_slice %129 {offsets = [0, 0], sizes = [8, 128], strides = [1, 1]} : vector<8x384xf32> to vector<8x128xf32>
    %132 = arith.addf %130, %131 : vector<8x128xf32>
    %133 = arith.negf %132 : vector<8x128xf32>
    %134 = math.exp %133 : vector<8x128xf32>
    %cst_60 = arith.constant 1.000000e+00 : f32
    %135 = vector.broadcast %cst_60 : f32 to vector<8x128xf32>
    %136 = arith.addf %135, %134 : vector<8x128xf32>
    %137 = arith.divf %135, %136 : vector<8x128xf32>
    %138 = vector.extract_strided_slice %125 {offsets = [0, 128], sizes = [8, 128], strides = [1, 1]} : vector<8x384xf32> to vector<8x128xf32>
    %139 = vector.extract_strided_slice %129 {offsets = [0, 128], sizes = [8, 128], strides = [1, 1]} : vector<8x384xf32> to vector<8x128xf32>
    %140 = arith.addf %138, %139 : vector<8x128xf32>
    %141 = arith.negf %140 : vector<8x128xf32>
    %142 = math.exp %141 : vector<8x128xf32>
    %cst_61 = arith.constant 1.000000e+00 : f32
    %143 = vector.broadcast %cst_61 : f32 to vector<8x128xf32>
    %144 = arith.addf %143, %142 : vector<8x128xf32>
    %145 = arith.divf %143, %144 : vector<8x128xf32>
    %146 = vector.extract_strided_slice %125 {offsets = [0, 256], sizes = [8, 128], strides = [1, 1]} : vector<8x384xf32> to vector<8x128xf32>
    %147 = vector.extract_strided_slice %129 {offsets = [0, 256], sizes = [8, 128], strides = [1, 1]} : vector<8x384xf32> to vector<8x128xf32>
    %148 = arith.mulf %137, %147 : vector<8x128xf32>
    %149 = arith.addf %146, %148 : vector<8x128xf32>
    %150 = math.tanh %149 : vector<8x128xf32>
    %cst_62 = arith.constant 1.000000e+00 : f32
    %151 = vector.broadcast %cst_62 : f32 to vector<8x128xf32>
    %152 = arith.subf %151, %145 : vector<8x128xf32>
    %153 = arith.mulf %152, %150 : vector<8x128xf32>
    %154 = arith.mulf %145, %73 : vector<8x128xf32>
    %155 = arith.addf %153, %154 : vector<8x128xf32>
    %156 = arith.addi %27, %c1_i32 : i32
    %c4_i32_63 = arith.constant 4 : i32
    %157 = arith.cmpi slt, %156, %c4_i32_63 : i32
    %158 = arith.select %157, %155, %73 : vector<8x128xf32>
    %159 = arith.truncf %158 : vector<8x128xf32> to vector<8x128xbf16>
    %160 = arith.index_cast %c1_i32 : i32 to index
    %c0_64 = arith.constant 0 : index
    %c0_65 = arith.constant 0 : index
    %161 = vector.load %arg7[%160, %c0_64, %c0_65] : memref<4x8x128xbf16, #tpu.memory_space<vmem>>, vector<1x8x128xbf16>
    %162 = vector.shape_cast %161 : vector<1x8x128xbf16> to vector<8x128xbf16>
    %163 = vector.shape_cast %159 : vector<8x128xbf16> to vector<1x8x128xbf16>
    tpu.vector_store %arg7[%160, %c0_64, %c0_65], %163 {strides = array<i32>} : memref<4x8x128xbf16, #tpu.memory_space<vmem>>, vector<1x8x128xbf16>,
    %164 = arith.index_cast %123 : i32 to index
    %c0_66 = arith.constant 0 : index
    %165 = vector.load %arg11[%164, %c0_66] : memref<32x384xf32, #tpu.memory_space<vmem>>, vector<8x384xf32>
    %166 = arith.truncf %113 : vector<8x128xf32> to vector<8x128xbf16>
    %cst_67 = arith.constant dense<0.000000e+00> : vector<8x384xf32>
    %167 = tpu.matmul %166, %22, %cst_67 {dimension_numbers = #tpu.dot_dimension_numbers<[1], [0], [0], [1], [0, 0, 1, 1], [], []>} : vector<8x128xbf16>, vector<128x384xbf16>, vector<8x384xf32> -> vector<8x384xf32>
    %168 = vector.broadcast %26 : vector<1x384xf32> to vector<8x384xf32>
    %169 = arith.addf %167, %168 : vector<8x384xf32>
    %170 = vector.extract_strided_slice %165 {offsets = [0, 0], sizes = [8, 128], strides = [1, 1]} : vector<8x384xf32> to vector<8x128xf32>
    %171 = vector.extract_strided_slice %169 {offsets = [0, 0], sizes = [8, 128], strides = [1, 1]} : vector<8x384xf32> to vector<8x128xf32>
    %172 = arith.addf %170, %171 : vector<8x128xf32>
    %173 = arith.negf %172 : vector<8x128xf32>
    %174 = math.exp %173 : vector<8x128xf32>
    %cst_68 = arith.constant 1.000000e+00 : f32
    %175 = vector.broadcast %cst_68 : f32 to vector<8x128xf32>
    %176 = arith.addf %175, %174 : vector<8x128xf32>
    %177 = arith.divf %175, %176 : vector<8x128xf32>
    %178 = vector.extract_strided_slice %165 {offsets = [0, 128], sizes = [8, 128], strides = [1, 1]} : vector<8x384xf32> to vector<8x128xf32>
    %179 = vector.extract_strided_slice %169 {offsets = [0, 128], sizes = [8, 128], strides = [1, 1]} : vector<8x384xf32> to vector<8x128xf32>
    %180 = arith.addf %178, %179 : vector<8x128xf32>
    %181 = arith.negf %180 : vector<8x128xf32>
    %182 = math.exp %181 : vector<8x128xf32>
    %cst_69 = arith.constant 1.000000e+00 : f32
    %183 = vector.broadcast %cst_69 : f32 to vector<8x128xf32>
    %184 = arith.addf %183, %182 : vector<8x128xf32>
    %185 = arith.divf %183, %184 : vector<8x128xf32>
    %186 = vector.extract_strided_slice %165 {offsets = [0, 256], sizes = [8, 128], strides = [1, 1]} : vector<8x384xf32> to vector<8x128xf32>
    %187 = vector.extract_strided_slice %169 {offsets = [0, 256], sizes = [8, 128], strides = [1, 1]} : vector<8x384xf32> to vector<8x128xf32>
    %188 = arith.mulf %177, %187 : vector<8x128xf32>
    %189 = arith.addf %186, %188 : vector<8x128xf32>
    %190 = math.tanh %189 : vector<8x128xf32>
    %cst_70 = arith.constant 1.000000e+00 : f32
    %191 = vector.broadcast %cst_70 : f32 to vector<8x128xf32>
    %192 = arith.subf %191, %185 : vector<8x128xf32>
    %193 = arith.mulf %192, %190 : vector<8x128xf32>
    %194 = arith.mulf %185, %113 : vector<8x128xf32>
    %195 = arith.addf %193, %194 : vector<8x128xf32>
    %196 = arith.addi %29, %119 : i32
    %c4_i32_71 = arith.constant 4 : i32
    %197 = arith.cmpi slt, %196, %c4_i32_71 : i32
    %198 = arith.select %197, %195, %113 : vector<8x128xf32>
    %199 = arith.truncf %198 : vector<8x128xf32> to vector<8x128xbf16>
    %200 = arith.index_cast %119 : i32 to index
    %c0_72 = arith.constant 0 : index
    %c0_73 = arith.constant 0 : index
    %201 = vector.load %arg8[%200, %c0_72, %c0_73] : memref<4x8x128xbf16, #tpu.memory_space<vmem>>, vector<1x8x128xbf16>
    %202 = vector.shape_cast %201 : vector<1x8x128xbf16> to vector<8x128xbf16>
    %203 = vector.shape_cast %199 : vector<8x128xbf16> to vector<1x8x128xbf16>
    tpu.vector_store %arg8[%200, %c0_72, %c0_73], %203 {strides = array<i32>} : memref<4x8x128xbf16, #tpu.memory_space<vmem>>, vector<1x8x128xbf16>,
    %c2_i32 = arith.constant 2 : i32
    %c3_i32_74 = arith.constant 3 : i32
    %204 = arith.subi %c3_i32_74, %c2_i32 : i32
    %c8_i32_75 = arith.constant 8 : i32
    %205 = arith.muli %c2_i32, %c8_i32_75 : i32
    %206 = tpu.assume_multiple %205, 8 : i32
    %c8_i32_76 = arith.constant 8 : i32
    %207 = arith.muli %204, %c8_i32_76 : i32
    %208 = tpu.assume_multiple %207, 8 : i32
    %209 = arith.index_cast %206 : i32 to index
    %c0_77 = arith.constant 0 : index
    %210 = vector.load %arg10[%209, %c0_77] : memref<32x384xf32, #tpu.memory_space<vmem>>, vector<8x384xf32>
    %211 = arith.truncf %158 : vector<8x128xf32> to vector<8x128xbf16>
    %cst_78 = arith.constant dense<0.000000e+00> : vector<8x384xf32>
    %212 = tpu.matmul %211, %20, %cst_78 {dimension_numbers = #tpu.dot_dimension_numbers<[1], [0], [0], [1], [0, 0, 1, 1], [], []>} : vector<8x128xbf16>, vector<128x384xbf16>, vector<8x384xf32> -> vector<8x384xf32>
    %213 = vector.broadcast %24 : vector<1x384xf32> to vector<8x384xf32>
    %214 = arith.addf %212, %213 : vector<8x384xf32>
    %215 = vector.extract_strided_slice %210 {offsets = [0, 0], sizes = [8, 128], strides = [1, 1]} : vector<8x384xf32> to vector<8x128xf32>
    %216 = vector.extract_strided_slice %214 {offsets = [0, 0], sizes = [8, 128], strides = [1, 1]} : vector<8x384xf32> to vector<8x128xf32>
    %217 = arith.addf %215, %216 : vector<8x128xf32>
    %218 = arith.negf %217 : vector<8x128xf32>
    %219 = math.exp %218 : vector<8x128xf32>
    %cst_79 = arith.constant 1.000000e+00 : f32
    %220 = vector.broadcast %cst_79 : f32 to vector<8x128xf32>
    %221 = arith.addf %220, %219 : vector<8x128xf32>
    %222 = arith.divf %220, %221 : vector<8x128xf32>
    %223 = vector.extract_strided_slice %210 {offsets = [0, 128], sizes = [8, 128], strides = [1, 1]} : vector<8x384xf32> to vector<8x128xf32>
    %224 = vector.extract_strided_slice %214 {offsets = [0, 128], sizes = [8, 128], strides = [1, 1]} : vector<8x384xf32> to vector<8x128xf32>
    %225 = arith.addf %223, %224 : vector<8x128xf32>
    %226 = arith.negf %225 : vector<8x128xf32>
    %227 = math.exp %226 : vector<8x128xf32>
    %cst_80 = arith.constant 1.000000e+00 : f32
    %228 = vector.broadcast %cst_80 : f32 to vector<8x128xf32>
    %229 = arith.addf %228, %227 : vector<8x128xf32>
    %230 = arith.divf %228, %229 : vector<8x128xf32>
    %231 = vector.extract_strided_slice %210 {offsets = [0, 256], sizes = [8, 128], strides = [1, 1]} : vector<8x384xf32> to vector<8x128xf32>
    %232 = vector.extract_strided_slice %214 {offsets = [0, 256], sizes = [8, 128], strides = [1, 1]} : vector<8x384xf32> to vector<8x128xf32>
    %233 = arith.mulf %222, %232 : vector<8x128xf32>
    %234 = arith.addf %231, %233 : vector<8x128xf32>
    %235 = math.tanh %234 : vector<8x128xf32>
    %cst_81 = arith.constant 1.000000e+00 : f32
    %236 = vector.broadcast %cst_81 : f32 to vector<8x128xf32>
    %237 = arith.subf %236, %230 : vector<8x128xf32>
    %238 = arith.mulf %237, %235 : vector<8x128xf32>
    %239 = arith.mulf %230, %158 : vector<8x128xf32>
    %240 = arith.addf %238, %239 : vector<8x128xf32>
    %241 = arith.addi %27, %c2_i32 : i32
    %c4_i32_82 = arith.constant 4 : i32
    %242 = arith.cmpi slt, %241, %c4_i32_82 : i32
    %243 = arith.select %242, %240, %158 : vector<8x128xf32>
    %244 = arith.truncf %243 : vector<8x128xf32> to vector<8x128xbf16>
    %245 = arith.index_cast %c2_i32 : i32 to index
    %c0_83 = arith.constant 0 : index
    %c0_84 = arith.constant 0 : index
    %246 = vector.load %arg7[%245, %c0_83, %c0_84] : memref<4x8x128xbf16, #tpu.memory_space<vmem>>, vector<1x8x128xbf16>
    %247 = vector.shape_cast %246 : vector<1x8x128xbf16> to vector<8x128xbf16>
    %248 = vector.shape_cast %244 : vector<8x128xbf16> to vector<1x8x128xbf16>
    tpu.vector_store %arg7[%245, %c0_83, %c0_84], %248 {strides = array<i32>} : memref<4x8x128xbf16, #tpu.memory_space<vmem>>, vector<1x8x128xbf16>,
    %249 = arith.index_cast %208 : i32 to index
    %c0_85 = arith.constant 0 : index
    %250 = vector.load %arg11[%249, %c0_85] : memref<32x384xf32, #tpu.memory_space<vmem>>, vector<8x384xf32>
    %251 = arith.truncf %198 : vector<8x128xf32> to vector<8x128xbf16>
    %cst_86 = arith.constant dense<0.000000e+00> : vector<8x384xf32>
    %252 = tpu.matmul %251, %22, %cst_86 {dimension_numbers = #tpu.dot_dimension_numbers<[1], [0], [0], [1], [0, 0, 1, 1], [], []>} : vector<8x128xbf16>, vector<128x384xbf16>, vector<8x384xf32> -> vector<8x384xf32>
    %253 = vector.broadcast %26 : vector<1x384xf32> to vector<8x384xf32>
    %254 = arith.addf %252, %253 : vector<8x384xf32>
    %255 = vector.extract_strided_slice %250 {offsets = [0, 0], sizes = [8, 128], strides = [1, 1]} : vector<8x384xf32> to vector<8x128xf32>
    %256 = vector.extract_strided_slice %254 {offsets = [0, 0], sizes = [8, 128], strides = [1, 1]} : vector<8x384xf32> to vector<8x128xf32>
    %257 = arith.addf %255, %256 : vector<8x128xf32>
    %258 = arith.negf %257 : vector<8x128xf32>
    %259 = math.exp %258 : vector<8x128xf32>
    %cst_87 = arith.constant 1.000000e+00 : f32
    %260 = vector.broadcast %cst_87 : f32 to vector<8x128xf32>
    %261 = arith.addf %260, %259 : vector<8x128xf32>
    %262 = arith.divf %260, %261 : vector<8x128xf32>
    %263 = vector.extract_strided_slice %250 {offsets = [0, 128], sizes = [8, 128], strides = [1, 1]} : vector<8x384xf32> to vector<8x128xf32>
    %264 = vector.extract_strided_slice %254 {offsets = [0, 128], sizes = [8, 128], strides = [1, 1]} : vector<8x384xf32> to vector<8x128xf32>
    %265 = arith.addf %263, %264 : vector<8x128xf32>
    %266 = arith.negf %265 : vector<8x128xf32>
    %267 = math.exp %266 : vector<8x128xf32>
    %cst_88 = arith.constant 1.000000e+00 : f32
    %268 = vector.broadcast %cst_88 : f32 to vector<8x128xf32>
    %269 = arith.addf %268, %267 : vector<8x128xf32>
    %270 = arith.divf %268, %269 : vector<8x128xf32>
    %271 = vector.extract_strided_slice %250 {offsets = [0, 256], sizes = [8, 128], strides = [1, 1]} : vector<8x384xf32> to vector<8x128xf32>
    %272 = vector.extract_strided_slice %254 {offsets = [0, 256], sizes = [8, 128], strides = [1, 1]} : vector<8x384xf32> to vector<8x128xf32>
    %273 = arith.mulf %262, %272 : vector<8x128xf32>
    %274 = arith.addf %271, %273 : vector<8x128xf32>
    %275 = math.tanh %274 : vector<8x128xf32>
    %cst_89 = arith.constant 1.000000e+00 : f32
    %276 = vector.broadcast %cst_89 : f32 to vector<8x128xf32>
    %277 = arith.subf %276, %270 : vector<8x128xf32>
    %278 = arith.mulf %277, %275 : vector<8x128xf32>
    %279 = arith.mulf %270, %198 : vector<8x128xf32>
    %280 = arith.addf %278, %279 : vector<8x128xf32>
    %281 = arith.addi %29, %204 : i32
    %c4_i32_90 = arith.constant 4 : i32
    %282 = arith.cmpi slt, %281, %c4_i32_90 : i32
    %283 = arith.select %282, %280, %198 : vector<8x128xf32>
    %284 = arith.truncf %283 : vector<8x128xf32> to vector<8x128xbf16>
    %285 = arith.index_cast %204 : i32 to index
    %c0_91 = arith.constant 0 : index
    %c0_92 = arith.constant 0 : index
    %286 = vector.load %arg8[%285, %c0_91, %c0_92] : memref<4x8x128xbf16, #tpu.memory_space<vmem>>, vector<1x8x128xbf16>
    %287 = vector.shape_cast %286 : vector<1x8x128xbf16> to vector<8x128xbf16>
    %288 = vector.shape_cast %284 : vector<8x128xbf16> to vector<1x8x128xbf16>
    tpu.vector_store %arg8[%285, %c0_91, %c0_92], %288 {strides = array<i32>} : memref<4x8x128xbf16, #tpu.memory_space<vmem>>, vector<1x8x128xbf16>,
    %c3_i32_93 = arith.constant 3 : i32
    %c3_i32_94 = arith.constant 3 : i32
    %289 = arith.subi %c3_i32_94, %c3_i32_93 : i32
    %c8_i32_95 = arith.constant 8 : i32
    %290 = arith.muli %c3_i32_93, %c8_i32_95 : i32
    %291 = tpu.assume_multiple %290, 8 : i32
    %c8_i32_96 = arith.constant 8 : i32
    %292 = arith.muli %289, %c8_i32_96 : i32
    %293 = tpu.assume_multiple %292, 8 : i32
    %294 = arith.index_cast %291 : i32 to index
    %c0_97 = arith.constant 0 : index
    %295 = vector.load %arg10[%294, %c0_97] : memref<32x384xf32, #tpu.memory_space<vmem>>, vector<8x384xf32>
    %296 = arith.truncf %243 : vector<8x128xf32> to vector<8x128xbf16>
    %cst_98 = arith.constant dense<0.000000e+00> : vector<8x384xf32>
    %297 = tpu.matmul %296, %20, %cst_98 {dimension_numbers = #tpu.dot_dimension_numbers<[1], [0], [0], [1], [0, 0, 1, 1], [], []>} : vector<8x128xbf16>, vector<128x384xbf16>, vector<8x384xf32> -> vector<8x384xf32>
    %298 = vector.broadcast %24 : vector<1x384xf32> to vector<8x384xf32>
    %299 = arith.addf %297, %298 : vector<8x384xf32>
    %300 = vector.extract_strided_slice %295 {offsets = [0, 0], sizes = [8, 128], strides = [1, 1]} : vector<8x384xf32> to vector<8x128xf32>
    %301 = vector.extract_strided_slice %299 {offsets = [0, 0], sizes = [8, 128], strides = [1, 1]} : vector<8x384xf32> to vector<8x128xf32>
    %302 = arith.addf %300, %301 : vector<8x128xf32>
    %303 = arith.negf %302 : vector<8x128xf32>
    %304 = math.exp %303 : vector<8x128xf32>
    %cst_99 = arith.constant 1.000000e+00 : f32
    %305 = vector.broadcast %cst_99 : f32 to vector<8x128xf32>
    %306 = arith.addf %305, %304 : vector<8x128xf32>
    %307 = arith.divf %305, %306 : vector<8x128xf32>
    %308 = vector.extract_strided_slice %295 {offsets = [0, 128], sizes = [8, 128], strides = [1, 1]} : vector<8x384xf32> to vector<8x128xf32>
    %309 = vector.extract_strided_slice %299 {offsets = [0, 128], sizes = [8, 128], strides = [1, 1]} : vector<8x384xf32> to vector<8x128xf32>
    %310 = arith.addf %308, %309 : vector<8x128xf32>
    %311 = arith.negf %310 : vector<8x128xf32>
    %312 = math.exp %311 : vector<8x128xf32>
    %cst_100 = arith.constant 1.000000e+00 : f32
    %313 = vector.broadcast %cst_100 : f32 to vector<8x128xf32>
    %314 = arith.addf %313, %312 : vector<8x128xf32>
    %315 = arith.divf %313, %314 : vector<8x128xf32>
    %316 = vector.extract_strided_slice %295 {offsets = [0, 256], sizes = [8, 128], strides = [1, 1]} : vector<8x384xf32> to vector<8x128xf32>
    %317 = vector.extract_strided_slice %299 {offsets = [0, 256], sizes = [8, 128], strides = [1, 1]} : vector<8x384xf32> to vector<8x128xf32>
    %318 = arith.mulf %307, %317 : vector<8x128xf32>
    %319 = arith.addf %316, %318 : vector<8x128xf32>
    %320 = math.tanh %319 : vector<8x128xf32>
    %cst_101 = arith.constant 1.000000e+00 : f32
    %321 = vector.broadcast %cst_101 : f32 to vector<8x128xf32>
    %322 = arith.subf %321, %315 : vector<8x128xf32>
    %323 = arith.mulf %322, %320 : vector<8x128xf32>
    %324 = arith.mulf %315, %243 : vector<8x128xf32>
    %325 = arith.addf %323, %324 : vector<8x128xf32>
    %326 = arith.addi %27, %c3_i32_93 : i32
    %c4_i32_102 = arith.constant 4 : i32
    %327 = arith.cmpi slt, %326, %c4_i32_102 : i32
    %328 = arith.select %327, %325, %243 : vector<8x128xf32>
    %329 = arith.truncf %328 : vector<8x128xf32> to vector<8x128xbf16>
    %330 = arith.index_cast %c3_i32_93 : i32 to index
    %c0_103 = arith.constant 0 : index
    %c0_104 = arith.constant 0 : index
    %331 = vector.load %arg7[%330, %c0_103, %c0_104] : memref<4x8x128xbf16, #tpu.memory_space<vmem>>, vector<1x8x128xbf16>
    %332 = vector.shape_cast %331 : vector<1x8x128xbf16> to vector<8x128xbf16>
    %333 = vector.shape_cast %329 : vector<8x128xbf16> to vector<1x8x128xbf16>
    tpu.vector_store %arg7[%330, %c0_103, %c0_104], %333 {strides = array<i32>} : memref<4x8x128xbf16, #tpu.memory_space<vmem>>, vector<1x8x128xbf16>,
    %334 = arith.index_cast %293 : i32 to index
    %c0_105 = arith.constant 0 : index
    %335 = vector.load %arg11[%334, %c0_105] : memref<32x384xf32, #tpu.memory_space<vmem>>, vector<8x384xf32>
    %336 = arith.truncf %283 : vector<8x128xf32> to vector<8x128xbf16>
    %cst_106 = arith.constant dense<0.000000e+00> : vector<8x384xf32>
    %337 = tpu.matmul %336, %22, %cst_106 {dimension_numbers = #tpu.dot_dimension_numbers<[1], [0], [0], [1], [0, 0, 1, 1], [], []>} : vector<8x128xbf16>, vector<128x384xbf16>, vector<8x384xf32> -> vector<8x384xf32>
    %338 = vector.broadcast %26 : vector<1x384xf32> to vector<8x384xf32>
    %339 = arith.addf %337, %338 : vector<8x384xf32>
    %340 = vector.extract_strided_slice %335 {offsets = [0, 0], sizes = [8, 128], strides = [1, 1]} : vector<8x384xf32> to vector<8x128xf32>
    %341 = vector.extract_strided_slice %339 {offsets = [0, 0], sizes = [8, 128], strides = [1, 1]} : vector<8x384xf32> to vector<8x128xf32>
    %342 = arith.addf %340, %341 : vector<8x128xf32>
    %343 = arith.negf %342 : vector<8x128xf32>
    %344 = math.exp %343 : vector<8x128xf32>
    %cst_107 = arith.constant 1.000000e+00 : f32
    %345 = vector.broadcast %cst_107 : f32 to vector<8x128xf32>
    %346 = arith.addf %345, %344 : vector<8x128xf32>
    %347 = arith.divf %345, %346 : vector<8x128xf32>
    %348 = vector.extract_strided_slice %335 {offsets = [0, 128], sizes = [8, 128], strides = [1, 1]} : vector<8x384xf32> to vector<8x128xf32>
    %349 = vector.extract_strided_slice %339 {offsets = [0, 128], sizes = [8, 128], strides = [1, 1]} : vector<8x384xf32> to vector<8x128xf32>
    %350 = arith.addf %348, %349 : vector<8x128xf32>
    %351 = arith.negf %350 : vector<8x128xf32>
    %352 = math.exp %351 : vector<8x128xf32>
    %cst_108 = arith.constant 1.000000e+00 : f32
    %353 = vector.broadcast %cst_108 : f32 to vector<8x128xf32>
    %354 = arith.addf %353, %352 : vector<8x128xf32>
    %355 = arith.divf %353, %354 : vector<8x128xf32>
    %356 = vector.extract_strided_slice %335 {offsets = [0, 256], sizes = [8, 128], strides = [1, 1]} : vector<8x384xf32> to vector<8x128xf32>
    %357 = vector.extract_strided_slice %339 {offsets = [0, 256], sizes = [8, 128], strides = [1, 1]} : vector<8x384xf32> to vector<8x128xf32>
    %358 = arith.mulf %347, %357 : vector<8x128xf32>
    %359 = arith.addf %356, %358 : vector<8x128xf32>
    %360 = math.tanh %359 : vector<8x128xf32>
    %cst_109 = arith.constant 1.000000e+00 : f32
    %361 = vector.broadcast %cst_109 : f32 to vector<8x128xf32>
    %362 = arith.subf %361, %355 : vector<8x128xf32>
    %363 = arith.mulf %362, %360 : vector<8x128xf32>
    %364 = arith.mulf %355, %283 : vector<8x128xf32>
    %365 = arith.addf %363, %364 : vector<8x128xf32>
    %366 = arith.addi %29, %289 : i32
    %c4_i32_110 = arith.constant 4 : i32
    %367 = arith.cmpi slt, %366, %c4_i32_110 : i32
    %368 = arith.select %367, %365, %283 : vector<8x128xf32>
    %369 = arith.truncf %368 : vector<8x128xf32> to vector<8x128xbf16>
    %370 = arith.index_cast %289 : i32 to index
    %c0_111 = arith.constant 0 : index
    %c0_112 = arith.constant 0 : index
    %371 = vector.load %arg8[%370, %c0_111, %c0_112] : memref<4x8x128xbf16, #tpu.memory_space<vmem>>, vector<1x8x128xbf16>
    %372 = vector.shape_cast %371 : vector<1x8x128xbf16> to vector<8x128xbf16>
    %373 = vector.shape_cast %369 : vector<8x128xbf16> to vector<1x8x128xbf16>
    tpu.vector_store %arg8[%370, %c0_111, %c0_112], %373 {strides = array<i32>} : memref<4x8x128xbf16, #tpu.memory_space<vmem>>, vector<1x8x128xbf16>,
    %c4_i32_113 = arith.constant 4 : i32
    %c0_114 = arith.constant 0 : index
    %c0_115 = arith.constant 0 : index
    %c0_116 = arith.constant 0 : index
    %374 = vector.load %arg9[%c0_114, %c0_115, %c0_116] : memref<2x8x128xf32, #tpu.memory_space<vmem>>, vector<1x8x128xf32>
    %375 = vector.shape_cast %374 : vector<1x8x128xf32> to vector<8x128xf32>
    %376 = vector.shape_cast %328 : vector<8x128xf32> to vector<1x8x128xf32>
    tpu.vector_store %arg9[%c0_114, %c0_115, %c0_116], %376 {strides = array<i32>} : memref<2x8x128xf32, #tpu.memory_space<vmem>>, vector<1x8x128xf32>,
    %c1_117 = arith.constant 1 : index
    %c0_118 = arith.constant 0 : index
    %c0_119 = arith.constant 0 : index
    %377 = vector.load %arg9[%c1_117, %c0_118, %c0_119] : memref<2x8x128xf32, #tpu.memory_space<vmem>>, vector<1x8x128xf32>
    %378 = vector.shape_cast %377 : vector<1x8x128xf32> to vector<8x128xf32>
    %379 = vector.shape_cast %368 : vector<8x128xf32> to vector<1x8x128xf32>
    tpu.vector_store %arg9[%c1_117, %c0_118, %c0_119], %379 {strides = array<i32>} : memref<2x8x128xf32, #tpu.memory_space<vmem>>, vector<1x8x128xf32>,
    return
  }
  func.func @transform_0(%arg0: i32) -> (i32, i32, i32) {
    %c0_i32 = arith.constant 0 : i32
    %c0_i32_0 = arith.constant 0 : i32
    %c0_i32_1 = arith.constant 0 : i32
    return %arg0, %c0_i32, %c0_i32_0 : i32, i32, i32
  }
  func.func @transform_1(%arg0: i32) -> (i32, i32, i32) {
    %c0_i32 = arith.constant 0 : i32
    %0 = arith.subi %c0_i32, %arg0 : i32
    %c0_i32_0 = arith.constant 0 : i32
    %c0_i32_1 = arith.constant 0 : i32
    %c0_i32_2 = arith.constant 0 : i32
    return %0, %c0_i32_0, %c0_i32_1 : i32, i32, i32
  }
  func.func @transform_2(%arg0: i32) -> (i32, i32) {
    %c0_i32 = arith.constant 0 : i32
    %c0_i32_0 = arith.constant 0 : i32
    %c0_i32_1 = arith.constant 0 : i32
    return %c0_i32, %c0_i32_0 : i32, i32
  }
  func.func @transform_3(%arg0: i32) -> (i32, i32) {
    %c0_i32 = arith.constant 0 : i32
    %c0_i32_0 = arith.constant 0 : i32
    %c0_i32_1 = arith.constant 0 : i32
    return %c0_i32, %c0_i32_0 : i32, i32
  }
  func.func @transform_4(%arg0: i32) -> (i32, i32, i32) {
    %c0_i32 = arith.constant 0 : i32
    %c0_i32_0 = arith.constant 0 : i32
    %c0_i32_1 = arith.constant 0 : i32
    %c0_i32_2 = arith.constant 0 : i32
    return %c0_i32, %c0_i32_0, %c0_i32_1 : i32, i32, i32
  }
  func.func @transform_5(%arg0: i32) -> (i32, i32, i32) {
    %c0_i32 = arith.constant 0 : i32
    %c0_i32_0 = arith.constant 0 : i32
    %c0_i32_1 = arith.constant 0 : i32
    %c0_i32_2 = arith.constant 0 : i32
    return %c0_i32, %c0_i32_0, %c0_i32_1 : i32, i32, i32
  }
  func.func @transform_6(%arg0: i32) -> (i32, i32, i32) {
    %c0_i32 = arith.constant 0 : i32
    %c0_i32_0 = arith.constant 0 : i32
    %c0_i32_1 = arith.constant 0 : i32
    return %arg0, %c0_i32, %c0_i32_0 : i32, i32, i32
  }
  func.func @transform_7(%arg0: i32) -> (i32, i32, i32) {
    %c0_i32 = arith.constant 0 : i32
    %0 = arith.subi %c0_i32, %arg0 : i32
    %c0_i32_0 = arith.constant 0 : i32
    %c0_i32_1 = arith.constant 0 : i32
    %c0_i32_2 = arith.constant 0 : i32
    return %0, %c0_i32_0, %c0_i32_1 : i32, i32, i32
  }
}

module attributes {stable_mosaic.version = 11 : i64} {
  func.func @gru_layer_kernel(%arg0: i32, %arg1: memref<4x8x128xbf16, #tpu.memory_space<vmem>>, %arg2: memref<4x8x128xbf16, #tpu.memory_space<vmem>>, %arg3: memref<4x8x128xbf16, #tpu.memory_space<vmem>>, %arg4: memref<4x8x128xbf16, #tpu.memory_space<vmem>>, %arg5: memref<256x768xbf16, #tpu.memory_space<vmem>>, %arg6: memref<1x768xf32, #tpu.memory_space<vmem>>, %arg7: memref<2x128x384xbf16, #tpu.memory_space<vmem>>, %arg8: memref<2x1x384xf32, #tpu.memory_space<vmem>>, %arg9: memref<4x8x128xbf16, #tpu.memory_space<vmem>>, %arg10: memref<4x8x128xbf16, #tpu.memory_space<vmem>>, %arg11: memref<2x8x128xf32, #tpu.memory_space<vmem>>, %arg12: memref<32x384xf32, #tpu.memory_space<vmem>>, %arg13: memref<32x384xf32, #tpu.memory_space<vmem>>) attributes {dimension_semantics = [#tpu.dimension_semantics<arbitrary>], iteration_bounds = array<i64: 1>, scalar_prefetch = 0 : i64, scratch_operands = 3 : i64, tpu.core_type = #tpu.core_type<tc>, window_params = [{transform_indices = @transform_0, window_bounds = array<i64: 4, 8, 128>}, {transform_indices = @transform_1, window_bounds = array<i64: 4, 8, 128>}, {transform_indices = @transform_2, window_bounds = array<i64: 4, 8, 128>}, {transform_indices = @transform_3, window_bounds = array<i64: 4, 8, 128>}, {pipeline_mode = #tpu.pipeline_mode<synchronous>, transform_indices = @transform_4, window_bounds = array<i64: 256, 768>}, {pipeline_mode = #tpu.pipeline_mode<synchronous>, transform_indices = @transform_5, window_bounds = array<i64: 1, 768>}, {pipeline_mode = #tpu.pipeline_mode<synchronous>, transform_indices = @transform_6, window_bounds = array<i64: 2, 128, 384>}, {pipeline_mode = #tpu.pipeline_mode<synchronous>, transform_indices = @transform_7, window_bounds = array<i64: 2, 1, 384>}, {transform_indices = @transform_8, window_bounds = array<i64: 4, 8, 128>}, {transform_indices = @transform_9, window_bounds = array<i64: 4, 8, 128>}]} {
    %c0_i32 = arith.constant 0 : i32
    %0 = arith.cmpi eq, %arg0, %c0_i32 : i32
    %1 = arith.extui %0 : i1 to i32
    %c0_i32_0 = arith.constant 0 : i32
    %2 = arith.cmpi ne, %1, %c0_i32_0 : i32
    scf.if %2 {
      %cst_131 = arith.constant 0.000000e+00 : f32
      %390 = vector.broadcast %cst_131 : f32 to vector<2x8x128xf32>
      %c0_132 = arith.constant 0 : index
      %c0_133 = arith.constant 0 : index
      %c0_134 = arith.constant 0 : index
      %391 = vector.load %arg11[%c0_132, %c0_133, %c0_134] : memref<2x8x128xf32, #tpu.memory_space<vmem>>, vector<2x8x128xf32>
      tpu.vector_store %arg11[%c0_132, %c0_133, %c0_134], %390 {strides = array<i32>} : memref<2x8x128xf32, #tpu.memory_space<vmem>>, vector<2x8x128xf32>,
    } else {
    }
    %c0 = arith.constant 0 : index
    %c0_1 = arith.constant 0 : index
    %c0_2 = arith.constant 0 : index
    %3 = vector.load %arg1[%c0, %c0_1, %c0_2] : memref<4x8x128xbf16, #tpu.memory_space<vmem>>, vector<4x8x128xbf16>
    %4 = vector.shape_cast %3 : vector<4x8x128xbf16> to vector<32x128xbf16>
    %c0_3 = arith.constant 0 : index
    %c0_4 = arith.constant 0 : index
    %c0_5 = arith.constant 0 : index
    %5 = vector.load %arg3[%c0_3, %c0_4, %c0_5] : memref<4x8x128xbf16, #tpu.memory_space<vmem>>, vector<4x8x128xbf16>
    %6 = vector.shape_cast %5 : vector<4x8x128xbf16> to vector<32x128xbf16>
    %c0_6 = arith.constant 0 : index
    %c0_7 = arith.constant 0 : index
    %7 = vector.load %arg5[%c0_6, %c0_7] : memref<256x768xbf16, #tpu.memory_space<vmem>>, vector<128x384xbf16>
    %cst = arith.constant dense<0.000000e+00> : vector<32x384xf32>
    %8 = tpu.matmul %4, %7, %cst {dimension_numbers = #tpu.dot_dimension_numbers<[1], [0], [0], [1], [0, 0, 1, 1], [], []>} : vector<32x128xbf16>, vector<128x384xbf16>, vector<32x384xf32> -> vector<32x384xf32>
    %c0_8 = arith.constant 0 : index
    %c384 = arith.constant 384 : index
    %9 = vector.load %arg5[%c0_8, %c384] : memref<256x768xbf16, #tpu.memory_space<vmem>>, vector<128x384xbf16>
    %cst_9 = arith.constant dense<0.000000e+00> : vector<32x384xf32>
    %10 = tpu.matmul %6, %9, %cst_9 {dimension_numbers = #tpu.dot_dimension_numbers<[1], [0], [0], [1], [0, 0, 1, 1], [], []>} : vector<32x128xbf16>, vector<128x384xbf16>, vector<32x384xf32> -> vector<32x384xf32>
    %c0_10 = arith.constant 0 : index
    %c0_11 = arith.constant 0 : index
    %c0_12 = arith.constant 0 : index
    %11 = vector.load %arg2[%c0_10, %c0_11, %c0_12] : memref<4x8x128xbf16, #tpu.memory_space<vmem>>, vector<4x8x128xbf16>
    %12 = vector.shape_cast %11 : vector<4x8x128xbf16> to vector<32x128xbf16>
    %c0_13 = arith.constant 0 : index
    %c0_14 = arith.constant 0 : index
    %c0_15 = arith.constant 0 : index
    %13 = vector.load %arg4[%c0_13, %c0_14, %c0_15] : memref<4x8x128xbf16, #tpu.memory_space<vmem>>, vector<4x8x128xbf16>
    %14 = vector.shape_cast %13 : vector<4x8x128xbf16> to vector<32x128xbf16>
    %c128 = arith.constant 128 : index
    %c0_16 = arith.constant 0 : index
    %15 = vector.load %arg5[%c128, %c0_16] : memref<256x768xbf16, #tpu.memory_space<vmem>>, vector<128x384xbf16>
    %cst_17 = arith.constant dense<0.000000e+00> : vector<32x384xf32>
    %16 = tpu.matmul %12, %15, %cst_17 {dimension_numbers = #tpu.dot_dimension_numbers<[1], [0], [0], [1], [0, 0, 1, 1], [], []>} : vector<32x128xbf16>, vector<128x384xbf16>, vector<32x384xf32> -> vector<32x384xf32>
    %c128_18 = arith.constant 128 : index
    %c384_19 = arith.constant 384 : index
    %17 = vector.load %arg5[%c128_18, %c384_19] : memref<256x768xbf16, #tpu.memory_space<vmem>>, vector<128x384xbf16>
    %cst_20 = arith.constant dense<0.000000e+00> : vector<32x384xf32>
    %18 = tpu.matmul %14, %17, %cst_20 {dimension_numbers = #tpu.dot_dimension_numbers<[1], [0], [0], [1], [0, 0, 1, 1], [], []>} : vector<32x128xbf16>, vector<128x384xbf16>, vector<32x384xf32> -> vector<32x384xf32>
    %19 = arith.addf %8, %16 : vector<32x384xf32>
    %20 = arith.addf %10, %18 : vector<32x384xf32>
    %c0_21 = arith.constant 0 : index
    %c0_22 = arith.constant 0 : index
    %21 = vector.load %arg6[%c0_21, %c0_22] : memref<1x768xf32, #tpu.memory_space<vmem>>, vector<1x384xf32>
    %22 = vector.broadcast %21 : vector<1x384xf32> to vector<32x384xf32>
    %23 = arith.addf %19, %22 : vector<32x384xf32>
    %c0_23 = arith.constant 0 : index
    %c0_24 = arith.constant 0 : index
    %24 = vector.load %arg12[%c0_23, %c0_24] : memref<32x384xf32, #tpu.memory_space<vmem>>, vector<32x384xf32>
    tpu.vector_store %arg12[%c0_23, %c0_24], %23 {strides = array<i32>} : memref<32x384xf32, #tpu.memory_space<vmem>>, vector<32x384xf32>,
    %c0_25 = arith.constant 0 : index
    %c384_26 = arith.constant 384 : index
    %25 = vector.load %arg6[%c0_25, %c384_26] : memref<1x768xf32, #tpu.memory_space<vmem>>, vector<1x384xf32>
    %26 = vector.broadcast %25 : vector<1x384xf32> to vector<32x384xf32>
    %27 = arith.addf %20, %26 : vector<32x384xf32>
    %c0_27 = arith.constant 0 : index
    %c0_28 = arith.constant 0 : index
    %28 = vector.load %arg13[%c0_27, %c0_28] : memref<32x384xf32, #tpu.memory_space<vmem>>, vector<32x384xf32>
    tpu.vector_store %arg13[%c0_27, %c0_28], %27 {strides = array<i32>} : memref<32x384xf32, #tpu.memory_space<vmem>>, vector<32x384xf32>,
    %c0_29 = arith.constant 0 : index
    %c0_30 = arith.constant 0 : index
    %c0_31 = arith.constant 0 : index
    %29 = vector.load %arg7[%c0_29, %c0_30, %c0_31] : memref<2x128x384xbf16, #tpu.memory_space<vmem>>, vector<1x128x384xbf16>
    %30 = vector.shape_cast %29 : vector<1x128x384xbf16> to vector<128x384xbf16>
    %c1 = arith.constant 1 : index
    %c0_32 = arith.constant 0 : index
    %c0_33 = arith.constant 0 : index
    %31 = vector.load %arg7[%c1, %c0_32, %c0_33] : memref<2x128x384xbf16, #tpu.memory_space<vmem>>, vector<1x128x384xbf16>
    %32 = vector.shape_cast %31 : vector<1x128x384xbf16> to vector<128x384xbf16>
    %c0_34 = arith.constant 0 : index
    %c0_35 = arith.constant 0 : index
    %c0_36 = arith.constant 0 : index
    %33 = vector.load %arg8[%c0_34, %c0_35, %c0_36] : memref<2x1x384xf32, #tpu.memory_space<vmem>>, vector<1x1x384xf32>
    %34 = vector.shape_cast %33 : vector<1x1x384xf32> to vector<1x384xf32>
    %c1_37 = arith.constant 1 : index
    %c0_38 = arith.constant 0 : index
    %c0_39 = arith.constant 0 : index
    %35 = vector.load %arg8[%c1_37, %c0_38, %c0_39] : memref<2x1x384xf32, #tpu.memory_space<vmem>>, vector<1x1x384xf32>
    %36 = vector.shape_cast %35 : vector<1x1x384xf32> to vector<1x384xf32>
    %c4_i32 = arith.constant 4 : i32
    %37 = arith.muli %arg0, %c4_i32 : i32
    %c0_i32_40 = arith.constant 0 : i32
    %38 = arith.subi %c0_i32_40, %arg0 : i32
    %c4_i32_41 = arith.constant 4 : i32
    %39 = arith.muli %38, %c4_i32_41 : i32
    %c0_42 = arith.constant 0 : index
    %c0_43 = arith.constant 0 : index
    %c0_44 = arith.constant 0 : index
    %40 = vector.load %arg11[%c0_42, %c0_43, %c0_44] : memref<2x8x128xf32, #tpu.memory_space<vmem>>, vector<1x8x128xf32>
    %41 = vector.shape_cast %40 : vector<1x8x128xf32> to vector<8x128xf32>
    %c1_45 = arith.constant 1 : index
    %c0_46 = arith.constant 0 : index
    %c0_47 = arith.constant 0 : index
    %42 = vector.load %arg11[%c1_45, %c0_46, %c0_47] : memref<2x8x128xf32, #tpu.memory_space<vmem>>, vector<1x8x128xf32>
    %43 = vector.shape_cast %42 : vector<1x8x128xf32> to vector<8x128xf32>
    %c0_i32_48 = arith.constant 0 : i32
    %c3_i32 = arith.constant 3 : i32
    %44 = arith.subi %c3_i32, %c0_i32_48 : i32
    %c8_i32 = arith.constant 8 : i32
    %45 = arith.muli %c0_i32_48, %c8_i32 : i32
    %46 = tpu.assume_multiple %45, 8 : i32
    %c8_i32_49 = arith.constant 8 : i32
    %47 = arith.muli %44, %c8_i32_49 : i32
    %48 = tpu.assume_multiple %47, 8 : i32
    %49 = arith.index_cast %46 : i32 to index
    %c0_50 = arith.constant 0 : index
    %50 = vector.load %arg12[%49, %c0_50] : memref<32x384xf32, #tpu.memory_space<vmem>>, vector<8x384xf32>
    %51 = arith.truncf %41 : vector<8x128xf32> to vector<8x128xbf16>
    %cst_51 = arith.constant dense<0.000000e+00> : vector<8x384xf32>
    %52 = tpu.matmul %51, %30, %cst_51 {dimension_numbers = #tpu.dot_dimension_numbers<[1], [0], [0], [1], [0, 0, 1, 1], [], []>} : vector<8x128xbf16>, vector<128x384xbf16>, vector<8x384xf32> -> vector<8x384xf32>
    %53 = vector.broadcast %34 : vector<1x384xf32> to vector<8x384xf32>
    %54 = arith.addf %52, %53 : vector<8x384xf32>
    %55 = vector.extract_strided_slice %50 {offsets = [0, 0], sizes = [8, 128], strides = [1, 1]} : vector<8x384xf32> to vector<8x128xf32>
    %56 = vector.extract_strided_slice %54 {offsets = [0, 0], sizes = [8, 128], strides = [1, 1]} : vector<8x384xf32> to vector<8x128xf32>
    %57 = arith.addf %55, %56 : vector<8x128xf32>
    %58 = arith.negf %57 : vector<8x128xf32>
    %59 = math.exp %58 : vector<8x128xf32>
    %cst_52 = arith.constant 1.000000e+00 : f32
    %60 = vector.broadcast %cst_52 : f32 to vector<8x128xf32>
    %61 = arith.addf %60, %59 : vector<8x128xf32>
    %62 = arith.divf %60, %61 : vector<8x128xf32>
    %63 = vector.extract_strided_slice %50 {offsets = [0, 128], sizes = [8, 128], strides = [1, 1]} : vector<8x384xf32> to vector<8x128xf32>
    %64 = vector.extract_strided_slice %54 {offsets = [0, 128], sizes = [8, 128], strides = [1, 1]} : vector<8x384xf32> to vector<8x128xf32>
    %65 = arith.addf %63, %64 : vector<8x128xf32>
    %66 = arith.negf %65 : vector<8x128xf32>
    %67 = math.exp %66 : vector<8x128xf32>
    %cst_53 = arith.constant 1.000000e+00 : f32
    %68 = vector.broadcast %cst_53 : f32 to vector<8x128xf32>
    %69 = arith.addf %68, %67 : vector<8x128xf32>
    %70 = arith.divf %68, %69 : vector<8x128xf32>
    %71 = vector.extract_strided_slice %50 {offsets = [0, 256], sizes = [8, 128], strides = [1, 1]} : vector<8x384xf32> to vector<8x128xf32>
    %72 = vector.extract_strided_slice %54 {offsets = [0, 256], sizes = [8, 128], strides = [1, 1]} : vector<8x384xf32> to vector<8x128xf32>
    %73 = arith.mulf %62, %72 : vector<8x128xf32>
    %74 = arith.addf %71, %73 : vector<8x128xf32>
    %75 = math.tanh %74 : vector<8x128xf32>
    %cst_54 = arith.constant 1.000000e+00 : f32
    %76 = vector.broadcast %cst_54 : f32 to vector<8x128xf32>
    %77 = arith.subf %76, %70 : vector<8x128xf32>
    %78 = arith.mulf %77, %75 : vector<8x128xf32>
    %79 = arith.mulf %70, %41 : vector<8x128xf32>
    %80 = arith.addf %78, %79 : vector<8x128xf32>
    %81 = arith.addi %37, %c0_i32_48 : i32
    %c4_i32_55 = arith.constant 4 : i32
    %82 = arith.cmpi slt, %81, %c4_i32_55 : i32
    %83 = arith.select %82, %80, %41 : vector<8x128xf32>
    %84 = arith.truncf %83 : vector<8x128xf32> to vector<8x128xbf16>
    %85 = arith.index_cast %c0_i32_48 : i32 to index
    %c0_56 = arith.constant 0 : index
    %c0_57 = arith.constant 0 : index
    %86 = vector.load %arg9[%85, %c0_56, %c0_57] : memref<4x8x128xbf16, #tpu.memory_space<vmem>>, vector<1x8x128xbf16>
    %87 = vector.shape_cast %86 : vector<1x8x128xbf16> to vector<8x128xbf16>
    %88 = vector.shape_cast %84 : vector<8x128xbf16> to vector<1x8x128xbf16>
    tpu.vector_store %arg9[%85, %c0_56, %c0_57], %88 {strides = array<i32>} : memref<4x8x128xbf16, #tpu.memory_space<vmem>>, vector<1x8x128xbf16>,
    %89 = arith.index_cast %48 : i32 to index
    %c0_58 = arith.constant 0 : index
    %90 = vector.load %arg13[%89, %c0_58] : memref<32x384xf32, #tpu.memory_space<vmem>>, vector<8x384xf32>
    %91 = arith.truncf %43 : vector<8x128xf32> to vector<8x128xbf16>
    %cst_59 = arith.constant dense<0.000000e+00> : vector<8x384xf32>
    %92 = tpu.matmul %91, %32, %cst_59 {dimension_numbers = #tpu.dot_dimension_numbers<[1], [0], [0], [1], [0, 0, 1, 1], [], []>} : vector<8x128xbf16>, vector<128x384xbf16>, vector<8x384xf32> -> vector<8x384xf32>
    %93 = vector.broadcast %36 : vector<1x384xf32> to vector<8x384xf32>
    %94 = arith.addf %92, %93 : vector<8x384xf32>
    %95 = vector.extract_strided_slice %90 {offsets = [0, 0], sizes = [8, 128], strides = [1, 1]} : vector<8x384xf32> to vector<8x128xf32>
    %96 = vector.extract_strided_slice %94 {offsets = [0, 0], sizes = [8, 128], strides = [1, 1]} : vector<8x384xf32> to vector<8x128xf32>
    %97 = arith.addf %95, %96 : vector<8x128xf32>
    %98 = arith.negf %97 : vector<8x128xf32>
    %99 = math.exp %98 : vector<8x128xf32>
    %cst_60 = arith.constant 1.000000e+00 : f32
    %100 = vector.broadcast %cst_60 : f32 to vector<8x128xf32>
    %101 = arith.addf %100, %99 : vector<8x128xf32>
    %102 = arith.divf %100, %101 : vector<8x128xf32>
    %103 = vector.extract_strided_slice %90 {offsets = [0, 128], sizes = [8, 128], strides = [1, 1]} : vector<8x384xf32> to vector<8x128xf32>
    %104 = vector.extract_strided_slice %94 {offsets = [0, 128], sizes = [8, 128], strides = [1, 1]} : vector<8x384xf32> to vector<8x128xf32>
    %105 = arith.addf %103, %104 : vector<8x128xf32>
    %106 = arith.negf %105 : vector<8x128xf32>
    %107 = math.exp %106 : vector<8x128xf32>
    %cst_61 = arith.constant 1.000000e+00 : f32
    %108 = vector.broadcast %cst_61 : f32 to vector<8x128xf32>
    %109 = arith.addf %108, %107 : vector<8x128xf32>
    %110 = arith.divf %108, %109 : vector<8x128xf32>
    %111 = vector.extract_strided_slice %90 {offsets = [0, 256], sizes = [8, 128], strides = [1, 1]} : vector<8x384xf32> to vector<8x128xf32>
    %112 = vector.extract_strided_slice %94 {offsets = [0, 256], sizes = [8, 128], strides = [1, 1]} : vector<8x384xf32> to vector<8x128xf32>
    %113 = arith.mulf %102, %112 : vector<8x128xf32>
    %114 = arith.addf %111, %113 : vector<8x128xf32>
    %115 = math.tanh %114 : vector<8x128xf32>
    %cst_62 = arith.constant 1.000000e+00 : f32
    %116 = vector.broadcast %cst_62 : f32 to vector<8x128xf32>
    %117 = arith.subf %116, %110 : vector<8x128xf32>
    %118 = arith.mulf %117, %115 : vector<8x128xf32>
    %119 = arith.mulf %110, %43 : vector<8x128xf32>
    %120 = arith.addf %118, %119 : vector<8x128xf32>
    %121 = arith.addi %39, %44 : i32
    %c4_i32_63 = arith.constant 4 : i32
    %122 = arith.cmpi slt, %121, %c4_i32_63 : i32
    %123 = arith.select %122, %120, %43 : vector<8x128xf32>
    %124 = arith.truncf %123 : vector<8x128xf32> to vector<8x128xbf16>
    %125 = arith.index_cast %44 : i32 to index
    %c0_64 = arith.constant 0 : index
    %c0_65 = arith.constant 0 : index
    %126 = vector.load %arg10[%125, %c0_64, %c0_65] : memref<4x8x128xbf16, #tpu.memory_space<vmem>>, vector<1x8x128xbf16>
    %127 = vector.shape_cast %126 : vector<1x8x128xbf16> to vector<8x128xbf16>
    %128 = vector.shape_cast %124 : vector<8x128xbf16> to vector<1x8x128xbf16>
    tpu.vector_store %arg10[%125, %c0_64, %c0_65], %128 {strides = array<i32>} : memref<4x8x128xbf16, #tpu.memory_space<vmem>>, vector<1x8x128xbf16>,
    %c1_i32 = arith.constant 1 : i32
    %c3_i32_66 = arith.constant 3 : i32
    %129 = arith.subi %c3_i32_66, %c1_i32 : i32
    %c8_i32_67 = arith.constant 8 : i32
    %130 = arith.muli %c1_i32, %c8_i32_67 : i32
    %131 = tpu.assume_multiple %130, 8 : i32
    %c8_i32_68 = arith.constant 8 : i32
    %132 = arith.muli %129, %c8_i32_68 : i32
    %133 = tpu.assume_multiple %132, 8 : i32
    %134 = arith.index_cast %131 : i32 to index
    %c0_69 = arith.constant 0 : index
    %135 = vector.load %arg12[%134, %c0_69] : memref<32x384xf32, #tpu.memory_space<vmem>>, vector<8x384xf32>
    %136 = arith.truncf %83 : vector<8x128xf32> to vector<8x128xbf16>
    %cst_70 = arith.constant dense<0.000000e+00> : vector<8x384xf32>
    %137 = tpu.matmul %136, %30, %cst_70 {dimension_numbers = #tpu.dot_dimension_numbers<[1], [0], [0], [1], [0, 0, 1, 1], [], []>} : vector<8x128xbf16>, vector<128x384xbf16>, vector<8x384xf32> -> vector<8x384xf32>
    %138 = vector.broadcast %34 : vector<1x384xf32> to vector<8x384xf32>
    %139 = arith.addf %137, %138 : vector<8x384xf32>
    %140 = vector.extract_strided_slice %135 {offsets = [0, 0], sizes = [8, 128], strides = [1, 1]} : vector<8x384xf32> to vector<8x128xf32>
    %141 = vector.extract_strided_slice %139 {offsets = [0, 0], sizes = [8, 128], strides = [1, 1]} : vector<8x384xf32> to vector<8x128xf32>
    %142 = arith.addf %140, %141 : vector<8x128xf32>
    %143 = arith.negf %142 : vector<8x128xf32>
    %144 = math.exp %143 : vector<8x128xf32>
    %cst_71 = arith.constant 1.000000e+00 : f32
    %145 = vector.broadcast %cst_71 : f32 to vector<8x128xf32>
    %146 = arith.addf %145, %144 : vector<8x128xf32>
    %147 = arith.divf %145, %146 : vector<8x128xf32>
    %148 = vector.extract_strided_slice %135 {offsets = [0, 128], sizes = [8, 128], strides = [1, 1]} : vector<8x384xf32> to vector<8x128xf32>
    %149 = vector.extract_strided_slice %139 {offsets = [0, 128], sizes = [8, 128], strides = [1, 1]} : vector<8x384xf32> to vector<8x128xf32>
    %150 = arith.addf %148, %149 : vector<8x128xf32>
    %151 = arith.negf %150 : vector<8x128xf32>
    %152 = math.exp %151 : vector<8x128xf32>
    %cst_72 = arith.constant 1.000000e+00 : f32
    %153 = vector.broadcast %cst_72 : f32 to vector<8x128xf32>
    %154 = arith.addf %153, %152 : vector<8x128xf32>
    %155 = arith.divf %153, %154 : vector<8x128xf32>
    %156 = vector.extract_strided_slice %135 {offsets = [0, 256], sizes = [8, 128], strides = [1, 1]} : vector<8x384xf32> to vector<8x128xf32>
    %157 = vector.extract_strided_slice %139 {offsets = [0, 256], sizes = [8, 128], strides = [1, 1]} : vector<8x384xf32> to vector<8x128xf32>
    %158 = arith.mulf %147, %157 : vector<8x128xf32>
    %159 = arith.addf %156, %158 : vector<8x128xf32>
    %160 = math.tanh %159 : vector<8x128xf32>
    %cst_73 = arith.constant 1.000000e+00 : f32
    %161 = vector.broadcast %cst_73 : f32 to vector<8x128xf32>
    %162 = arith.subf %161, %155 : vector<8x128xf32>
    %163 = arith.mulf %162, %160 : vector<8x128xf32>
    %164 = arith.mulf %155, %83 : vector<8x128xf32>
    %165 = arith.addf %163, %164 : vector<8x128xf32>
    %166 = arith.addi %37, %c1_i32 : i32
    %c4_i32_74 = arith.constant 4 : i32
    %167 = arith.cmpi slt, %166, %c4_i32_74 : i32
    %168 = arith.select %167, %165, %83 : vector<8x128xf32>
    %169 = arith.truncf %168 : vector<8x128xf32> to vector<8x128xbf16>
    %170 = arith.index_cast %c1_i32 : i32 to index
    %c0_75 = arith.constant 0 : index
    %c0_76 = arith.constant 0 : index
    %171 = vector.load %arg9[%170, %c0_75, %c0_76] : memref<4x8x128xbf16, #tpu.memory_space<vmem>>, vector<1x8x128xbf16>
    %172 = vector.shape_cast %171 : vector<1x8x128xbf16> to vector<8x128xbf16>
    %173 = vector.shape_cast %169 : vector<8x128xbf16> to vector<1x8x128xbf16>
    tpu.vector_store %arg9[%170, %c0_75, %c0_76], %173 {strides = array<i32>} : memref<4x8x128xbf16, #tpu.memory_space<vmem>>, vector<1x8x128xbf16>,
    %174 = arith.index_cast %133 : i32 to index
    %c0_77 = arith.constant 0 : index
    %175 = vector.load %arg13[%174, %c0_77] : memref<32x384xf32, #tpu.memory_space<vmem>>, vector<8x384xf32>
    %176 = arith.truncf %123 : vector<8x128xf32> to vector<8x128xbf16>
    %cst_78 = arith.constant dense<0.000000e+00> : vector<8x384xf32>
    %177 = tpu.matmul %176, %32, %cst_78 {dimension_numbers = #tpu.dot_dimension_numbers<[1], [0], [0], [1], [0, 0, 1, 1], [], []>} : vector<8x128xbf16>, vector<128x384xbf16>, vector<8x384xf32> -> vector<8x384xf32>
    %178 = vector.broadcast %36 : vector<1x384xf32> to vector<8x384xf32>
    %179 = arith.addf %177, %178 : vector<8x384xf32>
    %180 = vector.extract_strided_slice %175 {offsets = [0, 0], sizes = [8, 128], strides = [1, 1]} : vector<8x384xf32> to vector<8x128xf32>
    %181 = vector.extract_strided_slice %179 {offsets = [0, 0], sizes = [8, 128], strides = [1, 1]} : vector<8x384xf32> to vector<8x128xf32>
    %182 = arith.addf %180, %181 : vector<8x128xf32>
    %183 = arith.negf %182 : vector<8x128xf32>
    %184 = math.exp %183 : vector<8x128xf32>
    %cst_79 = arith.constant 1.000000e+00 : f32
    %185 = vector.broadcast %cst_79 : f32 to vector<8x128xf32>
    %186 = arith.addf %185, %184 : vector<8x128xf32>
    %187 = arith.divf %185, %186 : vector<8x128xf32>
    %188 = vector.extract_strided_slice %175 {offsets = [0, 128], sizes = [8, 128], strides = [1, 1]} : vector<8x384xf32> to vector<8x128xf32>
    %189 = vector.extract_strided_slice %179 {offsets = [0, 128], sizes = [8, 128], strides = [1, 1]} : vector<8x384xf32> to vector<8x128xf32>
    %190 = arith.addf %188, %189 : vector<8x128xf32>
    %191 = arith.negf %190 : vector<8x128xf32>
    %192 = math.exp %191 : vector<8x128xf32>
    %cst_80 = arith.constant 1.000000e+00 : f32
    %193 = vector.broadcast %cst_80 : f32 to vector<8x128xf32>
    %194 = arith.addf %193, %192 : vector<8x128xf32>
    %195 = arith.divf %193, %194 : vector<8x128xf32>
    %196 = vector.extract_strided_slice %175 {offsets = [0, 256], sizes = [8, 128], strides = [1, 1]} : vector<8x384xf32> to vector<8x128xf32>
    %197 = vector.extract_strided_slice %179 {offsets = [0, 256], sizes = [8, 128], strides = [1, 1]} : vector<8x384xf32> to vector<8x128xf32>
    %198 = arith.mulf %187, %197 : vector<8x128xf32>
    %199 = arith.addf %196, %198 : vector<8x128xf32>
    %200 = math.tanh %199 : vector<8x128xf32>
    %cst_81 = arith.constant 1.000000e+00 : f32
    %201 = vector.broadcast %cst_81 : f32 to vector<8x128xf32>
    %202 = arith.subf %201, %195 : vector<8x128xf32>
    %203 = arith.mulf %202, %200 : vector<8x128xf32>
    %204 = arith.mulf %195, %123 : vector<8x128xf32>
    %205 = arith.addf %203, %204 : vector<8x128xf32>
    %206 = arith.addi %39, %129 : i32
    %c4_i32_82 = arith.constant 4 : i32
    %207 = arith.cmpi slt, %206, %c4_i32_82 : i32
    %208 = arith.select %207, %205, %123 : vector<8x128xf32>
    %209 = arith.truncf %208 : vector<8x128xf32> to vector<8x128xbf16>
    %210 = arith.index_cast %129 : i32 to index
    %c0_83 = arith.constant 0 : index
    %c0_84 = arith.constant 0 : index
    %211 = vector.load %arg10[%210, %c0_83, %c0_84] : memref<4x8x128xbf16, #tpu.memory_space<vmem>>, vector<1x8x128xbf16>
    %212 = vector.shape_cast %211 : vector<1x8x128xbf16> to vector<8x128xbf16>
    %213 = vector.shape_cast %209 : vector<8x128xbf16> to vector<1x8x128xbf16>
    tpu.vector_store %arg10[%210, %c0_83, %c0_84], %213 {strides = array<i32>} : memref<4x8x128xbf16, #tpu.memory_space<vmem>>, vector<1x8x128xbf16>,
    %c2_i32 = arith.constant 2 : i32
    %c3_i32_85 = arith.constant 3 : i32
    %214 = arith.subi %c3_i32_85, %c2_i32 : i32
    %c8_i32_86 = arith.constant 8 : i32
    %215 = arith.muli %c2_i32, %c8_i32_86 : i32
    %216 = tpu.assume_multiple %215, 8 : i32
    %c8_i32_87 = arith.constant 8 : i32
    %217 = arith.muli %214, %c8_i32_87 : i32
    %218 = tpu.assume_multiple %217, 8 : i32
    %219 = arith.index_cast %216 : i32 to index
    %c0_88 = arith.constant 0 : index
    %220 = vector.load %arg12[%219, %c0_88] : memref<32x384xf32, #tpu.memory_space<vmem>>, vector<8x384xf32>
    %221 = arith.truncf %168 : vector<8x128xf32> to vector<8x128xbf16>
    %cst_89 = arith.constant dense<0.000000e+00> : vector<8x384xf32>
    %222 = tpu.matmul %221, %30, %cst_89 {dimension_numbers = #tpu.dot_dimension_numbers<[1], [0], [0], [1], [0, 0, 1, 1], [], []>} : vector<8x128xbf16>, vector<128x384xbf16>, vector<8x384xf32> -> vector<8x384xf32>
    %223 = vector.broadcast %34 : vector<1x384xf32> to vector<8x384xf32>
    %224 = arith.addf %222, %223 : vector<8x384xf32>
    %225 = vector.extract_strided_slice %220 {offsets = [0, 0], sizes = [8, 128], strides = [1, 1]} : vector<8x384xf32> to vector<8x128xf32>
    %226 = vector.extract_strided_slice %224 {offsets = [0, 0], sizes = [8, 128], strides = [1, 1]} : vector<8x384xf32> to vector<8x128xf32>
    %227 = arith.addf %225, %226 : vector<8x128xf32>
    %228 = arith.negf %227 : vector<8x128xf32>
    %229 = math.exp %228 : vector<8x128xf32>
    %cst_90 = arith.constant 1.000000e+00 : f32
    %230 = vector.broadcast %cst_90 : f32 to vector<8x128xf32>
    %231 = arith.addf %230, %229 : vector<8x128xf32>
    %232 = arith.divf %230, %231 : vector<8x128xf32>
    %233 = vector.extract_strided_slice %220 {offsets = [0, 128], sizes = [8, 128], strides = [1, 1]} : vector<8x384xf32> to vector<8x128xf32>
    %234 = vector.extract_strided_slice %224 {offsets = [0, 128], sizes = [8, 128], strides = [1, 1]} : vector<8x384xf32> to vector<8x128xf32>
    %235 = arith.addf %233, %234 : vector<8x128xf32>
    %236 = arith.negf %235 : vector<8x128xf32>
    %237 = math.exp %236 : vector<8x128xf32>
    %cst_91 = arith.constant 1.000000e+00 : f32
    %238 = vector.broadcast %cst_91 : f32 to vector<8x128xf32>
    %239 = arith.addf %238, %237 : vector<8x128xf32>
    %240 = arith.divf %238, %239 : vector<8x128xf32>
    %241 = vector.extract_strided_slice %220 {offsets = [0, 256], sizes = [8, 128], strides = [1, 1]} : vector<8x384xf32> to vector<8x128xf32>
    %242 = vector.extract_strided_slice %224 {offsets = [0, 256], sizes = [8, 128], strides = [1, 1]} : vector<8x384xf32> to vector<8x128xf32>
    %243 = arith.mulf %232, %242 : vector<8x128xf32>
    %244 = arith.addf %241, %243 : vector<8x128xf32>
    %245 = math.tanh %244 : vector<8x128xf32>
    %cst_92 = arith.constant 1.000000e+00 : f32
    %246 = vector.broadcast %cst_92 : f32 to vector<8x128xf32>
    %247 = arith.subf %246, %240 : vector<8x128xf32>
    %248 = arith.mulf %247, %245 : vector<8x128xf32>
    %249 = arith.mulf %240, %168 : vector<8x128xf32>
    %250 = arith.addf %248, %249 : vector<8x128xf32>
    %251 = arith.addi %37, %c2_i32 : i32
    %c4_i32_93 = arith.constant 4 : i32
    %252 = arith.cmpi slt, %251, %c4_i32_93 : i32
    %253 = arith.select %252, %250, %168 : vector<8x128xf32>
    %254 = arith.truncf %253 : vector<8x128xf32> to vector<8x128xbf16>
    %255 = arith.index_cast %c2_i32 : i32 to index
    %c0_94 = arith.constant 0 : index
    %c0_95 = arith.constant 0 : index
    %256 = vector.load %arg9[%255, %c0_94, %c0_95] : memref<4x8x128xbf16, #tpu.memory_space<vmem>>, vector<1x8x128xbf16>
    %257 = vector.shape_cast %256 : vector<1x8x128xbf16> to vector<8x128xbf16>
    %258 = vector.shape_cast %254 : vector<8x128xbf16> to vector<1x8x128xbf16>
    tpu.vector_store %arg9[%255, %c0_94, %c0_95], %258 {strides = array<i32>} : memref<4x8x128xbf16, #tpu.memory_space<vmem>>, vector<1x8x128xbf16>,
    %259 = arith.index_cast %218 : i32 to index
    %c0_96 = arith.constant 0 : index
    %260 = vector.load %arg13[%259, %c0_96] : memref<32x384xf32, #tpu.memory_space<vmem>>, vector<8x384xf32>
    %261 = arith.truncf %208 : vector<8x128xf32> to vector<8x128xbf16>
    %cst_97 = arith.constant dense<0.000000e+00> : vector<8x384xf32>
    %262 = tpu.matmul %261, %32, %cst_97 {dimension_numbers = #tpu.dot_dimension_numbers<[1], [0], [0], [1], [0, 0, 1, 1], [], []>} : vector<8x128xbf16>, vector<128x384xbf16>, vector<8x384xf32> -> vector<8x384xf32>
    %263 = vector.broadcast %36 : vector<1x384xf32> to vector<8x384xf32>
    %264 = arith.addf %262, %263 : vector<8x384xf32>
    %265 = vector.extract_strided_slice %260 {offsets = [0, 0], sizes = [8, 128], strides = [1, 1]} : vector<8x384xf32> to vector<8x128xf32>
    %266 = vector.extract_strided_slice %264 {offsets = [0, 0], sizes = [8, 128], strides = [1, 1]} : vector<8x384xf32> to vector<8x128xf32>
    %267 = arith.addf %265, %266 : vector<8x128xf32>
    %268 = arith.negf %267 : vector<8x128xf32>
    %269 = math.exp %268 : vector<8x128xf32>
    %cst_98 = arith.constant 1.000000e+00 : f32
    %270 = vector.broadcast %cst_98 : f32 to vector<8x128xf32>
    %271 = arith.addf %270, %269 : vector<8x128xf32>
    %272 = arith.divf %270, %271 : vector<8x128xf32>
    %273 = vector.extract_strided_slice %260 {offsets = [0, 128], sizes = [8, 128], strides = [1, 1]} : vector<8x384xf32> to vector<8x128xf32>
    %274 = vector.extract_strided_slice %264 {offsets = [0, 128], sizes = [8, 128], strides = [1, 1]} : vector<8x384xf32> to vector<8x128xf32>
    %275 = arith.addf %273, %274 : vector<8x128xf32>
    %276 = arith.negf %275 : vector<8x128xf32>
    %277 = math.exp %276 : vector<8x128xf32>
    %cst_99 = arith.constant 1.000000e+00 : f32
    %278 = vector.broadcast %cst_99 : f32 to vector<8x128xf32>
    %279 = arith.addf %278, %277 : vector<8x128xf32>
    %280 = arith.divf %278, %279 : vector<8x128xf32>
    %281 = vector.extract_strided_slice %260 {offsets = [0, 256], sizes = [8, 128], strides = [1, 1]} : vector<8x384xf32> to vector<8x128xf32>
    %282 = vector.extract_strided_slice %264 {offsets = [0, 256], sizes = [8, 128], strides = [1, 1]} : vector<8x384xf32> to vector<8x128xf32>
    %283 = arith.mulf %272, %282 : vector<8x128xf32>
    %284 = arith.addf %281, %283 : vector<8x128xf32>
    %285 = math.tanh %284 : vector<8x128xf32>
    %cst_100 = arith.constant 1.000000e+00 : f32
    %286 = vector.broadcast %cst_100 : f32 to vector<8x128xf32>
    %287 = arith.subf %286, %280 : vector<8x128xf32>
    %288 = arith.mulf %287, %285 : vector<8x128xf32>
    %289 = arith.mulf %280, %208 : vector<8x128xf32>
    %290 = arith.addf %288, %289 : vector<8x128xf32>
    %291 = arith.addi %39, %214 : i32
    %c4_i32_101 = arith.constant 4 : i32
    %292 = arith.cmpi slt, %291, %c4_i32_101 : i32
    %293 = arith.select %292, %290, %208 : vector<8x128xf32>
    %294 = arith.truncf %293 : vector<8x128xf32> to vector<8x128xbf16>
    %295 = arith.index_cast %214 : i32 to index
    %c0_102 = arith.constant 0 : index
    %c0_103 = arith.constant 0 : index
    %296 = vector.load %arg10[%295, %c0_102, %c0_103] : memref<4x8x128xbf16, #tpu.memory_space<vmem>>, vector<1x8x128xbf16>
    %297 = vector.shape_cast %296 : vector<1x8x128xbf16> to vector<8x128xbf16>
    %298 = vector.shape_cast %294 : vector<8x128xbf16> to vector<1x8x128xbf16>
    tpu.vector_store %arg10[%295, %c0_102, %c0_103], %298 {strides = array<i32>} : memref<4x8x128xbf16, #tpu.memory_space<vmem>>, vector<1x8x128xbf16>,
    %c3_i32_104 = arith.constant 3 : i32
    %c3_i32_105 = arith.constant 3 : i32
    %299 = arith.subi %c3_i32_105, %c3_i32_104 : i32
    %c8_i32_106 = arith.constant 8 : i32
    %300 = arith.muli %c3_i32_104, %c8_i32_106 : i32
    %301 = tpu.assume_multiple %300, 8 : i32
    %c8_i32_107 = arith.constant 8 : i32
    %302 = arith.muli %299, %c8_i32_107 : i32
    %303 = tpu.assume_multiple %302, 8 : i32
    %304 = arith.index_cast %301 : i32 to index
    %c0_108 = arith.constant 0 : index
    %305 = vector.load %arg12[%304, %c0_108] : memref<32x384xf32, #tpu.memory_space<vmem>>, vector<8x384xf32>
    %306 = arith.truncf %253 : vector<8x128xf32> to vector<8x128xbf16>
    %cst_109 = arith.constant dense<0.000000e+00> : vector<8x384xf32>
    %307 = tpu.matmul %306, %30, %cst_109 {dimension_numbers = #tpu.dot_dimension_numbers<[1], [0], [0], [1], [0, 0, 1, 1], [], []>} : vector<8x128xbf16>, vector<128x384xbf16>, vector<8x384xf32> -> vector<8x384xf32>
    %308 = vector.broadcast %34 : vector<1x384xf32> to vector<8x384xf32>
    %309 = arith.addf %307, %308 : vector<8x384xf32>
    %310 = vector.extract_strided_slice %305 {offsets = [0, 0], sizes = [8, 128], strides = [1, 1]} : vector<8x384xf32> to vector<8x128xf32>
    %311 = vector.extract_strided_slice %309 {offsets = [0, 0], sizes = [8, 128], strides = [1, 1]} : vector<8x384xf32> to vector<8x128xf32>
    %312 = arith.addf %310, %311 : vector<8x128xf32>
    %313 = arith.negf %312 : vector<8x128xf32>
    %314 = math.exp %313 : vector<8x128xf32>
    %cst_110 = arith.constant 1.000000e+00 : f32
    %315 = vector.broadcast %cst_110 : f32 to vector<8x128xf32>
    %316 = arith.addf %315, %314 : vector<8x128xf32>
    %317 = arith.divf %315, %316 : vector<8x128xf32>
    %318 = vector.extract_strided_slice %305 {offsets = [0, 128], sizes = [8, 128], strides = [1, 1]} : vector<8x384xf32> to vector<8x128xf32>
    %319 = vector.extract_strided_slice %309 {offsets = [0, 128], sizes = [8, 128], strides = [1, 1]} : vector<8x384xf32> to vector<8x128xf32>
    %320 = arith.addf %318, %319 : vector<8x128xf32>
    %321 = arith.negf %320 : vector<8x128xf32>
    %322 = math.exp %321 : vector<8x128xf32>
    %cst_111 = arith.constant 1.000000e+00 : f32
    %323 = vector.broadcast %cst_111 : f32 to vector<8x128xf32>
    %324 = arith.addf %323, %322 : vector<8x128xf32>
    %325 = arith.divf %323, %324 : vector<8x128xf32>
    %326 = vector.extract_strided_slice %305 {offsets = [0, 256], sizes = [8, 128], strides = [1, 1]} : vector<8x384xf32> to vector<8x128xf32>
    %327 = vector.extract_strided_slice %309 {offsets = [0, 256], sizes = [8, 128], strides = [1, 1]} : vector<8x384xf32> to vector<8x128xf32>
    %328 = arith.mulf %317, %327 : vector<8x128xf32>
    %329 = arith.addf %326, %328 : vector<8x128xf32>
    %330 = math.tanh %329 : vector<8x128xf32>
    %cst_112 = arith.constant 1.000000e+00 : f32
    %331 = vector.broadcast %cst_112 : f32 to vector<8x128xf32>
    %332 = arith.subf %331, %325 : vector<8x128xf32>
    %333 = arith.mulf %332, %330 : vector<8x128xf32>
    %334 = arith.mulf %325, %253 : vector<8x128xf32>
    %335 = arith.addf %333, %334 : vector<8x128xf32>
    %336 = arith.addi %37, %c3_i32_104 : i32
    %c4_i32_113 = arith.constant 4 : i32
    %337 = arith.cmpi slt, %336, %c4_i32_113 : i32
    %338 = arith.select %337, %335, %253 : vector<8x128xf32>
    %339 = arith.truncf %338 : vector<8x128xf32> to vector<8x128xbf16>
    %340 = arith.index_cast %c3_i32_104 : i32 to index
    %c0_114 = arith.constant 0 : index
    %c0_115 = arith.constant 0 : index
    %341 = vector.load %arg9[%340, %c0_114, %c0_115] : memref<4x8x128xbf16, #tpu.memory_space<vmem>>, vector<1x8x128xbf16>
    %342 = vector.shape_cast %341 : vector<1x8x128xbf16> to vector<8x128xbf16>
    %343 = vector.shape_cast %339 : vector<8x128xbf16> to vector<1x8x128xbf16>
    tpu.vector_store %arg9[%340, %c0_114, %c0_115], %343 {strides = array<i32>} : memref<4x8x128xbf16, #tpu.memory_space<vmem>>, vector<1x8x128xbf16>,
    %344 = arith.index_cast %303 : i32 to index
    %c0_116 = arith.constant 0 : index
    %345 = vector.load %arg13[%344, %c0_116] : memref<32x384xf32, #tpu.memory_space<vmem>>, vector<8x384xf32>
    %346 = arith.truncf %293 : vector<8x128xf32> to vector<8x128xbf16>
    %cst_117 = arith.constant dense<0.000000e+00> : vector<8x384xf32>
    %347 = tpu.matmul %346, %32, %cst_117 {dimension_numbers = #tpu.dot_dimension_numbers<[1], [0], [0], [1], [0, 0, 1, 1], [], []>} : vector<8x128xbf16>, vector<128x384xbf16>, vector<8x384xf32> -> vector<8x384xf32>
    %348 = vector.broadcast %36 : vector<1x384xf32> to vector<8x384xf32>
    %349 = arith.addf %347, %348 : vector<8x384xf32>
    %350 = vector.extract_strided_slice %345 {offsets = [0, 0], sizes = [8, 128], strides = [1, 1]} : vector<8x384xf32> to vector<8x128xf32>
    %351 = vector.extract_strided_slice %349 {offsets = [0, 0], sizes = [8, 128], strides = [1, 1]} : vector<8x384xf32> to vector<8x128xf32>
    %352 = arith.addf %350, %351 : vector<8x128xf32>
    %353 = arith.negf %352 : vector<8x128xf32>
    %354 = math.exp %353 : vector<8x128xf32>
    %cst_118 = arith.constant 1.000000e+00 : f32
    %355 = vector.broadcast %cst_118 : f32 to vector<8x128xf32>
    %356 = arith.addf %355, %354 : vector<8x128xf32>
    %357 = arith.divf %355, %356 : vector<8x128xf32>
    %358 = vector.extract_strided_slice %345 {offsets = [0, 128], sizes = [8, 128], strides = [1, 1]} : vector<8x384xf32> to vector<8x128xf32>
    %359 = vector.extract_strided_slice %349 {offsets = [0, 128], sizes = [8, 128], strides = [1, 1]} : vector<8x384xf32> to vector<8x128xf32>
    %360 = arith.addf %358, %359 : vector<8x128xf32>
    %361 = arith.negf %360 : vector<8x128xf32>
    %362 = math.exp %361 : vector<8x128xf32>
    %cst_119 = arith.constant 1.000000e+00 : f32
    %363 = vector.broadcast %cst_119 : f32 to vector<8x128xf32>
    %364 = arith.addf %363, %362 : vector<8x128xf32>
    %365 = arith.divf %363, %364 : vector<8x128xf32>
    %366 = vector.extract_strided_slice %345 {offsets = [0, 256], sizes = [8, 128], strides = [1, 1]} : vector<8x384xf32> to vector<8x128xf32>
    %367 = vector.extract_strided_slice %349 {offsets = [0, 256], sizes = [8, 128], strides = [1, 1]} : vector<8x384xf32> to vector<8x128xf32>
    %368 = arith.mulf %357, %367 : vector<8x128xf32>
    %369 = arith.addf %366, %368 : vector<8x128xf32>
    %370 = math.tanh %369 : vector<8x128xf32>
    %cst_120 = arith.constant 1.000000e+00 : f32
    %371 = vector.broadcast %cst_120 : f32 to vector<8x128xf32>
    %372 = arith.subf %371, %365 : vector<8x128xf32>
    %373 = arith.mulf %372, %370 : vector<8x128xf32>
    %374 = arith.mulf %365, %293 : vector<8x128xf32>
    %375 = arith.addf %373, %374 : vector<8x128xf32>
    %376 = arith.addi %39, %299 : i32
    %c4_i32_121 = arith.constant 4 : i32
    %377 = arith.cmpi slt, %376, %c4_i32_121 : i32
    %378 = arith.select %377, %375, %293 : vector<8x128xf32>
    %379 = arith.truncf %378 : vector<8x128xf32> to vector<8x128xbf16>
    %380 = arith.index_cast %299 : i32 to index
    %c0_122 = arith.constant 0 : index
    %c0_123 = arith.constant 0 : index
    %381 = vector.load %arg10[%380, %c0_122, %c0_123] : memref<4x8x128xbf16, #tpu.memory_space<vmem>>, vector<1x8x128xbf16>
    %382 = vector.shape_cast %381 : vector<1x8x128xbf16> to vector<8x128xbf16>
    %383 = vector.shape_cast %379 : vector<8x128xbf16> to vector<1x8x128xbf16>
    tpu.vector_store %arg10[%380, %c0_122, %c0_123], %383 {strides = array<i32>} : memref<4x8x128xbf16, #tpu.memory_space<vmem>>, vector<1x8x128xbf16>,
    %c4_i32_124 = arith.constant 4 : i32
    %c0_125 = arith.constant 0 : index
    %c0_126 = arith.constant 0 : index
    %c0_127 = arith.constant 0 : index
    %384 = vector.load %arg11[%c0_125, %c0_126, %c0_127] : memref<2x8x128xf32, #tpu.memory_space<vmem>>, vector<1x8x128xf32>
    %385 = vector.shape_cast %384 : vector<1x8x128xf32> to vector<8x128xf32>
    %386 = vector.shape_cast %338 : vector<8x128xf32> to vector<1x8x128xf32>
    tpu.vector_store %arg11[%c0_125, %c0_126, %c0_127], %386 {strides = array<i32>} : memref<2x8x128xf32, #tpu.memory_space<vmem>>, vector<1x8x128xf32>,
    %c1_128 = arith.constant 1 : index
    %c0_129 = arith.constant 0 : index
    %c0_130 = arith.constant 0 : index
    %387 = vector.load %arg11[%c1_128, %c0_129, %c0_130] : memref<2x8x128xf32, #tpu.memory_space<vmem>>, vector<1x8x128xf32>
    %388 = vector.shape_cast %387 : vector<1x8x128xf32> to vector<8x128xf32>
    %389 = vector.shape_cast %378 : vector<8x128xf32> to vector<1x8x128xf32>
    tpu.vector_store %arg11[%c1_128, %c0_129, %c0_130], %389 {strides = array<i32>} : memref<2x8x128xf32, #tpu.memory_space<vmem>>, vector<1x8x128xf32>,
    return
  }
  func.func @transform_0(%arg0: i32) -> (i32, i32, i32) {
    %c0_i32 = arith.constant 0 : i32
    %c0_i32_0 = arith.constant 0 : i32
    %c0_i32_1 = arith.constant 0 : i32
    return %arg0, %c0_i32, %c0_i32_0 : i32, i32, i32
  }
  func.func @transform_1(%arg0: i32) -> (i32, i32, i32) {
    %c0_i32 = arith.constant 0 : i32
    %c0_i32_0 = arith.constant 0 : i32
    %c0_i32_1 = arith.constant 0 : i32
    return %arg0, %c0_i32, %c0_i32_0 : i32, i32, i32
  }
  func.func @transform_2(%arg0: i32) -> (i32, i32, i32) {
    %c0_i32 = arith.constant 0 : i32
    %0 = arith.subi %c0_i32, %arg0 : i32
    %c0_i32_0 = arith.constant 0 : i32
    %c0_i32_1 = arith.constant 0 : i32
    %c0_i32_2 = arith.constant 0 : i32
    return %0, %c0_i32_0, %c0_i32_1 : i32, i32, i32
  }
  func.func @transform_3(%arg0: i32) -> (i32, i32, i32) {
    %c0_i32 = arith.constant 0 : i32
    %0 = arith.subi %c0_i32, %arg0 : i32
    %c0_i32_0 = arith.constant 0 : i32
    %c0_i32_1 = arith.constant 0 : i32
    %c0_i32_2 = arith.constant 0 : i32
    return %0, %c0_i32_0, %c0_i32_1 : i32, i32, i32
  }
  func.func @transform_4(%arg0: i32) -> (i32, i32) {
    %c0_i32 = arith.constant 0 : i32
    %c0_i32_0 = arith.constant 0 : i32
    %c0_i32_1 = arith.constant 0 : i32
    return %c0_i32, %c0_i32_0 : i32, i32
  }
  func.func @transform_5(%arg0: i32) -> (i32, i32) {
    %c0_i32 = arith.constant 0 : i32
    %c0_i32_0 = arith.constant 0 : i32
    %c0_i32_1 = arith.constant 0 : i32
    return %c0_i32, %c0_i32_0 : i32, i32
  }
  func.func @transform_6(%arg0: i32) -> (i32, i32, i32) {
    %c0_i32 = arith.constant 0 : i32
    %c0_i32_0 = arith.constant 0 : i32
    %c0_i32_1 = arith.constant 0 : i32
    %c0_i32_2 = arith.constant 0 : i32
    return %c0_i32, %c0_i32_0, %c0_i32_1 : i32, i32, i32
  }
  func.func @transform_7(%arg0: i32) -> (i32, i32, i32) {
    %c0_i32 = arith.constant 0 : i32
    %c0_i32_0 = arith.constant 0 : i32
    %c0_i32_1 = arith.constant 0 : i32
    %c0_i32_2 = arith.constant 0 : i32
    return %c0_i32, %c0_i32_0, %c0_i32_1 : i32, i32, i32
  }
  func.func @transform_8(%arg0: i32) -> (i32, i32, i32) {
    %c0_i32 = arith.constant 0 : i32
    %c0_i32_0 = arith.constant 0 : i32
    %c0_i32_1 = arith.constant 0 : i32
    return %arg0, %c0_i32, %c0_i32_0 : i32, i32, i32
  }
  func.func @transform_9(%arg0: i32) -> (i32, i32, i32) {
    %c0_i32 = arith.constant 0 : i32
    %0 = arith.subi %c0_i32, %arg0 : i32
    %c0_i32_0 = arith.constant 0 : i32
    %c0_i32_1 = arith.constant 0 : i32
    %c0_i32_2 = arith.constant 0 : i32
    return %0, %c0_i32_0, %c0_i32_1 : i32, i32, i32
  }
}

module attributes {stable_mosaic.version = 11 : i64} {
  func.func @proj_logsoftmax_kernel(%arg0: i32, %arg1: memref<32x128xbf16, #tpu.memory_space<vmem>>, %arg2: memref<32x128xbf16, #tpu.memory_space<vmem>>, %arg3: memref<128x128xbf16, #tpu.memory_space<vmem>>, %arg4: memref<128x128xbf16, #tpu.memory_space<vmem>>, %arg5: memref<1x128xf32, #tpu.memory_space<vmem>>, %arg6: memref<32x128xf32, #tpu.memory_space<vmem>>) attributes {dimension_semantics = [#tpu.dimension_semantics<parallel>], iteration_bounds = array<i64: 1>, scalar_prefetch = 0 : i64, scratch_operands = 0 : i64, tpu.core_type = #tpu.core_type<tc>, window_params = [{transform_indices = @transform_0, window_bounds = array<i64: 32, 128>}, {transform_indices = @transform_1, window_bounds = array<i64: 32, 128>}, {pipeline_mode = #tpu.pipeline_mode<synchronous>, transform_indices = @transform_2, window_bounds = array<i64: 128, 128>}, {pipeline_mode = #tpu.pipeline_mode<synchronous>, transform_indices = @transform_3, window_bounds = array<i64: 128, 128>}, {pipeline_mode = #tpu.pipeline_mode<synchronous>, transform_indices = @transform_4, window_bounds = array<i64: 1, 128>}, {transform_indices = @transform_5, window_bounds = array<i64: 32, 128>}]} {
    %c0 = arith.constant 0 : index
    %c0_0 = arith.constant 0 : index
    %0 = vector.load %arg1[%c0, %c0_0] : memref<32x128xbf16, #tpu.memory_space<vmem>>, vector<32x128xbf16>
    %c0_1 = arith.constant 0 : index
    %c0_2 = arith.constant 0 : index
    %1 = vector.load %arg3[%c0_1, %c0_2] : memref<128x128xbf16, #tpu.memory_space<vmem>>, vector<128x128xbf16>
    %cst = arith.constant dense<0.000000e+00> : vector<32x128xf32>
    %2 = tpu.matmul %0, %1, %cst {dimension_numbers = #tpu.dot_dimension_numbers<[1], [0], [0], [1], [0, 0, 1, 1], [], []>} : vector<32x128xbf16>, vector<128x128xbf16>, vector<32x128xf32> -> vector<32x128xf32>
    %c0_3 = arith.constant 0 : index
    %c0_4 = arith.constant 0 : index
    %3 = vector.load %arg2[%c0_3, %c0_4] : memref<32x128xbf16, #tpu.memory_space<vmem>>, vector<32x128xbf16>
    %c0_5 = arith.constant 0 : index
    %c0_6 = arith.constant 0 : index
    %4 = vector.load %arg4[%c0_5, %c0_6] : memref<128x128xbf16, #tpu.memory_space<vmem>>, vector<128x128xbf16>
    %cst_7 = arith.constant dense<0.000000e+00> : vector<32x128xf32>
    %5 = tpu.matmul %3, %4, %cst_7 {dimension_numbers = #tpu.dot_dimension_numbers<[1], [0], [0], [1], [0, 0, 1, 1], [], []>} : vector<32x128xbf16>, vector<128x128xbf16>, vector<32x128xf32> -> vector<32x128xf32>
    %6 = arith.addf %2, %5 : vector<32x128xf32>
    %c0_8 = arith.constant 0 : index
    %c0_9 = arith.constant 0 : index
    %7 = vector.load %arg5[%c0_8, %c0_9] : memref<1x128xf32, #tpu.memory_space<vmem>>, vector<1x128xf32>
    %8 = vector.broadcast %7 : vector<1x128xf32> to vector<32x128xf32>
    %9 = arith.addf %6, %8 : vector<32x128xf32>
    %cst_10 = arith.constant dense<0xFF800000> : vector<32xf32>
    %10 = vector.multi_reduction <maximumf>, %9, %cst_10 [1] : vector<32x128xf32> to vector<32xf32>
    %11 = vector.shape_cast %10 : vector<32xf32> to vector<32x1xf32>
    %12 = vector.broadcast %11 : vector<32x1xf32> to vector<32x128xf32>
    %13 = arith.subf %9, %12 : vector<32x128xf32>
    %14 = math.exp %13 : vector<32x128xf32>
    %cst_11 = arith.constant dense<0.000000e+00> : vector<32xf32>
    %15 = vector.multi_reduction <add>, %14, %cst_11 [1] : vector<32x128xf32> to vector<32xf32>
    %16 = vector.shape_cast %15 : vector<32xf32> to vector<32x1xf32>
    %17 = math.log %16 : vector<32x1xf32>
    %18 = vector.broadcast %17 : vector<32x1xf32> to vector<32x128xf32>
    %19 = arith.subf %13, %18 : vector<32x128xf32>
    %c0_12 = arith.constant 0 : index
    %c0_13 = arith.constant 0 : index
    %20 = vector.load %arg6[%c0_12, %c0_13] : memref<32x128xf32, #tpu.memory_space<vmem>>, vector<32x128xf32>
    tpu.vector_store %arg6[%c0_12, %c0_13], %19 {strides = array<i32>} : memref<32x128xf32, #tpu.memory_space<vmem>>, vector<32x128xf32>,
    return
  }
  func.func @transform_0(%arg0: i32) -> (i32, i32) {
    %c0_i32 = arith.constant 0 : i32
    %c0_i32_0 = arith.constant 0 : i32
    return %arg0, %c0_i32 : i32, i32
  }
  func.func @transform_1(%arg0: i32) -> (i32, i32) {
    %c0_i32 = arith.constant 0 : i32
    %c0_i32_0 = arith.constant 0 : i32
    return %arg0, %c0_i32 : i32, i32
  }
  func.func @transform_2(%arg0: i32) -> (i32, i32) {
    %c0_i32 = arith.constant 0 : i32
    %c0_i32_0 = arith.constant 0 : i32
    %c0_i32_1 = arith.constant 0 : i32
    return %c0_i32, %c0_i32_0 : i32, i32
  }
  func.func @transform_3(%arg0: i32) -> (i32, i32) {
    %c0_i32 = arith.constant 0 : i32
    %c0_i32_0 = arith.constant 0 : i32
    %c0_i32_1 = arith.constant 0 : i32
    return %c0_i32, %c0_i32_0 : i32, i32
  }
  func.func @transform_4(%arg0: i32) -> (i32, i32) {
    %c0_i32 = arith.constant 0 : i32
    %c0_i32_0 = arith.constant 0 : i32
    %c0_i32_1 = arith.constant 0 : i32
    return %c0_i32, %c0_i32_0 : i32, i32
  }
  func.func @transform_5(%arg0: i32) -> (i32, i32) {
    %c0_i32 = arith.constant 0 : i32
    %c0_i32_0 = arith.constant 0 : i32
    return %arg0, %c0_i32 : i32, i32
  }
}

</mosaic_0001>

<llo_original>
// kernel: deepspeech2_forward.6
$region0: #{deepspeech2_forward.6}
  #allocation0 [shape = 'u32[]', space=smem, size = 0x4, offset = 0x4, fixed_abs, tag = 'smem constant byte address 0x4 - core index']
  #allocation1 [shape = 'u32[144,128]{1,0:T(1,128)}', space=vmem, size = 0x12000, scoped, tag = 'internal scratch']
  %s0 = inlined_call_operand.vmem [shape: bf16[64,451], index: 0, kind: input, shape index: {}]
  %s1 = inlined_call_operand.vmem [shape: bf16[451,8], index: 1, kind: input, shape index: {}]
  %s2 = inlined_call_operand.vmem [shape: f32[1,8], index: 2, kind: input, shape index: {}]
  %s3 = inlined_call_operand.vmem [shape: f32[1,8], index: 3, kind: input, shape index: {}]
  %s4 = inlined_call_operand.vmem [shape: bf16[64,8], index: 4, kind: output, shape index: {}]
  %s5 = sld [smem:[#allocation0]]
  $region26: #{deepspeech2_forward.6} parent=0
    _
  %s7 = ssub.s32 1, %s5
  %s8 = scalar_select 0, %s7, %s5
  // Predicated region
  $region2: #{deepspeech2_forward.6} parent=0 // pred_check
    _
  $region3: #{deepspeech2_forward.6} parent=0 // pred_check_branch
    %10 = sbr.rel (0) target = $region5
  $region4: #{deepspeech2_forward.6} parent=0 // pred_region
    _
  $region5: #{deepspeech2_forward.6} parent=0 // pred_fallthru
    _
  // Predicated region
  $region6: #{deepspeech2_forward.6} parent=0 // pred_check
    _
  $region7: #{deepspeech2_forward.6} parent=0 // pred_check_branch
    %12 = sbr.rel (0) target = $region9
  $region8: #{deepspeech2_forward.6} parent=0 // pred_region
    _
  $region9: #{deepspeech2_forward.6} parent=0 // pred_fallthru
    _
  // Predicated region
  $region10: #{deepspeech2_forward.6} parent=0 // pred_check
    _
  $region11: #{deepspeech2_forward.6} parent=0 // pred_check_branch
    %14 = sbr.rel (0) target = $region13
  $region12: #{deepspeech2_forward.6} parent=0 // pred_region
    _
  $region13: #{deepspeech2_forward.6} parent=0 // pred_fallthru
    _
  // Predicated region
  $region14: #{deepspeech2_forward.6} parent=0 // pred_check
    _
  $region15: #{deepspeech2_forward.6} parent=0 // pred_check_branch
    %16 = sbr.rel (0) target = $region17
  $region16: #{deepspeech2_forward.6} parent=0 // pred_region
    _
  $region17: #{deepspeech2_forward.6} parent=0 // pred_fallthru
    _
  %v18 = vld [vmem:[%s0] sm:$0xff]
  %v19 = vld [vmem:[%s0 + $0x8] sm:$0xff]
  %v20 = vld [vmem:[%s0 + $0x10] sm:$0xff]
  %v21 = vld [vmem:[%s0 + $0x18] sm:$0xff]
  %v22 = vld [vmem:[%s0 + $0x20] sm:$0xff]
  %v23 = vld [vmem:[%s0 + $0x28] sm:$0xff]
  %v24 = vld [vmem:[%s0 + $0x30] sm:$0xff]
  %v25 = vld [vmem:[%s0 + $0x38] sm:$0xff]
  %v26 = vld [vmem:[%s0 + $0x40] sm:$0xff]
  %v27 = vld [vmem:[%s0 + $0x48] sm:$0xff]
  %v28 = vld [vmem:[%s0 + $0x50] sm:$0xff]
  %v29 = vld [vmem:[%s0 + $0x58] sm:$0xff]
  %v30 = vld [vmem:[%s0 + $0x60] sm:$0xff]
  %v31 = vld [vmem:[%s0 + $0x68] sm:$0xff]
  %v32 = vld [vmem:[%s0 + $0x70] sm:$0xff]
  %v33 = vld [vmem:[%s0 + $0x78] sm:$0xff]
  %v34 = vld [vmem:[%s1] sm:$0xf]
  %v35 = vld [vmem:[%s1 + $0x4] sm:$0xf]
  %v36 = vld [vmem:[%s1 + $0x8] sm:$0xf]
  %v37 = vld [vmem:[%s1 + $0xc] sm:$0xf]
  %v38 = vld [vmem:[%s1 + $0x10] sm:$0xf]
  %v39 = vld [vmem:[%s1 + $0x14] sm:$0xf]
  %v40 = vld [vmem:[%s1 + $0x18] sm:$0xf]
  %v41 = vld [vmem:[%s1 + $0x1c] sm:$0xf]
  %v42 = vld [vmem:[%s1 + $0x20] sm:$0xf]
  %v43 = vld [vmem:[%s1 + $0x24] sm:$0xf]
  %v44 = vld [vmem:[%s1 + $0x28] sm:$0xf]
  %v45 = vld [vmem:[%s1 + $0x2c] sm:$0xf]
  %v46 = vld [vmem:[%s1 + $0x30] sm:$0xf]
  %v47 = vld [vmem:[%s1 + $0x34] sm:$0xf]
  %v48 = vld [vmem:[%s1 + $0x38] sm:$0xf]
  %v49 = vld [vmem:[%s1 + $0x3c] sm:$0xf]
  %v50 = vld [vmem:[%s1 + $0x40] sm:$0xf]
  %v51 = vld [vmem:[%s1 + $0x44] sm:$0xf]
  %v52 = vld [vmem:[%s1 + $0x48] sm:$0xf]
  %v53 = vld [vmem:[%s1 + $0x4c] sm:$0xf]
  %v54 = vld [vmem:[%s1 + $0x50] sm:$0xf]
  %v55 = vld [vmem:[%s1 + $0x54] sm:$0xf]
  %v56 = vld [vmem:[%s1 + $0x58] sm:$0xf]
  %v57 = vld [vmem:[%s1 + $0x5c] sm:$0xf]
  %v58 = vld [vmem:[%s1 + $0x60] sm:$0xf]
  %v59 = vld [vmem:[%s1 + $0x64] sm:$0xf]
  %v60 = vld [vmem:[%s1 + $0x68] sm:$0xf]
  %v61 = vld [vmem:[%s1 + $0x6c] sm:$0xf]
  %v62 = vld [vmem:[%s1 + $0x70] sm:$0xf]
  %v63 = vld [vmem:[%s1 + $0x74] sm:$0xf]
  %v64 = vld [vmem:[%s1 + $0x78] sm:$0xf]
  %v65 = vld [vmem:[%s1 + $0x7c] sm:$0xf]
  %v66 = vld [vmem:[%s1 + $0x80] sm:$0xf]
  %v67 = vld [vmem:[%s1 + $0x84] sm:$0xf]
  %v68 = vld [vmem:[%s1 + $0x88] sm:$0xf]
  %v69 = vld [vmem:[%s1 + $0x8c] sm:$0xf]
  %v70 = vld [vmem:[%s1 + $0x90] sm:$0xf]
  %v71 = vld [vmem:[%s1 + $0x94] sm:$0xf]
  %v72 = vld [vmem:[%s1 + $0x98] sm:$0xf]
  %v73 = vld [vmem:[%s1 + $0x9c] sm:$0xf]
  %v74 = vld [vmem:[%s1 + $0xa0] sm:$0xf]
  %v75 = vld [vmem:[%s1 + $0xa4] sm:$0xf]
  %v76 = vld [vmem:[%s1 + $0xa8] sm:$0xf]
  %v77 = vld [vmem:[%s1 + $0xac] sm:$0xf]
  %v78 = vld [vmem:[%s1 + $0xb0] sm:$0xf]
  %v79 = vld [vmem:[%s1 + $0xb4] sm:$0xf]
  %v80 = vld [vmem:[%s1 + $0xb8] sm:$0xf]
  %v81 = vld [vmem:[%s1 + $0xbc] sm:$0xf]
  %v82 = vld [vmem:[%s1 + $0xc0] sm:$0xf]
  %v83 = vld [vmem:[%s1 + $0xc4] sm:$0xf]
  %v84 = vld [vmem:[%s1 + $0xc8] sm:$0xf]
  %v85 = vld [vmem:[%s1 + $0xcc] sm:$0xf]
  %v86 = vld [vmem:[%s1 + $0xd0] sm:$0xf]
  %v87 = vld [vmem:[%s1 + $0xd4] sm:$0xf]
  %v88 = vld [vmem:[%s1 + $0xd8] sm:$0xf]
  %v89 = vld [vmem:[%s1 + $0xdc] sm:$0xf]
  %v90 = vld [vmem:[%s1 + $0xe0] sm:$0x3]
  %v107 = vunpack.c.l.b16 %v18
  %v108 = vunpack.c.h.b16 %v18
  %v109 = vunpack.c.l.b16 %v19
  %v110 = vunpack.c.h.b16 %v19
  %v111 = vunpack.c.l.b16 %v20
  %v112 = vunpack.c.h.b16 %v20
  %v113 = vunpack.c.l.b16 %v21
  %v114 = vunpack.c.h.b16 %v21
  %v115 = vunpack.c.l.b16 %v22
  %v116 = vunpack.c.h.b16 %v22
  %v117 = vunpack.c.l.b16 %v23
  %v118 = vunpack.c.h.b16 %v23
  %v119 = vunpack.c.l.b16 %v24
  %v120 = vunpack.c.h.b16 %v24
  %v121 = vunpack.c.l.b16 %v25
  %v122 = vunpack.c.h.b16 %v25
  %v123 = vunpack.c.l.b16 %v26
  %v124 = vunpack.c.h.b16 %v26
  %v125 = vunpack.c.l.b16 %v27
  %v126 = vunpack.c.h.b16 %v27
  %v127 = vunpack.c.l.b16 %v28
  %v128 = vunpack.c.h.b16 %v28
  %v129 = vunpack.c.l.b16 %v29
  %v130 = vunpack.c.h.b16 %v29
  %v131 = vunpack.c.l.b16 %v30
  %v132 = vunpack.c.h.b16 %v30
  %v133 = vunpack.c.l.b16 %v31
  %v134 = vunpack.c.h.b16 %v31
  %v135 = vunpack.c.l.b16 %v32
  %v136 = vunpack.c.h.b16 %v32
  %v137 = vunpack.c.l.b16 %v33
  %v138 = vunpack.c.h.b16 %v33
  %v139 = vpack.c.b16 %v111, %v107
  %v140 = vpack.c.b16 %v112, %v108
  %v141 = vpack.c.b16 %v113, %v109
  %v142 = vpack.c.b16 %v114, %v110
  %v143 = vpack.c.b16 %v119, %v115
  %v144 = vpack.c.b16 %v120, %v116
  %v145 = vpack.c.b16 %v121, %v117
  %v146 = vpack.c.b16 %v122, %v118
  %v147 = vpack.c.b16 %v127, %v123
  %v148 = vpack.c.b16 %v128, %v124
  %v149 = vpack.c.b16 %v129, %v125
  %v150 = vpack.c.b16 %v130, %v126
  %v151 = vpack.c.b16 %v135, %v131
  %v152 = vpack.c.b16 %v136, %v132
  %v153 = vpack.c.b16 %v137, %v133
  %v154 = vpack.c.b16 %v138, %v134
  %v224 = vunpack.c.l.b16 %v34
  %v225 = vunpack.c.l.b16 %v35
  %v226 = vunpack.c.l.b16 %v36
  %v227 = vunpack.c.l.b16 %v37
  %v228 = vunpack.c.l.b16 %v38
  %v229 = vunpack.c.l.b16 %v39
  %v230 = vunpack.c.l.b16 %v40
  %v231 = vunpack.c.l.b16 %v41
  %v232 = vunpack.c.l.b16 %v42
  %v233 = vunpack.c.l.b16 %v43
  %v234 = vunpack.c.l.b16 %v44
  %v235 = vunpack.c.l.b16 %v45
  %v236 = vunpack.c.l.b16 %v46
  %v237 = vunpack.c.l.b16 %v47
  %v238 = vunpack.c.l.b16 %v48
  %v239 = vunpack.c.l.b16 %v49
  %v240 = vunpack.c.l.b16 %v50
  %v241 = vunpack.c.l.b16 %v51
  %v242 = vunpack.c.l.b16 %v52
  %v243 = vunpack.c.l.b16 %v53
  %v244 = vunpack.c.l.b16 %v54
  %v245 = vunpack.c.l.b16 %v55
  %v246 = vunpack.c.l.b16 %v56
  %v247 = vunpack.c.l.b16 %v57
  %v248 = vunpack.c.l.b16 %v58
  %v249 = vunpack.c.l.b16 %v59
  %v250 = vunpack.c.l.b16 %v60
  %v251 = vunpack.c.l.b16 %v61
  %v252 = vunpack.c.l.b16 %v62
  %v253 = vunpack.c.l.b16 %v63
  %v254 = vunpack.c.l.b16 %v64
  %v255 = vunpack.c.l.b16 %v65
  %v256 = vunpack.c.l.b16 %v66
  %v257 = vunpack.c.l.b16 %v67
  %v258 = vunpack.c.l.b16 %v68
  %v259 = vunpack.c.l.b16 %v69
  %v260 = vunpack.c.l.b16 %v70
  %v261 = vunpack.c.l.b16 %v71
  %v262 = vunpack.c.l.b16 %v72
  %v263 = vunpack.c.l.b16 %v73
  %v264 = vunpack.c.l.b16 %v74
  %v265 = vunpack.c.l.b16 %v75
  %v266 = vunpack.c.l.b16 %v76
  %v267 = vunpack.c.l.b16 %v77
  %v268 = vunpack.c.l.b16 %v78
  %v269 = vunpack.c.l.b16 %v79
  %v270 = vunpack.c.l.b16 %v80
  %v271 = vunpack.c.l.b16 %v81
  %v272 = vunpack.c.l.b16 %v82
  %v273 = vunpack.c.l.b16 %v83
  %v274 = vunpack.c.l.b16 %v84
  %v275 = vunpack.c.l.b16 %v85
  %v276 = vunpack.c.l.b16 %v86
  %v277 = vunpack.c.l.b16 %v87
  %v278 = vunpack.c.l.b16 %v88
  %v279 = vunpack.c.l.b16 %v89
  %v280 = vunpack.c.l.b16 %v90
  %v281 = vpack.c.b16 %v225, %v224
  %v282 = vpack.c.b16 %v227, %v226
  %v283 = vpack.c.b16 %v229, %v228
  %v284 = vpack.c.b16 %v231, %v230
  %v285 = vpack.c.b16 %v233, %v232
  %v286 = vpack.c.b16 %v235, %v234
  %v287 = vpack.c.b16 %v237, %v236
  %v288 = vpack.c.b16 %v239, %v238
  %v289 = vpack.c.b16 %v241, %v240
  %v290 = vpack.c.b16 %v243, %v242
  %v291 = vpack.c.b16 %v245, %v244
  %v292 = vpack.c.b16 %v247, %v246
  %v293 = vpack.c.b16 %v249, %v248
  %v294 = vpack.c.b16 %v251, %v250
  %v295 = vpack.c.b16 %v253, %v252
  %v296 = vpack.c.b16 %v255, %v254
  %v297 = vpack.c.b16 %v257, %v256
  %v298 = vpack.c.b16 %v259, %v258
  %v299 = vpack.c.b16 %v261, %v260
  %v300 = vpack.c.b16 %v263, %v262
  %v301 = vpack.c.b16 %v265, %v264
  %v302 = vpack.c.b16 %v267, %v266
  %v303 = vpack.c.b16 %v269, %v268
  %v304 = vpack.c.b16 %v271, %v270
  %v305 = vpack.c.b16 %v273, %v272
  %v306 = vpack.c.b16 %v275, %v274
  %v307 = vpack.c.b16 %v277, %v276
  %v308 = vpack.c.b16 %v279, %v278
  %v309 = vpack.c.b16 %v280, %v280
  %vm338 = vcmask 547840
  %v340 = vsel %vm338, %v142, 0
  %v343 = vsel %vm338, %v146, 0
  %v346 = vsel %vm338, %v150, 0
  %v349 = vsel %vm338, %v154, 0
  %vm351 = vcmask 1040384
  %vm352 = vcmask 1041408
  %v353 = vsel %vm351, 4294967295, 65535
  %v354 = vsel %vm352, %v353, 0
  %v356 = vand.u32 %v309, %v354
  %358 = vmatprep.subr.bf16.mxu0 0
  %359 = vmatpush1.bf16.msra.mxu0 %v288
  %360 = vmatprep.subr.bf16.mxu0 0
  %361 = vmatpush1.bf16.msra.mxu0 %v287
  %362 = vmatprep.subr.bf16.mxu0 0
  %363 = vmatpush1.bf16.msra.mxu0 %v286
  %364 = vmatprep.subr.bf16.mxu0 0
  %365 = vmatpush1.bf16.msra.mxu0 %v285
  %366 = vmatprep.subr.bf16.mxu0 0
  %367 = vmatpush1.bf16.msra.mxu0 %v284
  %368 = vmatprep.subr.bf16.mxu0 0
  %369 = vmatpush1.bf16.msra.mxu0 %v283
  %370 = vmatprep.subr.bf16.mxu0 0
  %371 = vmatpush1.bf16.msra.mxu0 %v282
  %372 = vmatprep.subr.bf16.mxu0 0
  %373 = vmatpush1.bf16.msra.mxu0 %v281
  %374 = vmatprep.subr.bf16.mxu0 0
  %375 = vmatpush2.bf16.msra.mxu0 %v296
  %376 = vmatprep.subr.bf16.mxu0 0
  %377 = vmatpush2.bf16.msra.mxu0 %v295
  %378 = vmatprep.subr.bf16.mxu0 0
  %379 = vmatpush2.bf16.msra.mxu0 %v294
  %380 = vmatprep.subr.bf16.mxu0 0
  %381 = vmatpush2.bf16.msra.mxu0 %v293
  %382 = vmatprep.subr.bf16.mxu0 0
  %383 = vmatpush2.bf16.msra.mxu0 %v292
  %384 = vmatprep.subr.bf16.mxu0 0
  %385 = vmatpush2.bf16.msra.mxu0 %v291
  %386 = vmatprep.subr.bf16.mxu0 0
  %387 = vmatpush2.bf16.msra.mxu0 %v290
  %388 = vmatprep.subr.bf16.mxu0 0
  %389 = vmatpush2.bf16.msra.mxu0 %v289
  %390 = vmatprep.mubr.bf16.mxu0 %v140
  %391 = vmatmul.mubr.bf16.gmra.mxu0 %v139
  %v392 = vpop.f32.mrf.mxu0
  %v393 = vadd.f32 0.0, %v392
  %v394 = vpop.f32.mrf.mxu0
  %v395 = vpop.f32.mrf.mxu0
  %v396 = vadd.f32 0.0, %v395
  %v397 = vpop.f32.mrf.mxu0
  %398 = vmatprep.mubr.bf16.mxu0 %v144
  %399 = vmatmul.mubr.bf16.gmra.mxu0 %v143
  %v400 = vpop.f32.mrf.mxu0
  %v401 = vadd.f32 0.0, %v400
  %v402 = vpop.f32.mrf.mxu0
  %v403 = vpop.f32.mrf.mxu0
  %v404 = vadd.f32 0.0, %v403
  %v405 = vpop.f32.mrf.mxu0
  %406 = vmatprep.mubr.bf16.mxu0 %v148
  %407 = vmatmul.mubr.bf16.gmra.mxu0 %v147
  %v408 = vpop.f32.mrf.mxu0
  %v409 = vadd.f32 0.0, %v408
  %v410 = vpop.f32.mrf.mxu0
  %v411 = vpop.f32.mrf.mxu0
  %v412 = vadd.f32 0.0, %v411
  %v413 = vpop.f32.mrf.mxu0
  %414 = vmatprep.mubr.bf16.mxu0 %v152
  %415 = vmatmul.mubr.bf16.gmra.mxu0 %v151
  %v416 = vpop.f32.mrf.mxu0
  %v417 = vadd.f32 0.0, %v416
  %v418 = vpop.f32.mrf.mxu0
  %v419 = vpop.f32.mrf.mxu0
  %v420 = vadd.f32 0.0, %v419
  %v421 = vpop.f32.mrf.mxu0
  %422 = vdwg.mxu0
  %423 = vmatprep.subr.bf16.mxu0 0
  %424 = vmatpush1.bf16.msra.mxu0 %v304
  %425 = vmatprep.subr.bf16.mxu0 0
  %426 = vmatpush1.bf16.msra.mxu0 %v303
  %427 = vmatprep.subr.bf16.mxu0 0
  %428 = vmatpush1.bf16.msra.mxu0 %v302
  %429 = vmatprep.subr.bf16.mxu0 0
  %430 = vmatpush1.bf16.msra.mxu0 %v301
  %431 = vmatprep.subr.bf16.mxu0 0
  %432 = vmatpush1.bf16.msra.mxu0 %v300
  %433 = vmatprep.subr.bf16.mxu0 0
  %434 = vmatpush1.bf16.msra.mxu0 %v299
  %435 = vmatprep.subr.bf16.mxu0 0
  %436 = vmatpush1.bf16.msra.mxu0 %v298
  %437 = vmatprep.subr.bf16.mxu0 0
  %438 = vmatpush1.bf16.msra.mxu0 %v297
  %439 = vmatprep.subr.bf16.mxu0 0
  %440 = vmatpush2.bf16.msra.mxu0 0
  %441 = vmatprep.subr.bf16.mxu0 0
  %442 = vmatpush2.bf16.msra.mxu0 0
  %443 = vmatprep.subr.bf16.mxu0 0
  %444 = vmatpush2.bf16.msra.mxu0 0
  %445 = vmatprep.subr.bf16.mxu0 0
  %446 = vmatpush2.bf16.msra.mxu0 %v356
  %447 = vmatprep.subr.bf16.mxu0 0
  %448 = vmatpush2.bf16.msra.mxu0 %v308
  %449 = vmatprep.subr.bf16.mxu0 0
  %450 = vmatpush2.bf16.msra.mxu0 %v307
  %451 = vmatprep.subr.bf16.mxu0 0
  %452 = vmatpush2.bf16.msra.mxu0 %v306
  %453 = vmatprep.subr.bf16.mxu0 0
  %454 = vmatpush2.bf16.msra.mxu0 %v305
  %455 = vmatprep.mubr.bf16.mxu0 %v340
  %456 = vmatmul.mubr.bf16.gmra.mxu0 %v141
  %v457 = vpop.f32.mrf.mxu0
  %v458 = vadd.f32 %v393, %v457
  %v459 = vpop.f32.mrf.mxu0
  %v460 = vpop.f32.mrf.mxu0
  %v461 = vadd.f32 %v396, %v460
  %v462 = vpop.f32.mrf.mxu0
  %463 = vmatprep.mubr.bf16.mxu0 %v343
  %464 = vmatmul.mubr.bf16.gmra.mxu0 %v145
  %v465 = vpop.f32.mrf.mxu0
  %v466 = vadd.f32 %v401, %v465
  %v467 = vpop.f32.mrf.mxu0
  %v468 = vpop.f32.mrf.mxu0
  %v469 = vadd.f32 %v404, %v468
  %v470 = vpop.f32.mrf.mxu0
  %471 = vmatprep.mubr.bf16.mxu0 %v346
  %472 = vmatmul.mubr.bf16.gmra.mxu0 %v149
  %v473 = vpop.f32.mrf.mxu0
  %v474 = vadd.f32 %v409, %v473
  %v475 = vpop.f32.mrf.mxu0
  %v476 = vpop.f32.mrf.mxu0
  %v477 = vadd.f32 %v412, %v476
  %v478 = vpop.f32.mrf.mxu0
  %479 = vmatprep.mubr.bf16.mxu0 %v349
  %480 = vmatmul.mubr.bf16.gmra.mxu0 %v153
  %v481 = vpop.f32.mrf.mxu0
  %v482 = vadd.f32 %v417, %v481
  %v483 = vpop.f32.mrf.mxu0
  %v484 = vpop.f32.mrf.mxu0
  %v485 = vadd.f32 %v420, %v484
  %v486 = vpop.f32.mrf.mxu0
  %487 = vdwg.mxu0
  %v488 = vld [vmem:[%s2] sm:$0x1]
  %v490 = vlaneseq
  %v491 = vshrl.u32 %v490, 7
  %v492 = vsub.s32 0, %v491
  %v493 = vrot.slane %v488, %v492
  %v495 = vmul.f32 %v458, %v493
  %v496 = vmul.f32 %v461, %v493
  %v497 = vmul.f32 %v466, %v493
  %v498 = vmul.f32 %v469, %v493
  %v499 = vmul.f32 %v474, %v493
  %v500 = vmul.f32 %v477, %v493
  %v501 = vmul.f32 %v482, %v493
  %v502 = vmul.f32 %v485, %v493
  %v503 = vld [vmem:[%s3] sm:$0x1]
  %v505 = vlaneseq
  %v506 = vshrl.u32 %v505, 7
  %v507 = vsub.s32 0, %v506
  %v508 = vrot.slane %v503, %v507
  %v510 = vadd.f32 %v495, %v508
  %v511 = vadd.f32 %v496, %v508
  %v512 = vadd.f32 %v497, %v508
  %v513 = vadd.f32 %v498, %v508
  %v514 = vadd.f32 %v499, %v508
  %v515 = vadd.f32 %v500, %v508
  %v516 = vadd.f32 %v501, %v508
  %v517 = vadd.f32 %v502, %v508
  %v518 = vmax.f32 %v510, 0.0
  %v519 = vmax.f32 %v511, 0.0
  %v520 = vmax.f32 %v512, 0.0
  %v521 = vmax.f32 %v513, 0.0
  %v522 = vmax.f32 %v514, 0.0
  %v523 = vmax.f32 %v515, 0.0
  %v524 = vmax.f32 %v516, 0.0
  %v525 = vmax.f32 %v517, 0.0
  %v526 = vmin.f32 %v518, 20.0
  %v527 = vmin.f32 %v519, 20.0
  %v528 = vmin.f32 %v520, 20.0
  %v529 = vmin.f32 %v521, 20.0
  %v530 = vmin.f32 %v522, 20.0
  %v531 = vmin.f32 %v523, 20.0
  %v532 = vmin.f32 %v524, 20.0
  %v533 = vmin.f32 %v525, 20.0
  %v534 = vpack.c.bf16 %v527, %v526
  %v535 = vpack.c.bf16 %v529, %v528
  %v536 = vpack.c.bf16 %v531, %v530
  %v537 = vpack.c.bf16 %v533, %v532
  %v542 = vunpack.c.l.b16 %v534
  %v543 = vunpack.c.h.b16 %v534
  %v544 = vunpack.c.l.b16 %v535
  %v545 = vunpack.c.h.b16 %v535
  %v546 = vunpack.c.l.b16 %v536
  %v547 = vunpack.c.h.b16 %v536
  %v548 = vunpack.c.l.b16 %v537
  %v549 = vunpack.c.h.b16 %v537
  %v550 = vpack.c.b16 %v542, %v542
  %v551 = vpack.c.b16 %v543, %v543
  %v552 = vpack.c.b16 %v544, %v544
  %v553 = vpack.c.b16 %v545, %v545
  %v554 = vpack.c.b16 %v546, %v546
  %v555 = vpack.c.b16 %v547, %v547
  %v556 = vpack.c.b16 %v548, %v548
  %v557 = vpack.c.b16 %v549, %v549
  %vm566 = vcmask 60416
  %567 = vst.msk [vmem:[%s4] sm:$0xf] %vm566, %v550
  %568 = vst.msk [vmem:[%s4 + $0x4] sm:$0xf] %vm566, %v551
  %569 = vst.msk [vmem:[%s4 + $0x8] sm:$0xf] %vm566, %v552
  %570 = vst.msk [vmem:[%s4 + $0xc] sm:$0xf] %vm566, %v553
  %571 = vst.msk [vmem:[%s4 + $0x10] sm:$0xf] %vm566, %v554
  %572 = vst.msk [vmem:[%s4 + $0x14] sm:$0xf] %vm566, %v555
  %573 = vst.msk [vmem:[%s4 + $0x18] sm:$0xf] %vm566, %v556
  %574 = vst.msk [vmem:[%s4 + $0x1c] sm:$0xf] %vm566, %v557
  // Predicated region
  $region18: #{deepspeech2_forward.6} parent=0 // pred_check
    _
  $region19: #{deepspeech2_forward.6} parent=0 // pred_check_branch
    %576 = sbr.rel (0) target = $region21
  $region20: #{deepspeech2_forward.6} parent=0 // pred_region
    _
  $region21: #{deepspeech2_forward.6} parent=0 // pred_fallthru
    _
  // Predicated region
  $region22: #{deepspeech2_forward.6} parent=0 // pred_check
    _
  $region23: #{deepspeech2_forward.6} parent=0 // pred_check_branch
    %578 = sbr.rel (0) target = $region25
  $region24: #{deepspeech2_forward.6} parent=0 // pred_region
    _
  $region25: #{deepspeech2_forward.6} parent=0 // pred_fallthru
    _

// kernel: deepspeech2_forward.7
$region0: #{deepspeech2_forward.7}
  #allocation0 [shape = 'u32[]', space=smem, size = 0x4, offset = 0x4, fixed_abs, tag = 'smem constant byte address 0x4 - core index']
  #allocation1 [shape = 'u32[144,128]{1,0:T(1,128)}', space=vmem, size = 0x12000, scoped, tag = 'internal scratch']
  %s0 = inlined_call_operand.vmem [shape: bf16[32,1848], index: 0, kind: input, shape index: {}]
  %s1 = inlined_call_operand.vmem [shape: bf16[1848,8], index: 1, kind: input, shape index: {}]
  %s2 = inlined_call_operand.vmem [shape: f32[1,8], index: 2, kind: input, shape index: {}]
  %s3 = inlined_call_operand.vmem [shape: f32[1,8], index: 3, kind: input, shape index: {}]
  %s4 = inlined_call_operand.vmem [shape: bf16[32,8], index: 4, kind: output, shape index: {}]
  %s5 = sld [smem:[#allocation0]]
  $region26: #{deepspeech2_forward.7} parent=0
    _
  %s7 = ssub.s32 1, %s5
  %s8 = scalar_select 0, %s7, %s5
  // Predicated region
  $region2: #{deepspeech2_forward.7} parent=0 // pred_check
    _
  $region3: #{deepspeech2_forward.7} parent=0 // pred_check_branch
    %10 = sbr.rel (0) target = $region5
  $region4: #{deepspeech2_forward.7} parent=0 // pred_region
    _
  $region5: #{deepspeech2_forward.7} parent=0 // pred_fallthru
    _
  // Predicated region
  $region6: #{deepspeech2_forward.7} parent=0 // pred_check
    _
  $region7: #{deepspeech2_forward.7} parent=0 // pred_check_branch
    %12 = sbr.rel (0) target = $region9
  $region8: #{deepspeech2_forward.7} parent=0 // pred_region
    _
  $region9: #{deepspeech2_forward.7} parent=0 // pred_fallthru
    _
  // Predicated region
  $region10: #{deepspeech2_forward.7} parent=0 // pred_check
    _
  $region11: #{deepspeech2_forward.7} parent=0 // pred_check_branch
    %14 = sbr.rel (0) target = $region13
  $region12: #{deepspeech2_forward.7} parent=0 // pred_region
    _
  $region13: #{deepspeech2_forward.7} parent=0 // pred_fallthru
    _
  // Predicated region
  $region14: #{deepspeech2_forward.7} parent=0 // pred_check
    _
  $region15: #{deepspeech2_forward.7} parent=0 // pred_check_branch
    %16 = sbr.rel (0) target = $region17
  $region16: #{deepspeech2_forward.7} parent=0 // pred_region
    _
  $region17: #{deepspeech2_forward.7} parent=0 // pred_fallthru
    _
  %v18 = vld [vmem:[%s0] sm:$0xff]
  %v19 = vld [vmem:[%s0 + $0x8] sm:$0xff]
  %v20 = vld [vmem:[%s0 + $0x10] sm:$0xff]
  %v21 = vld [vmem:[%s0 + $0x18] sm:$0xff]
  %v22 = vld [vmem:[%s0 + $0x20] sm:$0xff]
  %v23 = vld [vmem:[%s0 + $0x28] sm:$0xff]
  %v24 = vld [vmem:[%s0 + $0x30] sm:$0xff]
  %v25 = vld [vmem:[%s0 + $0x38] sm:$0xf]
  %v26 = vld [vmem:[%s0 + $0x3c] sm:$0xff]
  %v27 = vld [vmem:[%s0 + $0x44] sm:$0xff]
  %v28 = vld [vmem:[%s0 + $0x4c] sm:$0xff]
  %v29 = vld [vmem:[%s0 + $0x54] sm:$0xff]
  %v30 = vld [vmem:[%s0 + $0x5c] sm:$0xff]
  %v31 = vld [vmem:[%s0 + $0x64] sm:$0xff]
  %v32 = vld [vmem:[%s0 + $0x6c] sm:$0xff]
  %v33 = vld [vmem:[%s0 + $0x74] sm:$0xf]
  %v34 = vld [vmem:[%s0 + $0x78] sm:$0xff]
  %v35 = vld [vmem:[%s0 + $0x80] sm:$0xff]
  %v36 = vld [vmem:[%s0 + $0x88] sm:$0xff]
  %v37 = vld [vmem:[%s0 + $0x90] sm:$0xff]
  %v38 = vld [vmem:[%s0 + $0x98] sm:$0xff]
  %v39 = vld [vmem:[%s0 + $0xa0] sm:$0xff]
  %v40 = vld [vmem:[%s0 + $0xa8] sm:$0xff]
  %v41 = vld [vmem:[%s0 + $0xb0] sm:$0xf]
  %v42 = vld [vmem:[%s0 + $0xb4] sm:$0xff]
  %v43 = vld [vmem:[%s0 + $0xbc] sm:$0xff]
  %v44 = vld [vmem:[%s0 + $0xc4] sm:$0xff]
  %v45 = vld [vmem:[%s0 + $0xcc] sm:$0xff]
  %v46 = vld [vmem:[%s0 + $0xd4] sm:$0xff]
  %v47 = vld [vmem:[%s0 + $0xdc] sm:$0xff]
  %v48 = vld [vmem:[%s0 + $0xe4] sm:$0xff]
  %v49 = vld [vmem:[%s0 + $0xec] sm:$0xf]
  %v50 = vld [vmem:[%s1] sm:$0xf]
  %v51 = vld [vmem:[%s1 + $0x4] sm:$0xf]
  %v52 = vld [vmem:[%s1 + $0x8] sm:$0xf]
  %v53 = vld [vmem:[%s1 + $0xc] sm:$0xf]
  %v54 = vld [vmem:[%s1 + $0x10] sm:$0xf]
  %v55 = vld [vmem:[%s1 + $0x14] sm:$0xf]
  %v56 = vld [vmem:[%s1 + $0x18] sm:$0xf]
  %v57 = vld [vmem:[%s1 + $0x1c] sm:$0xf]
  %v58 = vld [vmem:[%s1 + $0x20] sm:$0xf]
  %v59 = vld [vmem:[%s1 + $0x24] sm:$0xf]
  %v60 = vld [vmem:[%s1 + $0x28] sm:$0xf]
  %v61 = vld [vmem:[%s1 + $0x2c] sm:$0xf]
  %v62 = vld [vmem:[%s1 + $0x30] sm:$0xf]
  %v63 = vld [vmem:[%s1 + $0x34] sm:$0xf]
  %v64 = vld [vmem:[%s1 + $0x38] sm:$0xf]
  %v65 = vld [vmem:[%s1 + $0x3c] sm:$0xf]
  %v66 = vld [vmem:[%s1 + $0x40] sm:$0xf]
  %v67 = vld [vmem:[%s1 + $0x44] sm:$0xf]
  %v68 = vld [vmem:[%s1 + $0x48] sm:$0xf]
  %v69 = vld [vmem:[%s1 + $0x4c] sm:$0xf]
  %v70 = vld [vmem:[%s1 + $0x50] sm:$0xf]
  %v71 = vld [vmem:[%s1 + $0x54] sm:$0xf]
  %v72 = vld [vmem:[%s1 + $0x58] sm:$0xf]
  %v73 = vld [vmem:[%s1 + $0x5c] sm:$0xf]
  %v74 = vld [vmem:[%s1 + $0x60] sm:$0xf]
  %v75 = vld [vmem:[%s1 + $0x64] sm:$0xf]
  %v76 = vld [vmem:[%s1 + $0x68] sm:$0xf]
  %v77 = vld [vmem:[%s1 + $0x6c] sm:$0xf]
  %v78 = vld [vmem:[%s1 + $0x70] sm:$0xf]
  %v79 = vld [vmem:[%s1 + $0x74] sm:$0xf]
  %v80 = vld [vmem:[%s1 + $0x78] sm:$0xf]
  %v81 = vld [vmem:[%s1 + $0x7c] sm:$0xf]
  %v82 = vld [vmem:[%s1 + $0x80] sm:$0xf]
  %v83 = vld [vmem:[%s1 + $0x84] sm:$0xf]
  %v84 = vld [vmem:[%s1 + $0x88] sm:$0xf]
  %v85 = vld [vmem:[%s1 + $0x8c] sm:$0xf]
  %v86 = vld [vmem:[%s1 + $0x90] sm:$0xf]
  %v87 = vld [vmem:[%s1 + $0x94] sm:$0xf]
  %v88 = vld [vmem:[%s1 + $0x98] sm:$0xf]
  %v89 = vld [vmem:[%s1 + $0x9c] sm:$0xf]
  %v90 = vld [vmem:[%s1 + $0xa0] sm:$0xf]
  %v91 = vld [vmem:[%s1 + $0xa4] sm:$0xf]
  %v92 = vld [vmem:[%s1 + $0xa8] sm:$0xf]
  %v93 = vld [vmem:[%s1 + $0xac] sm:$0xf]
  %v94 = vld [vmem:[%s1 + $0xb0] sm:$0xf]
  %v95 = vld [vmem:[%s1 + $0xb4] sm:$0xf]
  %v96 = vld [vmem:[%s1 + $0xb8] sm:$0xf]
  %v97 = vld [vmem:[%s1 + $0xbc] sm:$0xf]
  %v98 = vld [vmem:[%s1 + $0xc0] sm:$0xf]
  %v99 = vld [vmem:[%s1 + $0xc4] sm:$0xf]
  %v100 = vld [vmem:[%s1 + $0xc8] sm:$0xf]
  %v101 = vld [vmem:[%s1 + $0xcc] sm:$0xf]
  %v102 = vld [vmem:[%s1 + $0xd0] sm:$0xf]
  %v103 = vld [vmem:[%s1 + $0xd4] sm:$0xf]
  %v104 = vld [vmem:[%s1 + $0xd8] sm:$0xf]
  %v105 = vld [vmem:[%s1 + $0xdc] sm:$0xf]
  %v106 = vld [vmem:[%s1 + $0xe0] sm:$0xf]
  %v107 = vld [vmem:[%s1 + $0xe4] sm:$0xf]
  %v108 = vld [vmem:[%s1 + $0xe8] sm:$0xf]
  %v109 = vld [vmem:[%s1 + $0xec] sm:$0xf]
  %v110 = vld [vmem:[%s1 + $0xf0] sm:$0xf]
  %v111 = vld [vmem:[%s1 + $0xf4] sm:$0xf]
  %v112 = vld [vmem:[%s1 + $0xf8] sm:$0xf]
  %v113 = vld [vmem:[%s1 + $0xfc] sm:$0xf]
  %v114 = vld [vmem:[%s1 + $0x100] sm:$0xf]
  %v115 = vld [vmem:[%s1 + $0x104] sm:$0xf]
  %v116 = vld [vmem:[%s1 + $0x108] sm:$0xf]
  %v117 = vld [vmem:[%s1 + $0x10c] sm:$0xf]
  %v118 = vld [vmem:[%s1 + $0x110] sm:$0xf]
  %v119 = vld [vmem:[%s1 + $0x114] sm:$0xf]
  %v120 = vld [vmem:[%s1 + $0x118] sm:$0xf]
  %v121 = vld [vmem:[%s1 + $0x11c] sm:$0xf]
  %v122 = vld [vmem:[%s1 + $0x120] sm:$0xf]
  %v123 = vld [vmem:[%s1 + $0x124] sm:$0xf]
  %v124 = vld [vmem:[%s1 + $0x128] sm:$0xf]
  %v125 = vld [vmem:[%s1 + $0x12c] sm:$0xf]
  %v126 = vld [vmem:[%s1 + $0x130] sm:$0xf]
  %v127 = vld [vmem:[%s1 + $0x134] sm:$0xf]
  %v128 = vld [vmem:[%s1 + $0x138] sm:$0xf]
  %v129 = vld [vmem:[%s1 + $0x13c] sm:$0xf]
  %v130 = vld [vmem:[%s1 + $0x140] sm:$0xf]
  %v131 = vld [vmem:[%s1 + $0x144] sm:$0xf]
  %v132 = vld [vmem:[%s1 + $0x148] sm:$0xf]
  %v133 = vld [vmem:[%s1 + $0x14c] sm:$0xf]
  %v134 = vld [vmem:[%s1 + $0x150] sm:$0xf]
  %v135 = vld [vmem:[%s1 + $0x154] sm:$0xf]
  %v136 = vld [vmem:[%s1 + $0x158] sm:$0xf]
  %v137 = vld [vmem:[%s1 + $0x15c] sm:$0xf]
  %v138 = vld [vmem:[%s1 + $0x160] sm:$0xf]
  %v139 = vld [vmem:[%s1 + $0x164] sm:$0xf]
  %v140 = vld [vmem:[%s1 + $0x168] sm:$0xf]
  %v141 = vld [vmem:[%s1 + $0x16c] sm:$0xf]
  %v142 = vld [vmem:[%s1 + $0x170] sm:$0xf]
  %v143 = vld [vmem:[%s1 + $0x174] sm:$0xf]
  %v144 = vld [vmem:[%s1 + $0x178] sm:$0xf]
  %v145 = vld [vmem:[%s1 + $0x17c] sm:$0xf]
  %v146 = vld [vmem:[%s1 + $0x180] sm:$0xf]
  %v147 = vld [vmem:[%s1 + $0x184] sm:$0xf]
  %v148 = vld [vmem:[%s1 + $0x188] sm:$0xf]
  %v149 = vld [vmem:[%s1 + $0x18c] sm:$0xf]
  %v150 = vld [vmem:[%s1 + $0x190] sm:$0xf]
  %v151 = vld [vmem:[%s1 + $0x194] sm:$0xf]
  %v152 = vld [vmem:[%s1 + $0x198] sm:$0xf]
  %v153 = vld [vmem:[%s1 + $0x19c] sm:$0xf]
  %v154 = vld [vmem:[%s1 + $0x1a0] sm:$0xf]
  %v155 = vld [vmem:[%s1 + $0x1a4] sm:$0xf]
  %v156 = vld [vmem:[%s1 + $0x1a8] sm:$0xf]
  %v157 = vld [vmem:[%s1 + $0x1ac] sm:$0xf]
  %v158 = vld [vmem:[%s1 + $0x1b0] sm:$0xf]
  %v159 = vld [vmem:[%s1 + $0x1b4] sm:$0xf]
  %v160 = vld [vmem:[%s1 + $0x1b8] sm:$0xf]
  %v161 = vld [vmem:[%s1 + $0x1bc] sm:$0xf]
  %v162 = vld [vmem:[%s1 + $0x1c0] sm:$0xf]
  %v163 = vld [vmem:[%s1 + $0x1c4] sm:$0xf]
  %v164 = vld [vmem:[%s1 + $0x1c8] sm:$0xf]
  %v165 = vld [vmem:[%s1 + $0x1cc] sm:$0xf]
  %v166 = vld [vmem:[%s1 + $0x1d0] sm:$0xf]
  %v167 = vld [vmem:[%s1 + $0x1d4] sm:$0xf]
  %v168 = vld [vmem:[%s1 + $0x1d8] sm:$0xf]
  %v169 = vld [vmem:[%s1 + $0x1dc] sm:$0xf]
  %v170 = vld [vmem:[%s1 + $0x1e0] sm:$0xf]
  %v171 = vld [vmem:[%s1 + $0x1e4] sm:$0xf]
  %v172 = vld [vmem:[%s1 + $0x1e8] sm:$0xf]
  %v173 = vld [vmem:[%s1 + $0x1ec] sm:$0xf]
  %v174 = vld [vmem:[%s1 + $0x1f0] sm:$0xf]
  %v175 = vld [vmem:[%s1 + $0x1f4] sm:$0xf]
  %v176 = vld [vmem:[%s1 + $0x1f8] sm:$0xf]
  %v177 = vld [vmem:[%s1 + $0x1fc] sm:$0xf]
  %v178 = vld [vmem:[%s1 + $0x200] sm:$0xf]
  %v179 = vld [vmem:[%s1 + $0x204] sm:$0xf]
  %v180 = vld [vmem:[%s1 + $0x208] sm:$0xf]
  %v181 = vld [vmem:[%s1 + $0x20c] sm:$0xf]
  %v182 = vld [vmem:[%s1 + $0x210] sm:$0xf]
  %v183 = vld [vmem:[%s1 + $0x214] sm:$0xf]
  %v184 = vld [vmem:[%s1 + $0x218] sm:$0xf]
  %v185 = vld [vmem:[%s1 + $0x21c] sm:$0xf]
  %v186 = vld [vmem:[%s1 + $0x220] sm:$0xf]
  %v187 = vld [vmem:[%s1 + $0x224] sm:$0xf]
  %v188 = vld [vmem:[%s1 + $0x228] sm:$0xf]
  %v189 = vld [vmem:[%s1 + $0x22c] sm:$0xf]
  %v190 = vld [vmem:[%s1 + $0x230] sm:$0xf]
  %v191 = vld [vmem:[%s1 + $0x234] sm:$0xf]
  %v192 = vld [vmem:[%s1 + $0x238] sm:$0xf]
  %v193 = vld [vmem:[%s1 + $0x23c] sm:$0xf]
  %v194 = vld [vmem:[%s1 + $0x240] sm:$0xf]
  %v195 = vld [vmem:[%s1 + $0x244] sm:$0xf]
  %v196 = vld [vmem:[%s1 + $0x248] sm:$0xf]
  %v197 = vld [vmem:[%s1 + $0x24c] sm:$0xf]
  %v198 = vld [vmem:[%s1 + $0x250] sm:$0xf]
  %v199 = vld [vmem:[%s1 + $0x254] sm:$0xf]
  %v200 = vld [vmem:[%s1 + $0x258] sm:$0xf]
  %v201 = vld [vmem:[%s1 + $0x25c] sm:$0xf]
  %v202 = vld [vmem:[%s1 + $0x260] sm:$0xf]
  %v203 = vld [vmem:[%s1 + $0x264] sm:$0xf]
  %v204 = vld [vmem:[%s1 + $0x268] sm:$0xf]
  %v205 = vld [vmem:[%s1 + $0x26c] sm:$0xf]
  %v206 = vld [vmem:[%s1 + $0x270] sm:$0xf]
  %v207 = vld [vmem:[%s1 + $0x274] sm:$0xf]
  %v208 = vld [vmem:[%s1 + $0x278] sm:$0xf]
  %v209 = vld [vmem:[%s1 + $0x27c] sm:$0xf]
  %v210 = vld [vmem:[%s1 + $0x280] sm:$0xf]
  %v211 = vld [vmem:[%s1 + $0x284] sm:$0xf]
  %v212 = vld [vmem:[%s1 + $0x288] sm:$0xf]
  %v213 = vld [vmem:[%s1 + $0x28c] sm:$0xf]
  %v214 = vld [vmem:[%s1 + $0x290] sm:$0xf]
  %v215 = vld [vmem:[%s1 + $0x294] sm:$0xf]
  %v216 = vld [vmem:[%s1 + $0x298] sm:$0xf]
  %v217 = vld [vmem:[%s1 + $0x29c] sm:$0xf]
  %v218 = vld [vmem:[%s1 + $0x2a0] sm:$0xf]
  %v219 = vld [vmem:[%s1 + $0x2a4] sm:$0xf]
  %v220 = vld [vmem:[%s1 + $0x2a8] sm:$0xf]
  %v221 = vld [vmem:[%s1 + $0x2ac] sm:$0xf]
  %v222 = vld [vmem:[%s1 + $0x2b0] sm:$0xf]
  %v223 = vld [vmem:[%s1 + $0x2b4] sm:$0xf]
  %v224 = vld [vmem:[%s1 + $0x2b8] sm:$0xf]
  %v225 = vld [vmem:[%s1 + $0x2bc] sm:$0xf]
  %v226 = vld [vmem:[%s1 + $0x2c0] sm:$0xf]
  %v227 = vld [vmem:[%s1 + $0x2c4] sm:$0xf]
  %v228 = vld [vmem:[%s1 + $0x2c8] sm:$0xf]
  %v229 = vld [vmem:[%s1 + $0x2cc] sm:$0xf]
  %v230 = vld [vmem:[%s1 + $0x2d0] sm:$0xf]
  %v231 = vld [vmem:[%s1 + $0x2d4] sm:$0xf]
  %v232 = vld [vmem:[%s1 + $0x2d8] sm:$0xf]
  %v233 = vld [vmem:[%s1 + $0x2dc] sm:$0xf]
  %v234 = vld [vmem:[%s1 + $0x2e0] sm:$0xf]
  %v235 = vld [vmem:[%s1 + $0x2e4] sm:$0xf]
  %v236 = vld [vmem:[%s1 + $0x2e8] sm:$0xf]
  %v237 = vld [vmem:[%s1 + $0x2ec] sm:$0xf]
  %v238 = vld [vmem:[%s1 + $0x2f0] sm:$0xf]
  %v239 = vld [vmem:[%s1 + $0x2f4] sm:$0xf]
  %v240 = vld [vmem:[%s1 + $0x2f8] sm:$0xf]
  %v241 = vld [vmem:[%s1 + $0x2fc] sm:$0xf]
  %v242 = vld [vmem:[%s1 + $0x300] sm:$0xf]
  %v243 = vld [vmem:[%s1 + $0x304] sm:$0xf]
  %v244 = vld [vmem:[%s1 + $0x308] sm:$0xf]
  %v245 = vld [vmem:[%s1 + $0x30c] sm:$0xf]
  %v246 = vld [vmem:[%s1 + $0x310] sm:$0xf]
  %v247 = vld [vmem:[%s1 + $0x314] sm:$0xf]
  %v248 = vld [vmem:[%s1 + $0x318] sm:$0xf]
  %v249 = vld [vmem:[%s1 + $0x31c] sm:$0xf]
  %v250 = vld [vmem:[%s1 + $0x320] sm:$0xf]
  %v251 = vld [vmem:[%s1 + $0x324] sm:$0xf]
  %v252 = vld [vmem:[%s1 + $0x328] sm:$0xf]
  %v253 = vld [vmem:[%s1 + $0x32c] sm:$0xf]
  %v254 = vld [vmem:[%s1 + $0x330] sm:$0xf]
  %v255 = vld [vmem:[%s1 + $0x334] sm:$0xf]
  %v256 = vld [vmem:[%s1 + $0x338] sm:$0xf]
  %v257 = vld [vmem:[%s1 + $0x33c] sm:$0xf]
  %v258 = vld [vmem:[%s1 + $0x340] sm:$0xf]
  %v259 = vld [vmem:[%s1 + $0x344] sm:$0xf]
  %v260 = vld [vmem:[%s1 + $0x348] sm:$0xf]
  %v261 = vld [vmem:[%s1 + $0x34c] sm:$0xf]
  %v262 = vld [vmem:[%s1 + $0x350] sm:$0xf]
  %v263 = vld [vmem:[%s1 + $0x354] sm:$0xf]
  %v264 = vld [vmem:[%s1 + $0x358] sm:$0xf]
  %v265 = vld [vmem:[%s1 + $0x35c] sm:$0xf]
  %v266 = vld [vmem:[%s1 + $0x360] sm:$0xf]
  %v267 = vld [vmem:[%s1 + $0x364] sm:$0xf]
  %v268 = vld [vmem:[%s1 + $0x368] sm:$0xf]
  %v269 = vld [vmem:[%s1 + $0x36c] sm:$0xf]
  %v270 = vld [vmem:[%s1 + $0x370] sm:$0xf]
  %v271 = vld [vmem:[%s1 + $0x374] sm:$0xf]
  %v272 = vld [vmem:[%s1 + $0x378] sm:$0xf]
  %v273 = vld [vmem:[%s1 + $0x37c] sm:$0xf]
  %v274 = vld [vmem:[%s1 + $0x380] sm:$0xf]
  %v275 = vld [vmem:[%s1 + $0x384] sm:$0xf]
  %v276 = vld [vmem:[%s1 + $0x388] sm:$0xf]
  %v277 = vld [vmem:[%s1 + $0x38c] sm:$0xf]
  %v278 = vld [vmem:[%s1 + $0x390] sm:$0xf]
  %v279 = vld [vmem:[%s1 + $0x394] sm:$0xf]
  %v280 = vld [vmem:[%s1 + $0x398] sm:$0xf]
  %v313 = vunpack.c.l.b16 %v18
  %v314 = vunpack.c.h.b16 %v18
  %v315 = vunpack.c.l.b16 %v19
  %v316 = vunpack.c.h.b16 %v19
  %v317 = vunpack.c.l.b16 %v20
  %v318 = vunpack.c.h.b16 %v20
  %v319 = vunpack.c.l.b16 %v21
  %v320 = vunpack.c.h.b16 %v21
  %v321 = vunpack.c.l.b16 %v22
  %v322 = vunpack.c.h.b16 %v22
  %v323 = vunpack.c.l.b16 %v23
  %v324 = vunpack.c.h.b16 %v23
  %v325 = vunpack.c.l.b16 %v24
  %v326 = vunpack.c.h.b16 %v24
  %v327 = vunpack.c.l.b16 %v25
  %v328 = vunpack.c.l.b16 %v26
  %v329 = vunpack.c.h.b16 %v26
  %v330 = vunpack.c.l.b16 %v27
  %v331 = vunpack.c.h.b16 %v27
  %v332 = vunpack.c.l.b16 %v28
  %v333 = vunpack.c.h.b16 %v28
  %v334 = vunpack.c.l.b16 %v29
  %v335 = vunpack.c.h.b16 %v29
  %v336 = vunpack.c.l.b16 %v30
  %v337 = vunpack.c.h.b16 %v30
  %v338 = vunpack.c.l.b16 %v31
  %v339 = vunpack.c.h.b16 %v31
  %v340 = vunpack.c.l.b16 %v32
  %v341 = vunpack.c.h.b16 %v32
  %v342 = vunpack.c.l.b16 %v33
  %v343 = vunpack.c.l.b16 %v34
  %v344 = vunpack.c.h.b16 %v34
  %v345 = vunpack.c.l.b16 %v35
  %v346 = vunpack.c.h.b16 %v35
  %v347 = vunpack.c.l.b16 %v36
  %v348 = vunpack.c.h.b16 %v36
  %v349 = vunpack.c.l.b16 %v37
  %v350 = vunpack.c.h.b16 %v37
  %v351 = vunpack.c.l.b16 %v38
  %v352 = vunpack.c.h.b16 %v38
  %v353 = vunpack.c.l.b16 %v39
  %v354 = vunpack.c.h.b16 %v39
  %v355 = vunpack.c.l.b16 %v40
  %v356 = vunpack.c.h.b16 %v40
  %v357 = vunpack.c.l.b16 %v41
  %v358 = vunpack.c.l.b16 %v42
  %v359 = vunpack.c.h.b16 %v42
  %v360 = vunpack.c.l.b16 %v43
  %v361 = vunpack.c.h.b16 %v43
  %v362 = vunpack.c.l.b16 %v44
  %v363 = vunpack.c.h.b16 %v44
  %v364 = vunpack.c.l.b16 %v45
  %v365 = vunpack.c.h.b16 %v45
  %v366 = vunpack.c.l.b16 %v46
  %v367 = vunpack.c.h.b16 %v46
  %v368 = vunpack.c.l.b16 %v47
  %v369 = vunpack.c.h.b16 %v47
  %v370 = vunpack.c.l.b16 %v48
  %v371 = vunpack.c.h.b16 %v48
  %v372 = vunpack.c.l.b16 %v49
  %v373 = vpack.c.b16 %v328, %v313
  %v374 = vpack.c.b16 %v329, %v314
  %v375 = vpack.c.b16 %v330, %v315
  %v376 = vpack.c.b16 %v331, %v316
  %v377 = vpack.c.b16 %v332, %v317
  %v378 = vpack.c.b16 %v333, %v318
  %v379 = vpack.c.b16 %v334, %v319
  %v380 = vpack.c.b16 %v335, %v320
  %v381 = vpack.c.b16 %v336, %v321
  %v382 = vpack.c.b16 %v337, %v322
  %v383 = vpack.c.b16 %v338, %v323
  %v384 = vpack.c.b16 %v339, %v324
  %v385 = vpack.c.b16 %v340, %v325
  %v386 = vpack.c.b16 %v341, %v326
  %v387 = vpack.c.b16 %v342, %v327
  %v388 = vpack.c.b16 %v358, %v343
  %v389 = vpack.c.b16 %v359, %v344
  %v390 = vpack.c.b16 %v360, %v345
  %v391 = vpack.c.b16 %v361, %v346
  %v392 = vpack.c.b16 %v362, %v347
  %v393 = vpack.c.b16 %v363, %v348
  %v394 = vpack.c.b16 %v364, %v349
  %v395 = vpack.c.b16 %v365, %v350
  %v396 = vpack.c.b16 %v366, %v351
  %v397 = vpack.c.b16 %v367, %v352
  %v398 = vpack.c.b16 %v368, %v353
  %v399 = vpack.c.b16 %v369, %v354
  %v400 = vpack.c.b16 %v370, %v355
  %v401 = vpack.c.b16 %v371, %v356
  %v402 = vpack.c.b16 %v372, %v357
  %v662 = vunpack.c.l.b16 %v50
  %v663 = vunpack.c.l.b16 %v51
  %v664 = vunpack.c.l.b16 %v52
  %v665 = vunpack.c.l.b16 %v53
  %v666 = vunpack.c.l.b16 %v54
  %v667 = vunpack.c.l.b16 %v55
  %v668 = vunpack.c.l.b16 %v56
  %v669 = vunpack.c.l.b16 %v57
  %v670 = vunpack.c.l.b16 %v58
  %v671 = vunpack.c.l.b16 %v59
  %v672 = vunpack.c.l.b16 %v60
  %v673 = vunpack.c.l.b16 %v61
  %v674 = vunpack.c.l.b16 %v62
  %v675 = vunpack.c.l.b16 %v63
  %v676 = vunpack.c.l.b16 %v64
  %v677 = vunpack.c.l.b16 %v65
  %v678 = vunpack.c.l.b16 %v66
  %v679 = vunpack.c.l.b16 %v67
  %v680 = vunpack.c.l.b16 %v68
  %v681 = vunpack.c.l.b16 %v69
  %v682 = vunpack.c.l.b16 %v70
  %v683 = vunpack.c.l.b16 %v71
  %v684 = vunpack.c.l.b16 %v72
  %v685 = vunpack.c.l.b16 %v73
  %v686 = vunpack.c.l.b16 %v74
  %v687 = vunpack.c.l.b16 %v75
  %v688 = vunpack.c.l.b16 %v76
  %v689 = vunpack.c.l.b16 %v77
  %v690 = vunpack.c.l.b16 %v78
  %v691 = vunpack.c.l.b16 %v79
  %v692 = vunpack.c.l.b16 %v80
  %v693 = vunpack.c.l.b16 %v81
  %v694 = vunpack.c.l.b16 %v82
  %v695 = vunpack.c.l.b16 %v83
  %v696 = vunpack.c.l.b16 %v84
  %v697 = vunpack.c.l.b16 %v85
  %v698 = vunpack.c.l.b16 %v86
  %v699 = vunpack.c.l.b16 %v87
  %v700 = vunpack.c.l.b16 %v88
  %v701 = vunpack.c.l.b16 %v89
  %v702 = vunpack.c.l.b16 %v90
  %v703 = vunpack.c.l.b16 %v91
  %v704 = vunpack.c.l.b16 %v92
  %v705 = vunpack.c.l.b16 %v93
  %v706 = vunpack.c.l.b16 %v94
  %v707 = vunpack.c.l.b16 %v95
  %v708 = vunpack.c.l.b16 %v96
  %v709 = vunpack.c.l.b16 %v97
  %v710 = vunpack.c.l.b16 %v98
  %v711 = vunpack.c.l.b16 %v99
  %v712 = vunpack.c.l.b16 %v100
  %v713 = vunpack.c.l.b16 %v101
  %v714 = vunpack.c.l.b16 %v102
  %v715 = vunpack.c.l.b16 %v103
  %v716 = vunpack.c.l.b16 %v104
  %v717 = vunpack.c.l.b16 %v105
  %v718 = vunpack.c.l.b16 %v106
  %v719 = vunpack.c.l.b16 %v107
  %v720 = vunpack.c.l.b16 %v108
  %v721 = vunpack.c.l.b16 %v109
  %v722 = vunpack.c.l.b16 %v110
  %v723 = vunpack.c.l.b16 %v111
  %v724 = vunpack.c.l.b16 %v112
  %v725 = vunpack.c.l.b16 %v113
  %v726 = vunpack.c.l.b16 %v114
  %v727 = vunpack.c.l.b16 %v115
  %v728 = vunpack.c.l.b16 %v116
  %v729 = vunpack.c.l.b16 %v117
  %v730 = vunpack.c.l.b16 %v118
  %v731 = vunpack.c.l.b16 %v119
  %v732 = vunpack.c.l.b16 %v120
  %v733 = vunpack.c.l.b16 %v121
  %v734 = vunpack.c.l.b16 %v122
  %v735 = vunpack.c.l.b16 %v123
  %v736 = vunpack.c.l.b16 %v124
  %v737 = vunpack.c.l.b16 %v125
  %v738 = vunpack.c.l.b16 %v126
  %v739 = vunpack.c.l.b16 %v127
  %v740 = vunpack.c.l.b16 %v128
  %v741 = vunpack.c.l.b16 %v129
  %v742 = vunpack.c.l.b16 %v130
  %v743 = vunpack.c.l.b16 %v131
  %v744 = vunpack.c.l.b16 %v132
  %v745 = vunpack.c.l.b16 %v133
  %v746 = vunpack.c.l.b16 %v134
  %v747 = vunpack.c.l.b16 %v135
  %v748 = vunpack.c.l.b16 %v136
  %v749 = vunpack.c.l.b16 %v137
  %v750 = vunpack.c.l.b16 %v138
  %v751 = vunpack.c.l.b16 %v139
  %v752 = vunpack.c.l.b16 %v140
  %v753 = vunpack.c.l.b16 %v141
  %v754 = vunpack.c.l.b16 %v142
  %v755 = vunpack.c.l.b16 %v143
  %v756 = vunpack.c.l.b16 %v144
  %v757 = vunpack.c.l.b16 %v145
  %v758 = vunpack.c.l.b16 %v146
  %v759 = vunpack.c.l.b16 %v147
  %v760 = vunpack.c.l.b16 %v148
  %v761 = vunpack.c.l.b16 %v149
  %v762 = vunpack.c.l.b16 %v150
  %v763 = vunpack.c.l.b16 %v151
  %v764 = vunpack.c.l.b16 %v152
  %v765 = vunpack.c.l.b16 %v153
  %v766 = vunpack.c.l.b16 %v154
  %v767 = vunpack.c.l.b16 %v155
  %v768 = vunpack.c.l.b16 %v156
  %v769 = vunpack.c.l.b16 %v157
  %v770 = vunpack.c.l.b16 %v158
  %v771 = vunpack.c.l.b16 %v159
  %v772 = vunpack.c.l.b16 %v160
  %v773 = vunpack.c.l.b16 %v161
  %v774 = vunpack.c.l.b16 %v162
  %v775 = vunpack.c.l.b16 %v163
  %v776 = vunpack.c.l.b16 %v164
  %v777 = vunpack.c.l.b16 %v165
  %v778 = vunpack.c.l.b16 %v166
  %v779 = vunpack.c.l.b16 %v167
  %v780 = vunpack.c.l.b16 %v168
  %v781 = vunpack.c.l.b16 %v169
  %v782 = vunpack.c.l.b16 %v170
  %v783 = vunpack.c.l.b16 %v171
  %v784 = vunpack.c.l.b16 %v172
  %v785 = vunpack.c.l.b16 %v173
  %v786 = vunpack.c.l.b16 %v174
  %v787 = vunpack.c.l.b16 %v175
  %v788 = vunpack.c.l.b16 %v176
  %v789 = vunpack.c.l.b16 %v177
  %v790 = vunpack.c.l.b16 %v178
  %v791 = vunpack.c.l.b16 %v179
  %v792 = vunpack.c.l.b16 %v180
  %v793 = vunpack.c.l.b16 %v181
  %v794 = vunpack.c.l.b16 %v182
  %v795 = vunpack.c.l.b16 %v183
  %v796 = vunpack.c.l.b16 %v184
  %v797 = vunpack.c.l.b16 %v185
  %v798 = vunpack.c.l.b16 %v186
  %v799 = vunpack.c.l.b16 %v187
  %v800 = vunpack.c.l.b16 %v188
  %v801 = vunpack.c.l.b16 %v189
  %v802 = vunpack.c.l.b16 %v190
  %v803 = vunpack.c.l.b16 %v191
  %v804 = vunpack.c.l.b16 %v192
  %v805 = vunpack.c.l.b16 %v193
  %v806 = vunpack.c.l.b16 %v194
  %v807 = vunpack.c.l.b16 %v195
  %v808 = vunpack.c.l.b16 %v196
  %v809 = vunpack.c.l.b16 %v197
  %v810 = vunpack.c.l.b16 %v198
  %v811 = vunpack.c.l.b16 %v199
  %v812 = vunpack.c.l.b16 %v200
  %v813 = vunpack.c.l.b16 %v201
  %v814 = vunpack.c.l.b16 %v202
  %v815 = vunpack.c.l.b16 %v203
  %v816 = vunpack.c.l.b16 %v204
  %v817 = vunpack.c.l.b16 %v205
  %v818 = vunpack.c.l.b16 %v206
  %v819 = vunpack.c.l.b16 %v207
  %v820 = vunpack.c.l.b16 %v208
  %v821 = vunpack.c.l.b16 %v209
  %v822 = vunpack.c.l.b16 %v210
  %v823 = vunpack.c.l.b16 %v211
  %v824 = vunpack.c.l.b16 %v212
  %v825 = vunpack.c.l.b16 %v213
  %v826 = vunpack.c.l.b16 %v214
  %v827 = vunpack.c.l.b16 %v215
  %v828 = vunpack.c.l.b16 %v216
  %v829 = vunpack.c.l.b16 %v217
  %v830 = vunpack.c.l.b16 %v218
  %v831 = vunpack.c.l.b16 %v219
  %v832 = vunpack.c.l.b16 %v220
  %v833 = vunpack.c.l.b16 %v221
  %v834 = vunpack.c.l.b16 %v222
  %v835 = vunpack.c.l.b16 %v223
  %v836 = vunpack.c.l.b16 %v224
  %v837 = vunpack.c.l.b16 %v225
  %v838 = vunpack.c.l.b16 %v226
  %v839 = vunpack.c.l.b16 %v227
  %v840 = vunpack.c.l.b16 %v228
  %v841 = vunpack.c.l.b16 %v229
  %v842 = vunpack.c.l.b16 %v230
  %v843 = vunpack.c.l.b16 %v231
  %v844 = vunpack.c.l.b16 %v232
  %v845 = vunpack.c.l.b16 %v233
  %v846 = vunpack.c.l.b16 %v234
  %v847 = vunpack.c.l.b16 %v235
  %v848 = vunpack.c.l.b16 %v236
  %v849 = vunpack.c.l.b16 %v237
  %v850 = vunpack.c.l.b16 %v238
  %v851 = vunpack.c.l.b16 %v239
  %v852 = vunpack.c.l.b16 %v240
  %v853 = vunpack.c.l.b16 %v241
  %v854 = vunpack.c.l.b16 %v242
  %v855 = vunpack.c.l.b16 %v243
  %v856 = vunpack.c.l.b16 %v244
  %v857 = vunpack.c.l.b16 %v245
  %v858 = vunpack.c.l.b16 %v246
  %v859 = vunpack.c.l.b16 %v247
  %v860 = vunpack.c.l.b16 %v248
  %v861 = vunpack.c.l.b16 %v249
  %v862 = vunpack.c.l.b16 %v250
  %v863 = vunpack.c.l.b16 %v251
  %v864 = vunpack.c.l.b16 %v252
  %v865 = vunpack.c.l.b16 %v253
  %v866 = vunpack.c.l.b16 %v254
  %v867 = vunpack.c.l.b16 %v255
  %v868 = vunpack.c.l.b16 %v256
  %v869 = vunpack.c.l.b16 %v257
  %v870 = vunpack.c.l.b16 %v258
  %v871 = vunpack.c.l.b16 %v259
  %v872 = vunpack.c.l.b16 %v260
  %v873 = vunpack.c.l.b16 %v261
  %v874 = vunpack.c.l.b16 %v262
  %v875 = vunpack.c.l.b16 %v263
  %v876 = vunpack.c.l.b16 %v264
  %v877 = vunpack.c.l.b16 %v265
  %v878 = vunpack.c.l.b16 %v266
  %v879 = vunpack.c.l.b16 %v267
  %v880 = vunpack.c.l.b16 %v268
  %v881 = vunpack.c.l.b16 %v269
  %v882 = vunpack.c.l.b16 %v270
  %v883 = vunpack.c.l.b16 %v271
  %v884 = vunpack.c.l.b16 %v272
  %v885 = vunpack.c.l.b16 %v273
  %v886 = vunpack.c.l.b16 %v274
  %v887 = vunpack.c.l.b16 %v275
  %v888 = vunpack.c.l.b16 %v276
  %v889 = vunpack.c.l.b16 %v277
  %v890 = vunpack.c.l.b16 %v278
  %v891 = vunpack.c.l.b16 %v279
  %v892 = vunpack.c.l.b16 %v280
  %v893 = vpack.c.b16 %v663, %v662
  %v894 = vpack.c.b16 %v665, %v664
  %v895 = vpack.c.b16 %v667, %v666
  %v896 = vpack.c.b16 %v669, %v668
  %v897 = vpack.c.b16 %v671, %v670
  %v898 = vpack.c.b16 %v673, %v672
  %v899 = vpack.c.b16 %v675, %v674
  %v900 = vpack.c.b16 %v677, %v676
  %v901 = vpack.c.b16 %v679, %v678
  %v902 = vpack.c.b16 %v681, %v680
  %v903 = vpack.c.b16 %v683, %v682
  %v904 = vpack.c.b16 %v685, %v684
  %v905 = vpack.c.b16 %v687, %v686
  %v906 = vpack.c.b16 %v689, %v688
  %v907 = vpack.c.b16 %v691, %v690
  %v908 = vpack.c.b16 %v693, %v692
  %v909 = vpack.c.b16 %v695, %v694
  %v910 = vpack.c.b16 %v697, %v696
  %v911 = vpack.c.b16 %v699, %v698
  %v912 = vpack.c.b16 %v701, %v700
  %v913 = vpack.c.b16 %v703, %v702
  %v914 = vpack.c.b16 %v705, %v704
  %v915 = vpack.c.b16 %v707, %v706
  %v916 = vpack.c.b16 %v709, %v708
  %v917 = vpack.c.b16 %v711, %v710
  %v918 = vpack.c.b16 %v713, %v712
  %v919 = vpack.c.b16 %v715, %v714
  %v920 = vpack.c.b16 %v717, %v716
  %v921 = vpack.c.b16 %v719, %v718
  %v922 = vpack.c.b16 %v721, %v720
  %v923 = vpack.c.b16 %v723, %v722
  %v924 = vpack.c.b16 %v725, %v724
  %v925 = vpack.c.b16 %v727, %v726
  %v926 = vpack.c.b16 %v729, %v728
  %v927 = vpack.c.b16 %v731, %v730
  %v928 = vpack.c.b16 %v733, %v732
  %v929 = vpack.c.b16 %v735, %v734
  %v930 = vpack.c.b16 %v737, %v736
  %v931 = vpack.c.b16 %v739, %v738
  %v932 = vpack.c.b16 %v741, %v740
  %v933 = vpack.c.b16 %v743, %v742
  %v934 = vpack.c.b16 %v745, %v744
  %v935 = vpack.c.b16 %v747, %v746
  %v936 = vpack.c.b16 %v749, %v748
  %v937 = vpack.c.b16 %v751, %v750
  %v938 = vpack.c.b16 %v753, %v752
  %v939 = vpack.c.b16 %v755, %v754
  %v940 = vpack.c.b16 %v757, %v756
  %v941 = vpack.c.b16 %v759, %v758
  %v942 = vpack.c.b16 %v761, %v760
  %v943 = vpack.c.b16 %v763, %v762
  %v944 = vpack.c.b16 %v765, %v764
  %v945 = vpack.c.b16 %v767, %v766
  %v946 = vpack.c.b16 %v769, %v768
  %v947 = vpack.c.b16 %v771, %v770
  %v948 = vpack.c.b16 %v773, %v772
  %v949 = vpack.c.b16 %v775, %v774
  %v950 = vpack.c.b16 %v777, %v776
  %v951 = vpack.c.b16 %v779, %v778
  %v952 = vpack.c.b16 %v781, %v780
  %v953 = vpack.c.b16 %v783, %v782
  %v954 = vpack.c.b16 %v785, %v784
  %v955 = vpack.c.b16 %v787, %v786
  %v956 = vpack.c.b16 %v789, %v788
  %v957 = vpack.c.b16 %v791, %v790
  %v958 = vpack.c.b16 %v793, %v792
  %v959 = vpack.c.b16 %v795, %v794
  %v960 = vpack.c.b16 %v797, %v796
  %v961 = vpack.c.b16 %v799, %v798
  %v962 = vpack.c.b16 %v801, %v800
  %v963 = vpack.c.b16 %v803, %v802
  %v964 = vpack.c.b16 %v805, %v804
  %v965 = vpack.c.b16 %v807, %v806
  %v966 = vpack.c.b16 %v809, %v808
  %v967 = vpack.c.b16 %v811, %v810
  %v968 = vpack.c.b16 %v813, %v812
  %v969 = vpack.c.b16 %v815, %v814
  %v970 = vpack.c.b16 %v817, %v816
  %v971 = vpack.c.b16 %v819, %v818
  %v972 = vpack.c.b16 %v821, %v820
  %v973 = vpack.c.b16 %v823, %v822
  %v974 = vpack.c.b16 %v825, %v824
  %v975 = vpack.c.b16 %v827, %v826
  %v976 = vpack.c.b16 %v829, %v828
  %v977 = vpack.c.b16 %v831, %v830
  %v978 = vpack.c.b16 %v833, %v832
  %v979 = vpack.c.b16 %v835, %v834
  %v980 = vpack.c.b16 %v837, %v836
  %v981 = vpack.c.b16 %v839, %v838
  %v982 = vpack.c.b16 %v841, %v840
  %v983 = vpack.c.b16 %v843, %v842
  %v984 = vpack.c.b16 %v845, %v844
  %v985 = vpack.c.b16 %v847, %v846
  %v986 = vpack.c.b16 %v849, %v848
  %v987 = vpack.c.b16 %v851, %v850
  %v988 = vpack.c.b16 %v853, %v852
  %v989 = vpack.c.b16 %v855, %v854
  %v990 = vpack.c.b16 %v857, %v856
  %v991 = vpack.c.b16 %v859, %v858
  %v992 = vpack.c.b16 %v861, %v860
  %v993 = vpack.c.b16 %v863, %v862
  %v994 = vpack.c.b16 %v865, %v864
  %v995 = vpack.c.b16 %v867, %v866
  %v996 = vpack.c.b16 %v869, %v868
  %v997 = vpack.c.b16 %v871, %v870
  %v998 = vpack.c.b16 %v873, %v872
  %v999 = vpack.c.b16 %v875, %v874
  %v1000 = vpack.c.b16 %v877, %v876
  %v1001 = vpack.c.b16 %v879, %v878
  %v1002 = vpack.c.b16 %v881, %v880
  %v1003 = vpack.c.b16 %v883, %v882
  %v1004 = vpack.c.b16 %v885, %v884
  %v1005 = vpack.c.b16 %v887, %v886
  %v1006 = vpack.c.b16 %v889, %v888
  %v1007 = vpack.c.b16 %v891, %v890
  %v1008 = vpack.c.b16 %v892, %v892
  %vm1124 = vcmask 457728
  %v1126 = vsel %vm1124, %v387, 0
  %v1129 = vsel %vm1124, %v402, 0
  %vm1131 = vcmask 1043456
  %v1133 = vsel %vm1131, %v1008, 0
  %1135 = vmatprep.subr.bf16.mxu0 0
  %1136 = vmatpush1.bf16.msra.mxu0 %v900
  %1137 = vmatprep.subr.bf16.mxu0 0
  %1138 = vmatpush1.bf16.msra.mxu0 %v899
  %1139 = vmatprep.subr.bf16.mxu0 0
  %1140 = vmatpush1.bf16.msra.mxu0 %v898
  %1141 = vmatprep.subr.bf16.mxu0 0
  %1142 = vmatpush1.bf16.msra.mxu0 %v897
  %1143 = vmatprep.subr.bf16.mxu0 0
  %1144 = vmatpush1.bf16.msra.mxu0 %v896
  %1145 = vmatprep.subr.bf16.mxu0 0
  %1146 = vmatpush1.bf16.msra.mxu0 %v895
  %1147 = vmatprep.subr.bf16.mxu0 0
  %1148 = vmatpush1.bf16.msra.mxu0 %v894
  %1149 = vmatprep.subr.bf16.mxu0 0
  %1150 = vmatpush1.bf16.msra.mxu0 %v893
  %1151 = vmatprep.subr.bf16.mxu0 0
  %1152 = vmatpush2.bf16.msra.mxu0 %v908
  %1153 = vmatprep.subr.bf16.mxu0 0
  %1154 = vmatpush2.bf16.msra.mxu0 %v907
  %1155 = vmatprep.subr.bf16.mxu0 0
  %1156 = vmatpush2.bf16.msra.mxu0 %v906
  %1157 = vmatprep.subr.bf16.mxu0 0
  %1158 = vmatpush2.bf16.msra.mxu0 %v905
  %1159 = vmatprep.subr.bf16.mxu0 0
  %1160 = vmatpush2.bf16.msra.mxu0 %v904
  %1161 = vmatprep.subr.bf16.mxu0 0
  %1162 = vmatpush2.bf16.msra.mxu0 %v903
  %1163 = vmatprep.subr.bf16.mxu0 0
  %1164 = vmatpush2.bf16.msra.mxu0 %v902
  %1165 = vmatprep.subr.bf16.mxu0 0
  %1166 = vmatpush2.bf16.msra.mxu0 %v901
  %1167 = vmatprep.mubr.bf16.mxu0 %v374
  %1168 = vmatmul.mubr.bf16.gmra.mxu0 %v373
  %v1169 = vpop.f32.mrf.mxu0
  %v1170 = vadd.f32 0.0, %v1169
  %v1171 = vpop.f32.mrf.mxu0
  %v1172 = vpop.f32.mrf.mxu0
  %v1173 = vadd.f32 0.0, %v1172
  %v1174 = vpop.f32.mrf.mxu0
  %1175 = vmatprep.mubr.bf16.mxu0 %v389
  %1176 = vmatmul.mubr.bf16.gmra.mxu0 %v388
  %v1177 = vpop.f32.mrf.mxu0
  %v1178 = vadd.f32 0.0, %v1177
  %v1179 = vpop.f32.mrf.mxu0
  %v1180 = vpop.f32.mrf.mxu0
  %v1181 = vadd.f32 0.0, %v1180
  %v1182 = vpop.f32.mrf.mxu0
  %1183 = vdwg.mxu0
  %1184 = vmatprep.subr.bf16.mxu0 0
  %1185 = vmatpush1.bf16.msra.mxu0 %v916
  %1186 = vmatprep.subr.bf16.mxu0 0
  %1187 = vmatpush1.bf16.msra.mxu0 %v915
  %1188 = vmatprep.subr.bf16.mxu0 0
  %1189 = vmatpush1.bf16.msra.mxu0 %v914
  %1190 = vmatprep.subr.bf16.mxu0 0
  %1191 = vmatpush1.bf16.msra.mxu0 %v913
  %1192 = vmatprep.subr.bf16.mxu0 0
  %1193 = vmatpush1.bf16.msra.mxu0 %v912
  %1194 = vmatprep.subr.bf16.mxu0 0
  %1195 = vmatpush1.bf16.msra.mxu0 %v911
  %1196 = vmatprep.subr.bf16.mxu0 0
  %1197 = vmatpush1.bf16.msra.mxu0 %v910
  %1198 = vmatprep.subr.bf16.mxu0 0
  %1199 = vmatpush1.bf16.msra.mxu0 %v909
  %1200 = vmatprep.subr.bf16.mxu0 0
  %1201 = vmatpush2.bf16.msra.mxu0 %v924
  %1202 = vmatprep.subr.bf16.mxu0 0
  %1203 = vmatpush2.bf16.msra.mxu0 %v923
  %1204 = vmatprep.subr.bf16.mxu0 0
  %1205 = vmatpush2.bf16.msra.mxu0 %v922
  %1206 = vmatprep.subr.bf16.mxu0 0
  %1207 = vmatpush2.bf16.msra.mxu0 %v921
  %1208 = vmatprep.subr.bf16.mxu0 0
  %1209 = vmatpush2.bf16.msra.mxu0 %v920
  %1210 = vmatprep.subr.bf16.mxu0 0
  %1211 = vmatpush2.bf16.msra.mxu0 %v919
  %1212 = vmatprep.subr.bf16.mxu0 0
  %1213 = vmatpush2.bf16.msra.mxu0 %v918
  %1214 = vmatprep.subr.bf16.mxu0 0
  %1215 = vmatpush2.bf16.msra.mxu0 %v917
  %1216 = vmatprep.mubr.bf16.mxu0 %v376
  %1217 = vmatmul.mubr.bf16.gmra.mxu0 %v375
  %v1218 = vpop.f32.mrf.mxu0
  %v1219 = vadd.f32 %v1170, %v1218
  %v1220 = vpop.f32.mrf.mxu0
  %v1221 = vpop.f32.mrf.mxu0
  %v1222 = vadd.f32 %v1173, %v1221
  %v1223 = vpop.f32.mrf.mxu0
  %1224 = vmatprep.mubr.bf16.mxu0 %v391
  %1225 = vmatmul.mubr.bf16.gmra.mxu0 %v390
  %v1226 = vpop.f32.mrf.mxu0
  %v1227 = vadd.f32 %v1178, %v1226
  %v1228 = vpop.f32.mrf.mxu0
  %v1229 = vpop.f32.mrf.mxu0
  %v1230 = vadd.f32 %v1181, %v1229
  %v1231 = vpop.f32.mrf.mxu0
  %1232 = vdwg.mxu0
  %1233 = vmatprep.subr.bf16.mxu0 0
  %1234 = vmatpush1.bf16.msra.mxu0 %v932
  %1235 = vmatprep.subr.bf16.mxu0 0
  %1236 = vmatpush1.bf16.msra.mxu0 %v931
  %1237 = vmatprep.subr.bf16.mxu0 0
  %1238 = vmatpush1.bf16.msra.mxu0 %v930
  %1239 = vmatprep.subr.bf16.mxu0 0
  %1240 = vmatpush1.bf16.msra.mxu0 %v929
  %1241 = vmatprep.subr.bf16.mxu0 0
  %1242 = vmatpush1.bf16.msra.mxu0 %v928
  %1243 = vmatprep.subr.bf16.mxu0 0
  %1244 = vmatpush1.bf16.msra.mxu0 %v927
  %1245 = vmatprep.subr.bf16.mxu0 0
  %1246 = vmatpush1.bf16.msra.mxu0 %v926
  %1247 = vmatprep.subr.bf16.mxu0 0
  %1248 = vmatpush1.bf16.msra.mxu0 %v925
  %1249 = vmatprep.subr.bf16.mxu0 0
  %1250 = vmatpush2.bf16.msra.mxu0 %v940
  %1251 = vmatprep.subr.bf16.mxu0 0
  %1252 = vmatpush2.bf16.msra.mxu0 %v939
  %1253 = vmatprep.subr.bf16.mxu0 0
  %1254 = vmatpush2.bf16.msra.mxu0 %v938
  %1255 = vmatprep.subr.bf16.mxu0 0
  %1256 = vmatpush2.bf16.msra.mxu0 %v937
  %1257 = vmatprep.subr.bf16.mxu0 0
  %1258 = vmatpush2.bf16.msra.mxu0 %v936
  %1259 = vmatprep.subr.bf16.mxu0 0
  %1260 = vmatpush2.bf16.msra.mxu0 %v935
  %1261 = vmatprep.subr.bf16.mxu0 0
  %1262 = vmatpush2.bf16.msra.mxu0 %v934
  %1263 = vmatprep.subr.bf16.mxu0 0
  %1264 = vmatpush2.bf16.msra.mxu0 %v933
  %1265 = vmatprep.mubr.bf16.mxu0 %v378
  %1266 = vmatmul.mubr.bf16.gmra.mxu0 %v377
  %v1267 = vpop.f32.mrf.mxu0
  %v1268 = vadd.f32 %v1219, %v1267
  %v1269 = vpop.f32.mrf.mxu0
  %v1270 = vpop.f32.mrf.mxu0
  %v1271 = vadd.f32 %v1222, %v1270
  %v1272 = vpop.f32.mrf.mxu0
  %1273 = vmatprep.mubr.bf16.mxu0 %v393
  %1274 = vmatmul.mubr.bf16.gmra.mxu0 %v392
  %v1275 = vpop.f32.mrf.mxu0
  %v1276 = vadd.f32 %v1227, %v1275
  %v1277 = vpop.f32.mrf.mxu0
  %v1278 = vpop.f32.mrf.mxu0
  %v1279 = vadd.f32 %v1230, %v1278
  %v1280 = vpop.f32.mrf.mxu0
  %1281 = vdwg.mxu0
  %1282 = vmatprep.subr.bf16.mxu0 0
  %1283 = vmatpush1.bf16.msra.mxu0 %v948
  %1284 = vmatprep.subr.bf16.mxu0 0
  %1285 = vmatpush1.bf16.msra.mxu0 %v947
  %1286 = vmatprep.subr.bf16.mxu0 0
  %1287 = vmatpush1.bf16.msra.mxu0 %v946
  %1288 = vmatprep.subr.bf16.mxu0 0
  %1289 = vmatpush1.bf16.msra.mxu0 %v945
  %1290 = vmatprep.subr.bf16.mxu0 0
  %1291 = vmatpush1.bf16.msra.mxu0 %v944
  %1292 = vmatprep.subr.bf16.mxu0 0
  %1293 = vmatpush1.bf16.msra.mxu0 %v943
  %1294 = vmatprep.subr.bf16.mxu0 0
  %1295 = vmatpush1.bf16.msra.mxu0 %v942
  %1296 = vmatprep.subr.bf16.mxu0 0
  %1297 = vmatpush1.bf16.msra.mxu0 %v941
  %1298 = vmatprep.subr.bf16.mxu0 0
  %1299 = vmatpush2.bf16.msra.mxu0 %v956
  %1300 = vmatprep.subr.bf16.mxu0 0
  %1301 = vmatpush2.bf16.msra.mxu0 %v955
  %1302 = vmatprep.subr.bf16.mxu0 0
  %1303 = vmatpush2.bf16.msra.mxu0 %v954
  %1304 = vmatprep.subr.bf16.mxu0 0
  %1305 = vmatpush2.bf16.msra.mxu0 %v953
  %1306 = vmatprep.subr.bf16.mxu0 0
  %1307 = vmatpush2.bf16.msra.mxu0 %v952
  %1308 = vmatprep.subr.bf16.mxu0 0
  %1309 = vmatpush2.bf16.msra.mxu0 %v951
  %1310 = vmatprep.subr.bf16.mxu0 0
  %1311 = vmatpush2.bf16.msra.mxu0 %v950
  %1312 = vmatprep.subr.bf16.mxu0 0
  %1313 = vmatpush2.bf16.msra.mxu0 %v949
  %1314 = vmatprep.mubr.bf16.mxu0 %v380
  %1315 = vmatmul.mubr.bf16.gmra.mxu0 %v379
  %v1316 = vpop.f32.mrf.mxu0
  %v1317 = vadd.f32 %v1268, %v1316
  %v1318 = vpop.f32.mrf.mxu0
  %v1319 = vpop.f32.mrf.mxu0
  %v1320 = vadd.f32 %v1271, %v1319
  %v1321 = vpop.f32.mrf.mxu0
  %1322 = vmatprep.mubr.bf16.mxu0 %v395
  %1323 = vmatmul.mubr.bf16.gmra.mxu0 %v394
  %v1324 = vpop.f32.mrf.mxu0
  %v1325 = vadd.f32 %v1276, %v1324
  %v1326 = vpop.f32.mrf.mxu0
  %v1327 = vpop.f32.mrf.mxu0
  %v1328 = vadd.f32 %v1279, %v1327
  %v1329 = vpop.f32.mrf.mxu0
  %1330 = vdwg.mxu0
  %1331 = vmatprep.subr.bf16.mxu0 0
  %1332 = vmatpush1.bf16.msra.mxu0 %v964
  %1333 = vmatprep.subr.bf16.mxu0 0
  %1334 = vmatpush1.bf16.msra.mxu0 %v963
  %1335 = vmatprep.subr.bf16.mxu0 0
  %1336 = vmatpush1.bf16.msra.mxu0 %v962
  %1337 = vmatprep.subr.bf16.mxu0 0
  %1338 = vmatpush1.bf16.msra.mxu0 %v961
  %1339 = vmatprep.subr.bf16.mxu0 0
  %1340 = vmatpush1.bf16.msra.mxu0 %v960
  %1341 = vmatprep.subr.bf16.mxu0 0
  %1342 = vmatpush1.bf16.msra.mxu0 %v959
  %1343 = vmatprep.subr.bf16.mxu0 0
  %1344 = vmatpush1.bf16.msra.mxu0 %v958
  %1345 = vmatprep.subr.bf16.mxu0 0
  %1346 = vmatpush1.bf16.msra.mxu0 %v957
  %1347 = vmatprep.subr.bf16.mxu0 0
  %1348 = vmatpush2.bf16.msra.mxu0 %v972
  %1349 = vmatprep.subr.bf16.mxu0 0
  %1350 = vmatpush2.bf16.msra.mxu0 %v971
  %1351 = vmatprep.subr.bf16.mxu0 0
  %1352 = vmatpush2.bf16.msra.mxu0 %v970
  %1353 = vmatprep.subr.bf16.mxu0 0
  %1354 = vmatpush2.bf16.msra.mxu0 %v969
  %1355 = vmatprep.subr.bf16.mxu0 0
  %1356 = vmatpush2.bf16.msra.mxu0 %v968
  %1357 = vmatprep.subr.bf16.mxu0 0
  %1358 = vmatpush2.bf16.msra.mxu0 %v967
  %1359 = vmatprep.subr.bf16.mxu0 0
  %1360 = vmatpush2.bf16.msra.mxu0 %v966
  %1361 = vmatprep.subr.bf16.mxu0 0
  %1362 = vmatpush2.bf16.msra.mxu0 %v965
  %1363 = vmatprep.mubr.bf16.mxu0 %v382
  %1364 = vmatmul.mubr.bf16.gmra.mxu0 %v381
  %v1365 = vpop.f32.mrf.mxu0
  %v1366 = vadd.f32 %v1317, %v1365
  %v1367 = vpop.f32.mrf.mxu0
  %v1368 = vpop.f32.mrf.mxu0
  %v1369 = vadd.f32 %v1320, %v1368
  %v1370 = vpop.f32.mrf.mxu0
  %1371 = vmatprep.mubr.bf16.mxu0 %v397
  %1372 = vmatmul.mubr.bf16.gmra.mxu0 %v396
  %v1373 = vpop.f32.mrf.mxu0
  %v1374 = vadd.f32 %v1325, %v1373
  %v1375 = vpop.f32.mrf.mxu0
  %v1376 = vpop.f32.mrf.mxu0
  %v1377 = vadd.f32 %v1328, %v1376
  %v1378 = vpop.f32.mrf.mxu0
  %1379 = vdwg.mxu0
  %1380 = vmatprep.subr.bf16.mxu0 0
  %1381 = vmatpush1.bf16.msra.mxu0 %v980
  %1382 = vmatprep.subr.bf16.mxu0 0
  %1383 = vmatpush1.bf16.msra.mxu0 %v979
  %1384 = vmatprep.subr.bf16.mxu0 0
  %1385 = vmatpush1.bf16.msra.mxu0 %v978
  %1386 = vmatprep.subr.bf16.mxu0 0
  %1387 = vmatpush1.bf16.msra.mxu0 %v977
  %1388 = vmatprep.subr.bf16.mxu0 0
  %1389 = vmatpush1.bf16.msra.mxu0 %v976
  %1390 = vmatprep.subr.bf16.mxu0 0
  %1391 = vmatpush1.bf16.msra.mxu0 %v975
  %1392 = vmatprep.subr.bf16.mxu0 0
  %1393 = vmatpush1.bf16.msra.mxu0 %v974
  %1394 = vmatprep.subr.bf16.mxu0 0
  %1395 = vmatpush1.bf16.msra.mxu0 %v973
  %1396 = vmatprep.subr.bf16.mxu0 0
  %1397 = vmatpush2.bf16.msra.mxu0 %v988
  %1398 = vmatprep.subr.bf16.mxu0 0
  %1399 = vmatpush2.bf16.msra.mxu0 %v987
  %1400 = vmatprep.subr.bf16.mxu0 0
  %1401 = vmatpush2.bf16.msra.mxu0 %v986
  %1402 = vmatprep.subr.bf16.mxu0 0
  %1403 = vmatpush2.bf16.msra.mxu0 %v985
  %1404 = vmatprep.subr.bf16.mxu0 0
  %1405 = vmatpush2.bf16.msra.mxu0 %v984
  %1406 = vmatprep.subr.bf16.mxu0 0
  %1407 = vmatpush2.bf16.msra.mxu0 %v983
  %1408 = vmatprep.subr.bf16.mxu0 0
  %1409 = vmatpush2.bf16.msra.mxu0 %v982
  %1410 = vmatprep.subr.bf16.mxu0 0
  %1411 = vmatpush2.bf16.msra.mxu0 %v981
  %1412 = vmatprep.mubr.bf16.mxu0 %v384
  %1413 = vmatmul.mubr.bf16.gmra.mxu0 %v383
  %v1414 = vpop.f32.mrf.mxu0
  %v1415 = vadd.f32 %v1366, %v1414
  %v1416 = vpop.f32.mrf.mxu0
  %v1417 = vpop.f32.mrf.mxu0
  %v1418 = vadd.f32 %v1369, %v1417
  %v1419 = vpop.f32.mrf.mxu0
  %1420 = vmatprep.mubr.bf16.mxu0 %v399
  %1421 = vmatmul.mubr.bf16.gmra.mxu0 %v398
  %v1422 = vpop.f32.mrf.mxu0
  %v1423 = vadd.f32 %v1374, %v1422
  %v1424 = vpop.f32.mrf.mxu0
  %v1425 = vpop.f32.mrf.mxu0
  %v1426 = vadd.f32 %v1377, %v1425
  %v1427 = vpop.f32.mrf.mxu0
  %1428 = vdwg.mxu0
  %1429 = vmatprep.subr.bf16.mxu0 0
  %1430 = vmatpush1.bf16.msra.mxu0 %v996
  %1431 = vmatprep.subr.bf16.mxu0 0
  %1432 = vmatpush1.bf16.msra.mxu0 %v995
  %1433 = vmatprep.subr.bf16.mxu0 0
  %1434 = vmatpush1.bf16.msra.mxu0 %v994
  %1435 = vmatprep.subr.bf16.mxu0 0
  %1436 = vmatpush1.bf16.msra.mxu0 %v993
  %1437 = vmatprep.subr.bf16.mxu0 0
  %1438 = vmatpush1.bf16.msra.mxu0 %v992
  %1439 = vmatprep.subr.bf16.mxu0 0
  %1440 = vmatpush1.bf16.msra.mxu0 %v991
  %1441 = vmatprep.subr.bf16.mxu0 0
  %1442 = vmatpush1.bf16.msra.mxu0 %v990
  %1443 = vmatprep.subr.bf16.mxu0 0
  %1444 = vmatpush1.bf16.msra.mxu0 %v989
  %1445 = vmatprep.subr.bf16.mxu0 0
  %1446 = vmatpush2.bf16.msra.mxu0 %v1004
  %1447 = vmatprep.subr.bf16.mxu0 0
  %1448 = vmatpush2.bf16.msra.mxu0 %v1003
  %1449 = vmatprep.subr.bf16.mxu0 0
  %1450 = vmatpush2.bf16.msra.mxu0 %v1002
  %1451 = vmatprep.subr.bf16.mxu0 0
  %1452 = vmatpush2.bf16.msra.mxu0 %v1001
  %1453 = vmatprep.subr.bf16.mxu0 0
  %1454 = vmatpush2.bf16.msra.mxu0 %v1000
  %1455 = vmatprep.subr.bf16.mxu0 0
  %1456 = vmatpush2.bf16.msra.mxu0 %v999
  %1457 = vmatprep.subr.bf16.mxu0 0
  %1458 = vmatpush2.bf16.msra.mxu0 %v998
  %1459 = vmatprep.subr.bf16.mxu0 0
  %1460 = vmatpush2.bf16.msra.mxu0 %v997
  %1461 = vmatprep.mubr.bf16.mxu0 %v386
  %1462 = vmatmul.mubr.bf16.gmra.mxu0 %v385
  %v1463 = vpop.f32.mrf.mxu0
  %v1464 = vadd.f32 %v1415, %v1463
  %v1465 = vpop.f32.mrf.mxu0
  %v1466 = vpop.f32.mrf.mxu0
  %v1467 = vadd.f32 %v1418, %v1466
  %v1468 = vpop.f32.mrf.mxu0
  %1469 = vmatprep.mubr.bf16.mxu0 %v401
  %1470 = vmatmul.mubr.bf16.gmra.mxu0 %v400
  %v1471 = vpop.f32.mrf.mxu0
  %v1472 = vadd.f32 %v1423, %v1471
  %v1473 = vpop.f32.mrf.mxu0
  %v1474 = vpop.f32.mrf.mxu0
  %v1475 = vadd.f32 %v1426, %v1474
  %v1476 = vpop.f32.mrf.mxu0
  %1477 = vdwg.mxu0
  %1478 = vmatprep.subr.bf16.mxu0 0
  %1479 = vmatpush1.bf16.msra.mxu0 0
  %1480 = vmatprep.subr.bf16.mxu0 0
  %1481 = vmatpush1.bf16.msra.mxu0 0
  %1482 = vmatprep.subr.bf16.mxu0 0
  %1483 = vmatpush1.bf16.msra.mxu0 0
  %1484 = vmatprep.subr.bf16.mxu0 0
  %1485 = vmatpush1.bf16.msra.mxu0 0
  %1486 = vmatprep.subr.bf16.mxu0 0
  %1487 = vmatpush1.bf16.msra.mxu0 %v1133
  %1488 = vmatprep.subr.bf16.mxu0 0
  %1489 = vmatpush1.bf16.msra.mxu0 %v1007
  %1490 = vmatprep.subr.bf16.mxu0 0
  %1491 = vmatpush1.bf16.msra.mxu0 %v1006
  %1492 = vmatprep.subr.bf16.mxu0 0
  %1493 = vmatpush1.bf16.msra.mxu0 %v1005
  %1494 = vmatprep.subr.bf16.mxu0 0
  %1495 = vmatpush2.bf16.msra.mxu0 0
  %1496 = vmatprep.subr.bf16.mxu0 0
  %1497 = vmatpush2.bf16.msra.mxu0 0
  %1498 = vmatprep.subr.bf16.mxu0 0
  %1499 = vmatpush2.bf16.msra.mxu0 0
  %1500 = vmatprep.subr.bf16.mxu0 0
  %1501 = vmatpush2.bf16.msra.mxu0 0
  %1502 = vmatprep.subr.bf16.mxu0 0
  %1503 = vmatpush2.bf16.msra.mxu0 0
  %1504 = vmatprep.subr.bf16.mxu0 0
  %1505 = vmatpush2.bf16.msra.mxu0 0
  %1506 = vmatprep.subr.bf16.mxu0 0
  %1507 = vmatpush2.bf16.msra.mxu0 0
  %1508 = vmatprep.subr.bf16.mxu0 0
  %1509 = vmatpush2.bf16.msra.mxu0 0
  %1510 = vmatprep.mubr.bf16.mxu0 0
  %1511 = vmatmul.mubr.bf16.gmra.mxu0 %v1126
  %v1512 = vpop.f32.mrf.mxu0
  %v1513 = vadd.f32 %v1464, %v1512
  %v1514 = vpop.f32.mrf.mxu0
  %v1515 = vpop.f32.mrf.mxu0
  %v1516 = vadd.f32 %v1467, %v1515
  %v1517 = vpop.f32.mrf.mxu0
  %1518 = vmatprep.mubr.bf16.mxu0 0
  %1519 = vmatmul.mubr.bf16.gmra.mxu0 %v1129
  %v1520 = vpop.f32.mrf.mxu0
  %v1521 = vadd.f32 %v1472, %v1520
  %v1522 = vpop.f32.mrf.mxu0
  %v1523 = vpop.f32.mrf.mxu0
  %v1524 = vadd.f32 %v1475, %v1523
  %v1525 = vpop.f32.mrf.mxu0
  %1526 = vdwg.mxu0
  %v1527 = vld [vmem:[%s2] sm:$0x1]
  %v1529 = vlaneseq
  %v1530 = vshrl.u32 %v1529, 7
  %v1531 = vsub.s32 0, %v1530
  %v1532 = vrot.slane %v1527, %v1531
  %v1534 = vmul.f32 %v1513, %v1532
  %v1535 = vmul.f32 %v1516, %v1532
  %v1536 = vmul.f32 %v1521, %v1532
  %v1537 = vmul.f32 %v1524, %v1532
  %v1538 = vld [vmem:[%s3] sm:$0x1]
  %v1540 = vlaneseq
  %v1541 = vshrl.u32 %v1540, 7
  %v1542 = vsub.s32 0, %v1541
  %v1543 = vrot.slane %v1538, %v1542
  %v1545 = vadd.f32 %v1534, %v1543
  %v1546 = vadd.f32 %v1535, %v1543
  %v1547 = vadd.f32 %v1536, %v1543
  %v1548 = vadd.f32 %v1537, %v1543
  %v1549 = vmax.f32 %v1545, 0.0
  %v1550 = vmax.f32 %v1546, 0.0
  %v1551 = vmax.f32 %v1547, 0.0
  %v1552 = vmax.f32 %v1548, 0.0
  %v1553 = vmin.f32 %v1549, 20.0
  %v1554 = vmin.f32 %v1550, 20.0
  %v1555 = vmin.f32 %v1551, 20.0
  %v1556 = vmin.f32 %v1552, 20.0
  %v1557 = vpack.c.bf16 %v1554, %v1553
  %v1558 = vpack.c.bf16 %v1556, %v1555
  %v1561 = vunpack.c.l.b16 %v1557
  %v1562 = vunpack.c.h.b16 %v1557
  %v1563 = vunpack.c.l.b16 %v1558
  %v1564 = vunpack.c.h.b16 %v1558
  %v1565 = vpack.c.b16 %v1561, %v1561
  %v1566 = vpack.c.b16 %v1562, %v1562
  %v1567 = vpack.c.b16 %v1563, %v1563
  %v1568 = vpack.c.b16 %v1564, %v1564
  %vm1573 = vcmask 60416
  %1574 = vst.msk [vmem:[%s4] sm:$0xf] %vm1573, %v1565
  %1575 = vst.msk [vmem:[%s4 + $0x4] sm:$0xf] %vm1573, %v1566
  %1576 = vst.msk [vmem:[%s4 + $0x8] sm:$0xf] %vm1573, %v1567
  %1577 = vst.msk [vmem:[%s4 + $0xc] sm:$0xf] %vm1573, %v1568
  // Predicated region
  $region18: #{deepspeech2_forward.7} parent=0 // pred_check
    _
  $region19: #{deepspeech2_forward.7} parent=0 // pred_check_branch
    %1579 = sbr.rel (0) target = $region21
  $region20: #{deepspeech2_forward.7} parent=0 // pred_region
    _
  $region21: #{deepspeech2_forward.7} parent=0 // pred_fallthru
    _
  // Predicated region
  $region22: #{deepspeech2_forward.7} parent=0 // pred_check
    _
  $region23: #{deepspeech2_forward.7} parent=0 // pred_check_branch
    %1581 = sbr.rel (0) target = $region25
  $region24: #{deepspeech2_forward.7} parent=0 // pred_region
    _
  $region25: #{deepspeech2_forward.7} parent=0 // pred_fallthru
    _

// kernel: deepspeech2_forward.8
$region0: #{deepspeech2_forward.8}
  #allocation0 [shape = 'u32[]', space=smem, size = 0x4, offset = 0x4, fixed_abs, tag = 'smem constant byte address 0x4 - core index']
  #allocation1 [shape = 'u32[144,128]{1,0:T(1,128)}', space=vmem, size = 0x12000, scoped, tag = 'internal scratch']
  %s0 = inlined_call_operand.vmem [shape: bf16[16,1848], index: 0, kind: input, shape index: {}]
  %s1 = inlined_call_operand.vmem [shape: bf16[1848,8], index: 1, kind: input, shape index: {}]
  %s2 = inlined_call_operand.vmem [shape: f32[1,8], index: 2, kind: input, shape index: {}]
  %s3 = inlined_call_operand.vmem [shape: f32[1,8], index: 3, kind: input, shape index: {}]
  %s4 = inlined_call_operand.vmem [shape: bf16[16,8], index: 4, kind: output, shape index: {}]
  %s5 = sld [smem:[#allocation0]]
  $region26: #{deepspeech2_forward.8} parent=0
    _
  %s7 = ssub.s32 1, %s5
  %s8 = scalar_select 0, %s7, %s5
  // Predicated region
  $region2: #{deepspeech2_forward.8} parent=0 // pred_check
    _
  $region3: #{deepspeech2_forward.8} parent=0 // pred_check_branch
    %10 = sbr.rel (0) target = $region5
  $region4: #{deepspeech2_forward.8} parent=0 // pred_region
    _
  $region5: #{deepspeech2_forward.8} parent=0 // pred_fallthru
    _
  // Predicated region
  $region6: #{deepspeech2_forward.8} parent=0 // pred_check
    _
  $region7: #{deepspeech2_forward.8} parent=0 // pred_check_branch
    %12 = sbr.rel (0) target = $region9
  $region8: #{deepspeech2_forward.8} parent=0 // pred_region
    _
  $region9: #{deepspeech2_forward.8} parent=0 // pred_fallthru
    _
  // Predicated region
  $region10: #{deepspeech2_forward.8} parent=0 // pred_check
    _
  $region11: #{deepspeech2_forward.8} parent=0 // pred_check_branch
    %14 = sbr.rel (0) target = $region13
  $region12: #{deepspeech2_forward.8} parent=0 // pred_region
    _
  $region13: #{deepspeech2_forward.8} parent=0 // pred_fallthru
    _
  // Predicated region
  $region14: #{deepspeech2_forward.8} parent=0 // pred_check
    _
  $region15: #{deepspeech2_forward.8} parent=0 // pred_check_branch
    %16 = sbr.rel (0) target = $region17
  $region16: #{deepspeech2_forward.8} parent=0 // pred_region
    _
  $region17: #{deepspeech2_forward.8} parent=0 // pred_fallthru
    _
  %v18 = vld [vmem:[%s0] sm:$0xff]
  %v19 = vld [vmem:[%s0 + $0x8] sm:$0xff]
  %v20 = vld [vmem:[%s0 + $0x10] sm:$0xff]
  %v21 = vld [vmem:[%s0 + $0x18] sm:$0xff]
  %v22 = vld [vmem:[%s0 + $0x20] sm:$0xff]
  %v23 = vld [vmem:[%s0 + $0x28] sm:$0xff]
  %v24 = vld [vmem:[%s0 + $0x30] sm:$0xff]
  %v25 = vld [vmem:[%s0 + $0x38] sm:$0xf]
  %v26 = vld [vmem:[%s0 + $0x3c] sm:$0xff]
  %v27 = vld [vmem:[%s0 + $0x44] sm:$0xff]
  %v28 = vld [vmem:[%s0 + $0x4c] sm:$0xff]
  %v29 = vld [vmem:[%s0 + $0x54] sm:$0xff]
  %v30 = vld [vmem:[%s0 + $0x5c] sm:$0xff]
  %v31 = vld [vmem:[%s0 + $0x64] sm:$0xff]
  %v32 = vld [vmem:[%s0 + $0x6c] sm:$0xff]
  %v33 = vld [vmem:[%s0 + $0x74] sm:$0xf]
  %v34 = vld [vmem:[%s1] sm:$0xf]
  %v35 = vld [vmem:[%s1 + $0x4] sm:$0xf]
  %v36 = vld [vmem:[%s1 + $0x8] sm:$0xf]
  %v37 = vld [vmem:[%s1 + $0xc] sm:$0xf]
  %v38 = vld [vmem:[%s1 + $0x10] sm:$0xf]
  %v39 = vld [vmem:[%s1 + $0x14] sm:$0xf]
  %v40 = vld [vmem:[%s1 + $0x18] sm:$0xf]
  %v41 = vld [vmem:[%s1 + $0x1c] sm:$0xf]
  %v42 = vld [vmem:[%s1 + $0x20] sm:$0xf]
  %v43 = vld [vmem:[%s1 + $0x24] sm:$0xf]
  %v44 = vld [vmem:[%s1 + $0x28] sm:$0xf]
  %v45 = vld [vmem:[%s1 + $0x2c] sm:$0xf]
  %v46 = vld [vmem:[%s1 + $0x30] sm:$0xf]
  %v47 = vld [vmem:[%s1 + $0x34] sm:$0xf]
  %v48 = vld [vmem:[%s1 + $0x38] sm:$0xf]
  %v49 = vld [vmem:[%s1 + $0x3c] sm:$0xf]
  %v50 = vld [vmem:[%s1 + $0x40] sm:$0xf]
  %v51 = vld [vmem:[%s1 + $0x44] sm:$0xf]
  %v52 = vld [vmem:[%s1 + $0x48] sm:$0xf]
  %v53 = vld [vmem:[%s1 + $0x4c] sm:$0xf]
  %v54 = vld [vmem:[%s1 + $0x50] sm:$0xf]
  %v55 = vld [vmem:[%s1 + $0x54] sm:$0xf]
  %v56 = vld [vmem:[%s1 + $0x58] sm:$0xf]
  %v57 = vld [vmem:[%s1 + $0x5c] sm:$0xf]
  %v58 = vld [vmem:[%s1 + $0x60] sm:$0xf]
  %v59 = vld [vmem:[%s1 + $0x64] sm:$0xf]
  %v60 = vld [vmem:[%s1 + $0x68] sm:$0xf]
  %v61 = vld [vmem:[%s1 + $0x6c] sm:$0xf]
  %v62 = vld [vmem:[%s1 + $0x70] sm:$0xf]
  %v63 = vld [vmem:[%s1 + $0x74] sm:$0xf]
  %v64 = vld [vmem:[%s1 + $0x78] sm:$0xf]
  %v65 = vld [vmem:[%s1 + $0x7c] sm:$0xf]
  %v66 = vld [vmem:[%s1 + $0x80] sm:$0xf]
  %v67 = vld [vmem:[%s1 + $0x84] sm:$0xf]
  %v68 = vld [vmem:[%s1 + $0x88] sm:$0xf]
  %v69 = vld [vmem:[%s1 + $0x8c] sm:$0xf]
  %v70 = vld [vmem:[%s1 + $0x90] sm:$0xf]
  %v71 = vld [vmem:[%s1 + $0x94] sm:$0xf]
  %v72 = vld [vmem:[%s1 + $0x98] sm:$0xf]
  %v73 = vld [vmem:[%s1 + $0x9c] sm:$0xf]
  %v74 = vld [vmem:[%s1 + $0xa0] sm:$0xf]
  %v75 = vld [vmem:[%s1 + $0xa4] sm:$0xf]
  %v76 = vld [vmem:[%s1 + $0xa8] sm:$0xf]
  %v77 = vld [vmem:[%s1 + $0xac] sm:$0xf]
  %v78 = vld [vmem:[%s1 + $0xb0] sm:$0xf]
  %v79 = vld [vmem:[%s1 + $0xb4] sm:$0xf]
  %v80 = vld [vmem:[%s1 + $0xb8] sm:$0xf]
  %v81 = vld [vmem:[%s1 + $0xbc] sm:$0xf]
  %v82 = vld [vmem:[%s1 + $0xc0] sm:$0xf]
  %v83 = vld [vmem:[%s1 + $0xc4] sm:$0xf]
  %v84 = vld [vmem:[%s1 + $0xc8] sm:$0xf]
  %v85 = vld [vmem:[%s1 + $0xcc] sm:$0xf]
  %v86 = vld [vmem:[%s1 + $0xd0] sm:$0xf]
  %v87 = vld [vmem:[%s1 + $0xd4] sm:$0xf]
  %v88 = vld [vmem:[%s1 + $0xd8] sm:$0xf]
  %v89 = vld [vmem:[%s1 + $0xdc] sm:$0xf]
  %v90 = vld [vmem:[%s1 + $0xe0] sm:$0xf]
  %v91 = vld [vmem:[%s1 + $0xe4] sm:$0xf]
  %v92 = vld [vmem:[%s1 + $0xe8] sm:$0xf]
  %v93 = vld [vmem:[%s1 + $0xec] sm:$0xf]
  %v94 = vld [vmem:[%s1 + $0xf0] sm:$0xf]
  %v95 = vld [vmem:[%s1 + $0xf4] sm:$0xf]
  %v96 = vld [vmem:[%s1 + $0xf8] sm:$0xf]
  %v97 = vld [vmem:[%s1 + $0xfc] sm:$0xf]
  %v98 = vld [vmem:[%s1 + $0x100] sm:$0xf]
  %v99 = vld [vmem:[%s1 + $0x104] sm:$0xf]
  %v100 = vld [vmem:[%s1 + $0x108] sm:$0xf]
  %v101 = vld [vmem:[%s1 + $0x10c] sm:$0xf]
  %v102 = vld [vmem:[%s1 + $0x110] sm:$0xf]
  %v103 = vld [vmem:[%s1 + $0x114] sm:$0xf]
  %v104 = vld [vmem:[%s1 + $0x118] sm:$0xf]
  %v105 = vld [vmem:[%s1 + $0x11c] sm:$0xf]
  %v106 = vld [vmem:[%s1 + $0x120] sm:$0xf]
  %v107 = vld [vmem:[%s1 + $0x124] sm:$0xf]
  %v108 = vld [vmem:[%s1 + $0x128] sm:$0xf]
  %v109 = vld [vmem:[%s1 + $0x12c] sm:$0xf]
  %v110 = vld [vmem:[%s1 + $0x130] sm:$0xf]
  %v111 = vld [vmem:[%s1 + $0x134] sm:$0xf]
  %v112 = vld [vmem:[%s1 + $0x138] sm:$0xf]
  %v113 = vld [vmem:[%s1 + $0x13c] sm:$0xf]
  %v114 = vld [vmem:[%s1 + $0x140] sm:$0xf]
  %v115 = vld [vmem:[%s1 + $0x144] sm:$0xf]
  %v116 = vld [vmem:[%s1 + $0x148] sm:$0xf]
  %v117 = vld [vmem:[%s1 + $0x14c] sm:$0xf]
  %v118 = vld [vmem:[%s1 + $0x150] sm:$0xf]
  %v119 = vld [vmem:[%s1 + $0x154] sm:$0xf]
  %v120 = vld [vmem:[%s1 + $0x158] sm:$0xf]
  %v121 = vld [vmem:[%s1 + $0x15c] sm:$0xf]
  %v122 = vld [vmem:[%s1 + $0x160] sm:$0xf]
  %v123 = vld [vmem:[%s1 + $0x164] sm:$0xf]
  %v124 = vld [vmem:[%s1 + $0x168] sm:$0xf]
  %v125 = vld [vmem:[%s1 + $0x16c] sm:$0xf]
  %v126 = vld [vmem:[%s1 + $0x170] sm:$0xf]
  %v127 = vld [vmem:[%s1 + $0x174] sm:$0xf]
  %v128 = vld [vmem:[%s1 + $0x178] sm:$0xf]
  %v129 = vld [vmem:[%s1 + $0x17c] sm:$0xf]
  %v130 = vld [vmem:[%s1 + $0x180] sm:$0xf]
  %v131 = vld [vmem:[%s1 + $0x184] sm:$0xf]
  %v132 = vld [vmem:[%s1 + $0x188] sm:$0xf]
  %v133 = vld [vmem:[%s1 + $0x18c] sm:$0xf]
  %v134 = vld [vmem:[%s1 + $0x190] sm:$0xf]
  %v135 = vld [vmem:[%s1 + $0x194] sm:$0xf]
  %v136 = vld [vmem:[%s1 + $0x198] sm:$0xf]
  %v137 = vld [vmem:[%s1 + $0x19c] sm:$0xf]
  %v138 = vld [vmem:[%s1 + $0x1a0] sm:$0xf]
  %v139 = vld [vmem:[%s1 + $0x1a4] sm:$0xf]
  %v140 = vld [vmem:[%s1 + $0x1a8] sm:$0xf]
  %v141 = vld [vmem:[%s1 + $0x1ac] sm:$0xf]
  %v142 = vld [vmem:[%s1 + $0x1b0] sm:$0xf]
  %v143 = vld [vmem:[%s1 + $0x1b4] sm:$0xf]
  %v144 = vld [vmem:[%s1 + $0x1b8] sm:$0xf]
  %v145 = vld [vmem:[%s1 + $0x1bc] sm:$0xf]
  %v146 = vld [vmem:[%s1 + $0x1c0] sm:$0xf]
  %v147 = vld [vmem:[%s1 + $0x1c4] sm:$0xf]
  %v148 = vld [vmem:[%s1 + $0x1c8] sm:$0xf]
  %v149 = vld [vmem:[%s1 + $0x1cc] sm:$0xf]
  %v150 = vld [vmem:[%s1 + $0x1d0] sm:$0xf]
  %v151 = vld [vmem:[%s1 + $0x1d4] sm:$0xf]
  %v152 = vld [vmem:[%s1 + $0x1d8] sm:$0xf]
  %v153 = vld [vmem:[%s1 + $0x1dc] sm:$0xf]
  %v154 = vld [vmem:[%s1 + $0x1e0] sm:$0xf]
  %v155 = vld [vmem:[%s1 + $0x1e4] sm:$0xf]
  %v156 = vld [vmem:[%s1 + $0x1e8] sm:$0xf]
  %v157 = vld [vmem:[%s1 + $0x1ec] sm:$0xf]
  %v158 = vld [vmem:[%s1 + $0x1f0] sm:$0xf]
  %v159 = vld [vmem:[%s1 + $0x1f4] sm:$0xf]
  %v160 = vld [vmem:[%s1 + $0x1f8] sm:$0xf]
  %v161 = vld [vmem:[%s1 + $0x1fc] sm:$0xf]
  %v162 = vld [vmem:[%s1 + $0x200] sm:$0xf]
  %v163 = vld [vmem:[%s1 + $0x204] sm:$0xf]
  %v164 = vld [vmem:[%s1 + $0x208] sm:$0xf]
  %v165 = vld [vmem:[%s1 + $0x20c] sm:$0xf]
  %v166 = vld [vmem:[%s1 + $0x210] sm:$0xf]
  %v167 = vld [vmem:[%s1 + $0x214] sm:$0xf]
  %v168 = vld [vmem:[%s1 + $0x218] sm:$0xf]
  %v169 = vld [vmem:[%s1 + $0x21c] sm:$0xf]
  %v170 = vld [vmem:[%s1 + $0x220] sm:$0xf]
  %v171 = vld [vmem:[%s1 + $0x224] sm:$0xf]
  %v172 = vld [vmem:[%s1 + $0x228] sm:$0xf]
  %v173 = vld [vmem:[%s1 + $0x22c] sm:$0xf]
  %v174 = vld [vmem:[%s1 + $0x230] sm:$0xf]
  %v175 = vld [vmem:[%s1 + $0x234] sm:$0xf]
  %v176 = vld [vmem:[%s1 + $0x238] sm:$0xf]
  %v177 = vld [vmem:[%s1 + $0x23c] sm:$0xf]
  %v178 = vld [vmem:[%s1 + $0x240] sm:$0xf]
  %v179 = vld [vmem:[%s1 + $0x244] sm:$0xf]
  %v180 = vld [vmem:[%s1 + $0x248] sm:$0xf]
  %v181 = vld [vmem:[%s1 + $0x24c] sm:$0xf]
  %v182 = vld [vmem:[%s1 + $0x250] sm:$0xf]
  %v183 = vld [vmem:[%s1 + $0x254] sm:$0xf]
  %v184 = vld [vmem:[%s1 + $0x258] sm:$0xf]
  %v185 = vld [vmem:[%s1 + $0x25c] sm:$0xf]
  %v186 = vld [vmem:[%s1 + $0x260] sm:$0xf]
  %v187 = vld [vmem:[%s1 + $0x264] sm:$0xf]
  %v188 = vld [vmem:[%s1 + $0x268] sm:$0xf]
  %v189 = vld [vmem:[%s1 + $0x26c] sm:$0xf]
  %v190 = vld [vmem:[%s1 + $0x270] sm:$0xf]
  %v191 = vld [vmem:[%s1 + $0x274] sm:$0xf]
  %v192 = vld [vmem:[%s1 + $0x278] sm:$0xf]
  %v193 = vld [vmem:[%s1 + $0x27c] sm:$0xf]
  %v194 = vld [vmem:[%s1 + $0x280] sm:$0xf]
  %v195 = vld [vmem:[%s1 + $0x284] sm:$0xf]
  %v196 = vld [vmem:[%s1 + $0x288] sm:$0xf]
  %v197 = vld [vmem:[%s1 + $0x28c] sm:$0xf]
  %v198 = vld [vmem:[%s1 + $0x290] sm:$0xf]
  %v199 = vld [vmem:[%s1 + $0x294] sm:$0xf]
  %v200 = vld [vmem:[%s1 + $0x298] sm:$0xf]
  %v201 = vld [vmem:[%s1 + $0x29c] sm:$0xf]
  %v202 = vld [vmem:[%s1 + $0x2a0] sm:$0xf]
  %v203 = vld [vmem:[%s1 + $0x2a4] sm:$0xf]
  %v204 = vld [vmem:[%s1 + $0x2a8] sm:$0xf]
  %v205 = vld [vmem:[%s1 + $0x2ac] sm:$0xf]
  %v206 = vld [vmem:[%s1 + $0x2b0] sm:$0xf]
  %v207 = vld [vmem:[%s1 + $0x2b4] sm:$0xf]
  %v208 = vld [vmem:[%s1 + $0x2b8] sm:$0xf]
  %v209 = vld [vmem:[%s1 + $0x2bc] sm:$0xf]
  %v210 = vld [vmem:[%s1 + $0x2c0] sm:$0xf]
  %v211 = vld [vmem:[%s1 + $0x2c4] sm:$0xf]
  %v212 = vld [vmem:[%s1 + $0x2c8] sm:$0xf]
  %v213 = vld [vmem:[%s1 + $0x2cc] sm:$0xf]
  %v214 = vld [vmem:[%s1 + $0x2d0] sm:$0xf]
  %v215 = vld [vmem:[%s1 + $0x2d4] sm:$0xf]
  %v216 = vld [vmem:[%s1 + $0x2d8] sm:$0xf]
  %v217 = vld [vmem:[%s1 + $0x2dc] sm:$0xf]
  %v218 = vld [vmem:[%s1 + $0x2e0] sm:$0xf]
  %v219 = vld [vmem:[%s1 + $0x2e4] sm:$0xf]
  %v220 = vld [vmem:[%s1 + $0x2e8] sm:$0xf]
  %v221 = vld [vmem:[%s1 + $0x2ec] sm:$0xf]
  %v222 = vld [vmem:[%s1 + $0x2f0] sm:$0xf]
  %v223 = vld [vmem:[%s1 + $0x2f4] sm:$0xf]
  %v224 = vld [vmem:[%s1 + $0x2f8] sm:$0xf]
  %v225 = vld [vmem:[%s1 + $0x2fc] sm:$0xf]
  %v226 = vld [vmem:[%s1 + $0x300] sm:$0xf]
  %v227 = vld [vmem:[%s1 + $0x304] sm:$0xf]
  %v228 = vld [vmem:[%s1 + $0x308] sm:$0xf]
  %v229 = vld [vmem:[%s1 + $0x30c] sm:$0xf]
  %v230 = vld [vmem:[%s1 + $0x310] sm:$0xf]
  %v231 = vld [vmem:[%s1 + $0x314] sm:$0xf]
  %v232 = vld [vmem:[%s1 + $0x318] sm:$0xf]
  %v233 = vld [vmem:[%s1 + $0x31c] sm:$0xf]
  %v234 = vld [vmem:[%s1 + $0x320] sm:$0xf]
  %v235 = vld [vmem:[%s1 + $0x324] sm:$0xf]
  %v236 = vld [vmem:[%s1 + $0x328] sm:$0xf]
  %v237 = vld [vmem:[%s1 + $0x32c] sm:$0xf]
  %v238 = vld [vmem:[%s1 + $0x330] sm:$0xf]
  %v239 = vld [vmem:[%s1 + $0x334] sm:$0xf]
  %v240 = vld [vmem:[%s1 + $0x338] sm:$0xf]
  %v241 = vld [vmem:[%s1 + $0x33c] sm:$0xf]
  %v242 = vld [vmem:[%s1 + $0x340] sm:$0xf]
  %v243 = vld [vmem:[%s1 + $0x344] sm:$0xf]
  %v244 = vld [vmem:[%s1 + $0x348] sm:$0xf]
  %v245 = vld [vmem:[%s1 + $0x34c] sm:$0xf]
  %v246 = vld [vmem:[%s1 + $0x350] sm:$0xf]
  %v247 = vld [vmem:[%s1 + $0x354] sm:$0xf]
  %v248 = vld [vmem:[%s1 + $0x358] sm:$0xf]
  %v249 = vld [vmem:[%s1 + $0x35c] sm:$0xf]
  %v250 = vld [vmem:[%s1 + $0x360] sm:$0xf]
  %v251 = vld [vmem:[%s1 + $0x364] sm:$0xf]
  %v252 = vld [vmem:[%s1 + $0x368] sm:$0xf]
  %v253 = vld [vmem:[%s1 + $0x36c] sm:$0xf]
  %v254 = vld [vmem:[%s1 + $0x370] sm:$0xf]
  %v255 = vld [vmem:[%s1 + $0x374] sm:$0xf]
  %v256 = vld [vmem:[%s1 + $0x378] sm:$0xf]
  %v257 = vld [vmem:[%s1 + $0x37c] sm:$0xf]
  %v258 = vld [vmem:[%s1 + $0x380] sm:$0xf]
  %v259 = vld [vmem:[%s1 + $0x384] sm:$0xf]
  %v260 = vld [vmem:[%s1 + $0x388] sm:$0xf]
  %v261 = vld [vmem:[%s1 + $0x38c] sm:$0xf]
  %v262 = vld [vmem:[%s1 + $0x390] sm:$0xf]
  %v263 = vld [vmem:[%s1 + $0x394] sm:$0xf]
  %v264 = vld [vmem:[%s1 + $0x398] sm:$0xf]
  %v281 = vunpack.c.l.b16 %v18
  %v282 = vunpack.c.h.b16 %v18
  %v283 = vunpack.c.l.b16 %v19
  %v284 = vunpack.c.h.b16 %v19
  %v285 = vunpack.c.l.b16 %v20
  %v286 = vunpack.c.h.b16 %v20
  %v287 = vunpack.c.l.b16 %v21
  %v288 = vunpack.c.h.b16 %v21
  %v289 = vunpack.c.l.b16 %v22
  %v290 = vunpack.c.h.b16 %v22
  %v291 = vunpack.c.l.b16 %v23
  %v292 = vunpack.c.h.b16 %v23
  %v293 = vunpack.c.l.b16 %v24
  %v294 = vunpack.c.h.b16 %v24
  %v295 = vunpack.c.l.b16 %v25
  %v296 = vunpack.c.l.b16 %v26
  %v297 = vunpack.c.h.b16 %v26
  %v298 = vunpack.c.l.b16 %v27
  %v299 = vunpack.c.h.b16 %v27
  %v300 = vunpack.c.l.b16 %v28
  %v301 = vunpack.c.h.b16 %v28
  %v302 = vunpack.c.l.b16 %v29
  %v303 = vunpack.c.h.b16 %v29
  %v304 = vunpack.c.l.b16 %v30
  %v305 = vunpack.c.h.b16 %v30
  %v306 = vunpack.c.l.b16 %v31
  %v307 = vunpack.c.h.b16 %v31
  %v308 = vunpack.c.l.b16 %v32
  %v309 = vunpack.c.h.b16 %v32
  %v310 = vunpack.c.l.b16 %v33
  %v311 = vpack.c.b16 %v296, %v281
  %v312 = vpack.c.b16 %v297, %v282
  %v313 = vpack.c.b16 %v298, %v283
  %v314 = vpack.c.b16 %v299, %v284
  %v315 = vpack.c.b16 %v300, %v285
  %v316 = vpack.c.b16 %v301, %v286
  %v317 = vpack.c.b16 %v302, %v287
  %v318 = vpack.c.b16 %v303, %v288
  %v319 = vpack.c.b16 %v304, %v289
  %v320 = vpack.c.b16 %v305, %v290
  %v321 = vpack.c.b16 %v306, %v291
  %v322 = vpack.c.b16 %v307, %v292
  %v323 = vpack.c.b16 %v308, %v293
  %v324 = vpack.c.b16 %v309, %v294
  %v325 = vpack.c.b16 %v310, %v295
  %v571 = vunpack.c.l.b16 %v34
  %v572 = vunpack.c.l.b16 %v35
  %v573 = vunpack.c.l.b16 %v36
  %v574 = vunpack.c.l.b16 %v37
  %v575 = vunpack.c.l.b16 %v38
  %v576 = vunpack.c.l.b16 %v39
  %v577 = vunpack.c.l.b16 %v40
  %v578 = vunpack.c.l.b16 %v41
  %v579 = vunpack.c.l.b16 %v42
  %v580 = vunpack.c.l.b16 %v43
  %v581 = vunpack.c.l.b16 %v44
  %v582 = vunpack.c.l.b16 %v45
  %v583 = vunpack.c.l.b16 %v46
  %v584 = vunpack.c.l.b16 %v47
  %v585 = vunpack.c.l.b16 %v48
  %v586 = vunpack.c.l.b16 %v49
  %v587 = vunpack.c.l.b16 %v50
  %v588 = vunpack.c.l.b16 %v51
  %v589 = vunpack.c.l.b16 %v52
  %v590 = vunpack.c.l.b16 %v53
  %v591 = vunpack.c.l.b16 %v54
  %v592 = vunpack.c.l.b16 %v55
  %v593 = vunpack.c.l.b16 %v56
  %v594 = vunpack.c.l.b16 %v57
  %v595 = vunpack.c.l.b16 %v58
  %v596 = vunpack.c.l.b16 %v59
  %v597 = vunpack.c.l.b16 %v60
  %v598 = vunpack.c.l.b16 %v61
  %v599 = vunpack.c.l.b16 %v62
  %v600 = vunpack.c.l.b16 %v63
  %v601 = vunpack.c.l.b16 %v64
  %v602 = vunpack.c.l.b16 %v65
  %v603 = vunpack.c.l.b16 %v66
  %v604 = vunpack.c.l.b16 %v67
  %v605 = vunpack.c.l.b16 %v68
  %v606 = vunpack.c.l.b16 %v69
  %v607 = vunpack.c.l.b16 %v70
  %v608 = vunpack.c.l.b16 %v71
  %v609 = vunpack.c.l.b16 %v72
  %v610 = vunpack.c.l.b16 %v73
  %v611 = vunpack.c.l.b16 %v74
  %v612 = vunpack.c.l.b16 %v75
  %v613 = vunpack.c.l.b16 %v76
  %v614 = vunpack.c.l.b16 %v77
  %v615 = vunpack.c.l.b16 %v78
  %v616 = vunpack.c.l.b16 %v79
  %v617 = vunpack.c.l.b16 %v80
  %v618 = vunpack.c.l.b16 %v81
  %v619 = vunpack.c.l.b16 %v82
  %v620 = vunpack.c.l.b16 %v83
  %v621 = vunpack.c.l.b16 %v84
  %v622 = vunpack.c.l.b16 %v85
  %v623 = vunpack.c.l.b16 %v86
  %v624 = vunpack.c.l.b16 %v87
  %v625 = vunpack.c.l.b16 %v88
  %v626 = vunpack.c.l.b16 %v89
  %v627 = vunpack.c.l.b16 %v90
  %v628 = vunpack.c.l.b16 %v91
  %v629 = vunpack.c.l.b16 %v92
  %v630 = vunpack.c.l.b16 %v93
  %v631 = vunpack.c.l.b16 %v94
  %v632 = vunpack.c.l.b16 %v95
  %v633 = vunpack.c.l.b16 %v96
  %v634 = vunpack.c.l.b16 %v97
  %v635 = vunpack.c.l.b16 %v98
  %v636 = vunpack.c.l.b16 %v99
  %v637 = vunpack.c.l.b16 %v100
  %v638 = vunpack.c.l.b16 %v101
  %v639 = vunpack.c.l.b16 %v102
  %v640 = vunpack.c.l.b16 %v103
  %v641 = vunpack.c.l.b16 %v104
  %v642 = vunpack.c.l.b16 %v105
  %v643 = vunpack.c.l.b16 %v106
  %v644 = vunpack.c.l.b16 %v107
  %v645 = vunpack.c.l.b16 %v108
  %v646 = vunpack.c.l.b16 %v109
  %v647 = vunpack.c.l.b16 %v110
  %v648 = vunpack.c.l.b16 %v111
  %v649 = vunpack.c.l.b16 %v112
  %v650 = vunpack.c.l.b16 %v113
  %v651 = vunpack.c.l.b16 %v114
  %v652 = vunpack.c.l.b16 %v115
  %v653 = vunpack.c.l.b16 %v116
  %v654 = vunpack.c.l.b16 %v117
  %v655 = vunpack.c.l.b16 %v118
  %v656 = vunpack.c.l.b16 %v119
  %v657 = vunpack.c.l.b16 %v120
  %v658 = vunpack.c.l.b16 %v121
  %v659 = vunpack.c.l.b16 %v122
  %v660 = vunpack.c.l.b16 %v123
  %v661 = vunpack.c.l.b16 %v124
  %v662 = vunpack.c.l.b16 %v125
  %v663 = vunpack.c.l.b16 %v126
  %v664 = vunpack.c.l.b16 %v127
  %v665 = vunpack.c.l.b16 %v128
  %v666 = vunpack.c.l.b16 %v129
  %v667 = vunpack.c.l.b16 %v130
  %v668 = vunpack.c.l.b16 %v131
  %v669 = vunpack.c.l.b16 %v132
  %v670 = vunpack.c.l.b16 %v133
  %v671 = vunpack.c.l.b16 %v134
  %v672 = vunpack.c.l.b16 %v135
  %v673 = vunpack.c.l.b16 %v136
  %v674 = vunpack.c.l.b16 %v137
  %v675 = vunpack.c.l.b16 %v138
  %v676 = vunpack.c.l.b16 %v139
  %v677 = vunpack.c.l.b16 %v140
  %v678 = vunpack.c.l.b16 %v141
  %v679 = vunpack.c.l.b16 %v142
  %v680 = vunpack.c.l.b16 %v143
  %v681 = vunpack.c.l.b16 %v144
  %v682 = vunpack.c.l.b16 %v145
  %v683 = vunpack.c.l.b16 %v146
  %v684 = vunpack.c.l.b16 %v147
  %v685 = vunpack.c.l.b16 %v148
  %v686 = vunpack.c.l.b16 %v149
  %v687 = vunpack.c.l.b16 %v150
  %v688 = vunpack.c.l.b16 %v151
  %v689 = vunpack.c.l.b16 %v152
  %v690 = vunpack.c.l.b16 %v153
  %v691 = vunpack.c.l.b16 %v154
  %v692 = vunpack.c.l.b16 %v155
  %v693 = vunpack.c.l.b16 %v156
  %v694 = vunpack.c.l.b16 %v157
  %v695 = vunpack.c.l.b16 %v158
  %v696 = vunpack.c.l.b16 %v159
  %v697 = vunpack.c.l.b16 %v160
  %v698 = vunpack.c.l.b16 %v161
  %v699 = vunpack.c.l.b16 %v162
  %v700 = vunpack.c.l.b16 %v163
  %v701 = vunpack.c.l.b16 %v164
  %v702 = vunpack.c.l.b16 %v165
  %v703 = vunpack.c.l.b16 %v166
  %v704 = vunpack.c.l.b16 %v167
  %v705 = vunpack.c.l.b16 %v168
  %v706 = vunpack.c.l.b16 %v169
  %v707 = vunpack.c.l.b16 %v170
  %v708 = vunpack.c.l.b16 %v171
  %v709 = vunpack.c.l.b16 %v172
  %v710 = vunpack.c.l.b16 %v173
  %v711 = vunpack.c.l.b16 %v174
  %v712 = vunpack.c.l.b16 %v175
  %v713 = vunpack.c.l.b16 %v176
  %v714 = vunpack.c.l.b16 %v177
  %v715 = vunpack.c.l.b16 %v178
  %v716 = vunpack.c.l.b16 %v179
  %v717 = vunpack.c.l.b16 %v180
  %v718 = vunpack.c.l.b16 %v181
  %v719 = vunpack.c.l.b16 %v182
  %v720 = vunpack.c.l.b16 %v183
  %v721 = vunpack.c.l.b16 %v184
  %v722 = vunpack.c.l.b16 %v185
  %v723 = vunpack.c.l.b16 %v186
  %v724 = vunpack.c.l.b16 %v187
  %v725 = vunpack.c.l.b16 %v188
  %v726 = vunpack.c.l.b16 %v189
  %v727 = vunpack.c.l.b16 %v190
  %v728 = vunpack.c.l.b16 %v191
  %v729 = vunpack.c.l.b16 %v192
  %v730 = vunpack.c.l.b16 %v193
  %v731 = vunpack.c.l.b16 %v194
  %v732 = vunpack.c.l.b16 %v195
  %v733 = vunpack.c.l.b16 %v196
  %v734 = vunpack.c.l.b16 %v197
  %v735 = vunpack.c.l.b16 %v198
  %v736 = vunpack.c.l.b16 %v199
  %v737 = vunpack.c.l.b16 %v200
  %v738 = vunpack.c.l.b16 %v201
  %v739 = vunpack.c.l.b16 %v202
  %v740 = vunpack.c.l.b16 %v203
  %v741 = vunpack.c.l.b16 %v204
  %v742 = vunpack.c.l.b16 %v205
  %v743 = vunpack.c.l.b16 %v206
  %v744 = vunpack.c.l.b16 %v207
  %v745 = vunpack.c.l.b16 %v208
  %v746 = vunpack.c.l.b16 %v209
  %v747 = vunpack.c.l.b16 %v210
  %v748 = vunpack.c.l.b16 %v211
  %v749 = vunpack.c.l.b16 %v212
  %v750 = vunpack.c.l.b16 %v213
  %v751 = vunpack.c.l.b16 %v214
  %v752 = vunpack.c.l.b16 %v215
  %v753 = vunpack.c.l.b16 %v216
  %v754 = vunpack.c.l.b16 %v217
  %v755 = vunpack.c.l.b16 %v218
  %v756 = vunpack.c.l.b16 %v219
  %v757 = vunpack.c.l.b16 %v220
  %v758 = vunpack.c.l.b16 %v221
  %v759 = vunpack.c.l.b16 %v222
  %v760 = vunpack.c.l.b16 %v223
  %v761 = vunpack.c.l.b16 %v224
  %v762 = vunpack.c.l.b16 %v225
  %v763 = vunpack.c.l.b16 %v226
  %v764 = vunpack.c.l.b16 %v227
  %v765 = vunpack.c.l.b16 %v228
  %v766 = vunpack.c.l.b16 %v229
  %v767 = vunpack.c.l.b16 %v230
  %v768 = vunpack.c.l.b16 %v231
  %v769 = vunpack.c.l.b16 %v232
  %v770 = vunpack.c.l.b16 %v233
  %v771 = vunpack.c.l.b16 %v234
  %v772 = vunpack.c.l.b16 %v235
  %v773 = vunpack.c.l.b16 %v236
  %v774 = vunpack.c.l.b16 %v237
  %v775 = vunpack.c.l.b16 %v238
  %v776 = vunpack.c.l.b16 %v239
  %v777 = vunpack.c.l.b16 %v240
  %v778 = vunpack.c.l.b16 %v241
  %v779 = vunpack.c.l.b16 %v242
  %v780 = vunpack.c.l.b16 %v243
  %v781 = vunpack.c.l.b16 %v244
  %v782 = vunpack.c.l.b16 %v245
  %v783 = vunpack.c.l.b16 %v246
  %v784 = vunpack.c.l.b16 %v247
  %v785 = vunpack.c.l.b16 %v248
  %v786 = vunpack.c.l.b16 %v249
  %v787 = vunpack.c.l.b16 %v250
  %v788 = vunpack.c.l.b16 %v251
  %v789 = vunpack.c.l.b16 %v252
  %v790 = vunpack.c.l.b16 %v253
  %v791 = vunpack.c.l.b16 %v254
  %v792 = vunpack.c.l.b16 %v255
  %v793 = vunpack.c.l.b16 %v256
  %v794 = vunpack.c.l.b16 %v257
  %v795 = vunpack.c.l.b16 %v258
  %v796 = vunpack.c.l.b16 %v259
  %v797 = vunpack.c.l.b16 %v260
  %v798 = vunpack.c.l.b16 %v261
  %v799 = vunpack.c.l.b16 %v262
  %v800 = vunpack.c.l.b16 %v263
  %v801 = vunpack.c.l.b16 %v264
  %v802 = vpack.c.b16 %v572, %v571
  %v803 = vpack.c.b16 %v574, %v573
  %v804 = vpack.c.b16 %v576, %v575
  %v805 = vpack.c.b16 %v578, %v577
  %v806 = vpack.c.b16 %v580, %v579
  %v807 = vpack.c.b16 %v582, %v581
  %v808 = vpack.c.b16 %v584, %v583
  %v809 = vpack.c.b16 %v586, %v585
  %v810 = vpack.c.b16 %v588, %v587
  %v811 = vpack.c.b16 %v590, %v589
  %v812 = vpack.c.b16 %v592, %v591
  %v813 = vpack.c.b16 %v594, %v593
  %v814 = vpack.c.b16 %v596, %v595
  %v815 = vpack.c.b16 %v598, %v597
  %v816 = vpack.c.b16 %v600, %v599
  %v817 = vpack.c.b16 %v602, %v601
  %v818 = vpack.c.b16 %v604, %v603
  %v819 = vpack.c.b16 %v606, %v605
  %v820 = vpack.c.b16 %v608, %v607
  %v821 = vpack.c.b16 %v610, %v609
  %v822 = vpack.c.b16 %v612, %v611
  %v823 = vpack.c.b16 %v614, %v613
  %v824 = vpack.c.b16 %v616, %v615
  %v825 = vpack.c.b16 %v618, %v617
  %v826 = vpack.c.b16 %v620, %v619
  %v827 = vpack.c.b16 %v622, %v621
  %v828 = vpack.c.b16 %v624, %v623
  %v829 = vpack.c.b16 %v626, %v625
  %v830 = vpack.c.b16 %v628, %v627
  %v831 = vpack.c.b16 %v630, %v629
  %v832 = vpack.c.b16 %v632, %v631
  %v833 = vpack.c.b16 %v634, %v633
  %v834 = vpack.c.b16 %v636, %v635
  %v835 = vpack.c.b16 %v638, %v637
  %v836 = vpack.c.b16 %v640, %v639
  %v837 = vpack.c.b16 %v642, %v641
  %v838 = vpack.c.b16 %v644, %v643
  %v839 = vpack.c.b16 %v646, %v645
  %v840 = vpack.c.b16 %v648, %v647
  %v841 = vpack.c.b16 %v650, %v649
  %v842 = vpack.c.b16 %v652, %v651
  %v843 = vpack.c.b16 %v654, %v653
  %v844 = vpack.c.b16 %v656, %v655
  %v845 = vpack.c.b16 %v658, %v657
  %v846 = vpack.c.b16 %v660, %v659
  %v847 = vpack.c.b16 %v662, %v661
  %v848 = vpack.c.b16 %v664, %v663
  %v849 = vpack.c.b16 %v666, %v665
  %v850 = vpack.c.b16 %v668, %v667
  %v851 = vpack.c.b16 %v670, %v669
  %v852 = vpack.c.b16 %v672, %v671
  %v853 = vpack.c.b16 %v674, %v673
  %v854 = vpack.c.b16 %v676, %v675
  %v855 = vpack.c.b16 %v678, %v677
  %v856 = vpack.c.b16 %v680, %v679
  %v857 = vpack.c.b16 %v682, %v681
  %v858 = vpack.c.b16 %v684, %v683
  %v859 = vpack.c.b16 %v686, %v685
  %v860 = vpack.c.b16 %v688, %v687
  %v861 = vpack.c.b16 %v690, %v689
  %v862 = vpack.c.b16 %v692, %v691
  %v863 = vpack.c.b16 %v694, %v693
  %v864 = vpack.c.b16 %v696, %v695
  %v865 = vpack.c.b16 %v698, %v697
  %v866 = vpack.c.b16 %v700, %v699
  %v867 = vpack.c.b16 %v702, %v701
  %v868 = vpack.c.b16 %v704, %v703
  %v869 = vpack.c.b16 %v706, %v705
  %v870 = vpack.c.b16 %v708, %v707
  %v871 = vpack.c.b16 %v710, %v709
  %v872 = vpack.c.b16 %v712, %v711
  %v873 = vpack.c.b16 %v714, %v713
  %v874 = vpack.c.b16 %v716, %v715
  %v875 = vpack.c.b16 %v718, %v717
  %v876 = vpack.c.b16 %v720, %v719
  %v877 = vpack.c.b16 %v722, %v721
  %v878 = vpack.c.b16 %v724, %v723
  %v879 = vpack.c.b16 %v726, %v725
  %v880 = vpack.c.b16 %v728, %v727
  %v881 = vpack.c.b16 %v730, %v729
  %v882 = vpack.c.b16 %v732, %v731
  %v883 = vpack.c.b16 %v734, %v733
  %v884 = vpack.c.b16 %v736, %v735
  %v885 = vpack.c.b16 %v738, %v737
  %v886 = vpack.c.b16 %v740, %v739
  %v887 = vpack.c.b16 %v742, %v741
  %v888 = vpack.c.b16 %v744, %v743
  %v889 = vpack.c.b16 %v746, %v745
  %v890 = vpack.c.b16 %v748, %v747
  %v891 = vpack.c.b16 %v750, %v749
  %v892 = vpack.c.b16 %v752, %v751
  %v893 = vpack.c.b16 %v754, %v753
  %v894 = vpack.c.b16 %v756, %v755
  %v895 = vpack.c.b16 %v758, %v757
  %v896 = vpack.c.b16 %v760, %v759
  %v897 = vpack.c.b16 %v762, %v761
  %v898 = vpack.c.b16 %v764, %v763
  %v899 = vpack.c.b16 %v766, %v765
  %v900 = vpack.c.b16 %v768, %v767
  %v901 = vpack.c.b16 %v770, %v769
  %v902 = vpack.c.b16 %v772, %v771
  %v903 = vpack.c.b16 %v774, %v773
  %v904 = vpack.c.b16 %v776, %v775
  %v905 = vpack.c.b16 %v778, %v777
  %v906 = vpack.c.b16 %v780, %v779
  %v907 = vpack.c.b16 %v782, %v781
  %v908 = vpack.c.b16 %v784, %v783
  %v909 = vpack.c.b16 %v786, %v785
  %v910 = vpack.c.b16 %v788, %v787
  %v911 = vpack.c.b16 %v790, %v789
  %v912 = vpack.c.b16 %v792, %v791
  %v913 = vpack.c.b16 %v794, %v793
  %v914 = vpack.c.b16 %v796, %v795
  %v915 = vpack.c.b16 %v798, %v797
  %v916 = vpack.c.b16 %v800, %v799
  %v917 = vpack.c.b16 %v801, %v801
  %vm1033 = vcmask 457728
  %v1035 = vsel %vm1033, %v325, 0
  %vm1037 = vcmask 1043456
  %v1039 = vsel %vm1037, %v917, 0
  %1041 = vmatprep.subr.bf16.mxu0 0
  %1042 = vmatpush1.bf16.msra.mxu0 %v809
  %1043 = vmatprep.subr.bf16.mxu0 0
  %1044 = vmatpush1.bf16.msra.mxu0 %v808
  %1045 = vmatprep.subr.bf16.mxu0 0
  %1046 = vmatpush1.bf16.msra.mxu0 %v807
  %1047 = vmatprep.subr.bf16.mxu0 0
  %1048 = vmatpush1.bf16.msra.mxu0 %v806
  %1049 = vmatprep.subr.bf16.mxu0 0
  %1050 = vmatpush1.bf16.msra.mxu0 %v805
  %1051 = vmatprep.subr.bf16.mxu0 0
  %1052 = vmatpush1.bf16.msra.mxu0 %v804
  %1053 = vmatprep.subr.bf16.mxu0 0
  %1054 = vmatpush1.bf16.msra.mxu0 %v803
  %1055 = vmatprep.subr.bf16.mxu0 0
  %1056 = vmatpush1.bf16.msra.mxu0 %v802
  %1057 = vmatprep.subr.bf16.mxu0 0
  %1058 = vmatpush2.bf16.msra.mxu0 %v817
  %1059 = vmatprep.subr.bf16.mxu0 0
  %1060 = vmatpush2.bf16.msra.mxu0 %v816
  %1061 = vmatprep.subr.bf16.mxu0 0
  %1062 = vmatpush2.bf16.msra.mxu0 %v815
  %1063 = vmatprep.subr.bf16.mxu0 0
  %1064 = vmatpush2.bf16.msra.mxu0 %v814
  %1065 = vmatprep.subr.bf16.mxu0 0
  %1066 = vmatpush2.bf16.msra.mxu0 %v813
  %1067 = vmatprep.subr.bf16.mxu0 0
  %1068 = vmatpush2.bf16.msra.mxu0 %v812
  %1069 = vmatprep.subr.bf16.mxu0 0
  %1070 = vmatpush2.bf16.msra.mxu0 %v811
  %1071 = vmatprep.subr.bf16.mxu0 0
  %1072 = vmatpush2.bf16.msra.mxu0 %v810
  %1073 = vmatprep.mubr.bf16.mxu0 %v312
  %1074 = vmatmul.mubr.bf16.gmra.mxu0 %v311
  %v1075 = vpop.f32.mrf.mxu0
  %v1076 = vadd.f32 0.0, %v1075
  %v1077 = vpop.f32.mrf.mxu0
  %v1078 = vpop.f32.mrf.mxu0
  %v1079 = vadd.f32 0.0, %v1078
  %v1080 = vpop.f32.mrf.mxu0
  %1081 = vdwg.mxu0
  %1082 = vmatprep.subr.bf16.mxu0 0
  %1083 = vmatpush1.bf16.msra.mxu0 %v825
  %1084 = vmatprep.subr.bf16.mxu0 0
  %1085 = vmatpush1.bf16.msra.mxu0 %v824
  %1086 = vmatprep.subr.bf16.mxu0 0
  %1087 = vmatpush1.bf16.msra.mxu0 %v823
  %1088 = vmatprep.subr.bf16.mxu0 0
  %1089 = vmatpush1.bf16.msra.mxu0 %v822
  %1090 = vmatprep.subr.bf16.mxu0 0
  %1091 = vmatpush1.bf16.msra.mxu0 %v821
  %1092 = vmatprep.subr.bf16.mxu0 0
  %1093 = vmatpush1.bf16.msra.mxu0 %v820
  %1094 = vmatprep.subr.bf16.mxu0 0
  %1095 = vmatpush1.bf16.msra.mxu0 %v819
  %1096 = vmatprep.subr.bf16.mxu0 0
  %1097 = vmatpush1.bf16.msra.mxu0 %v818
  %1098 = vmatprep.subr.bf16.mxu0 0
  %1099 = vmatpush2.bf16.msra.mxu0 %v833
  %1100 = vmatprep.subr.bf16.mxu0 0
  %1101 = vmatpush2.bf16.msra.mxu0 %v832
  %1102 = vmatprep.subr.bf16.mxu0 0
  %1103 = vmatpush2.bf16.msra.mxu0 %v831
  %1104 = vmatprep.subr.bf16.mxu0 0
  %1105 = vmatpush2.bf16.msra.mxu0 %v830
  %1106 = vmatprep.subr.bf16.mxu0 0
  %1107 = vmatpush2.bf16.msra.mxu0 %v829
  %1108 = vmatprep.subr.bf16.mxu0 0
  %1109 = vmatpush2.bf16.msra.mxu0 %v828
  %1110 = vmatprep.subr.bf16.mxu0 0
  %1111 = vmatpush2.bf16.msra.mxu0 %v827
  %1112 = vmatprep.subr.bf16.mxu0 0
  %1113 = vmatpush2.bf16.msra.mxu0 %v826
  %1114 = vmatprep.mubr.bf16.mxu0 %v314
  %1115 = vmatmul.mubr.bf16.gmra.mxu0 %v313
  %v1116 = vpop.f32.mrf.mxu0
  %v1117 = vadd.f32 %v1076, %v1116
  %v1118 = vpop.f32.mrf.mxu0
  %v1119 = vpop.f32.mrf.mxu0
  %v1120 = vadd.f32 %v1079, %v1119
  %v1121 = vpop.f32.mrf.mxu0
  %1122 = vdwg.mxu0
  %1123 = vmatprep.subr.bf16.mxu0 0
  %1124 = vmatpush1.bf16.msra.mxu0 %v841
  %1125 = vmatprep.subr.bf16.mxu0 0
  %1126 = vmatpush1.bf16.msra.mxu0 %v840
  %1127 = vmatprep.subr.bf16.mxu0 0
  %1128 = vmatpush1.bf16.msra.mxu0 %v839
  %1129 = vmatprep.subr.bf16.mxu0 0
  %1130 = vmatpush1.bf16.msra.mxu0 %v838
  %1131 = vmatprep.subr.bf16.mxu0 0
  %1132 = vmatpush1.bf16.msra.mxu0 %v837
  %1133 = vmatprep.subr.bf16.mxu0 0
  %1134 = vmatpush1.bf16.msra.mxu0 %v836
  %1135 = vmatprep.subr.bf16.mxu0 0
  %1136 = vmatpush1.bf16.msra.mxu0 %v835
  %1137 = vmatprep.subr.bf16.mxu0 0
  %1138 = vmatpush1.bf16.msra.mxu0 %v834
  %1139 = vmatprep.subr.bf16.mxu0 0
  %1140 = vmatpush2.bf16.msra.mxu0 %v849
  %1141 = vmatprep.subr.bf16.mxu0 0
  %1142 = vmatpush2.bf16.msra.mxu0 %v848
  %1143 = vmatprep.subr.bf16.mxu0 0
  %1144 = vmatpush2.bf16.msra.mxu0 %v847
  %1145 = vmatprep.subr.bf16.mxu0 0
  %1146 = vmatpush2.bf16.msra.mxu0 %v846
  %1147 = vmatprep.subr.bf16.mxu0 0
  %1148 = vmatpush2.bf16.msra.mxu0 %v845
  %1149 = vmatprep.subr.bf16.mxu0 0
  %1150 = vmatpush2.bf16.msra.mxu0 %v844
  %1151 = vmatprep.subr.bf16.mxu0 0
  %1152 = vmatpush2.bf16.msra.mxu0 %v843
  %1153 = vmatprep.subr.bf16.mxu0 0
  %1154 = vmatpush2.bf16.msra.mxu0 %v842
  %1155 = vmatprep.mubr.bf16.mxu0 %v316
  %1156 = vmatmul.mubr.bf16.gmra.mxu0 %v315
  %v1157 = vpop.f32.mrf.mxu0
  %v1158 = vadd.f32 %v1117, %v1157
  %v1159 = vpop.f32.mrf.mxu0
  %v1160 = vpop.f32.mrf.mxu0
  %v1161 = vadd.f32 %v1120, %v1160
  %v1162 = vpop.f32.mrf.mxu0
  %1163 = vdwg.mxu0
  %1164 = vmatprep.subr.bf16.mxu0 0
  %1165 = vmatpush1.bf16.msra.mxu0 %v857
  %1166 = vmatprep.subr.bf16.mxu0 0
  %1167 = vmatpush1.bf16.msra.mxu0 %v856
  %1168 = vmatprep.subr.bf16.mxu0 0
  %1169 = vmatpush1.bf16.msra.mxu0 %v855
  %1170 = vmatprep.subr.bf16.mxu0 0
  %1171 = vmatpush1.bf16.msra.mxu0 %v854
  %1172 = vmatprep.subr.bf16.mxu0 0
  %1173 = vmatpush1.bf16.msra.mxu0 %v853
  %1174 = vmatprep.subr.bf16.mxu0 0
  %1175 = vmatpush1.bf16.msra.mxu0 %v852
  %1176 = vmatprep.subr.bf16.mxu0 0
  %1177 = vmatpush1.bf16.msra.mxu0 %v851
  %1178 = vmatprep.subr.bf16.mxu0 0
  %1179 = vmatpush1.bf16.msra.mxu0 %v850
  %1180 = vmatprep.subr.bf16.mxu0 0
  %1181 = vmatpush2.bf16.msra.mxu0 %v865
  %1182 = vmatprep.subr.bf16.mxu0 0
  %1183 = vmatpush2.bf16.msra.mxu0 %v864
  %1184 = vmatprep.subr.bf16.mxu0 0
  %1185 = vmatpush2.bf16.msra.mxu0 %v863
  %1186 = vmatprep.subr.bf16.mxu0 0
  %1187 = vmatpush2.bf16.msra.mxu0 %v862
  %1188 = vmatprep.subr.bf16.mxu0 0
  %1189 = vmatpush2.bf16.msra.mxu0 %v861
  %1190 = vmatprep.subr.bf16.mxu0 0
  %1191 = vmatpush2.bf16.msra.mxu0 %v860
  %1192 = vmatprep.subr.bf16.mxu0 0
  %1193 = vmatpush2.bf16.msra.mxu0 %v859
  %1194 = vmatprep.subr.bf16.mxu0 0
  %1195 = vmatpush2.bf16.msra.mxu0 %v858
  %1196 = vmatprep.mubr.bf16.mxu0 %v318
  %1197 = vmatmul.mubr.bf16.gmra.mxu0 %v317
  %v1198 = vpop.f32.mrf.mxu0
  %v1199 = vadd.f32 %v1158, %v1198
  %v1200 = vpop.f32.mrf.mxu0
  %v1201 = vpop.f32.mrf.mxu0
  %v1202 = vadd.f32 %v1161, %v1201
  %v1203 = vpop.f32.mrf.mxu0
  %1204 = vdwg.mxu0
  %1205 = vmatprep.subr.bf16.mxu0 0
  %1206 = vmatpush1.bf16.msra.mxu0 %v873
  %1207 = vmatprep.subr.bf16.mxu0 0
  %1208 = vmatpush1.bf16.msra.mxu0 %v872
  %1209 = vmatprep.subr.bf16.mxu0 0
  %1210 = vmatpush1.bf16.msra.mxu0 %v871
  %1211 = vmatprep.subr.bf16.mxu0 0
  %1212 = vmatpush1.bf16.msra.mxu0 %v870
  %1213 = vmatprep.subr.bf16.mxu0 0
  %1214 = vmatpush1.bf16.msra.mxu0 %v869
  %1215 = vmatprep.subr.bf16.mxu0 0
  %1216 = vmatpush1.bf16.msra.mxu0 %v868
  %1217 = vmatprep.subr.bf16.mxu0 0
  %1218 = vmatpush1.bf16.msra.mxu0 %v867
  %1219 = vmatprep.subr.bf16.mxu0 0
  %1220 = vmatpush1.bf16.msra.mxu0 %v866
  %1221 = vmatprep.subr.bf16.mxu0 0
  %1222 = vmatpush2.bf16.msra.mxu0 %v881
  %1223 = vmatprep.subr.bf16.mxu0 0
  %1224 = vmatpush2.bf16.msra.mxu0 %v880
  %1225 = vmatprep.subr.bf16.mxu0 0
  %1226 = vmatpush2.bf16.msra.mxu0 %v879
  %1227 = vmatprep.subr.bf16.mxu0 0
  %1228 = vmatpush2.bf16.msra.mxu0 %v878
  %1229 = vmatprep.subr.bf16.mxu0 0
  %1230 = vmatpush2.bf16.msra.mxu0 %v877
  %1231 = vmatprep.subr.bf16.mxu0 0
  %1232 = vmatpush2.bf16.msra.mxu0 %v876
  %1233 = vmatprep.subr.bf16.mxu0 0
  %1234 = vmatpush2.bf16.msra.mxu0 %v875
  %1235 = vmatprep.subr.bf16.mxu0 0
  %1236 = vmatpush2.bf16.msra.mxu0 %v874
  %1237 = vmatprep.mubr.bf16.mxu0 %v320
  %1238 = vmatmul.mubr.bf16.gmra.mxu0 %v319
  %v1239 = vpop.f32.mrf.mxu0
  %v1240 = vadd.f32 %v1199, %v1239
  %v1241 = vpop.f32.mrf.mxu0
  %v1242 = vpop.f32.mrf.mxu0
  %v1243 = vadd.f32 %v1202, %v1242
  %v1244 = vpop.f32.mrf.mxu0
  %1245 = vdwg.mxu0
  %1246 = vmatprep.subr.bf16.mxu0 0
  %1247 = vmatpush1.bf16.msra.mxu0 %v889
  %1248 = vmatprep.subr.bf16.mxu0 0
  %1249 = vmatpush1.bf16.msra.mxu0 %v888
  %1250 = vmatprep.subr.bf16.mxu0 0
  %1251 = vmatpush1.bf16.msra.mxu0 %v887
  %1252 = vmatprep.subr.bf16.mxu0 0
  %1253 = vmatpush1.bf16.msra.mxu0 %v886
  %1254 = vmatprep.subr.bf16.mxu0 0
  %1255 = vmatpush1.bf16.msra.mxu0 %v885
  %1256 = vmatprep.subr.bf16.mxu0 0
  %1257 = vmatpush1.bf16.msra.mxu0 %v884
  %1258 = vmatprep.subr.bf16.mxu0 0
  %1259 = vmatpush1.bf16.msra.mxu0 %v883
  %1260 = vmatprep.subr.bf16.mxu0 0
  %1261 = vmatpush1.bf16.msra.mxu0 %v882
  %1262 = vmatprep.subr.bf16.mxu0 0
  %1263 = vmatpush2.bf16.msra.mxu0 %v897
  %1264 = vmatprep.subr.bf16.mxu0 0
  %1265 = vmatpush2.bf16.msra.mxu0 %v896
  %1266 = vmatprep.subr.bf16.mxu0 0
  %1267 = vmatpush2.bf16.msra.mxu0 %v895
  %1268 = vmatprep.subr.bf16.mxu0 0
  %1269 = vmatpush2.bf16.msra.mxu0 %v894
  %1270 = vmatprep.subr.bf16.mxu0 0
  %1271 = vmatpush2.bf16.msra.mxu0 %v893
  %1272 = vmatprep.subr.bf16.mxu0 0
  %1273 = vmatpush2.bf16.msra.mxu0 %v892
  %1274 = vmatprep.subr.bf16.mxu0 0
  %1275 = vmatpush2.bf16.msra.mxu0 %v891
  %1276 = vmatprep.subr.bf16.mxu0 0
  %1277 = vmatpush2.bf16.msra.mxu0 %v890
  %1278 = vmatprep.mubr.bf16.mxu0 %v322
  %1279 = vmatmul.mubr.bf16.gmra.mxu0 %v321
  %v1280 = vpop.f32.mrf.mxu0
  %v1281 = vadd.f32 %v1240, %v1280
  %v1282 = vpop.f32.mrf.mxu0
  %v1283 = vpop.f32.mrf.mxu0
  %v1284 = vadd.f32 %v1243, %v1283
  %v1285 = vpop.f32.mrf.mxu0
  %1286 = vdwg.mxu0
  %1287 = vmatprep.subr.bf16.mxu0 0
  %1288 = vmatpush1.bf16.msra.mxu0 %v905
  %1289 = vmatprep.subr.bf16.mxu0 0
  %1290 = vmatpush1.bf16.msra.mxu0 %v904
  %1291 = vmatprep.subr.bf16.mxu0 0
  %1292 = vmatpush1.bf16.msra.mxu0 %v903
  %1293 = vmatprep.subr.bf16.mxu0 0
  %1294 = vmatpush1.bf16.msra.mxu0 %v902
  %1295 = vmatprep.subr.bf16.mxu0 0
  %1296 = vmatpush1.bf16.msra.mxu0 %v901
  %1297 = vmatprep.subr.bf16.mxu0 0
  %1298 = vmatpush1.bf16.msra.mxu0 %v900
  %1299 = vmatprep.subr.bf16.mxu0 0
  %1300 = vmatpush1.bf16.msra.mxu0 %v899
  %1301 = vmatprep.subr.bf16.mxu0 0
  %1302 = vmatpush1.bf16.msra.mxu0 %v898
  %1303 = vmatprep.subr.bf16.mxu0 0
  %1304 = vmatpush2.bf16.msra.mxu0 %v913
  %1305 = vmatprep.subr.bf16.mxu0 0
  %1306 = vmatpush2.bf16.msra.mxu0 %v912
  %1307 = vmatprep.subr.bf16.mxu0 0
  %1308 = vmatpush2.bf16.msra.mxu0 %v911
  %1309 = vmatprep.subr.bf16.mxu0 0
  %1310 = vmatpush2.bf16.msra.mxu0 %v910
  %1311 = vmatprep.subr.bf16.mxu0 0
  %1312 = vmatpush2.bf16.msra.mxu0 %v909
  %1313 = vmatprep.subr.bf16.mxu0 0
  %1314 = vmatpush2.bf16.msra.mxu0 %v908
  %1315 = vmatprep.subr.bf16.mxu0 0
  %1316 = vmatpush2.bf16.msra.mxu0 %v907
  %1317 = vmatprep.subr.bf16.mxu0 0
  %1318 = vmatpush2.bf16.msra.mxu0 %v906
  %1319 = vmatprep.mubr.bf16.mxu0 %v324
  %1320 = vmatmul.mubr.bf16.gmra.mxu0 %v323
  %v1321 = vpop.f32.mrf.mxu0
  %v1322 = vadd.f32 %v1281, %v1321
  %v1323 = vpop.f32.mrf.mxu0
  %v1324 = vpop.f32.mrf.mxu0
  %v1325 = vadd.f32 %v1284, %v1324
  %v1326 = vpop.f32.mrf.mxu0
  %1327 = vdwg.mxu0
  %1328 = vmatprep.subr.bf16.mxu0 0
  %1329 = vmatpush1.bf16.msra.mxu0 0
  %1330 = vmatprep.subr.bf16.mxu0 0
  %1331 = vmatpush1.bf16.msra.mxu0 0
  %1332 = vmatprep.subr.bf16.mxu0 0
  %1333 = vmatpush1.bf16.msra.mxu0 0
  %1334 = vmatprep.subr.bf16.mxu0 0
  %1335 = vmatpush1.bf16.msra.mxu0 0
  %1336 = vmatprep.subr.bf16.mxu0 0
  %1337 = vmatpush1.bf16.msra.mxu0 %v1039
  %1338 = vmatprep.subr.bf16.mxu0 0
  %1339 = vmatpush1.bf16.msra.mxu0 %v916
  %1340 = vmatprep.subr.bf16.mxu0 0
  %1341 = vmatpush1.bf16.msra.mxu0 %v915
  %1342 = vmatprep.subr.bf16.mxu0 0
  %1343 = vmatpush1.bf16.msra.mxu0 %v914
  %1344 = vmatprep.subr.bf16.mxu0 0
  %1345 = vmatpush2.bf16.msra.mxu0 0
  %1346 = vmatprep.subr.bf16.mxu0 0
  %1347 = vmatpush2.bf16.msra.mxu0 0
  %1348 = vmatprep.subr.bf16.mxu0 0
  %1349 = vmatpush2.bf16.msra.mxu0 0
  %1350 = vmatprep.subr.bf16.mxu0 0
  %1351 = vmatpush2.bf16.msra.mxu0 0
  %1352 = vmatprep.subr.bf16.mxu0 0
  %1353 = vmatpush2.bf16.msra.mxu0 0
  %1354 = vmatprep.subr.bf16.mxu0 0
  %1355 = vmatpush2.bf16.msra.mxu0 0
  %1356 = vmatprep.subr.bf16.mxu0 0
  %1357 = vmatpush2.bf16.msra.mxu0 0
  %1358 = vmatprep.subr.bf16.mxu0 0
  %1359 = vmatpush2.bf16.msra.mxu0 0
  %1360 = vmatprep.mubr.bf16.mxu0 0
  %1361 = vmatmul.mubr.bf16.gmra.mxu0 %v1035
  %v1362 = vpop.f32.mrf.mxu0
  %v1363 = vadd.f32 %v1322, %v1362
  %v1364 = vpop.f32.mrf.mxu0
  %v1365 = vpop.f32.mrf.mxu0
  %v1366 = vadd.f32 %v1325, %v1365
  %v1367 = vpop.f32.mrf.mxu0
  %1368 = vdwg.mxu0
  %v1369 = vld [vmem:[%s2] sm:$0x1]
  %v1371 = vlaneseq
  %v1372 = vshrl.u32 %v1371, 7
  %v1373 = vsub.s32 0, %v1372
  %v1374 = vrot.slane %v1369, %v1373
  %v1376 = vmul.f32 %v1363, %v1374
  %v1377 = vmul.f32 %v1366, %v1374
  %v1378 = vld [vmem:[%s3] sm:$0x1]
  %v1380 = vlaneseq
  %v1381 = vshrl.u32 %v1380, 7
  %v1382 = vsub.s32 0, %v1381
  %v1383 = vrot.slane %v1378, %v1382
  %v1385 = vadd.f32 %v1376, %v1383
  %v1386 = vadd.f32 %v1377, %v1383
  %v1387 = vmax.f32 %v1385, 0.0
  %v1388 = vmax.f32 %v1386, 0.0
  %v1389 = vmin.f32 %v1387, 20.0
  %v1390 = vmin.f32 %v1388, 20.0
  %v1391 = vpack.c.bf16 %v1390, %v1389
  %v1393 = vunpack.c.l.b16 %v1391
  %v1394 = vunpack.c.h.b16 %v1391
  %v1395 = vpack.c.b16 %v1393, %v1393
  %v1396 = vpack.c.b16 %v1394, %v1394
  %vm1399 = vcmask 60416
  %1400 = vst.msk [vmem:[%s4] sm:$0xf] %vm1399, %v1395
  %1401 = vst.msk [vmem:[%s4 + $0x4] sm:$0xf] %vm1399, %v1396
  // Predicated region
  $region18: #{deepspeech2_forward.8} parent=0 // pred_check
    _
  $region19: #{deepspeech2_forward.8} parent=0 // pred_check_branch
    %1403 = sbr.rel (0) target = $region21
  $region20: #{deepspeech2_forward.8} parent=0 // pred_region
    _
  $region21: #{deepspeech2_forward.8} parent=0 // pred_fallthru
    _
  // Predicated region
  $region22: #{deepspeech2_forward.8} parent=0 // pred_check
    _
  $region23: #{deepspeech2_forward.8} parent=0 // pred_check_branch
    %1405 = sbr.rel (0) target = $region25
  $region24: #{deepspeech2_forward.8} parent=0 // pred_region
    _
  $region25: #{deepspeech2_forward.8} parent=0 // pred_fallthru
    _

// kernel: deepspeech2_forward.11
$region0: #{deepspeech2_forward.11}
  #allocation0 [shape = 'u32[]', space=smem, size = 0x4, offset = 0x4, fixed_abs, tag = 'smem constant byte address 0x4 - core index']
  #allocation1 [shape = 'u32[144,128]{1,0:T(1,128)}', space=vmem, size = 0x12000, scoped, tag = 'internal scratch']
  %s0 = inlined_call_operand.vmem [shape: bf16[32,128], index: 0, kind: input, shape index: {}]
  %s1 = inlined_call_operand.vmem [shape: bf16[32,128], index: 1, kind: input, shape index: {}]
  %s2 = inlined_call_operand.vmem [shape: bf16[128,128], index: 2, kind: input, shape index: {}]
  %s3 = inlined_call_operand.vmem [shape: bf16[128,128], index: 3, kind: input, shape index: {}]
  %s4 = inlined_call_operand.vmem [shape: f32[1,128], index: 4, kind: input, shape index: {}]
  %s5 = inlined_call_operand.vmem [shape: f32[32,128], index: 5, kind: output, shape index: {}]
  %s6 = sld [smem:[#allocation0]]
  $region30: #{deepspeech2_forward.11} parent=0
    _
  %s8 = ssub.s32 1, %s6
  %s9 = scalar_select 0, %s8, %s6
  // Predicated region
  $region2: #{deepspeech2_forward.11} parent=0 // pred_check
    _
  $region3: #{deepspeech2_forward.11} parent=0 // pred_check_branch
    %11 = sbr.rel (0) target = $region5
  $region4: #{deepspeech2_forward.11} parent=0 // pred_region
    _
  $region5: #{deepspeech2_forward.11} parent=0 // pred_fallthru
    _
  // Predicated region
  $region6: #{deepspeech2_forward.11} parent=0 // pred_check
    _
  $region7: #{deepspeech2_forward.11} parent=0 // pred_check_branch
    %13 = sbr.rel (0) target = $region9
  $region8: #{deepspeech2_forward.11} parent=0 // pred_region
    _
  $region9: #{deepspeech2_forward.11} parent=0 // pred_fallthru
    _
  // Predicated region
  $region10: #{deepspeech2_forward.11} parent=0 // pred_check
    _
  $region11: #{deepspeech2_forward.11} parent=0 // pred_check_branch
    %15 = sbr.rel (0) target = $region13
  $region12: #{deepspeech2_forward.11} parent=0 // pred_region
    _
  $region13: #{deepspeech2_forward.11} parent=0 // pred_fallthru
    _
  // Predicated region
  $region14: #{deepspeech2_forward.11} parent=0 // pred_check
    _
  $region15: #{deepspeech2_forward.11} parent=0 // pred_check_branch
    %17 = sbr.rel (0) target = $region17
  $region16: #{deepspeech2_forward.11} parent=0 // pred_region
    _
  $region17: #{deepspeech2_forward.11} parent=0 // pred_fallthru
    _
  // Predicated region
  $region18: #{deepspeech2_forward.11} parent=0 // pred_check
    _
  $region19: #{deepspeech2_forward.11} parent=0 // pred_check_branch
    %19 = sbr.rel (0) target = $region21
  $region20: #{deepspeech2_forward.11} parent=0 // pred_region
    _
  $region21: #{deepspeech2_forward.11} parent=0 // pred_fallthru
    _
  %v21 = vld [vmem:[%s0] sm:$0xf]
  %v22 = vld [vmem:[%s0 + $0x4] sm:$0xf]
  %v23 = vld [vmem:[%s0 + $0x8] sm:$0xf]
  %v24 = vld [vmem:[%s0 + $0xc] sm:$0xf]
  %v25 = vld [vmem:[%s2] sm:$0xf]
  %v26 = vld [vmem:[%s2 + $0x4] sm:$0xf]
  %v27 = vld [vmem:[%s2 + $0x8] sm:$0xf]
  %v28 = vld [vmem:[%s2 + $0xc] sm:$0xf]
  %v29 = vld [vmem:[%s2 + $0x10] sm:$0xf]
  %v30 = vld [vmem:[%s2 + $0x14] sm:$0xf]
  %v31 = vld [vmem:[%s2 + $0x18] sm:$0xf]
  %v32 = vld [vmem:[%s2 + $0x1c] sm:$0xf]
  %v33 = vld [vmem:[%s2 + $0x20] sm:$0xf]
  %v34 = vld [vmem:[%s2 + $0x24] sm:$0xf]
  %v35 = vld [vmem:[%s2 + $0x28] sm:$0xf]
  %v36 = vld [vmem:[%s2 + $0x2c] sm:$0xf]
  %v37 = vld [vmem:[%s2 + $0x30] sm:$0xf]
  %v38 = vld [vmem:[%s2 + $0x34] sm:$0xf]
  %v39 = vld [vmem:[%s2 + $0x38] sm:$0xf]
  %v40 = vld [vmem:[%s2 + $0x3c] sm:$0xf]
  %v41 = vld [vmem:[%s1] sm:$0xf]
  %v42 = vld [vmem:[%s1 + $0x4] sm:$0xf]
  %v43 = vld [vmem:[%s1 + $0x8] sm:$0xf]
  %v44 = vld [vmem:[%s1 + $0xc] sm:$0xf]
  %v45 = vld [vmem:[%s3] sm:$0xf]
  %v46 = vld [vmem:[%s3 + $0x4] sm:$0xf]
  %v47 = vld [vmem:[%s3 + $0x8] sm:$0xf]
  %v48 = vld [vmem:[%s3 + $0xc] sm:$0xf]
  %v49 = vld [vmem:[%s3 + $0x10] sm:$0xf]
  %v50 = vld [vmem:[%s3 + $0x14] sm:$0xf]
  %v51 = vld [vmem:[%s3 + $0x18] sm:$0xf]
  %v52 = vld [vmem:[%s3 + $0x1c] sm:$0xf]
  %v53 = vld [vmem:[%s3 + $0x20] sm:$0xf]
  %v54 = vld [vmem:[%s3 + $0x24] sm:$0xf]
  %v55 = vld [vmem:[%s3 + $0x28] sm:$0xf]
  %v56 = vld [vmem:[%s3 + $0x2c] sm:$0xf]
  %v57 = vld [vmem:[%s3 + $0x30] sm:$0xf]
  %v58 = vld [vmem:[%s3 + $0x34] sm:$0xf]
  %v59 = vld [vmem:[%s3 + $0x38] sm:$0xf]
  %v60 = vld [vmem:[%s3 + $0x3c] sm:$0xf]
  %v65 = vunpack.c.l.b16 %v41
  %v66 = vunpack.c.l.b16 %v42
  %v67 = vunpack.c.l.b16 %v43
  %v68 = vunpack.c.l.b16 %v44
  %v69 = vpack.c.b16 %v66, %v65
  %v70 = vpack.c.b16 %v68, %v67
  %v89 = vunpack.c.l.b16 %v45
  %v90 = vunpack.c.l.b16 %v46
  %v91 = vunpack.c.l.b16 %v47
  %v92 = vunpack.c.l.b16 %v48
  %v93 = vunpack.c.l.b16 %v49
  %v94 = vunpack.c.l.b16 %v50
  %v95 = vunpack.c.l.b16 %v51
  %v96 = vunpack.c.l.b16 %v52
  %v97 = vunpack.c.l.b16 %v53
  %v98 = vunpack.c.l.b16 %v54
  %v99 = vunpack.c.l.b16 %v55
  %v100 = vunpack.c.l.b16 %v56
  %v101 = vunpack.c.l.b16 %v57
  %v102 = vunpack.c.l.b16 %v58
  %v103 = vunpack.c.l.b16 %v59
  %v104 = vunpack.c.l.b16 %v60
  %v105 = vpack.c.b16 %v90, %v89
  %v106 = vpack.c.b16 %v92, %v91
  %v107 = vpack.c.b16 %v94, %v93
  %v108 = vpack.c.b16 %v96, %v95
  %v109 = vpack.c.b16 %v98, %v97
  %v110 = vpack.c.b16 %v100, %v99
  %v111 = vpack.c.b16 %v102, %v101
  %v112 = vpack.c.b16 %v104, %v103
  %121 = vmatprep.subr.bf16.mxu0 0
  %122 = vmatpush1.bf16.msra.mxu0 %v112
  %123 = vmatprep.subr.bf16.mxu0 0
  %124 = vmatpush1.bf16.msra.mxu0 %v111
  %125 = vmatprep.subr.bf16.mxu0 0
  %126 = vmatpush1.bf16.msra.mxu0 %v110
  %127 = vmatprep.subr.bf16.mxu0 0
  %128 = vmatpush1.bf16.msra.mxu0 %v109
  %129 = vmatprep.subr.bf16.mxu0 0
  %130 = vmatpush1.bf16.msra.mxu0 %v108
  %131 = vmatprep.subr.bf16.mxu0 0
  %132 = vmatpush1.bf16.msra.mxu0 %v107
  %133 = vmatprep.subr.bf16.mxu0 0
  %134 = vmatpush1.bf16.msra.mxu0 %v106
  %135 = vmatprep.subr.bf16.mxu0 0
  %136 = vmatpush1.bf16.msra.mxu0 %v105
  %137 = vmatprep.subr.bf16.mxu0 0
  %138 = vmatpush2.bf16.msra.mxu0 0
  %139 = vmatprep.subr.bf16.mxu0 0
  %140 = vmatpush2.bf16.msra.mxu0 0
  %141 = vmatprep.subr.bf16.mxu0 0
  %142 = vmatpush2.bf16.msra.mxu0 0
  %143 = vmatprep.subr.bf16.mxu0 0
  %144 = vmatpush2.bf16.msra.mxu0 0
  %145 = vmatprep.subr.bf16.mxu0 0
  %146 = vmatpush2.bf16.msra.mxu0 0
  %147 = vmatprep.subr.bf16.mxu0 0
  %148 = vmatpush2.bf16.msra.mxu0 0
  %149 = vmatprep.subr.bf16.mxu0 0
  %150 = vmatpush2.bf16.msra.mxu0 0
  %151 = vmatprep.subr.bf16.mxu0 0
  %152 = vmatpush2.bf16.msra.mxu0 0
  %153 = vmatprep.mubr.bf16.mxu0 0
  %154 = vmatmul.mubr.bf16.gmra.mxu0 %v69
  %v155 = vpop.f32.mrf.mxu0
  %v156 = vadd.f32 0.0, %v155
  %v157 = vpop.f32.mrf.mxu0
  %v158 = vpop.f32.mrf.mxu0
  %v159 = vadd.f32 0.0, %v158
  %v160 = vpop.f32.mrf.mxu0
  %161 = vmatprep.mubr.bf16.mxu0 0
  %162 = vmatmul.mubr.bf16.gmra.mxu0 %v70
  %v163 = vpop.f32.mrf.mxu0
  %v164 = vadd.f32 0.0, %v163
  %v165 = vpop.f32.mrf.mxu0
  %v166 = vpop.f32.mrf.mxu0
  %v167 = vadd.f32 0.0, %v166
  %v168 = vpop.f32.mrf.mxu0
  %169 = vdwg.mxu0
  %v174 = vunpack.c.l.b16 %v21
  %v175 = vunpack.c.l.b16 %v22
  %v176 = vunpack.c.l.b16 %v23
  %v177 = vunpack.c.l.b16 %v24
  %v178 = vpack.c.b16 %v175, %v174
  %v179 = vpack.c.b16 %v177, %v176
  %v198 = vunpack.c.l.b16 %v25
  %v199 = vunpack.c.l.b16 %v26
  %v200 = vunpack.c.l.b16 %v27
  %v201 = vunpack.c.l.b16 %v28
  %v202 = vunpack.c.l.b16 %v29
  %v203 = vunpack.c.l.b16 %v30
  %v204 = vunpack.c.l.b16 %v31
  %v205 = vunpack.c.l.b16 %v32
  %v206 = vunpack.c.l.b16 %v33
  %v207 = vunpack.c.l.b16 %v34
  %v208 = vunpack.c.l.b16 %v35
  %v209 = vunpack.c.l.b16 %v36
  %v210 = vunpack.c.l.b16 %v37
  %v211 = vunpack.c.l.b16 %v38
  %v212 = vunpack.c.l.b16 %v39
  %v213 = vunpack.c.l.b16 %v40
  %v214 = vpack.c.b16 %v199, %v198
  %v215 = vpack.c.b16 %v201, %v200
  %v216 = vpack.c.b16 %v203, %v202
  %v217 = vpack.c.b16 %v205, %v204
  %v218 = vpack.c.b16 %v207, %v206
  %v219 = vpack.c.b16 %v209, %v208
  %v220 = vpack.c.b16 %v211, %v210
  %v221 = vpack.c.b16 %v213, %v212
  %230 = vmatprep.subr.bf16.mxu0 0
  %231 = vmatpush1.bf16.msra.mxu0 %v221
  %232 = vmatprep.subr.bf16.mxu0 0
  %233 = vmatpush1.bf16.msra.mxu0 %v220
  %234 = vmatprep.subr.bf16.mxu0 0
  %235 = vmatpush1.bf16.msra.mxu0 %v219
  %236 = vmatprep.subr.bf16.mxu0 0
  %237 = vmatpush1.bf16.msra.mxu0 %v218
  %238 = vmatprep.subr.bf16.mxu0 0
  %239 = vmatpush1.bf16.msra.mxu0 %v217
  %240 = vmatprep.subr.bf16.mxu0 0
  %241 = vmatpush1.bf16.msra.mxu0 %v216
  %242 = vmatprep.subr.bf16.mxu0 0
  %243 = vmatpush1.bf16.msra.mxu0 %v215
  %244 = vmatprep.subr.bf16.mxu0 0
  %245 = vmatpush1.bf16.msra.mxu0 %v214
  %246 = vmatprep.subr.bf16.mxu0 0
  %247 = vmatpush2.bf16.msra.mxu0 0
  %248 = vmatprep.subr.bf16.mxu0 0
  %249 = vmatpush2.bf16.msra.mxu0 0
  %250 = vmatprep.subr.bf16.mxu0 0
  %251 = vmatpush2.bf16.msra.mxu0 0
  %252 = vmatprep.subr.bf16.mxu0 0
  %253 = vmatpush2.bf16.msra.mxu0 0
  %254 = vmatprep.subr.bf16.mxu0 0
  %255 = vmatpush2.bf16.msra.mxu0 0
  %256 = vmatprep.subr.bf16.mxu0 0
  %257 = vmatpush2.bf16.msra.mxu0 0
  %258 = vmatprep.subr.bf16.mxu0 0
  %259 = vmatpush2.bf16.msra.mxu0 0
  %260 = vmatprep.subr.bf16.mxu0 0
  %261 = vmatpush2.bf16.msra.mxu0 0
  %262 = vmatprep.mubr.bf16.mxu0 0
  %263 = vmatmul.mubr.bf16.gmra.mxu0 %v178
  %v264 = vpop.f32.mrf.mxu0
  %v265 = vadd.f32 %v156, %v264
  %v266 = vpop.f32.mrf.mxu0
  %v267 = vpop.f32.mrf.mxu0
  %v268 = vadd.f32 %v159, %v267
  %v269 = vpop.f32.mrf.mxu0
  %270 = vmatprep.mubr.bf16.mxu0 0
  %271 = vmatmul.mubr.bf16.gmra.mxu0 %v179
  %v272 = vpop.f32.mrf.mxu0
  %v273 = vadd.f32 %v164, %v272
  %v274 = vpop.f32.mrf.mxu0
  %v275 = vpop.f32.mrf.mxu0
  %v276 = vadd.f32 %v167, %v275
  %v277 = vpop.f32.mrf.mxu0
  %278 = vdwg.mxu0
  %v279 = vld [vmem:[%s4] sm:$0x1]
  %v281 = vlaneseq
  %v282 = vshrl.u32 %v281, 7
  %v283 = vsub.s32 0, %v282
  %v284 = vrot.slane %v279, %v283
  %v286 = vadd.f32 %v265, %v284
  %v287 = vadd.f32 %v268, %v284
  %v288 = vadd.f32 %v273, %v284
  %v289 = vadd.f32 %v276, %v284
  %290 = vmax.xlane.f32.xlu0 %v286
  %v291 = vpop.xlane.xlu0 %290
  %292 = vmax.xlane.f32.xlu0 %v287
  %v293 = vpop.xlane.xlu0 %292
  %294 = vmax.xlane.f32.xlu0 %v288
  %v295 = vpop.xlane.xlu0 %294
  %296 = vmax.xlane.f32.xlu0 %v289
  %v297 = vpop.xlane.xlu0 %296
  %v298 = vsub.f32 %v286, %v291
  %v299 = vsub.f32 %v287, %v293
  %v300 = vsub.f32 %v288, %v295
  %v301 = vsub.f32 %v289, %v297
  %v302 = vmul.f32 %v298, 1.442695
  %v303 = vpow.pop %v302
  %v304 = vmul.f32 %v299, 1.442695
  %v305 = vpow.pop %v304
  %v306 = vmul.f32 %v300, 1.442695
  %v307 = vpow.pop %v306
  %v308 = vmul.f32 %v301, 1.442695
  %v309 = vpow.pop %v308
  %310 = vadd.xlane.f32.xlu0 %v303
  %v311 = vpop.xlane.xlu0 %310
  %312 = vadd.xlane.f32.xlu0 %v305
  %v313 = vpop.xlane.xlu0 %312
  %314 = vadd.xlane.f32.xlu0 %v307
  %v315 = vpop.xlane.xlu0 %314
  %316 = vadd.xlane.f32.xlu0 %v309
  %v317 = vpop.xlane.xlu0 %316
  %v318 = vlog2.pop %v311
  %v319 = vmul.f32 %v318, 0.6931472
  %v320 = vlog2.pop %v313
  %v321 = vmul.f32 %v320, 0.6931472
  %v322 = vlog2.pop %v315
  %v323 = vmul.f32 %v322, 0.6931472
  %v324 = vlog2.pop %v317
  %v325 = vmul.f32 %v324, 0.6931472
  %v326 = vsub.f32 %v298, %v319
  %v327 = vsub.f32 %v299, %v321
  %v328 = vsub.f32 %v300, %v323
  %v329 = vsub.f32 %v301, %v325
  %330 = vst [vmem:[%s5] sm:$0xff] %v326
  %331 = vst [vmem:[%s5 + $0x8] sm:$0xff] %v327
  %332 = vst [vmem:[%s5 + $0x10] sm:$0xff] %v328
  %333 = vst [vmem:[%s5 + $0x18] sm:$0xff] %v329
  // Predicated region
  $region22: #{deepspeech2_forward.11} parent=0 // pred_check
    _
  $region23: #{deepspeech2_forward.11} parent=0 // pred_check_branch
    %335 = sbr.rel (0) target = $region25
  $region24: #{deepspeech2_forward.11} parent=0 // pred_region
    _
  $region25: #{deepspeech2_forward.11} parent=0 // pred_fallthru
    _
  // Predicated region
  $region26: #{deepspeech2_forward.11} parent=0 // pred_check
    _
  $region27: #{deepspeech2_forward.11} parent=0 // pred_check_branch
    %337 = sbr.rel (0) target = $region29
  $region28: #{deepspeech2_forward.11} parent=0 // pred_region
    _
  $region29: #{deepspeech2_forward.11} parent=0 // pred_fallthru
    _

// kernel: deepspeech2_forward.9
$region0: #{deepspeech2_forward.9}
  #allocation0 [shape = 'u32[]', space=smem, size = 0x4, offset = 0x4, fixed_abs, tag = 'smem constant byte address 0x4 - core index']
  #allocation1 [shape = 'u32[144,128]{1,0:T(1,128)}', space=vmem, size = 0x12000, scoped, tag = 'internal scratch']
  #allocation2 [shape = 'f32[2,8,128]{2,1,0:T(8,128)}', space=vmem, size = 0x2000, scoped, tag = 'scratch operand']
  #allocation3 [shape = 'f32[32,384]{1,0:T(8,128)}', space=vmem, size = 0xc000, scoped, tag = 'scratch operand']
  #allocation4 [shape = 'f32[32,384]{1,0:T(8,128)}', space=vmem, size = 0xc000, scoped, tag = 'scratch operand']
  %s0 = inlined_call_operand.vmem [shape: bf16[4,8,16], index: 0, kind: input, shape index: {}, may-alias: {0,1}]
  %s1 = inlined_call_operand.vmem [shape: bf16[4,8,16], index: 1, kind: input, shape index: {}, may-alias: {0,1}]
  %s2 = inlined_call_operand.vmem [shape: bf16[16,768], index: 2, kind: input, shape index: {}]
  %s3 = inlined_call_operand.vmem [shape: f32[1,768], index: 3, kind: input, shape index: {}]
  %s4 = inlined_call_operand.vmem [shape: bf16[2,128,384], index: 4, kind: input, shape index: {}]
  %s5 = inlined_call_operand.vmem [shape: f32[2,1,384], index: 5, kind: input, shape index: {}]
  %s6 = inlined_call_operand.vmem [shape: bf16[4,8,128], index: 6, kind: output, shape index: {0}]
  %s7 = inlined_call_operand.vmem [shape: bf16[4,8,128], index: 7, kind: output, shape index: {1}]
  %8 = xla_tuple %s6, %s7
  %s9 = sld [smem:[#allocation0]]
  $region46: #{deepspeech2_forward.9} parent=0
    _
  %s11 = ssub.s32 1, %s9
  %s12 = scalar_select 0, %s11, %s9
  // Predicated region
  $region2: #{deepspeech2_forward.9} parent=0 // pred_check
    _
  $region3: #{deepspeech2_forward.9} parent=0 // pred_check_branch
    %14 = sbr.rel (0) target = $region5
  $region4: #{deepspeech2_forward.9} parent=0 // pred_region
    _
  $region5: #{deepspeech2_forward.9} parent=0 // pred_fallthru
    _
  // Predicated region
  $region6: #{deepspeech2_forward.9} parent=0 // pred_check
    _
  $region7: #{deepspeech2_forward.9} parent=0 // pred_check_branch
    %16 = sbr.rel (0) target = $region9
  $region8: #{deepspeech2_forward.9} parent=0 // pred_region
    %s17 = ssub.s32 0, 0
    %s18 = smul.u32 4, %s17
    %p19 = scmp.lt.s32.totalorder %s18, 3
    %s20 = scalar_select %p19, %s18, 3
    %s21 = smul.addr %s20, 4
    %s22 = scalar_lea.vmem %s1, %s21
    %s23 = ssub.s32 0, 0
    %s24 = smul.u32 4, %s23
  $region9: #{deepspeech2_forward.9} parent=0 // pred_fallthru
    _
  // Predicated region
  $region10: #{deepspeech2_forward.9} parent=0 // pred_check
    _
  $region11: #{deepspeech2_forward.9} parent=0 // pred_check_branch
    %26 = sbr.rel (0) target = $region13
  $region12: #{deepspeech2_forward.9} parent=0 // pred_region
    _
  $region13: #{deepspeech2_forward.9} parent=0 // pred_fallthru
    _
  // Predicated region
  $region14: #{deepspeech2_forward.9} parent=0 // pred_check
    _
  $region15: #{deepspeech2_forward.9} parent=0 // pred_check_branch
    %28 = sbr.rel (0) target = $region17
  $region16: #{deepspeech2_forward.9} parent=0 // pred_region
    _
  $region17: #{deepspeech2_forward.9} parent=0 // pred_fallthru
    _
  // Predicated region
  $region18: #{deepspeech2_forward.9} parent=0 // pred_check
    _
  $region19: #{deepspeech2_forward.9} parent=0 // pred_check_branch
    %30 = sbr.rel (0) target = $region21
  $region20: #{deepspeech2_forward.9} parent=0 // pred_region
    _
  $region21: #{deepspeech2_forward.9} parent=0 // pred_fallthru
    _
  // Predicated region
  $region22: #{deepspeech2_forward.9} parent=0 // pred_check
    _
  $region23: #{deepspeech2_forward.9} parent=0 // pred_check_branch
    %32 = sbr.rel (0) target = $region25
  $region24: #{deepspeech2_forward.9} parent=0 // pred_region
    _
  $region25: #{deepspeech2_forward.9} parent=0 // pred_fallthru
    _
  %s33 = ssub.s32 0, 0
  %s34 = smul.u32 4, %s33
  %p35 = scmp.lt.s32.totalorder %s34, 3
  %s36 = scalar_select %p35, %s34, 3
  %s37 = smul.addr %s36, 4
  %s38 = scalar_lea.vmem %s1, %s37
  %s39 = ssub.s32 0, 0
  %s40 = smul.u32 4, %s39
  %p41 = scmp.lt.s32.totalorder %s40, 3
  %s42 = scalar_select %p41, %s40, 3
  %s43 = smul.addr %s42, 4
  %s44 = scalar_lea.vmem %s7, %s43
  %s45 = ssub.s32 0, 0
  %s46 = smul.u32 4, %s45
  %p47 = scmp.lt.s32.totalorder %s46, 3
  %s48 = scalar_select %p47, %s46, 3
  %s49 = smul.addr %s48, 4
  %s50 = scalar_lea.vmem %s1, %s49
  %s51 = ssub.s32 0, 0
  %s52 = smul.u32 4, %s51
  %s53 = ssub.s32 0, 0
  %s54 = smul.u32 4, %s53
  %p55 = scmp.lt.s32.totalorder %s54, 3
  %s56 = scalar_select %p55, %s54, 3
  %s57 = smul.addr %s56, 4
  %s58 = scalar_lea.vmem %s7, %s57
  %s59 = ssub.s32 0, 0
  %s60 = smul.u32 4, %s59
  %p62 = scmp.eq.s32.totalorder 0, 0
  // Predicated region
  $region26: #{deepspeech2_forward.9} parent=0 // pred_check
    %p63 = pneg %p62
  $region27: #{deepspeech2_forward.9} parent=0 // pred_check_branch
    %65 = sbr.rel (%p63) target = $region29
  $region28: #{deepspeech2_forward.9} parent=0 // pred_region
    %66 = vst [vmem:[#allocation2] sm:$0xff] 0.0
    %67 = vst [vmem:[#allocation2 + $0x8] sm:$0xff] 0.0
  $region29: #{deepspeech2_forward.9} parent=0 // pred_fallthru
    _
  %v68 = vld [vmem:[%s0] sm:$0xf]
  %v69 = vld [vmem:[%s0 + $0x4] sm:$0xf]
  %v70 = vld [vmem:[%s0 + $0x8] sm:$0xf]
  %v71 = vld [vmem:[%s0 + $0xc] sm:$0xf]
  %v72 = vld [vmem:[%s50] sm:$0xf]
  %v73 = vld [vmem:[%s50 + $0x4] sm:$0xf]
  %v74 = vld [vmem:[%s50 + $0x8] sm:$0xf]
  %v75 = vld [vmem:[%s50 + $0xc] sm:$0xf]
  %v76 = vld [vmem:[%s2] sm:$0xff]
  %v77 = vld [vmem:[%s2 + $0x8] sm:$0xf]
  %v78 = vld [vmem:[%s2 + $0x18] sm:$0xff]
  %v79 = vld [vmem:[%s2 + $0x20] sm:$0xf]
  %v80 = vld [vmem:[%s2 + $0xc] sm:$0xff]
  %v81 = vld [vmem:[%s2 + $0x14] sm:$0xf]
  %v82 = vld [vmem:[%s2 + $0x24] sm:$0xff]
  %v83 = vld [vmem:[%s2 + $0x2c] sm:$0xf]
  %v84 = vld [vmem:[%s3] sm:$0x7]
  %v86 = vlaneseq
  %v87 = vshrl.u32 %v86, 7
  %v88 = vsub.s32 0, %v87
  %v89 = vrot.slane %v84, %v88
  %v90 = vlaneseq
  %v91 = vshrl.u32 %v90, 7
  %v92 = vsub.s32 1, %v91
  %v93 = vrot.slane %v84, %v92
  %v94 = vlaneseq
  %v95 = vshrl.u32 %v94, 7
  %v96 = vsub.s32 2, %v95
  %v97 = vrot.slane %v84, %v96
  %v105 = vunpack.c.l.b16 %v68
  %v106 = vunpack.c.l.b16 %v69
  %v107 = vunpack.c.l.b16 %v70
  %v108 = vunpack.c.l.b16 %v71
  %v109 = vpack.c.b16 %v106, %v105
  %v110 = vpack.c.b16 %v108, %v107
  %v115 = vunpack.c.l.b16 %v76
  %v116 = vunpack.c.h.b16 %v76
  %v117 = vunpack.c.l.b16 %v77
  %v118 = vunpack.c.l.b16 %v78
  %v119 = vunpack.c.h.b16 %v78
  %v120 = vunpack.c.l.b16 %v79
  %v121 = vpack.c.b16 %v118, %v115
  %v122 = vpack.c.b16 %v119, %v116
  %v123 = vpack.c.b16 %v120, %v117
  %vm127 = vcmask 130048
  %v129 = vsel %vm127, %v109, 0
  %v132 = vsel %vm127, %v110, 0
  %134 = vmatprep.subr.bf16.mxu0 0
  %135 = vmatpush1.bf16.msra.mxu0 0
  %136 = vmatprep.subr.bf16.mxu0 0
  %137 = vmatpush1.bf16.msra.mxu0 0
  %138 = vmatprep.subr.bf16.mxu0 0
  %139 = vmatpush1.bf16.msra.mxu0 0
  %140 = vmatprep.subr.bf16.mxu0 0
  %141 = vmatpush1.bf16.msra.mxu0 0
  %142 = vmatprep.subr.bf16.mxu0 0
  %143 = vmatpush1.bf16.msra.mxu0 0
  %144 = vmatprep.subr.bf16.mxu0 0
  %145 = vmatpush1.bf16.msra.mxu0 0
  %146 = vmatprep.subr.bf16.mxu0 0
  %147 = vmatpush1.bf16.msra.mxu0 0
  %148 = vmatprep.subr.bf16.mxu0 %v122
  %149 = vmatpush1.bf16.msra.mxu0 %v121
  %150 = vmatprep.subr.bf16.mxu0 0
  %151 = vmatpush2.bf16.msra.mxu0 0
  %152 = vmatprep.subr.bf16.mxu0 0
  %153 = vmatpush2.bf16.msra.mxu0 0
  %154 = vmatprep.subr.bf16.mxu0 0
  %155 = vmatpush2.bf16.msra.mxu0 0
  %156 = vmatprep.subr.bf16.mxu0 0
  %157 = vmatpush2.bf16.msra.mxu0 0
  %158 = vmatprep.subr.bf16.mxu0 0
  %159 = vmatpush2.bf16.msra.mxu0 0
  %160 = vmatprep.subr.bf16.mxu0 0
  %161 = vmatpush2.bf16.msra.mxu0 0
  %162 = vmatprep.subr.bf16.mxu0 0
  %163 = vmatpush2.bf16.msra.mxu0 0
  %164 = vmatprep.subr.bf16.mxu0 0
  %165 = vmatpush2.bf16.msra.mxu0 0
  %166 = vmatprep.mubr.bf16.mxu0 0
  %167 = vmatmul.mubr.bf16.gmra.mxu0 %v129
  %v168 = vpop.f32.mrf.mxu0
  %v169 = vadd.f32 %v89, %v168
  %v170 = vpop.f32.mrf.mxu0
  %v171 = vadd.f32 %v93, %v170
  %v172 = vpop.f32.mrf.mxu0
  %v173 = vadd.f32 %v89, %v172
  %v174 = vpop.f32.mrf.mxu0
  %v175 = vadd.f32 %v93, %v174
  %176 = vmatprep.mubr.bf16.mxu0 0
  %177 = vmatmul.mubr.bf16.gmra.mxu0 %v132
  %v178 = vpop.f32.mrf.mxu0
  %v179 = vadd.f32 %v89, %v178
  %v180 = vpop.f32.mrf.mxu0
  %v181 = vadd.f32 %v93, %v180
  %v182 = vpop.f32.mrf.mxu0
  %v183 = vadd.f32 %v89, %v182
  %v184 = vpop.f32.mrf.mxu0
  %v185 = vadd.f32 %v93, %v184
  %186 = vdwg.mxu0
  %187 = vmatprep.subr.bf16.mxu0 0
  %188 = vmatpush1.bf16.msra.mxu0 0
  %189 = vmatprep.subr.bf16.mxu0 0
  %190 = vmatpush1.bf16.msra.mxu0 0
  %191 = vmatprep.subr.bf16.mxu0 0
  %192 = vmatpush1.bf16.msra.mxu0 0
  %193 = vmatprep.subr.bf16.mxu0 0
  %194 = vmatpush1.bf16.msra.mxu0 0
  %195 = vmatprep.subr.bf16.mxu0 0
  %196 = vmatpush1.bf16.msra.mxu0 0
  %197 = vmatprep.subr.bf16.mxu0 0
  %198 = vmatpush1.bf16.msra.mxu0 0
  %199 = vmatprep.subr.bf16.mxu0 0
  %200 = vmatpush1.bf16.msra.mxu0 0
  %201 = vmatprep.subr.bf16.mxu0 0
  %202 = vmatpush1.bf16.msra.mxu0 %v123
  %203 = vmatprep.subr.bf16.mxu0 0
  %204 = vmatpush2.bf16.msra.mxu0 0
  %205 = vmatprep.subr.bf16.mxu0 0
  %206 = vmatpush2.bf16.msra.mxu0 0
  %207 = vmatprep.subr.bf16.mxu0 0
  %208 = vmatpush2.bf16.msra.mxu0 0
  %209 = vmatprep.subr.bf16.mxu0 0
  %210 = vmatpush2.bf16.msra.mxu0 0
  %211 = vmatprep.subr.bf16.mxu0 0
  %212 = vmatpush2.bf16.msra.mxu0 0
  %213 = vmatprep.subr.bf16.mxu0 0
  %214 = vmatpush2.bf16.msra.mxu0 0
  %215 = vmatprep.subr.bf16.mxu0 0
  %216 = vmatpush2.bf16.msra.mxu0 0
  %217 = vmatprep.subr.bf16.mxu0 0
  %218 = vmatpush2.bf16.msra.mxu0 0
  %219 = vmatprep.mubr.bf16.mxu0 0
  %220 = vmatmul.mubr.bf16.gmra.mxu0 %v129
  %v221 = vpop.f32.mrf.mxu0
  %v222 = vadd.f32 %v97, %v221
  %v223 = vpop.f32.mrf.mxu0
  %v224 = vpop.f32.mrf.mxu0
  %v225 = vadd.f32 %v97, %v224
  %v226 = vpop.f32.mrf.mxu0
  %227 = vmatprep.mubr.bf16.mxu0 0
  %228 = vmatmul.mubr.bf16.gmra.mxu0 %v132
  %v229 = vpop.f32.mrf.mxu0
  %v230 = vadd.f32 %v97, %v229
  %v231 = vpop.f32.mrf.mxu0
  %v232 = vpop.f32.mrf.mxu0
  %v233 = vadd.f32 %v97, %v232
  %v234 = vpop.f32.mrf.mxu0
  %235 = vdwg.mxu0
  %236 = vst [vmem:[#allocation3] sm:$0xff] %v169
  %237 = vst [vmem:[#allocation3 + $0x8] sm:$0xff] %v171
  %238 = vst [vmem:[#allocation3 + $0x10] sm:$0xff] %v222
  %239 = vst [vmem:[#allocation3 + $0x18] sm:$0xff] %v173
  %240 = vst [vmem:[#allocation3 + $0x20] sm:$0xff] %v175
  %241 = vst [vmem:[#allocation3 + $0x28] sm:$0xff] %v225
  %242 = vst [vmem:[#allocation3 + $0x30] sm:$0xff] %v179
  %243 = vst [vmem:[#allocation3 + $0x38] sm:$0xff] %v181
  %244 = vst [vmem:[#allocation3 + $0x40] sm:$0xff] %v230
  %245 = vst [vmem:[#allocation3 + $0x48] sm:$0xff] %v183
  %246 = vst [vmem:[#allocation3 + $0x50] sm:$0xff] %v185
  %247 = vst [vmem:[#allocation3 + $0x58] sm:$0xff] %v233
  %v248 = vld [vmem:[%s3 + $0x3] sm:$0x7]
  %v250 = vlaneseq
  %v251 = vshrl.u32 %v250, 7
  %v252 = vsub.s32 0, %v251
  %v253 = vrot.slane %v248, %v252
  %v254 = vlaneseq
  %v255 = vshrl.u32 %v254, 7
  %v256 = vsub.s32 1, %v255
  %v257 = vrot.slane %v248, %v256
  %v258 = vlaneseq
  %v259 = vshrl.u32 %v258, 7
  %v260 = vsub.s32 2, %v259
  %v261 = vrot.slane %v248, %v260
  %v269 = vunpack.c.l.b16 %v72
  %v270 = vunpack.c.l.b16 %v73
  %v271 = vunpack.c.l.b16 %v74
  %v272 = vunpack.c.l.b16 %v75
  %v273 = vpack.c.b16 %v270, %v269
  %v274 = vpack.c.b16 %v272, %v271
  %v279 = vunpack.c.l.b16 %v80
  %v280 = vunpack.c.h.b16 %v80
  %v281 = vunpack.c.l.b16 %v81
  %v282 = vunpack.c.l.b16 %v82
  %v283 = vunpack.c.h.b16 %v82
  %v284 = vunpack.c.l.b16 %v83
  %v285 = vpack.c.b16 %v282, %v279
  %v286 = vpack.c.b16 %v283, %v280
  %v287 = vpack.c.b16 %v284, %v281
  %v292 = vsel %vm127, %v273, 0
  %v295 = vsel %vm127, %v274, 0
  %297 = vmatprep.subr.bf16.mxu0 0
  %298 = vmatpush1.bf16.msra.mxu0 0
  %299 = vmatprep.subr.bf16.mxu0 0
  %300 = vmatpush1.bf16.msra.mxu0 0
  %301 = vmatprep.subr.bf16.mxu0 0
  %302 = vmatpush1.bf16.msra.mxu0 0
  %303 = vmatprep.subr.bf16.mxu0 0
  %304 = vmatpush1.bf16.msra.mxu0 0
  %305 = vmatprep.subr.bf16.mxu0 0
  %306 = vmatpush1.bf16.msra.mxu0 0
  %307 = vmatprep.subr.bf16.mxu0 0
  %308 = vmatpush1.bf16.msra.mxu0 0
  %309 = vmatprep.subr.bf16.mxu0 0
  %310 = vmatpush1.bf16.msra.mxu0 0
  %311 = vmatprep.subr.bf16.mxu0 %v286
  %312 = vmatpush1.bf16.msra.mxu0 %v285
  %313 = vmatprep.subr.bf16.mxu0 0
  %314 = vmatpush2.bf16.msra.mxu0 0
  %315 = vmatprep.subr.bf16.mxu0 0
  %316 = vmatpush2.bf16.msra.mxu0 0
  %317 = vmatprep.subr.bf16.mxu0 0
  %318 = vmatpush2.bf16.msra.mxu0 0
  %319 = vmatprep.subr.bf16.mxu0 0
  %320 = vmatpush2.bf16.msra.mxu0 0
  %321 = vmatprep.subr.bf16.mxu0 0
  %322 = vmatpush2.bf16.msra.mxu0 0
  %323 = vmatprep.subr.bf16.mxu0 0
  %324 = vmatpush2.bf16.msra.mxu0 0
  %325 = vmatprep.subr.bf16.mxu0 0
  %326 = vmatpush2.bf16.msra.mxu0 0
  %327 = vmatprep.subr.bf16.mxu0 0
  %328 = vmatpush2.bf16.msra.mxu0 0
  %329 = vmatprep.mubr.bf16.mxu0 0
  %330 = vmatmul.mubr.bf16.gmra.mxu0 %v292
  %v331 = vpop.f32.mrf.mxu0
  %v332 = vadd.f32 %v253, %v331
  %v333 = vpop.f32.mrf.mxu0
  %v334 = vadd.f32 %v257, %v333
  %v335 = vpop.f32.mrf.mxu0
  %v336 = vadd.f32 %v253, %v335
  %v337 = vpop.f32.mrf.mxu0
  %v338 = vadd.f32 %v257, %v337
  %339 = vmatprep.mubr.bf16.mxu0 0
  %340 = vmatmul.mubr.bf16.gmra.mxu0 %v295
  %v341 = vpop.f32.mrf.mxu0
  %v342 = vadd.f32 %v253, %v341
  %v343 = vpop.f32.mrf.mxu0
  %v344 = vadd.f32 %v257, %v343
  %v345 = vpop.f32.mrf.mxu0
  %v346 = vadd.f32 %v253, %v345
  %v347 = vpop.f32.mrf.mxu0
  %v348 = vadd.f32 %v257, %v347
  %349 = vdwg.mxu0
  %350 = vmatprep.subr.bf16.mxu0 0
  %351 = vmatpush1.bf16.msra.mxu0 0
  %352 = vmatprep.subr.bf16.mxu0 0
  %353 = vmatpush1.bf16.msra.mxu0 0
  %354 = vmatprep.subr.bf16.mxu0 0
  %355 = vmatpush1.bf16.msra.mxu0 0
  %356 = vmatprep.subr.bf16.mxu0 0
  %357 = vmatpush1.bf16.msra.mxu0 0
  %358 = vmatprep.subr.bf16.mxu0 0
  %359 = vmatpush1.bf16.msra.mxu0 0
  %360 = vmatprep.subr.bf16.mxu0 0
  %361 = vmatpush1.bf16.msra.mxu0 0
  %362 = vmatprep.subr.bf16.mxu0 0
  %363 = vmatpush1.bf16.msra.mxu0 0
  %364 = vmatprep.subr.bf16.mxu0 0
  %365 = vmatpush1.bf16.msra.mxu0 %v287
  %366 = vmatprep.subr.bf16.mxu0 0
  %367 = vmatpush2.bf16.msra.mxu0 0
  %368 = vmatprep.subr.bf16.mxu0 0
  %369 = vmatpush2.bf16.msra.mxu0 0
  %370 = vmatprep.subr.bf16.mxu0 0
  %371 = vmatpush2.bf16.msra.mxu0 0
  %372 = vmatprep.subr.bf16.mxu0 0
  %373 = vmatpush2.bf16.msra.mxu0 0
  %374 = vmatprep.subr.bf16.mxu0 0
  %375 = vmatpush2.bf16.msra.mxu0 0
  %376 = vmatprep.subr.bf16.mxu0 0
  %377 = vmatpush2.bf16.msra.mxu0 0
  %378 = vmatprep.subr.bf16.mxu0 0
  %379 = vmatpush2.bf16.msra.mxu0 0
  %380 = vmatprep.subr.bf16.mxu0 0
  %381 = vmatpush2.bf16.msra.mxu0 0
  %382 = vmatprep.mubr.bf16.mxu0 0
  %383 = vmatmul.mubr.bf16.gmra.mxu0 %v292
  %v384 = vpop.f32.mrf.mxu0
  %v385 = vadd.f32 %v261, %v384
  %v386 = vpop.f32.mrf.mxu0
  %v387 = vpop.f32.mrf.mxu0
  %v388 = vadd.f32 %v261, %v387
  %v389 = vpop.f32.mrf.mxu0
  %390 = vmatprep.mubr.bf16.mxu0 0
  %391 = vmatmul.mubr.bf16.gmra.mxu0 %v295
  %v392 = vpop.f32.mrf.mxu0
  %v393 = vadd.f32 %v261, %v392
  %v394 = vpop.f32.mrf.mxu0
  %v395 = vpop.f32.mrf.mxu0
  %v396 = vadd.f32 %v261, %v395
  %v397 = vpop.f32.mrf.mxu0
  %398 = vdwg.mxu0
  %399 = vst [vmem:[#allocation4] sm:$0xff] %v332
  %400 = vst [vmem:[#allocation4 + $0x8] sm:$0xff] %v334
  %401 = vst [vmem:[#allocation4 + $0x10] sm:$0xff] %v385
  %402 = vst [vmem:[#allocation4 + $0x18] sm:$0xff] %v336
  %403 = vst [vmem:[#allocation4 + $0x20] sm:$0xff] %v338
  %404 = vst [vmem:[#allocation4 + $0x28] sm:$0xff] %v388
  %405 = vst [vmem:[#allocation4 + $0x30] sm:$0xff] %v342
  %406 = vst [vmem:[#allocation4 + $0x38] sm:$0xff] %v344
  %407 = vst [vmem:[#allocation4 + $0x40] sm:$0xff] %v393
  %408 = vst [vmem:[#allocation4 + $0x48] sm:$0xff] %v346
  %409 = vst [vmem:[#allocation4 + $0x50] sm:$0xff] %v348
  %410 = vst [vmem:[#allocation4 + $0x58] sm:$0xff] %v396
  %v411 = vld [vmem:[%s4] sm:$0xff]
  %v412 = vld [vmem:[%s4 + $0x8] sm:$0xf]
  %v413 = vld [vmem:[%s4 + $0xc] sm:$0xff]
  %v414 = vld [vmem:[%s4 + $0x14] sm:$0xf]
  %v415 = vld [vmem:[%s4 + $0x18] sm:$0xff]
  %v416 = vld [vmem:[%s4 + $0x20] sm:$0xf]
  %v417 = vld [vmem:[%s4 + $0x24] sm:$0xff]
  %v418 = vld [vmem:[%s4 + $0x2c] sm:$0xf]
  %v419 = vld [vmem:[%s4 + $0x30] sm:$0xff]
  %v420 = vld [vmem:[%s4 + $0x38] sm:$0xf]
  %v421 = vld [vmem:[%s4 + $0x3c] sm:$0xff]
  %v422 = vld [vmem:[%s4 + $0x44] sm:$0xf]
  %v423 = vld [vmem:[%s4 + $0x48] sm:$0xff]
  %v424 = vld [vmem:[%s4 + $0x50] sm:$0xf]
  %v425 = vld [vmem:[%s4 + $0x54] sm:$0xff]
  %v426 = vld [vmem:[%s4 + $0x5c] sm:$0xf]
  %v427 = vld [vmem:[%s4 + $0x60] sm:$0xff]
  %v428 = vld [vmem:[%s4 + $0x68] sm:$0xf]
  %v429 = vld [vmem:[%s4 + $0x6c] sm:$0xff]
  %v430 = vld [vmem:[%s4 + $0x74] sm:$0xf]
  %v431 = vld [vmem:[%s4 + $0x78] sm:$0xff]
  %v432 = vld [vmem:[%s4 + $0x80] sm:$0xf]
  %v433 = vld [vmem:[%s4 + $0x84] sm:$0xff]
  %v434 = vld [vmem:[%s4 + $0x8c] sm:$0xf]
  %v435 = vld [vmem:[%s4 + $0x90] sm:$0xff]
  %v436 = vld [vmem:[%s4 + $0x98] sm:$0xf]
  %v437 = vld [vmem:[%s4 + $0x9c] sm:$0xff]
  %v438 = vld [vmem:[%s4 + $0xa4] sm:$0xf]
  %v439 = vld [vmem:[%s4 + $0xa8] sm:$0xff]
  %v440 = vld [vmem:[%s4 + $0xb0] sm:$0xf]
  %v441 = vld [vmem:[%s4 + $0xb4] sm:$0xff]
  %v442 = vld [vmem:[%s4 + $0xbc] sm:$0xf]
  %s443 = scalar_lea.vmem %s4, 192
  %v444 = vld [vmem:[%s443] sm:$0xff]
  %v445 = vld [vmem:[%s443 + $0x8] sm:$0xf]
  %v446 = vld [vmem:[%s443 + $0xc] sm:$0xff]
  %v447 = vld [vmem:[%s443 + $0x14] sm:$0xf]
  %v448 = vld [vmem:[%s443 + $0x18] sm:$0xff]
  %v449 = vld [vmem:[%s443 + $0x20] sm:$0xf]
  %v450 = vld [vmem:[%s443 + $0x24] sm:$0xff]
  %v451 = vld [vmem:[%s443 + $0x2c] sm:$0xf]
  %v452 = vld [vmem:[%s443 + $0x30] sm:$0xff]
  %v453 = vld [vmem:[%s443 + $0x38] sm:$0xf]
  %v454 = vld [vmem:[%s443 + $0x3c] sm:$0xff]
  %v455 = vld [vmem:[%s443 + $0x44] sm:$0xf]
  %v456 = vld [vmem:[%s443 + $0x48] sm:$0xff]
  %v457 = vld [vmem:[%s443 + $0x50] sm:$0xf]
  %v458 = vld [vmem:[%s443 + $0x54] sm:$0xff]
  %v459 = vld [vmem:[%s443 + $0x5c] sm:$0xf]
  %v460 = vld [vmem:[%s443 + $0x60] sm:$0xff]
  %v461 = vld [vmem:[%s443 + $0x68] sm:$0xf]
  %v462 = vld [vmem:[%s443 + $0x6c] sm:$0xff]
  %v463 = vld [vmem:[%s443 + $0x74] sm:$0xf]
  %v464 = vld [vmem:[%s443 + $0x78] sm:$0xff]
  %v465 = vld [vmem:[%s443 + $0x80] sm:$0xf]
  %v466 = vld [vmem:[%s443 + $0x84] sm:$0xff]
  %v467 = vld [vmem:[%s443 + $0x8c] sm:$0xf]
  %v468 = vld [vmem:[%s443 + $0x90] sm:$0xff]
  %v469 = vld [vmem:[%s443 + $0x98] sm:$0xf]
  %v470 = vld [vmem:[%s443 + $0x9c] sm:$0xff]
  %v471 = vld [vmem:[%s443 + $0xa4] sm:$0xf]
  %v472 = vld [vmem:[%s443 + $0xa8] sm:$0xff]
  %v473 = vld [vmem:[%s443 + $0xb0] sm:$0xf]
  %v474 = vld [vmem:[%s443 + $0xb4] sm:$0xff]
  %v475 = vld [vmem:[%s443 + $0xbc] sm:$0xf]
  %v476 = vld [vmem:[%s5] sm:$0x7]
  %s477 = scalar_lea.vmem %s5, 3
  %v478 = vld [vmem:[%s477] sm:$0x7]
  %s479 = smul.u32 0, 4
  %s480 = ssub.s32 0, 0
  %s481 = smul.u32 %s480, 4
  %v482 = vld [vmem:[#allocation2] sm:$0xff]
  %s483 = scalar_lea.vmem [#allocation2], 8
  %v484 = vld [vmem:[%s483] sm:$0xff]
  %s485 = smul.u32 0, 3
  %s486 = smul.addr %s485, 8
  %s487 = scalar_lea.vmem [#allocation3], %s486
  %v488 = vld [vmem:[%s487] sm:$0xff]
  %v489 = vld [vmem:[%s487 + $0x8] sm:$0xff]
  %v490 = vld [vmem:[%s487 + $0x10] sm:$0xff]
  %v491 = vpack.c.bf16 %v482, %v482
  %v493 = vlaneseq
  %v494 = vshrl.u32 %v493, 7
  %v495 = vsub.s32 0, %v494
  %v496 = vrot.slane %v476, %v495
  %v497 = vlaneseq
  %v498 = vshrl.u32 %v497, 7
  %v499 = vsub.s32 1, %v498
  %v500 = vrot.slane %v476, %v499
  %v501 = vlaneseq
  %v502 = vshrl.u32 %v501, 7
  %v503 = vsub.s32 2, %v502
  %v504 = vrot.slane %v476, %v503
  %v540 = vunpack.c.l.b16 %v411
  %v541 = vunpack.c.h.b16 %v411
  %v542 = vunpack.c.l.b16 %v412
  %v543 = vunpack.c.l.b16 %v413
  %v544 = vunpack.c.h.b16 %v413
  %v545 = vunpack.c.l.b16 %v414
  %v546 = vunpack.c.l.b16 %v415
  %v547 = vunpack.c.h.b16 %v415
  %v548 = vunpack.c.l.b16 %v416
  %v549 = vunpack.c.l.b16 %v417
  %v550 = vunpack.c.h.b16 %v417
  %v551 = vunpack.c.l.b16 %v418
  %v552 = vunpack.c.l.b16 %v419
  %v553 = vunpack.c.h.b16 %v419
  %v554 = vunpack.c.l.b16 %v420
  %v555 = vunpack.c.l.b16 %v421
  %v556 = vunpack.c.h.b16 %v421
  %v557 = vunpack.c.l.b16 %v422
  %v558 = vunpack.c.l.b16 %v423
  %v559 = vunpack.c.h.b16 %v423
  %v560 = vunpack.c.l.b16 %v424
  %v561 = vunpack.c.l.b16 %v425
  %v562 = vunpack.c.h.b16 %v425
  %v563 = vunpack.c.l.b16 %v426
  %v564 = vunpack.c.l.b16 %v427
  %v565 = vunpack.c.h.b16 %v427
  %v566 = vunpack.c.l.b16 %v428
  %v567 = vunpack.c.l.b16 %v429
  %v568 = vunpack.c.h.b16 %v429
  %v569 = vunpack.c.l.b16 %v430
  %v570 = vunpack.c.l.b16 %v431
  %v571 = vunpack.c.h.b16 %v431
  %v572 = vunpack.c.l.b16 %v432
  %v573 = vunpack.c.l.b16 %v433
  %v574 = vunpack.c.h.b16 %v433
  %v575 = vunpack.c.l.b16 %v434
  %v576 = vunpack.c.l.b16 %v435
  %v577 = vunpack.c.h.b16 %v435
  %v578 = vunpack.c.l.b16 %v436
  %v579 = vunpack.c.l.b16 %v437
  %v580 = vunpack.c.h.b16 %v437
  %v581 = vunpack.c.l.b16 %v438
  %v582 = vunpack.c.l.b16 %v439
  %v583 = vunpack.c.h.b16 %v439
  %v584 = vunpack.c.l.b16 %v440
  %v585 = vunpack.c.l.b16 %v441
  %v586 = vunpack.c.h.b16 %v441
  %v587 = vunpack.c.l.b16 %v442
  %v588 = vpack.c.b16 %v543, %v540
  %v589 = vpack.c.b16 %v544, %v541
  %v590 = vpack.c.b16 %v545, %v542
  %v591 = vpack.c.b16 %v549, %v546
  %v592 = vpack.c.b16 %v550, %v547
  %v593 = vpack.c.b16 %v551, %v548
  %v594 = vpack.c.b16 %v555, %v552
  %v595 = vpack.c.b16 %v556, %v553
  %v596 = vpack.c.b16 %v557, %v554
  %v597 = vpack.c.b16 %v561, %v558
  %v598 = vpack.c.b16 %v562, %v559
  %v599 = vpack.c.b16 %v563, %v560
  %v600 = vpack.c.b16 %v567, %v564
  %v601 = vpack.c.b16 %v568, %v565
  %v602 = vpack.c.b16 %v569, %v566
  %v603 = vpack.c.b16 %v573, %v570
  %v604 = vpack.c.b16 %v574, %v571
  %v605 = vpack.c.b16 %v575, %v572
  %v606 = vpack.c.b16 %v579, %v576
  %v607 = vpack.c.b16 %v580, %v577
  %v608 = vpack.c.b16 %v581, %v578
  %v609 = vpack.c.b16 %v585, %v582
  %v610 = vpack.c.b16 %v586, %v583
  %v611 = vpack.c.b16 %v587, %v584
  %636 = vmatprep.subr.bf16.mxu0 %v610
  %637 = vmatpush1.bf16.msra.mxu0 %v609
  %638 = vmatprep.subr.bf16.mxu0 %v607
  %639 = vmatpush1.bf16.msra.mxu0 %v606
  %640 = vmatprep.subr.bf16.mxu0 %v604
  %641 = vmatpush1.bf16.msra.mxu0 %v603
  %642 = vmatprep.subr.bf16.mxu0 %v601
  %643 = vmatpush1.bf16.msra.mxu0 %v600
  %644 = vmatprep.subr.bf16.mxu0 %v598
  %645 = vmatpush1.bf16.msra.mxu0 %v597
  %646 = vmatprep.subr.bf16.mxu0 %v595
  %647 = vmatpush1.bf16.msra.mxu0 %v594
  %648 = vmatprep.subr.bf16.mxu0 %v592
  %649 = vmatpush1.bf16.msra.mxu0 %v591
  %650 = vmatprep.subr.bf16.mxu0 %v589
  %651 = vmatpush1.bf16.msra.mxu0 %v588
  %652 = vmatprep.subr.bf16.mxu0 0
  %653 = vmatpush2.bf16.msra.mxu0 0
  %654 = vmatprep.subr.bf16.mxu0 0
  %655 = vmatpush2.bf16.msra.mxu0 0
  %656 = vmatprep.subr.bf16.mxu0 0
  %657 = vmatpush2.bf16.msra.mxu0 0
  %658 = vmatprep.subr.bf16.mxu0 0
  %659 = vmatpush2.bf16.msra.mxu0 0
  %660 = vmatprep.subr.bf16.mxu0 0
  %661 = vmatpush2.bf16.msra.mxu0 0
  %662 = vmatprep.subr.bf16.mxu0 0
  %663 = vmatpush2.bf16.msra.mxu0 0
  %664 = vmatprep.subr.bf16.mxu0 0
  %665 = vmatpush2.bf16.msra.mxu0 0
  %666 = vmatprep.subr.bf16.mxu0 0
  %667 = vmatpush2.bf16.msra.mxu0 0
  %668 = vmatprep.mubr.bf16.mxu0 0
  %669 = vmatmul.mubr.bf16.gmra.mxu0 %v491
  %v670 = vpop.f32.mrf.mxu0
  %v671 = vadd.f32 %v496, %v670
  %v672 = vpop.f32.mrf.mxu0
  %v673 = vadd.f32 %v500, %v672
  %v674 = vpop.f32.mrf.mxu0
  %v675 = vpop.f32.mrf.mxu0
  %676 = vdwg.mxu0
  %677 = vmatprep.subr.bf16.mxu0 0
  %678 = vmatpush1.bf16.msra.mxu0 %v611
  %679 = vmatprep.subr.bf16.mxu0 0
  %680 = vmatpush1.bf16.msra.mxu0 %v608
  %681 = vmatprep.subr.bf16.mxu0 0
  %682 = vmatpush1.bf16.msra.mxu0 %v605
  %683 = vmatprep.subr.bf16.mxu0 0
  %684 = vmatpush1.bf16.msra.mxu0 %v602
  %685 = vmatprep.subr.bf16.mxu0 0
  %686 = vmatpush1.bf16.msra.mxu0 %v599
  %687 = vmatprep.subr.bf16.mxu0 0
  %688 = vmatpush1.bf16.msra.mxu0 %v596
  %689 = vmatprep.subr.bf16.mxu0 0
  %690 = vmatpush1.bf16.msra.mxu0 %v593
  %691 = vmatprep.subr.bf16.mxu0 0
  %692 = vmatpush1.bf16.msra.mxu0 %v590
  %693 = vmatprep.subr.bf16.mxu0 0
  %694 = vmatpush2.bf16.msra.mxu0 0
  %695 = vmatprep.subr.bf16.mxu0 0
  %696 = vmatpush2.bf16.msra.mxu0 0
  %697 = vmatprep.subr.bf16.mxu0 0
  %698 = vmatpush2.bf16.msra.mxu0 0
  %699 = vmatprep.subr.bf16.mxu0 0
  %700 = vmatpush2.bf16.msra.mxu0 0
  %701 = vmatprep.subr.bf16.mxu0 0
  %702 = vmatpush2.bf16.msra.mxu0 0
  %703 = vmatprep.subr.bf16.mxu0 0
  %704 = vmatpush2.bf16.msra.mxu0 0
  %705 = vmatprep.subr.bf16.mxu0 0
  %706 = vmatpush2.bf16.msra.mxu0 0
  %707 = vmatprep.subr.bf16.mxu0 0
  %708 = vmatpush2.bf16.msra.mxu0 0
  %709 = vmatprep.mubr.bf16.mxu0 0
  %710 = vmatmul.mubr.bf16.gmra.mxu0 %v491
  %v711 = vpop.f32.mrf.mxu0
  %v712 = vadd.f32 %v504, %v711
  %v713 = vpop.f32.mrf.mxu0
  %v714 = vpop.f32.mrf.mxu0
  %v715 = vpop.f32.mrf.mxu0
  %716 = vdwg.mxu0
  %v717 = vadd.f32 %v488, %v671
  %v718 = vxor.u32 %v717, 2147483648
  %v719 = vmul.f32 %v718, 1.442695
  %v720 = vpow.pop %v719
  %v721 = vadd.f32 %v720, 1.0
  %v722 = vrcp.pop %v721
  %v723 = vmul.f32 1.0, %v722
  %v724 = vadd.f32 %v489, %v673
  %v725 = vxor.u32 %v724, 2147483648
  %v726 = vmul.f32 %v725, 1.442695
  %v727 = vpow.pop %v726
  %v728 = vadd.f32 %v727, 1.0
  %v729 = vrcp.pop %v728
  %v730 = vmul.f32 1.0, %v729
  %v731 = vmul.f32 %v723, %v712
  %v732 = vadd.f32 %v490, %v731
  %v733 = vtanh.pop %v732
  %v734 = vsub.f32 1.0, %v730
  %v735 = vmul.f32 %v734, %v733
  %v736 = vmul.f32 %v730, %v482
  %v737 = vadd.f32 %v735, %v736
  %p738 = scmp.lt.s32.totalorder %s479, 4
  %s739 = scalar_select %p738, 1, 0
  %v740 = vstv %s739
  %vm741 = vcmp.eq.s32.totalorder %v740, 1
  %v742 = vsel %vm741, %v737, %v482
  %v743 = vpack.c.bf16 %v742, %v742
  %744 = vst [vmem:[%s6] sm:$0xf] %v743
  %s745 = smul.u32 3, 3
  %s746 = smul.addr %s745, 8
  %s747 = scalar_lea.vmem [#allocation4], %s746
  %v748 = vld [vmem:[%s747] sm:$0xff]
  %v749 = vld [vmem:[%s747 + $0x8] sm:$0xff]
  %v750 = vld [vmem:[%s747 + $0x10] sm:$0xff]
  %v751 = vpack.c.bf16 %v484, %v484
  %v753 = vlaneseq
  %v754 = vshrl.u32 %v753, 7
  %v755 = vsub.s32 0, %v754
  %v756 = vrot.slane %v478, %v755
  %v757 = vlaneseq
  %v758 = vshrl.u32 %v757, 7
  %v759 = vsub.s32 1, %v758
  %v760 = vrot.slane %v478, %v759
  %v761 = vlaneseq
  %v762 = vshrl.u32 %v761, 7
  %v763 = vsub.s32 2, %v762
  %v764 = vrot.slane %v478, %v763
  %v800 = vunpack.c.l.b16 %v444
  %v801 = vunpack.c.h.b16 %v444
  %v802 = vunpack.c.l.b16 %v445
  %v803 = vunpack.c.l.b16 %v446
  %v804 = vunpack.c.h.b16 %v446
  %v805 = vunpack.c.l.b16 %v447
  %v806 = vunpack.c.l.b16 %v448
  %v807 = vunpack.c.h.b16 %v448
  %v808 = vunpack.c.l.b16 %v449
  %v809 = vunpack.c.l.b16 %v450
  %v810 = vunpack.c.h.b16 %v450
  %v811 = vunpack.c.l.b16 %v451
  %v812 = vunpack.c.l.b16 %v452
  %v813 = vunpack.c.h.b16 %v452
  %v814 = vunpack.c.l.b16 %v453
  %v815 = vunpack.c.l.b16 %v454
  %v816 = vunpack.c.h.b16 %v454
  %v817 = vunpack.c.l.b16 %v455
  %v818 = vunpack.c.l.b16 %v456
  %v819 = vunpack.c.h.b16 %v456
  %v820 = vunpack.c.l.b16 %v457
  %v821 = vunpack.c.l.b16 %v458
  %v822 = vunpack.c.h.b16 %v458
  %v823 = vunpack.c.l.b16 %v459
  %v824 = vunpack.c.l.b16 %v460
  %v825 = vunpack.c.h.b16 %v460
  %v826 = vunpack.c.l.b16 %v461
  %v827 = vunpack.c.l.b16 %v462
  %v828 = vunpack.c.h.b16 %v462
  %v829 = vunpack.c.l.b16 %v463
  %v830 = vunpack.c.l.b16 %v464
  %v831 = vunpack.c.h.b16 %v464
  %v832 = vunpack.c.l.b16 %v465
  %v833 = vunpack.c.l.b16 %v466
  %v834 = vunpack.c.h.b16 %v466
  %v835 = vunpack.c.l.b16 %v467
  %v836 = vunpack.c.l.b16 %v468
  %v837 = vunpack.c.h.b16 %v468
  %v838 = vunpack.c.l.b16 %v469
  %v839 = vunpack.c.l.b16 %v470
  %v840 = vunpack.c.h.b16 %v470
  %v841 = vunpack.c.l.b16 %v471
  %v842 = vunpack.c.l.b16 %v472
  %v843 = vunpack.c.h.b16 %v472
  %v844 = vunpack.c.l.b16 %v473
  %v845 = vunpack.c.l.b16 %v474
  %v846 = vunpack.c.h.b16 %v474
  %v847 = vunpack.c.l.b16 %v475
  %v848 = vpack.c.b16 %v803, %v800
  %v849 = vpack.c.b16 %v804, %v801
  %v850 = vpack.c.b16 %v805, %v802
  %v851 = vpack.c.b16 %v809, %v806
  %v852 = vpack.c.b16 %v810, %v807
  %v853 = vpack.c.b16 %v811, %v808
  %v854 = vpack.c.b16 %v815, %v812
  %v855 = vpack.c.b16 %v816, %v813
  %v856 = vpack.c.b16 %v817, %v814
  %v857 = vpack.c.b16 %v821, %v818
  %v858 = vpack.c.b16 %v822, %v819
  %v859 = vpack.c.b16 %v823, %v820
  %v860 = vpack.c.b16 %v827, %v824
  %v861 = vpack.c.b16 %v828, %v825
  %v862 = vpack.c.b16 %v829, %v826
  %v863 = vpack.c.b16 %v833, %v830
  %v864 = vpack.c.b16 %v834, %v831
  %v865 = vpack.c.b16 %v835, %v832
  %v866 = vpack.c.b16 %v839, %v836
  %v867 = vpack.c.b16 %v840, %v837
  %v868 = vpack.c.b16 %v841, %v838
  %v869 = vpack.c.b16 %v845, %v842
  %v870 = vpack.c.b16 %v846, %v843
  %v871 = vpack.c.b16 %v847, %v844
  %896 = vmatprep.subr.bf16.mxu0 %v870
  %897 = vmatpush1.bf16.msra.mxu0 %v869
  %898 = vmatprep.subr.bf16.mxu0 %v867
  %899 = vmatpush1.bf16.msra.mxu0 %v866
  %900 = vmatprep.subr.bf16.mxu0 %v864
  %901 = vmatpush1.bf16.msra.mxu0 %v863
  %902 = vmatprep.subr.bf16.mxu0 %v861
  %903 = vmatpush1.bf16.msra.mxu0 %v860
  %904 = vmatprep.subr.bf16.mxu0 %v858
  %905 = vmatpush1.bf16.msra.mxu0 %v857
  %906 = vmatprep.subr.bf16.mxu0 %v855
  %907 = vmatpush1.bf16.msra.mxu0 %v854
  %908 = vmatprep.subr.bf16.mxu0 %v852
  %909 = vmatpush1.bf16.msra.mxu0 %v851
  %910 = vmatprep.subr.bf16.mxu0 %v849
  %911 = vmatpush1.bf16.msra.mxu0 %v848
  %912 = vmatprep.subr.bf16.mxu0 0
  %913 = vmatpush2.bf16.msra.mxu0 0
  %914 = vmatprep.subr.bf16.mxu0 0
  %915 = vmatpush2.bf16.msra.mxu0 0
  %916 = vmatprep.subr.bf16.mxu0 0
  %917 = vmatpush2.bf16.msra.mxu0 0
  %918 = vmatprep.subr.bf16.mxu0 0
  %919 = vmatpush2.bf16.msra.mxu0 0
  %920 = vmatprep.subr.bf16.mxu0 0
  %921 = vmatpush2.bf16.msra.mxu0 0
  %922 = vmatprep.subr.bf16.mxu0 0
  %923 = vmatpush2.bf16.msra.mxu0 0
  %924 = vmatprep.subr.bf16.mxu0 0
  %925 = vmatpush2.bf16.msra.mxu0 0
  %926 = vmatprep.subr.bf16.mxu0 0
  %927 = vmatpush2.bf16.msra.mxu0 0
  %928 = vmatprep.mubr.bf16.mxu0 0
  %929 = vmatmul.mubr.bf16.gmra.mxu0 %v751
  %v930 = vpop.f32.mrf.mxu0
  %v931 = vadd.f32 %v756, %v930
  %v932 = vpop.f32.mrf.mxu0
  %v933 = vadd.f32 %v760, %v932
  %v934 = vpop.f32.mrf.mxu0
  %v935 = vpop.f32.mrf.mxu0
  %936 = vdwg.mxu0
  %937 = vmatprep.subr.bf16.mxu0 0
  %938 = vmatpush1.bf16.msra.mxu0 %v871
  %939 = vmatprep.subr.bf16.mxu0 0
  %940 = vmatpush1.bf16.msra.mxu0 %v868
  %941 = vmatprep.subr.bf16.mxu0 0
  %942 = vmatpush1.bf16.msra.mxu0 %v865
  %943 = vmatprep.subr.bf16.mxu0 0
  %944 = vmatpush1.bf16.msra.mxu0 %v862
  %945 = vmatprep.subr.bf16.mxu0 0
  %946 = vmatpush1.bf16.msra.mxu0 %v859
  %947 = vmatprep.subr.bf16.mxu0 0
  %948 = vmatpush1.bf16.msra.mxu0 %v856
  %949 = vmatprep.subr.bf16.mxu0 0
  %950 = vmatpush1.bf16.msra.mxu0 %v853
  %951 = vmatprep.subr.bf16.mxu0 0
  %952 = vmatpush1.bf16.msra.mxu0 %v850
  %953 = vmatprep.subr.bf16.mxu0 0
  %954 = vmatpush2.bf16.msra.mxu0 0
  %955 = vmatprep.subr.bf16.mxu0 0
  %956 = vmatpush2.bf16.msra.mxu0 0
  %957 = vmatprep.subr.bf16.mxu0 0
  %958 = vmatpush2.bf16.msra.mxu0 0
  %959 = vmatprep.subr.bf16.mxu0 0
  %960 = vmatpush2.bf16.msra.mxu0 0
  %961 = vmatprep.subr.bf16.mxu0 0
  %962 = vmatpush2.bf16.msra.mxu0 0
  %963 = vmatprep.subr.bf16.mxu0 0
  %964 = vmatpush2.bf16.msra.mxu0 0
  %965 = vmatprep.subr.bf16.mxu0 0
  %966 = vmatpush2.bf16.msra.mxu0 0
  %967 = vmatprep.subr.bf16.mxu0 0
  %968 = vmatpush2.bf16.msra.mxu0 0
  %969 = vmatprep.mubr.bf16.mxu0 0
  %970 = vmatmul.mubr.bf16.gmra.mxu0 %v751
  %v971 = vpop.f32.mrf.mxu0
  %v972 = vadd.f32 %v764, %v971
  %v973 = vpop.f32.mrf.mxu0
  %v974 = vpop.f32.mrf.mxu0
  %v975 = vpop.f32.mrf.mxu0
  %976 = vdwg.mxu0
  %v977 = vadd.f32 %v748, %v931
  %v978 = vxor.u32 %v977, 2147483648
  %v979 = vmul.f32 %v978, 1.442695
  %v980 = vpow.pop %v979
  %v981 = vadd.f32 %v980, 1.0
  %v982 = vrcp.pop %v981
  %v983 = vmul.f32 1.0, %v982
  %v984 = vadd.f32 %v749, %v933
  %v985 = vxor.u32 %v984, 2147483648
  %v986 = vmul.f32 %v985, 1.442695
  %v987 = vpow.pop %v986
  %v988 = vadd.f32 %v987, 1.0
  %v989 = vrcp.pop %v988
  %v990 = vmul.f32 1.0, %v989
  %v991 = vmul.f32 %v983, %v972
  %v992 = vadd.f32 %v750, %v991
  %v993 = vtanh.pop %v992
  %v994 = vsub.f32 1.0, %v990
  %v995 = vmul.f32 %v994, %v993
  %v996 = vmul.f32 %v990, %v484
  %v997 = vadd.f32 %v995, %v996
  %s998 = sadd.s32 %s481, 3
  %p999 = scmp.lt.s32.totalorder %s998, 4
  %s1000 = scalar_select %p999, 1, 0
  %v1001 = vstv %s1000
  %vm1002 = vcmp.eq.s32.totalorder %v1001, 1
  %v1003 = vsel %vm1002, %v997, %v484
  %v1004 = vpack.c.bf16 %v1003, %v1003
  %s1005 = scalar_lea.vmem %s58, 12
  %1006 = vst [vmem:[%s1005] sm:$0xf] %v1004
  %s1007 = smul.u32 1, 3
  %s1008 = smul.addr %s1007, 8
  %s1009 = scalar_lea.vmem [#allocation3], %s1008
  %v1010 = vld [vmem:[%s1009] sm:$0xff]
  %v1011 = vld [vmem:[%s1009 + $0x8] sm:$0xff]
  %v1012 = vld [vmem:[%s1009 + $0x10] sm:$0xff]
  %1013 = vmatprep.subr.bf16.mxu0 %v610
  %1014 = vmatpush1.bf16.msra.mxu0 %v609
  %1015 = vmatprep.subr.bf16.mxu0 %v607
  %1016 = vmatpush1.bf16.msra.mxu0 %v606
  %1017 = vmatprep.subr.bf16.mxu0 %v604
  %1018 = vmatpush1.bf16.msra.mxu0 %v603
  %1019 = vmatprep.subr.bf16.mxu0 %v601
  %1020 = vmatpush1.bf16.msra.mxu0 %v600
  %1021 = vmatprep.subr.bf16.mxu0 %v598
  %1022 = vmatpush1.bf16.msra.mxu0 %v597
  %1023 = vmatprep.subr.bf16.mxu0 %v595
  %1024 = vmatpush1.bf16.msra.mxu0 %v594
  %1025 = vmatprep.subr.bf16.mxu0 %v592
  %1026 = vmatpush1.bf16.msra.mxu0 %v591
  %1027 = vmatprep.subr.bf16.mxu0 %v589
  %1028 = vmatpush1.bf16.msra.mxu0 %v588
  %1029 = vmatprep.subr.bf16.mxu0 0
  %1030 = vmatpush2.bf16.msra.mxu0 0
  %1031 = vmatprep.subr.bf16.mxu0 0
  %1032 = vmatpush2.bf16.msra.mxu0 0
  %1033 = vmatprep.subr.bf16.mxu0 0
  %1034 = vmatpush2.bf16.msra.mxu0 0
  %1035 = vmatprep.subr.bf16.mxu0 0
  %1036 = vmatpush2.bf16.msra.mxu0 0
  %1037 = vmatprep.subr.bf16.mxu0 0
  %1038 = vmatpush2.bf16.msra.mxu0 0
  %1039 = vmatprep.subr.bf16.mxu0 0
  %1040 = vmatpush2.bf16.msra.mxu0 0
  %1041 = vmatprep.subr.bf16.mxu0 0
  %1042 = vmatpush2.bf16.msra.mxu0 0
  %1043 = vmatprep.subr.bf16.mxu0 0
  %1044 = vmatpush2.bf16.msra.mxu0 0
  %1045 = vmatprep.mubr.bf16.mxu0 0
  %1046 = vmatmul.mubr.bf16.gmra.mxu0 %v743
  %v1047 = vpop.f32.mrf.mxu0
  %v1048 = vadd.f32 %v496, %v1047
  %v1049 = vpop.f32.mrf.mxu0
  %v1050 = vadd.f32 %v500, %v1049
  %v1051 = vpop.f32.mrf.mxu0
  %v1052 = vpop.f32.mrf.mxu0
  %1053 = vdwg.mxu0
  %1054 = vmatprep.subr.bf16.mxu0 0
  %1055 = vmatpush1.bf16.msra.mxu0 %v611
  %1056 = vmatprep.subr.bf16.mxu0 0
  %1057 = vmatpush1.bf16.msra.mxu0 %v608
  %1058 = vmatprep.subr.bf16.mxu0 0
  %1059 = vmatpush1.bf16.msra.mxu0 %v605
  %1060 = vmatprep.subr.bf16.mxu0 0
  %1061 = vmatpush1.bf16.msra.mxu0 %v602
  %1062 = vmatprep.subr.bf16.mxu0 0
  %1063 = vmatpush1.bf16.msra.mxu0 %v599
  %1064 = vmatprep.subr.bf16.mxu0 0
  %1065 = vmatpush1.bf16.msra.mxu0 %v596
  %1066 = vmatprep.subr.bf16.mxu0 0
  %1067 = vmatpush1.bf16.msra.mxu0 %v593
  %1068 = vmatprep.subr.bf16.mxu0 0
  %1069 = vmatpush1.bf16.msra.mxu0 %v590
  %1070 = vmatprep.subr.bf16.mxu0 0
  %1071 = vmatpush2.bf16.msra.mxu0 0
  %1072 = vmatprep.subr.bf16.mxu0 0
  %1073 = vmatpush2.bf16.msra.mxu0 0
  %1074 = vmatprep.subr.bf16.mxu0 0
  %1075 = vmatpush2.bf16.msra.mxu0 0
  %1076 = vmatprep.subr.bf16.mxu0 0
  %1077 = vmatpush2.bf16.msra.mxu0 0
  %1078 = vmatprep.subr.bf16.mxu0 0
  %1079 = vmatpush2.bf16.msra.mxu0 0
  %1080 = vmatprep.subr.bf16.mxu0 0
  %1081 = vmatpush2.bf16.msra.mxu0 0
  %1082 = vmatprep.subr.bf16.mxu0 0
  %1083 = vmatpush2.bf16.msra.mxu0 0
  %1084 = vmatprep.subr.bf16.mxu0 0
  %1085 = vmatpush2.bf16.msra.mxu0 0
  %1086 = vmatprep.mubr.bf16.mxu0 0
  %1087 = vmatmul.mubr.bf16.gmra.mxu0 %v743
  %v1088 = vpop.f32.mrf.mxu0
  %v1089 = vadd.f32 %v504, %v1088
  %v1090 = vpop.f32.mrf.mxu0
  %v1091 = vpop.f32.mrf.mxu0
  %v1092 = vpop.f32.mrf.mxu0
  %1093 = vdwg.mxu0
  %v1094 = vadd.f32 %v1010, %v1048
  %v1095 = vxor.u32 %v1094, 2147483648
  %v1096 = vmul.f32 %v1095, 1.442695
  %v1097 = vpow.pop %v1096
  %v1098 = vadd.f32 %v1097, 1.0
  %v1099 = vrcp.pop %v1098
  %v1100 = vmul.f32 1.0, %v1099
  %v1101 = vadd.f32 %v1011, %v1050
  %v1102 = vxor.u32 %v1101, 2147483648
  %v1103 = vmul.f32 %v1102, 1.442695
  %v1104 = vpow.pop %v1103
  %v1105 = vadd.f32 %v1104, 1.0
  %v1106 = vrcp.pop %v1105
  %v1107 = vmul.f32 1.0, %v1106
  %v1108 = vmul.f32 %v1100, %v1089
  %v1109 = vadd.f32 %v1012, %v1108
  %v1110 = vtanh.pop %v1109
  %v1111 = vsub.f32 1.0, %v1107
  %v1112 = vmul.f32 %v1111, %v1110
  %v1113 = vmul.f32 %v1107, %v742
  %v1114 = vadd.f32 %v1112, %v1113
  %s1115 = sadd.s32 %s479, 1
  %p1116 = scmp.lt.s32.totalorder %s1115, 4
  %s1117 = scalar_select %p1116, 1, 0
  %v1118 = vstv %s1117
  %vm1119 = vcmp.eq.s32.totalorder %v1118, 1
  %v1120 = vsel %vm1119, %v1114, %v742
  %v1121 = vpack.c.bf16 %v1120, %v1120
  %s1122 = scalar_lea.vmem %s6, 4
  %1123 = vst [vmem:[%s1122] sm:$0xf] %v1121
  %s1124 = smul.u32 2, 3
  %s1125 = smul.addr %s1124, 8
  %s1126 = scalar_lea.vmem [#allocation4], %s1125
  %v1127 = vld [vmem:[%s1126] sm:$0xff]
  %v1128 = vld [vmem:[%s1126 + $0x8] sm:$0xff]
  %v1129 = vld [vmem:[%s1126 + $0x10] sm:$0xff]
  %1130 = vmatprep.subr.bf16.mxu0 %v870
  %1131 = vmatpush1.bf16.msra.mxu0 %v869
  %1132 = vmatprep.subr.bf16.mxu0 %v867
  %1133 = vmatpush1.bf16.msra.mxu0 %v866
  %1134 = vmatprep.subr.bf16.mxu0 %v864
  %1135 = vmatpush1.bf16.msra.mxu0 %v863
  %1136 = vmatprep.subr.bf16.mxu0 %v861
  %1137 = vmatpush1.bf16.msra.mxu0 %v860
  %1138 = vmatprep.subr.bf16.mxu0 %v858
  %1139 = vmatpush1.bf16.msra.mxu0 %v857
  %1140 = vmatprep.subr.bf16.mxu0 %v855
  %1141 = vmatpush1.bf16.msra.mxu0 %v854
  %1142 = vmatprep.subr.bf16.mxu0 %v852
  %1143 = vmatpush1.bf16.msra.mxu0 %v851
  %1144 = vmatprep.subr.bf16.mxu0 %v849
  %1145 = vmatpush1.bf16.msra.mxu0 %v848
  %1146 = vmatprep.subr.bf16.mxu0 0
  %1147 = vmatpush2.bf16.msra.mxu0 0
  %1148 = vmatprep.subr.bf16.mxu0 0
  %1149 = vmatpush2.bf16.msra.mxu0 0
  %1150 = vmatprep.subr.bf16.mxu0 0
  %1151 = vmatpush2.bf16.msra.mxu0 0
  %1152 = vmatprep.subr.bf16.mxu0 0
  %1153 = vmatpush2.bf16.msra.mxu0 0
  %1154 = vmatprep.subr.bf16.mxu0 0
  %1155 = vmatpush2.bf16.msra.mxu0 0
  %1156 = vmatprep.subr.bf16.mxu0 0
  %1157 = vmatpush2.bf16.msra.mxu0 0
  %1158 = vmatprep.subr.bf16.mxu0 0
  %1159 = vmatpush2.bf16.msra.mxu0 0
  %1160 = vmatprep.subr.bf16.mxu0 0
  %1161 = vmatpush2.bf16.msra.mxu0 0
  %1162 = vmatprep.mubr.bf16.mxu0 0
  %1163 = vmatmul.mubr.bf16.gmra.mxu0 %v1004
  %v1164 = vpop.f32.mrf.mxu0
  %v1165 = vadd.f32 %v756, %v1164
  %v1166 = vpop.f32.mrf.mxu0
  %v1167 = vadd.f32 %v760, %v1166
  %v1168 = vpop.f32.mrf.mxu0
  %v1169 = vpop.f32.mrf.mxu0
  %1170 = vdwg.mxu0
  %1171 = vmatprep.subr.bf16.mxu0 0
  %1172 = vmatpush1.bf16.msra.mxu0 %v871
  %1173 = vmatprep.subr.bf16.mxu0 0
  %1174 = vmatpush1.bf16.msra.mxu0 %v868
  %1175 = vmatprep.subr.bf16.mxu0 0
  %1176 = vmatpush1.bf16.msra.mxu0 %v865
  %1177 = vmatprep.subr.bf16.mxu0 0
  %1178 = vmatpush1.bf16.msra.mxu0 %v862
  %1179 = vmatprep.subr.bf16.mxu0 0
  %1180 = vmatpush1.bf16.msra.mxu0 %v859
  %1181 = vmatprep.subr.bf16.mxu0 0
  %1182 = vmatpush1.bf16.msra.mxu0 %v856
  %1183 = vmatprep.subr.bf16.mxu0 0
  %1184 = vmatpush1.bf16.msra.mxu0 %v853
  %1185 = vmatprep.subr.bf16.mxu0 0
  %1186 = vmatpush1.bf16.msra.mxu0 %v850
  %1187 = vmatprep.subr.bf16.mxu0 0
  %1188 = vmatpush2.bf16.msra.mxu0 0
  %1189 = vmatprep.subr.bf16.mxu0 0
  %1190 = vmatpush2.bf16.msra.mxu0 0
  %1191 = vmatprep.subr.bf16.mxu0 0
  %1192 = vmatpush2.bf16.msra.mxu0 0
  %1193 = vmatprep.subr.bf16.mxu0 0
  %1194 = vmatpush2.bf16.msra.mxu0 0
  %1195 = vmatprep.subr.bf16.mxu0 0
  %1196 = vmatpush2.bf16.msra.mxu0 0
  %1197 = vmatprep.subr.bf16.mxu0 0
  %1198 = vmatpush2.bf16.msra.mxu0 0
  %1199 = vmatprep.subr.bf16.mxu0 0
  %1200 = vmatpush2.bf16.msra.mxu0 0
  %1201 = vmatprep.subr.bf16.mxu0 0
  %1202 = vmatpush2.bf16.msra.mxu0 0
  %1203 = vmatprep.mubr.bf16.mxu0 0
  %1204 = vmatmul.mubr.bf16.gmra.mxu0 %v1004
  %v1205 = vpop.f32.mrf.mxu0
  %v1206 = vadd.f32 %v764, %v1205
  %v1207 = vpop.f32.mrf.mxu0
  %v1208 = vpop.f32.mrf.mxu0
  %v1209 = vpop.f32.mrf.mxu0
  %1210 = vdwg.mxu0
  %v1211 = vadd.f32 %v1127, %v1165
  %v1212 = vxor.u32 %v1211, 2147483648
  %v1213 = vmul.f32 %v1212, 1.442695
  %v1214 = vpow.pop %v1213
  %v1215 = vadd.f32 %v1214, 1.0
  %v1216 = vrcp.pop %v1215
  %v1217 = vmul.f32 1.0, %v1216
  %v1218 = vadd.f32 %v1128, %v1167
  %v1219 = vxor.u32 %v1218, 2147483648
  %v1220 = vmul.f32 %v1219, 1.442695
  %v1221 = vpow.pop %v1220
  %v1222 = vadd.f32 %v1221, 1.0
  %v1223 = vrcp.pop %v1222
  %v1224 = vmul.f32 1.0, %v1223
  %v1225 = vmul.f32 %v1217, %v1206
  %v1226 = vadd.f32 %v1129, %v1225
  %v1227 = vtanh.pop %v1226
  %v1228 = vsub.f32 1.0, %v1224
  %v1229 = vmul.f32 %v1228, %v1227
  %v1230 = vmul.f32 %v1224, %v1003
  %v1231 = vadd.f32 %v1229, %v1230
  %s1232 = sadd.s32 %s481, 2
  %p1233 = scmp.lt.s32.totalorder %s1232, 4
  %s1234 = scalar_select %p1233, 1, 0
  %v1235 = vstv %s1234
  %vm1236 = vcmp.eq.s32.totalorder %v1235, 1
  %v1237 = vsel %vm1236, %v1231, %v1003
  %v1238 = vpack.c.bf16 %v1237, %v1237
  %s1239 = scalar_lea.vmem %s58, 8
  %1240 = vst [vmem:[%s1239] sm:$0xf] %v1238
  %s1241 = smul.addr %s1124, 8
  %s1242 = scalar_lea.vmem [#allocation3], %s1241
  %v1243 = vld [vmem:[%s1242] sm:$0xff]
  %v1244 = vld [vmem:[%s1242 + $0x8] sm:$0xff]
  %v1245 = vld [vmem:[%s1242 + $0x10] sm:$0xff]
  %1246 = vmatprep.subr.bf16.mxu0 %v610
  %1247 = vmatpush1.bf16.msra.mxu0 %v609
  %1248 = vmatprep.subr.bf16.mxu0 %v607
  %1249 = vmatpush1.bf16.msra.mxu0 %v606
  %1250 = vmatprep.subr.bf16.mxu0 %v604
  %1251 = vmatpush1.bf16.msra.mxu0 %v603
  %1252 = vmatprep.subr.bf16.mxu0 %v601
  %1253 = vmatpush1.bf16.msra.mxu0 %v600
  %1254 = vmatprep.subr.bf16.mxu0 %v598
  %1255 = vmatpush1.bf16.msra.mxu0 %v597
  %1256 = vmatprep.subr.bf16.mxu0 %v595
  %1257 = vmatpush1.bf16.msra.mxu0 %v594
  %1258 = vmatprep.subr.bf16.mxu0 %v592
  %1259 = vmatpush1.bf16.msra.mxu0 %v591
  %1260 = vmatprep.subr.bf16.mxu0 %v589
  %1261 = vmatpush1.bf16.msra.mxu0 %v588
  %1262 = vmatprep.subr.bf16.mxu0 0
  %1263 = vmatpush2.bf16.msra.mxu0 0
  %1264 = vmatprep.subr.bf16.mxu0 0
  %1265 = vmatpush2.bf16.msra.mxu0 0
  %1266 = vmatprep.subr.bf16.mxu0 0
  %1267 = vmatpush2.bf16.msra.mxu0 0
  %1268 = vmatprep.subr.bf16.mxu0 0
  %1269 = vmatpush2.bf16.msra.mxu0 0
  %1270 = vmatprep.subr.bf16.mxu0 0
  %1271 = vmatpush2.bf16.msra.mxu0 0
  %1272 = vmatprep.subr.bf16.mxu0 0
  %1273 = vmatpush2.bf16.msra.mxu0 0
  %1274 = vmatprep.subr.bf16.mxu0 0
  %1275 = vmatpush2.bf16.msra.mxu0 0
  %1276 = vmatprep.subr.bf16.mxu0 0
  %1277 = vmatpush2.bf16.msra.mxu0 0
  %1278 = vmatprep.mubr.bf16.mxu0 0
  %1279 = vmatmul.mubr.bf16.gmra.mxu0 %v1121
  %v1280 = vpop.f32.mrf.mxu0
  %v1281 = vadd.f32 %v496, %v1280
  %v1282 = vpop.f32.mrf.mxu0
  %v1283 = vadd.f32 %v500, %v1282
  %v1284 = vpop.f32.mrf.mxu0
  %v1285 = vpop.f32.mrf.mxu0
  %1286 = vdwg.mxu0
  %1287 = vmatprep.subr.bf16.mxu0 0
  %1288 = vmatpush1.bf16.msra.mxu0 %v611
  %1289 = vmatprep.subr.bf16.mxu0 0
  %1290 = vmatpush1.bf16.msra.mxu0 %v608
  %1291 = vmatprep.subr.bf16.mxu0 0
  %1292 = vmatpush1.bf16.msra.mxu0 %v605
  %1293 = vmatprep.subr.bf16.mxu0 0
  %1294 = vmatpush1.bf16.msra.mxu0 %v602
  %1295 = vmatprep.subr.bf16.mxu0 0
  %1296 = vmatpush1.bf16.msra.mxu0 %v599
  %1297 = vmatprep.subr.bf16.mxu0 0
  %1298 = vmatpush1.bf16.msra.mxu0 %v596
  %1299 = vmatprep.subr.bf16.mxu0 0
  %1300 = vmatpush1.bf16.msra.mxu0 %v593
  %1301 = vmatprep.subr.bf16.mxu0 0
  %1302 = vmatpush1.bf16.msra.mxu0 %v590
  %1303 = vmatprep.subr.bf16.mxu0 0
  %1304 = vmatpush2.bf16.msra.mxu0 0
  %1305 = vmatprep.subr.bf16.mxu0 0
  %1306 = vmatpush2.bf16.msra.mxu0 0
  %1307 = vmatprep.subr.bf16.mxu0 0
  %1308 = vmatpush2.bf16.msra.mxu0 0
  %1309 = vmatprep.subr.bf16.mxu0 0
  %1310 = vmatpush2.bf16.msra.mxu0 0
  %1311 = vmatprep.subr.bf16.mxu0 0
  %1312 = vmatpush2.bf16.msra.mxu0 0
  %1313 = vmatprep.subr.bf16.mxu0 0
  %1314 = vmatpush2.bf16.msra.mxu0 0
  %1315 = vmatprep.subr.bf16.mxu0 0
  %1316 = vmatpush2.bf16.msra.mxu0 0
  %1317 = vmatprep.subr.bf16.mxu0 0
  %1318 = vmatpush2.bf16.msra.mxu0 0
  %1319 = vmatprep.mubr.bf16.mxu0 0
  %1320 = vmatmul.mubr.bf16.gmra.mxu0 %v1121
  %v1321 = vpop.f32.mrf.mxu0
  %v1322 = vadd.f32 %v504, %v1321
  %v1323 = vpop.f32.mrf.mxu0
  %v1324 = vpop.f32.mrf.mxu0
  %v1325 = vpop.f32.mrf.mxu0
  %1326 = vdwg.mxu0
  %v1327 = vadd.f32 %v1243, %v1281
  %v1328 = vxor.u32 %v1327, 2147483648
  %v1329 = vmul.f32 %v1328, 1.442695
  %v1330 = vpow.pop %v1329
  %v1331 = vadd.f32 %v1330, 1.0
  %v1332 = vrcp.pop %v1331
  %v1333 = vmul.f32 1.0, %v1332
  %v1334 = vadd.f32 %v1244, %v1283
  %v1335 = vxor.u32 %v1334, 2147483648
  %v1336 = vmul.f32 %v1335, 1.442695
  %v1337 = vpow.pop %v1336
  %v1338 = vadd.f32 %v1337, 1.0
  %v1339 = vrcp.pop %v1338
  %v1340 = vmul.f32 1.0, %v1339
  %v1341 = vmul.f32 %v1333, %v1322
  %v1342 = vadd.f32 %v1245, %v1341
  %v1343 = vtanh.pop %v1342
  %v1344 = vsub.f32 1.0, %v1340
  %v1345 = vmul.f32 %v1344, %v1343
  %v1346 = vmul.f32 %v1340, %v1120
  %v1347 = vadd.f32 %v1345, %v1346
  %s1348 = sadd.s32 %s479, 2
  %p1349 = scmp.lt.s32.totalorder %s1348, 4
  %s1350 = scalar_select %p1349, 1, 0
  %v1351 = vstv %s1350
  %vm1352 = vcmp.eq.s32.totalorder %v1351, 1
  %v1353 = vsel %vm1352, %v1347, %v1120
  %v1354 = vpack.c.bf16 %v1353, %v1353
  %s1355 = scalar_lea.vmem %s6, 8
  %1356 = vst [vmem:[%s1355] sm:$0xf] %v1354
  %s1357 = smul.addr %s1007, 8
  %s1358 = scalar_lea.vmem [#allocation4], %s1357
  %v1359 = vld [vmem:[%s1358] sm:$0xff]
  %v1360 = vld [vmem:[%s1358 + $0x8] sm:$0xff]
  %v1361 = vld [vmem:[%s1358 + $0x10] sm:$0xff]
  %1362 = vmatprep.subr.bf16.mxu0 %v870
  %1363 = vmatpush1.bf16.msra.mxu0 %v869
  %1364 = vmatprep.subr.bf16.mxu0 %v867
  %1365 = vmatpush1.bf16.msra.mxu0 %v866
  %1366 = vmatprep.subr.bf16.mxu0 %v864
  %1367 = vmatpush1.bf16.msra.mxu0 %v863
  %1368 = vmatprep.subr.bf16.mxu0 %v861
  %1369 = vmatpush1.bf16.msra.mxu0 %v860
  %1370 = vmatprep.subr.bf16.mxu0 %v858
  %1371 = vmatpush1.bf16.msra.mxu0 %v857
  %1372 = vmatprep.subr.bf16.mxu0 %v855
  %1373 = vmatpush1.bf16.msra.mxu0 %v854
  %1374 = vmatprep.subr.bf16.mxu0 %v852
  %1375 = vmatpush1.bf16.msra.mxu0 %v851
  %1376 = vmatprep.subr.bf16.mxu0 %v849
  %1377 = vmatpush1.bf16.msra.mxu0 %v848
  %1378 = vmatprep.subr.bf16.mxu0 0
  %1379 = vmatpush2.bf16.msra.mxu0 0
  %1380 = vmatprep.subr.bf16.mxu0 0
  %1381 = vmatpush2.bf16.msra.mxu0 0
  %1382 = vmatprep.subr.bf16.mxu0 0
  %1383 = vmatpush2.bf16.msra.mxu0 0
  %1384 = vmatprep.subr.bf16.mxu0 0
  %1385 = vmatpush2.bf16.msra.mxu0 0
  %1386 = vmatprep.subr.bf16.mxu0 0
  %1387 = vmatpush2.bf16.msra.mxu0 0
  %1388 = vmatprep.subr.bf16.mxu0 0
  %1389 = vmatpush2.bf16.msra.mxu0 0
  %1390 = vmatprep.subr.bf16.mxu0 0
  %1391 = vmatpush2.bf16.msra.mxu0 0
  %1392 = vmatprep.subr.bf16.mxu0 0
  %1393 = vmatpush2.bf16.msra.mxu0 0
  %1394 = vmatprep.mubr.bf16.mxu0 0
  %1395 = vmatmul.mubr.bf16.gmra.mxu0 %v1238
  %v1396 = vpop.f32.mrf.mxu0
  %v1397 = vadd.f32 %v756, %v1396
  %v1398 = vpop.f32.mrf.mxu0
  %v1399 = vadd.f32 %v760, %v1398
  %v1400 = vpop.f32.mrf.mxu0
  %v1401 = vpop.f32.mrf.mxu0
  %1402 = vdwg.mxu0
  %1403 = vmatprep.subr.bf16.mxu0 0
  %1404 = vmatpush1.bf16.msra.mxu0 %v871
  %1405 = vmatprep.subr.bf16.mxu0 0
  %1406 = vmatpush1.bf16.msra.mxu0 %v868
  %1407 = vmatprep.subr.bf16.mxu0 0
  %1408 = vmatpush1.bf16.msra.mxu0 %v865
  %1409 = vmatprep.subr.bf16.mxu0 0
  %1410 = vmatpush1.bf16.msra.mxu0 %v862
  %1411 = vmatprep.subr.bf16.mxu0 0
  %1412 = vmatpush1.bf16.msra.mxu0 %v859
  %1413 = vmatprep.subr.bf16.mxu0 0
  %1414 = vmatpush1.bf16.msra.mxu0 %v856
  %1415 = vmatprep.subr.bf16.mxu0 0
  %1416 = vmatpush1.bf16.msra.mxu0 %v853
  %1417 = vmatprep.subr.bf16.mxu0 0
  %1418 = vmatpush1.bf16.msra.mxu0 %v850
  %1419 = vmatprep.subr.bf16.mxu0 0
  %1420 = vmatpush2.bf16.msra.mxu0 0
  %1421 = vmatprep.subr.bf16.mxu0 0
  %1422 = vmatpush2.bf16.msra.mxu0 0
  %1423 = vmatprep.subr.bf16.mxu0 0
  %1424 = vmatpush2.bf16.msra.mxu0 0
  %1425 = vmatprep.subr.bf16.mxu0 0
  %1426 = vmatpush2.bf16.msra.mxu0 0
  %1427 = vmatprep.subr.bf16.mxu0 0
  %1428 = vmatpush2.bf16.msra.mxu0 0
  %1429 = vmatprep.subr.bf16.mxu0 0
  %1430 = vmatpush2.bf16.msra.mxu0 0
  %1431 = vmatprep.subr.bf16.mxu0 0
  %1432 = vmatpush2.bf16.msra.mxu0 0
  %1433 = vmatprep.subr.bf16.mxu0 0
  %1434 = vmatpush2.bf16.msra.mxu0 0
  %1435 = vmatprep.mubr.bf16.mxu0 0
  %1436 = vmatmul.mubr.bf16.gmra.mxu0 %v1238
  %v1437 = vpop.f32.mrf.mxu0
  %v1438 = vadd.f32 %v764, %v1437
  %v1439 = vpop.f32.mrf.mxu0
  %v1440 = vpop.f32.mrf.mxu0
  %v1441 = vpop.f32.mrf.mxu0
  %1442 = vdwg.mxu0
  %v1443 = vadd.f32 %v1359, %v1397
  %v1444 = vxor.u32 %v1443, 2147483648
  %v1445 = vmul.f32 %v1444, 1.442695
  %v1446 = vpow.pop %v1445
  %v1447 = vadd.f32 %v1446, 1.0
  %v1448 = vrcp.pop %v1447
  %v1449 = vmul.f32 1.0, %v1448
  %v1450 = vadd.f32 %v1360, %v1399
  %v1451 = vxor.u32 %v1450, 2147483648
  %v1452 = vmul.f32 %v1451, 1.442695
  %v1453 = vpow.pop %v1452
  %v1454 = vadd.f32 %v1453, 1.0
  %v1455 = vrcp.pop %v1454
  %v1456 = vmul.f32 1.0, %v1455
  %v1457 = vmul.f32 %v1449, %v1438
  %v1458 = vadd.f32 %v1361, %v1457
  %v1459 = vtanh.pop %v1458
  %v1460 = vsub.f32 1.0, %v1456
  %v1461 = vmul.f32 %v1460, %v1459
  %v1462 = vmul.f32 %v1456, %v1237
  %v1463 = vadd.f32 %v1461, %v1462
  %s1464 = sadd.s32 %s481, 1
  %p1465 = scmp.lt.s32.totalorder %s1464, 4
  %s1466 = scalar_select %p1465, 1, 0
  %v1467 = vstv %s1466
  %vm1468 = vcmp.eq.s32.totalorder %v1467, 1
  %v1469 = vsel %vm1468, %v1463, %v1237
  %v1470 = vpack.c.bf16 %v1469, %v1469
  %s1471 = scalar_lea.vmem %s58, 4
  %1472 = vst [vmem:[%s1471] sm:$0xf] %v1470
  %s1473 = smul.addr %s745, 8
  %s1474 = scalar_lea.vmem [#allocation3], %s1473
  %v1475 = vld [vmem:[%s1474] sm:$0xff]
  %v1476 = vld [vmem:[%s1474 + $0x8] sm:$0xff]
  %v1477 = vld [vmem:[%s1474 + $0x10] sm:$0xff]
  %1478 = vmatprep.subr.bf16.mxu0 %v610
  %1479 = vmatpush1.bf16.msra.mxu0 %v609
  %1480 = vmatprep.subr.bf16.mxu0 %v607
  %1481 = vmatpush1.bf16.msra.mxu0 %v606
  %1482 = vmatprep.subr.bf16.mxu0 %v604
  %1483 = vmatpush1.bf16.msra.mxu0 %v603
  %1484 = vmatprep.subr.bf16.mxu0 %v601
  %1485 = vmatpush1.bf16.msra.mxu0 %v600
  %1486 = vmatprep.subr.bf16.mxu0 %v598
  %1487 = vmatpush1.bf16.msra.mxu0 %v597
  %1488 = vmatprep.subr.bf16.mxu0 %v595
  %1489 = vmatpush1.bf16.msra.mxu0 %v594
  %1490 = vmatprep.subr.bf16.mxu0 %v592
  %1491 = vmatpush1.bf16.msra.mxu0 %v591
  %1492 = vmatprep.subr.bf16.mxu0 %v589
  %1493 = vmatpush1.bf16.msra.mxu0 %v588
  %1494 = vmatprep.subr.bf16.mxu0 0
  %1495 = vmatpush2.bf16.msra.mxu0 0
  %1496 = vmatprep.subr.bf16.mxu0 0
  %1497 = vmatpush2.bf16.msra.mxu0 0
  %1498 = vmatprep.subr.bf16.mxu0 0
  %1499 = vmatpush2.bf16.msra.mxu0 0
  %1500 = vmatprep.subr.bf16.mxu0 0
  %1501 = vmatpush2.bf16.msra.mxu0 0
  %1502 = vmatprep.subr.bf16.mxu0 0
  %1503 = vmatpush2.bf16.msra.mxu0 0
  %1504 = vmatprep.subr.bf16.mxu0 0
  %1505 = vmatpush2.bf16.msra.mxu0 0
  %1506 = vmatprep.subr.bf16.mxu0 0
  %1507 = vmatpush2.bf16.msra.mxu0 0
  %1508 = vmatprep.subr.bf16.mxu0 0
  %1509 = vmatpush2.bf16.msra.mxu0 0
  %1510 = vmatprep.mubr.bf16.mxu0 0
  %1511 = vmatmul.mubr.bf16.gmra.mxu0 %v1354
  %v1512 = vpop.f32.mrf.mxu0
  %v1513 = vadd.f32 %v496, %v1512
  %v1514 = vpop.f32.mrf.mxu0
  %v1515 = vadd.f32 %v500, %v1514
  %v1516 = vpop.f32.mrf.mxu0
  %v1517 = vpop.f32.mrf.mxu0
  %1518 = vdwg.mxu0
  %1519 = vmatprep.subr.bf16.mxu0 0
  %1520 = vmatpush1.bf16.msra.mxu0 %v611
  %1521 = vmatprep.subr.bf16.mxu0 0
  %1522 = vmatpush1.bf16.msra.mxu0 %v608
  %1523 = vmatprep.subr.bf16.mxu0 0
  %1524 = vmatpush1.bf16.msra.mxu0 %v605
  %1525 = vmatprep.subr.bf16.mxu0 0
  %1526 = vmatpush1.bf16.msra.mxu0 %v602
  %1527 = vmatprep.subr.bf16.mxu0 0
  %1528 = vmatpush1.bf16.msra.mxu0 %v599
  %1529 = vmatprep.subr.bf16.mxu0 0
  %1530 = vmatpush1.bf16.msra.mxu0 %v596
  %1531 = vmatprep.subr.bf16.mxu0 0
  %1532 = vmatpush1.bf16.msra.mxu0 %v593
  %1533 = vmatprep.subr.bf16.mxu0 0
  %1534 = vmatpush1.bf16.msra.mxu0 %v590
  %1535 = vmatprep.subr.bf16.mxu0 0
  %1536 = vmatpush2.bf16.msra.mxu0 0
  %1537 = vmatprep.subr.bf16.mxu0 0
  %1538 = vmatpush2.bf16.msra.mxu0 0
  %1539 = vmatprep.subr.bf16.mxu0 0
  %1540 = vmatpush2.bf16.msra.mxu0 0
  %1541 = vmatprep.subr.bf16.mxu0 0
  %1542 = vmatpush2.bf16.msra.mxu0 0
  %1543 = vmatprep.subr.bf16.mxu0 0
  %1544 = vmatpush2.bf16.msra.mxu0 0
  %1545 = vmatprep.subr.bf16.mxu0 0
  %1546 = vmatpush2.bf16.msra.mxu0 0
  %1547 = vmatprep.subr.bf16.mxu0 0
  %1548 = vmatpush2.bf16.msra.mxu0 0
  %1549 = vmatprep.subr.bf16.mxu0 0
  %1550 = vmatpush2.bf16.msra.mxu0 0
  %1551 = vmatprep.mubr.bf16.mxu0 0
  %1552 = vmatmul.mubr.bf16.gmra.mxu0 %v1354
  %v1553 = vpop.f32.mrf.mxu0
  %v1554 = vadd.f32 %v504, %v1553
  %v1555 = vpop.f32.mrf.mxu0
  %v1556 = vpop.f32.mrf.mxu0
  %v1557 = vpop.f32.mrf.mxu0
  %1558 = vdwg.mxu0
  %v1559 = vadd.f32 %v1475, %v1513
  %v1560 = vxor.u32 %v1559, 2147483648
  %v1561 = vmul.f32 %v1560, 1.442695
  %v1562 = vpow.pop %v1561
  %v1563 = vadd.f32 %v1562, 1.0
  %v1564 = vrcp.pop %v1563
  %v1565 = vmul.f32 1.0, %v1564
  %v1566 = vadd.f32 %v1476, %v1515
  %v1567 = vxor.u32 %v1566, 2147483648
  %v1568 = vmul.f32 %v1567, 1.442695
  %v1569 = vpow.pop %v1568
  %v1570 = vadd.f32 %v1569, 1.0
  %v1571 = vrcp.pop %v1570
  %v1572 = vmul.f32 1.0, %v1571
  %v1573 = vmul.f32 %v1565, %v1554
  %v1574 = vadd.f32 %v1477, %v1573
  %v1575 = vtanh.pop %v1574
  %v1576 = vsub.f32 1.0, %v1572
  %v1577 = vmul.f32 %v1576, %v1575
  %v1578 = vmul.f32 %v1572, %v1353
  %v1579 = vadd.f32 %v1577, %v1578
  %s1580 = sadd.s32 %s479, 3
  %p1581 = scmp.lt.s32.totalorder %s1580, 4
  %s1582 = scalar_select %p1581, 1, 0
  %v1583 = vstv %s1582
  %vm1584 = vcmp.eq.s32.totalorder %v1583, 1
  %v1585 = vsel %vm1584, %v1579, %v1353
  %v1586 = vpack.c.bf16 %v1585, %v1585
  %s1587 = scalar_lea.vmem %s6, 12
  %1588 = vst [vmem:[%s1587] sm:$0xf] %v1586
  %s1589 = smul.addr %s485, 8
  %s1590 = scalar_lea.vmem [#allocation4], %s1589
  %v1591 = vld [vmem:[%s1590] sm:$0xff]
  %v1592 = vld [vmem:[%s1590 + $0x8] sm:$0xff]
  %v1593 = vld [vmem:[%s1590 + $0x10] sm:$0xff]
  %1594 = vmatprep.subr.bf16.mxu0 %v870
  %1595 = vmatpush1.bf16.msra.mxu0 %v869
  %1596 = vmatprep.subr.bf16.mxu0 %v867
  %1597 = vmatpush1.bf16.msra.mxu0 %v866
  %1598 = vmatprep.subr.bf16.mxu0 %v864
  %1599 = vmatpush1.bf16.msra.mxu0 %v863
  %1600 = vmatprep.subr.bf16.mxu0 %v861
  %1601 = vmatpush1.bf16.msra.mxu0 %v860
  %1602 = vmatprep.subr.bf16.mxu0 %v858
  %1603 = vmatpush1.bf16.msra.mxu0 %v857
  %1604 = vmatprep.subr.bf16.mxu0 %v855
  %1605 = vmatpush1.bf16.msra.mxu0 %v854
  %1606 = vmatprep.subr.bf16.mxu0 %v852
  %1607 = vmatpush1.bf16.msra.mxu0 %v851
  %1608 = vmatprep.subr.bf16.mxu0 %v849
  %1609 = vmatpush1.bf16.msra.mxu0 %v848
  %1610 = vmatprep.subr.bf16.mxu0 0
  %1611 = vmatpush2.bf16.msra.mxu0 0
  %1612 = vmatprep.subr.bf16.mxu0 0
  %1613 = vmatpush2.bf16.msra.mxu0 0
  %1614 = vmatprep.subr.bf16.mxu0 0
  %1615 = vmatpush2.bf16.msra.mxu0 0
  %1616 = vmatprep.subr.bf16.mxu0 0
  %1617 = vmatpush2.bf16.msra.mxu0 0
  %1618 = vmatprep.subr.bf16.mxu0 0
  %1619 = vmatpush2.bf16.msra.mxu0 0
  %1620 = vmatprep.subr.bf16.mxu0 0
  %1621 = vmatpush2.bf16.msra.mxu0 0
  %1622 = vmatprep.subr.bf16.mxu0 0
  %1623 = vmatpush2.bf16.msra.mxu0 0
  %1624 = vmatprep.subr.bf16.mxu0 0
  %1625 = vmatpush2.bf16.msra.mxu0 0
  %1626 = vmatprep.mubr.bf16.mxu0 0
  %1627 = vmatmul.mubr.bf16.gmra.mxu0 %v1470
  %v1628 = vpop.f32.mrf.mxu0
  %v1629 = vadd.f32 %v756, %v1628
  %v1630 = vpop.f32.mrf.mxu0
  %v1631 = vadd.f32 %v760, %v1630
  %v1632 = vpop.f32.mrf.mxu0
  %v1633 = vpop.f32.mrf.mxu0
  %1634 = vdwg.mxu0
  %1635 = vmatprep.subr.bf16.mxu0 0
  %1636 = vmatpush1.bf16.msra.mxu0 %v871
  %1637 = vmatprep.subr.bf16.mxu0 0
  %1638 = vmatpush1.bf16.msra.mxu0 %v868
  %1639 = vmatprep.subr.bf16.mxu0 0
  %1640 = vmatpush1.bf16.msra.mxu0 %v865
  %1641 = vmatprep.subr.bf16.mxu0 0
  %1642 = vmatpush1.bf16.msra.mxu0 %v862
  %1643 = vmatprep.subr.bf16.mxu0 0
  %1644 = vmatpush1.bf16.msra.mxu0 %v859
  %1645 = vmatprep.subr.bf16.mxu0 0
  %1646 = vmatpush1.bf16.msra.mxu0 %v856
  %1647 = vmatprep.subr.bf16.mxu0 0
  %1648 = vmatpush1.bf16.msra.mxu0 %v853
  %1649 = vmatprep.subr.bf16.mxu0 0
  %1650 = vmatpush1.bf16.msra.mxu0 %v850
  %1651 = vmatprep.subr.bf16.mxu0 0
  %1652 = vmatpush2.bf16.msra.mxu0 0
  %1653 = vmatprep.subr.bf16.mxu0 0
  %1654 = vmatpush2.bf16.msra.mxu0 0
  %1655 = vmatprep.subr.bf16.mxu0 0
  %1656 = vmatpush2.bf16.msra.mxu0 0
  %1657 = vmatprep.subr.bf16.mxu0 0
  %1658 = vmatpush2.bf16.msra.mxu0 0
  %1659 = vmatprep.subr.bf16.mxu0 0
  %1660 = vmatpush2.bf16.msra.mxu0 0
  %1661 = vmatprep.subr.bf16.mxu0 0
  %1662 = vmatpush2.bf16.msra.mxu0 0
  %1663 = vmatprep.subr.bf16.mxu0 0
  %1664 = vmatpush2.bf16.msra.mxu0 0
  %1665 = vmatprep.subr.bf16.mxu0 0
  %1666 = vmatpush2.bf16.msra.mxu0 0
  %1667 = vmatprep.mubr.bf16.mxu0 0
  %1668 = vmatmul.mubr.bf16.gmra.mxu0 %v1470
  %v1669 = vpop.f32.mrf.mxu0
  %v1670 = vadd.f32 %v764, %v1669
  %v1671 = vpop.f32.mrf.mxu0
  %v1672 = vpop.f32.mrf.mxu0
  %v1673 = vpop.f32.mrf.mxu0
  %1674 = vdwg.mxu0
  %v1675 = vadd.f32 %v1591, %v1629
  %v1676 = vxor.u32 %v1675, 2147483648
  %v1677 = vmul.f32 %v1676, 1.442695
  %v1678 = vpow.pop %v1677
  %v1679 = vadd.f32 %v1678, 1.0
  %v1680 = vrcp.pop %v1679
  %v1681 = vmul.f32 1.0, %v1680
  %v1682 = vadd.f32 %v1592, %v1631
  %v1683 = vxor.u32 %v1682, 2147483648
  %v1684 = vmul.f32 %v1683, 1.442695
  %v1685 = vpow.pop %v1684
  %v1686 = vadd.f32 %v1685, 1.0
  %v1687 = vrcp.pop %v1686
  %v1688 = vmul.f32 1.0, %v1687
  %v1689 = vmul.f32 %v1681, %v1670
  %v1690 = vadd.f32 %v1593, %v1689
  %v1691 = vtanh.pop %v1690
  %v1692 = vsub.f32 1.0, %v1688
  %v1693 = vmul.f32 %v1692, %v1691
  %v1694 = vmul.f32 %v1688, %v1469
  %v1695 = vadd.f32 %v1693, %v1694
  %p1696 = scmp.lt.s32.totalorder %s481, 4
  %s1697 = scalar_select %p1696, 1, 0
  %v1698 = vstv %s1697
  %vm1699 = vcmp.eq.s32.totalorder %v1698, 1
  %v1700 = vsel %vm1699, %v1695, %v1469
  %v1701 = vpack.c.bf16 %v1700, %v1700
  %1702 = vst [vmem:[%s58] sm:$0xf] %v1701
  %1703 = vst [vmem:[#allocation2] sm:$0xff] %v1585
  %1704 = vst [vmem:[%s483] sm:$0xff] %v1700
  %s1705 = ssub.s32 0, 0
  %s1706 = smul.u32 4, %s1705
  %p1707 = scmp.lt.s32.totalorder %s1706, 3
  %s1708 = scalar_select %p1707, %s1706, 3
  %s1709 = smul.addr %s1708, 4
  %s1710 = scalar_lea.vmem %s7, %s1709
  // Predicated region
  $region30: #{deepspeech2_forward.9} parent=0 // pred_check
    _
  $region31: #{deepspeech2_forward.9} parent=0 // pred_check_branch
    %1712 = sbr.rel (0) target = $region33
  $region32: #{deepspeech2_forward.9} parent=0 // pred_region
    _
  $region33: #{deepspeech2_forward.9} parent=0 // pred_fallthru
    _
  // Predicated region
  $region34: #{deepspeech2_forward.9} parent=0 // pred_check
    _
  $region35: #{deepspeech2_forward.9} parent=0 // pred_check_branch
    %1714 = sbr.rel (0) target = $region37
  $region36: #{deepspeech2_forward.9} parent=0 // pred_region
    %s1715 = ssub.s32 0, 0
    %s1716 = smul.u32 4, %s1715
  $region37: #{deepspeech2_forward.9} parent=0 // pred_fallthru
    _
  // Predicated region
  $region38: #{deepspeech2_forward.9} parent=0 // pred_check
    _
  $region39: #{deepspeech2_forward.9} parent=0 // pred_check_branch
    %1718 = sbr.rel (0) target = $region41
  $region40: #{deepspeech2_forward.9} parent=0 // pred_region
    _
  $region41: #{deepspeech2_forward.9} parent=0 // pred_fallthru
    _
  // Predicated region
  $region42: #{deepspeech2_forward.9} parent=0 // pred_check
    _
  $region43: #{deepspeech2_forward.9} parent=0 // pred_check_branch
    %1720 = sbr.rel (0) target = $region45
  $region44: #{deepspeech2_forward.9} parent=0 // pred_region
    %s1721 = ssub.s32 0, 0
    %s1722 = smul.u32 4, %s1721
    %p1723 = scmp.lt.s32.totalorder %s1722, 3
    %s1724 = scalar_select %p1723, %s1722, 3
    %s1725 = smul.addr %s1724, 4
    %s1726 = scalar_lea.vmem %s7, %s1725
  $region45: #{deepspeech2_forward.9} parent=0 // pred_fallthru
    _

// kernel: deepspeech2_forward.10
$region0: #{deepspeech2_forward.10}
  #allocation0 [shape = 'u32[]', space=smem, size = 0x4, offset = 0x4, fixed_abs, tag = 'smem constant byte address 0x4 - core index']
  #allocation1 [shape = 'u32[144,128]{1,0:T(1,128)}', space=vmem, size = 0x12000, scoped, tag = 'internal scratch']
  #allocation2 [shape = 'f32[2,8,128]{2,1,0:T(8,128)}', space=vmem, size = 0x2000, scoped, tag = 'scratch operand']
  #allocation3 [shape = 'f32[32,384]{1,0:T(8,128)}', space=vmem, size = 0xc000, scoped, tag = 'scratch operand']
  #allocation4 [shape = 'f32[32,384]{1,0:T(8,128)}', space=vmem, size = 0xc000, scoped, tag = 'scratch operand']
  %s0 = inlined_call_operand.vmem [shape: bf16[4,8,128], index: 0, kind: input, shape index: {}, may-alias: {0,2}]
  %s1 = inlined_call_operand.vmem [shape: bf16[4,8,128], index: 1, kind: input, shape index: {}, may-alias: {1,3}]
  %s2 = inlined_call_operand.vmem [shape: bf16[4,8,128], index: 2, kind: input, shape index: {}, may-alias: {0,2}]
  %s3 = inlined_call_operand.vmem [shape: bf16[4,8,128], index: 3, kind: input, shape index: {}, may-alias: {1,3}]
  %s4 = inlined_call_operand.vmem [shape: bf16[256,768], index: 4, kind: input, shape index: {}]
  %s5 = inlined_call_operand.vmem [shape: f32[1,768], index: 5, kind: input, shape index: {}]
  %s6 = inlined_call_operand.vmem [shape: bf16[2,128,384], index: 6, kind: input, shape index: {}]
  %s7 = inlined_call_operand.vmem [shape: f32[2,1,384], index: 7, kind: input, shape index: {}]
  %s8 = inlined_call_operand.vmem [shape: bf16[4,8,128], index: 8, kind: output, shape index: {0}]
  %s9 = inlined_call_operand.vmem [shape: bf16[4,8,128], index: 9, kind: output, shape index: {1}]
  %10 = xla_tuple %s8, %s9
  %s11 = sld [smem:[#allocation0]]
  $region54: #{deepspeech2_forward.10} parent=0
    _
  %s13 = ssub.s32 1, %s11
  %s14 = scalar_select 0, %s13, %s11
  // Predicated region
  $region2: #{deepspeech2_forward.10} parent=0 // pred_check
    _
  $region3: #{deepspeech2_forward.10} parent=0 // pred_check_branch
    %16 = sbr.rel (0) target = $region5
  $region4: #{deepspeech2_forward.10} parent=0 // pred_region
    _
  $region5: #{deepspeech2_forward.10} parent=0 // pred_fallthru
    _
  // Predicated region
  $region6: #{deepspeech2_forward.10} parent=0 // pred_check
    _
  $region7: #{deepspeech2_forward.10} parent=0 // pred_check_branch
    %18 = sbr.rel (0) target = $region9
  $region8: #{deepspeech2_forward.10} parent=0 // pred_region
    _
  $region9: #{deepspeech2_forward.10} parent=0 // pred_fallthru
    _
  // Predicated region
  $region10: #{deepspeech2_forward.10} parent=0 // pred_check
    _
  $region11: #{deepspeech2_forward.10} parent=0 // pred_check_branch
    %20 = sbr.rel (0) target = $region13
  $region12: #{deepspeech2_forward.10} parent=0 // pred_region
    %s21 = ssub.s32 0, 0
    %s22 = smul.u32 4, %s21
    %p23 = scmp.lt.s32.totalorder %s22, 3
    %s24 = scalar_select %p23, %s22, 3
    %s25 = smul.addr %s24, 4
    %s26 = scalar_lea.vmem %s2, %s25
    %s27 = ssub.s32 0, 0
    %s28 = smul.u32 4, %s27
  $region13: #{deepspeech2_forward.10} parent=0 // pred_fallthru
    _
  // Predicated region
  $region14: #{deepspeech2_forward.10} parent=0 // pred_check
    _
  $region15: #{deepspeech2_forward.10} parent=0 // pred_check_branch
    %30 = sbr.rel (0) target = $region17
  $region16: #{deepspeech2_forward.10} parent=0 // pred_region
    %s31 = ssub.s32 0, 0
    %s32 = smul.u32 4, %s31
    %p33 = scmp.lt.s32.totalorder %s32, 3
    %s34 = scalar_select %p33, %s32, 3
    %s35 = smul.addr %s34, 4
    %s36 = scalar_lea.vmem %s3, %s35
    %s37 = ssub.s32 0, 0
    %s38 = smul.u32 4, %s37
  $region17: #{deepspeech2_forward.10} parent=0 // pred_fallthru
    _
  // Predicated region
  $region18: #{deepspeech2_forward.10} parent=0 // pred_check
    _
  $region19: #{deepspeech2_forward.10} parent=0 // pred_check_branch
    %40 = sbr.rel (0) target = $region21
  $region20: #{deepspeech2_forward.10} parent=0 // pred_region
    _
  $region21: #{deepspeech2_forward.10} parent=0 // pred_fallthru
    _
  // Predicated region
  $region22: #{deepspeech2_forward.10} parent=0 // pred_check
    _
  $region23: #{deepspeech2_forward.10} parent=0 // pred_check_branch
    %42 = sbr.rel (0) target = $region25
  $region24: #{deepspeech2_forward.10} parent=0 // pred_region
    _
  $region25: #{deepspeech2_forward.10} parent=0 // pred_fallthru
    _
  // Predicated region
  $region26: #{deepspeech2_forward.10} parent=0 // pred_check
    _
  $region27: #{deepspeech2_forward.10} parent=0 // pred_check_branch
    %44 = sbr.rel (0) target = $region29
  $region28: #{deepspeech2_forward.10} parent=0 // pred_region
    _
  $region29: #{deepspeech2_forward.10} parent=0 // pred_fallthru
    _
  // Predicated region
  $region30: #{deepspeech2_forward.10} parent=0 // pred_check
    _
  $region31: #{deepspeech2_forward.10} parent=0 // pred_check_branch
    %46 = sbr.rel (0) target = $region33
  $region32: #{deepspeech2_forward.10} parent=0 // pred_region
    _
  $region33: #{deepspeech2_forward.10} parent=0 // pred_fallthru
    _
  %s47 = ssub.s32 0, 0
  %s48 = smul.u32 4, %s47
  %p49 = scmp.lt.s32.totalorder %s48, 3
  %s50 = scalar_select %p49, %s48, 3
  %s51 = smul.addr %s50, 4
  %s52 = scalar_lea.vmem %s2, %s51
  %s53 = ssub.s32 0, 0
  %s54 = smul.u32 4, %s53
  %p55 = scmp.lt.s32.totalorder %s54, 3
  %s56 = scalar_select %p55, %s54, 3
  %s57 = smul.addr %s56, 4
  %s58 = scalar_lea.vmem %s3, %s57
  %s59 = ssub.s32 0, 0
  %s60 = smul.u32 4, %s59
  %p61 = scmp.lt.s32.totalorder %s60, 3
  %s62 = scalar_select %p61, %s60, 3
  %s63 = smul.addr %s62, 4
  %s64 = scalar_lea.vmem %s9, %s63
  %s65 = ssub.s32 0, 0
  %s66 = smul.u32 4, %s65
  %p67 = scmp.lt.s32.totalorder %s66, 3
  %s68 = scalar_select %p67, %s66, 3
  %s69 = smul.addr %s68, 4
  %s70 = scalar_lea.vmem %s2, %s69
  %s71 = ssub.s32 0, 0
  %s72 = smul.u32 4, %s71
  %s73 = ssub.s32 0, 0
  %s74 = smul.u32 4, %s73
  %p75 = scmp.lt.s32.totalorder %s74, 3
  %s76 = scalar_select %p75, %s74, 3
  %s77 = smul.addr %s76, 4
  %s78 = scalar_lea.vmem %s3, %s77
  %s79 = ssub.s32 0, 0
  %s80 = smul.u32 4, %s79
  %s81 = ssub.s32 0, 0
  %s82 = smul.u32 4, %s81
  %p83 = scmp.lt.s32.totalorder %s82, 3
  %s84 = scalar_select %p83, %s82, 3
  %s85 = smul.addr %s84, 4
  %s86 = scalar_lea.vmem %s9, %s85
  %s87 = ssub.s32 0, 0
  %s88 = smul.u32 4, %s87
  %p90 = scmp.eq.s32.totalorder 0, 0
  // Predicated region
  $region34: #{deepspeech2_forward.10} parent=0 // pred_check
    %p91 = pneg %p90
  $region35: #{deepspeech2_forward.10} parent=0 // pred_check_branch
    %93 = sbr.rel (%p91) target = $region37
  $region36: #{deepspeech2_forward.10} parent=0 // pred_region
    %94 = vst [vmem:[#allocation2] sm:$0xff] 0.0
    %95 = vst [vmem:[#allocation2 + $0x8] sm:$0xff] 0.0
  $region37: #{deepspeech2_forward.10} parent=0 // pred_fallthru
    _
  %v96 = vld [vmem:[%s0] sm:$0xf]
  %v97 = vld [vmem:[%s0 + $0x4] sm:$0xf]
  %v98 = vld [vmem:[%s0 + $0x8] sm:$0xf]
  %v99 = vld [vmem:[%s0 + $0xc] sm:$0xf]
  %v100 = vld [vmem:[%s70] sm:$0xf]
  %v101 = vld [vmem:[%s70 + $0x4] sm:$0xf]
  %v102 = vld [vmem:[%s70 + $0x8] sm:$0xf]
  %v103 = vld [vmem:[%s70 + $0xc] sm:$0xf]
  %v104 = vld [vmem:[%s4] sm:$0xff]
  %v105 = vld [vmem:[%s4 + $0x8] sm:$0xf]
  %v106 = vld [vmem:[%s4 + $0x18] sm:$0xff]
  %v107 = vld [vmem:[%s4 + $0x20] sm:$0xf]
  %v108 = vld [vmem:[%s4 + $0x30] sm:$0xff]
  %v109 = vld [vmem:[%s4 + $0x38] sm:$0xf]
  %v110 = vld [vmem:[%s4 + $0x48] sm:$0xff]
  %v111 = vld [vmem:[%s4 + $0x50] sm:$0xf]
  %v112 = vld [vmem:[%s4 + $0x60] sm:$0xff]
  %v113 = vld [vmem:[%s4 + $0x68] sm:$0xf]
  %v114 = vld [vmem:[%s4 + $0x78] sm:$0xff]
  %v115 = vld [vmem:[%s4 + $0x80] sm:$0xf]
  %v116 = vld [vmem:[%s4 + $0x90] sm:$0xff]
  %v117 = vld [vmem:[%s4 + $0x98] sm:$0xf]
  %v118 = vld [vmem:[%s4 + $0xa8] sm:$0xff]
  %v119 = vld [vmem:[%s4 + $0xb0] sm:$0xf]
  %v120 = vld [vmem:[%s4 + $0xc0] sm:$0xff]
  %v121 = vld [vmem:[%s4 + $0xc8] sm:$0xf]
  %v122 = vld [vmem:[%s4 + $0xd8] sm:$0xff]
  %v123 = vld [vmem:[%s4 + $0xe0] sm:$0xf]
  %v124 = vld [vmem:[%s4 + $0xf0] sm:$0xff]
  %v125 = vld [vmem:[%s4 + $0xf8] sm:$0xf]
  %v126 = vld [vmem:[%s4 + $0x108] sm:$0xff]
  %v127 = vld [vmem:[%s4 + $0x110] sm:$0xf]
  %v128 = vld [vmem:[%s4 + $0x120] sm:$0xff]
  %v129 = vld [vmem:[%s4 + $0x128] sm:$0xf]
  %v130 = vld [vmem:[%s4 + $0x138] sm:$0xff]
  %v131 = vld [vmem:[%s4 + $0x140] sm:$0xf]
  %v132 = vld [vmem:[%s4 + $0x150] sm:$0xff]
  %v133 = vld [vmem:[%s4 + $0x158] sm:$0xf]
  %v134 = vld [vmem:[%s4 + $0x168] sm:$0xff]
  %v135 = vld [vmem:[%s4 + $0x170] sm:$0xf]
  %v136 = vld [vmem:[%s4 + $0xc] sm:$0xff]
  %v137 = vld [vmem:[%s4 + $0x14] sm:$0xf]
  %v138 = vld [vmem:[%s4 + $0x24] sm:$0xff]
  %v139 = vld [vmem:[%s4 + $0x2c] sm:$0xf]
  %v140 = vld [vmem:[%s4 + $0x3c] sm:$0xff]
  %v141 = vld [vmem:[%s4 + $0x44] sm:$0xf]
  %v142 = vld [vmem:[%s4 + $0x54] sm:$0xff]
  %v143 = vld [vmem:[%s4 + $0x5c] sm:$0xf]
  %v144 = vld [vmem:[%s4 + $0x6c] sm:$0xff]
  %v145 = vld [vmem:[%s4 + $0x74] sm:$0xf]
  %v146 = vld [vmem:[%s4 + $0x84] sm:$0xff]
  %v147 = vld [vmem:[%s4 + $0x8c] sm:$0xf]
  %v148 = vld [vmem:[%s4 + $0x9c] sm:$0xff]
  %v149 = vld [vmem:[%s4 + $0xa4] sm:$0xf]
  %v150 = vld [vmem:[%s4 + $0xb4] sm:$0xff]
  %v151 = vld [vmem:[%s4 + $0xbc] sm:$0xf]
  %v152 = vld [vmem:[%s4 + $0xcc] sm:$0xff]
  %v153 = vld [vmem:[%s4 + $0xd4] sm:$0xf]
  %v154 = vld [vmem:[%s4 + $0xe4] sm:$0xff]
  %v155 = vld [vmem:[%s4 + $0xec] sm:$0xf]
  %v156 = vld [vmem:[%s4 + $0xfc] sm:$0xff]
  %v157 = vld [vmem:[%s4 + $0x104] sm:$0xf]
  %v158 = vld [vmem:[%s4 + $0x114] sm:$0xff]
  %v159 = vld [vmem:[%s4 + $0x11c] sm:$0xf]
  %v160 = vld [vmem:[%s4 + $0x12c] sm:$0xff]
  %v161 = vld [vmem:[%s4 + $0x134] sm:$0xf]
  %v162 = vld [vmem:[%s4 + $0x144] sm:$0xff]
  %v163 = vld [vmem:[%s4 + $0x14c] sm:$0xf]
  %v164 = vld [vmem:[%s4 + $0x15c] sm:$0xff]
  %v165 = vld [vmem:[%s4 + $0x164] sm:$0xf]
  %v166 = vld [vmem:[%s4 + $0x174] sm:$0xff]
  %v167 = vld [vmem:[%s4 + $0x17c] sm:$0xf]
  %v168 = vld [vmem:[%s1] sm:$0xf]
  %v169 = vld [vmem:[%s1 + $0x4] sm:$0xf]
  %v170 = vld [vmem:[%s1 + $0x8] sm:$0xf]
  %v171 = vld [vmem:[%s1 + $0xc] sm:$0xf]
  %v172 = vld [vmem:[%s78] sm:$0xf]
  %v173 = vld [vmem:[%s78 + $0x4] sm:$0xf]
  %v174 = vld [vmem:[%s78 + $0x8] sm:$0xf]
  %v175 = vld [vmem:[%s78 + $0xc] sm:$0xf]
  %v176 = vld [vmem:[%s4 + $0x180] sm:$0xff]
  %v177 = vld [vmem:[%s4 + $0x188] sm:$0xf]
  %v178 = vld [vmem:[%s4 + $0x198] sm:$0xff]
  %v179 = vld [vmem:[%s4 + $0x1a0] sm:$0xf]
  %v180 = vld [vmem:[%s4 + $0x1b0] sm:$0xff]
  %v181 = vld [vmem:[%s4 + $0x1b8] sm:$0xf]
  %v182 = vld [vmem:[%s4 + $0x1c8] sm:$0xff]
  %v183 = vld [vmem:[%s4 + $0x1d0] sm:$0xf]
  %v184 = vld [vmem:[%s4 + $0x1e0] sm:$0xff]
  %v185 = vld [vmem:[%s4 + $0x1e8] sm:$0xf]
  %v186 = vld [vmem:[%s4 + $0x1f8] sm:$0xff]
  %v187 = vld [vmem:[%s4 + $0x200] sm:$0xf]
  %v188 = vld [vmem:[%s4 + $0x210] sm:$0xff]
  %v189 = vld [vmem:[%s4 + $0x218] sm:$0xf]
  %v190 = vld [vmem:[%s4 + $0x228] sm:$0xff]
  %v191 = vld [vmem:[%s4 + $0x230] sm:$0xf]
  %v192 = vld [vmem:[%s4 + $0x240] sm:$0xff]
  %v193 = vld [vmem:[%s4 + $0x248] sm:$0xf]
  %v194 = vld [vmem:[%s4 + $0x258] sm:$0xff]
  %v195 = vld [vmem:[%s4 + $0x260] sm:$0xf]
  %v196 = vld [vmem:[%s4 + $0x270] sm:$0xff]
  %v197 = vld [vmem:[%s4 + $0x278] sm:$0xf]
  %v198 = vld [vmem:[%s4 + $0x288] sm:$0xff]
  %v199 = vld [vmem:[%s4 + $0x290] sm:$0xf]
  %v200 = vld [vmem:[%s4 + $0x2a0] sm:$0xff]
  %v201 = vld [vmem:[%s4 + $0x2a8] sm:$0xf]
  %v202 = vld [vmem:[%s4 + $0x2b8] sm:$0xff]
  %v203 = vld [vmem:[%s4 + $0x2c0] sm:$0xf]
  %v204 = vld [vmem:[%s4 + $0x2d0] sm:$0xff]
  %v205 = vld [vmem:[%s4 + $0x2d8] sm:$0xf]
  %v206 = vld [vmem:[%s4 + $0x2e8] sm:$0xff]
  %v207 = vld [vmem:[%s4 + $0x2f0] sm:$0xf]
  %v212 = vunpack.c.l.b16 %v168
  %v213 = vunpack.c.l.b16 %v169
  %v214 = vunpack.c.l.b16 %v170
  %v215 = vunpack.c.l.b16 %v171
  %v216 = vpack.c.b16 %v213, %v212
  %v217 = vpack.c.b16 %v215, %v214
  %v252 = vunpack.c.l.b16 %v176
  %v253 = vunpack.c.h.b16 %v176
  %v254 = vunpack.c.l.b16 %v177
  %v255 = vunpack.c.l.b16 %v178
  %v256 = vunpack.c.h.b16 %v178
  %v257 = vunpack.c.l.b16 %v179
  %v258 = vunpack.c.l.b16 %v180
  %v259 = vunpack.c.h.b16 %v180
  %v260 = vunpack.c.l.b16 %v181
  %v261 = vunpack.c.l.b16 %v182
  %v262 = vunpack.c.h.b16 %v182
  %v263 = vunpack.c.l.b16 %v183
  %v264 = vunpack.c.l.b16 %v184
  %v265 = vunpack.c.h.b16 %v184
  %v266 = vunpack.c.l.b16 %v185
  %v267 = vunpack.c.l.b16 %v186
  %v268 = vunpack.c.h.b16 %v186
  %v269 = vunpack.c.l.b16 %v187
  %v270 = vunpack.c.l.b16 %v188
  %v271 = vunpack.c.h.b16 %v188
  %v272 = vunpack.c.l.b16 %v189
  %v273 = vunpack.c.l.b16 %v190
  %v274 = vunpack.c.h.b16 %v190
  %v275 = vunpack.c.l.b16 %v191
  %v276 = vunpack.c.l.b16 %v192
  %v277 = vunpack.c.h.b16 %v192
  %v278 = vunpack.c.l.b16 %v193
  %v279 = vunpack.c.l.b16 %v194
  %v280 = vunpack.c.h.b16 %v194
  %v281 = vunpack.c.l.b16 %v195
  %v282 = vunpack.c.l.b16 %v196
  %v283 = vunpack.c.h.b16 %v196
  %v284 = vunpack.c.l.b16 %v197
  %v285 = vunpack.c.l.b16 %v198
  %v286 = vunpack.c.h.b16 %v198
  %v287 = vunpack.c.l.b16 %v199
  %v288 = vunpack.c.l.b16 %v200
  %v289 = vunpack.c.h.b16 %v200
  %v290 = vunpack.c.l.b16 %v201
  %v291 = vunpack.c.l.b16 %v202
  %v292 = vunpack.c.h.b16 %v202
  %v293 = vunpack.c.l.b16 %v203
  %v294 = vunpack.c.l.b16 %v204
  %v295 = vunpack.c.h.b16 %v204
  %v296 = vunpack.c.l.b16 %v205
  %v297 = vunpack.c.l.b16 %v206
  %v298 = vunpack.c.h.b16 %v206
  %v299 = vunpack.c.l.b16 %v207
  %v300 = vpack.c.b16 %v255, %v252
  %v301 = vpack.c.b16 %v256, %v253
  %v302 = vpack.c.b16 %v257, %v254
  %v303 = vpack.c.b16 %v261, %v258
  %v304 = vpack.c.b16 %v262, %v259
  %v305 = vpack.c.b16 %v263, %v260
  %v306 = vpack.c.b16 %v267, %v264
  %v307 = vpack.c.b16 %v268, %v265
  %v308 = vpack.c.b16 %v269, %v266
  %v309 = vpack.c.b16 %v273, %v270
  %v310 = vpack.c.b16 %v274, %v271
  %v311 = vpack.c.b16 %v275, %v272
  %v312 = vpack.c.b16 %v279, %v276
  %v313 = vpack.c.b16 %v280, %v277
  %v314 = vpack.c.b16 %v281, %v278
  %v315 = vpack.c.b16 %v285, %v282
  %v316 = vpack.c.b16 %v286, %v283
  %v317 = vpack.c.b16 %v287, %v284
  %v318 = vpack.c.b16 %v291, %v288
  %v319 = vpack.c.b16 %v292, %v289
  %v320 = vpack.c.b16 %v293, %v290
  %v321 = vpack.c.b16 %v297, %v294
  %v322 = vpack.c.b16 %v298, %v295
  %v323 = vpack.c.b16 %v299, %v296
  %348 = vmatprep.subr.bf16.mxu0 %v322
  %349 = vmatpush1.bf16.msra.mxu0 %v321
  %350 = vmatprep.subr.bf16.mxu0 %v319
  %351 = vmatpush1.bf16.msra.mxu0 %v318
  %352 = vmatprep.subr.bf16.mxu0 %v316
  %353 = vmatpush1.bf16.msra.mxu0 %v315
  %354 = vmatprep.subr.bf16.mxu0 %v313
  %355 = vmatpush1.bf16.msra.mxu0 %v312
  %356 = vmatprep.subr.bf16.mxu0 %v310
  %357 = vmatpush1.bf16.msra.mxu0 %v309
  %358 = vmatprep.subr.bf16.mxu0 %v307
  %359 = vmatpush1.bf16.msra.mxu0 %v306
  %360 = vmatprep.subr.bf16.mxu0 %v304
  %361 = vmatpush1.bf16.msra.mxu0 %v303
  %362 = vmatprep.subr.bf16.mxu0 %v301
  %363 = vmatpush1.bf16.msra.mxu0 %v300
  %364 = vmatprep.subr.bf16.mxu0 0
  %365 = vmatpush2.bf16.msra.mxu0 0
  %366 = vmatprep.subr.bf16.mxu0 0
  %367 = vmatpush2.bf16.msra.mxu0 0
  %368 = vmatprep.subr.bf16.mxu0 0
  %369 = vmatpush2.bf16.msra.mxu0 0
  %370 = vmatprep.subr.bf16.mxu0 0
  %371 = vmatpush2.bf16.msra.mxu0 0
  %372 = vmatprep.subr.bf16.mxu0 0
  %373 = vmatpush2.bf16.msra.mxu0 0
  %374 = vmatprep.subr.bf16.mxu0 0
  %375 = vmatpush2.bf16.msra.mxu0 0
  %376 = vmatprep.subr.bf16.mxu0 0
  %377 = vmatpush2.bf16.msra.mxu0 0
  %378 = vmatprep.subr.bf16.mxu0 0
  %379 = vmatpush2.bf16.msra.mxu0 0
  %380 = vmatprep.mubr.bf16.mxu0 0
  %381 = vmatmul.mubr.bf16.gmra.mxu0 %v216
  %v382 = vpop.f32.mrf.mxu0
  %v383 = vadd.f32 0.0, %v382
  %v384 = vpop.f32.mrf.mxu0
  %v385 = vadd.f32 0.0, %v384
  %v386 = vpop.f32.mrf.mxu0
  %v387 = vadd.f32 0.0, %v386
  %v388 = vpop.f32.mrf.mxu0
  %v389 = vadd.f32 0.0, %v388
  %390 = vmatprep.mubr.bf16.mxu0 0
  %391 = vmatmul.mubr.bf16.gmra.mxu0 %v217
  %v392 = vpop.f32.mrf.mxu0
  %v393 = vadd.f32 0.0, %v392
  %v394 = vpop.f32.mrf.mxu0
  %v395 = vadd.f32 0.0, %v394
  %v396 = vpop.f32.mrf.mxu0
  %v397 = vadd.f32 0.0, %v396
  %v398 = vpop.f32.mrf.mxu0
  %v399 = vadd.f32 0.0, %v398
  %400 = vdwg.mxu0
  %401 = vmatprep.subr.bf16.mxu0 0
  %402 = vmatpush1.bf16.msra.mxu0 %v323
  %403 = vmatprep.subr.bf16.mxu0 0
  %404 = vmatpush1.bf16.msra.mxu0 %v320
  %405 = vmatprep.subr.bf16.mxu0 0
  %406 = vmatpush1.bf16.msra.mxu0 %v317
  %407 = vmatprep.subr.bf16.mxu0 0
  %408 = vmatpush1.bf16.msra.mxu0 %v314
  %409 = vmatprep.subr.bf16.mxu0 0
  %410 = vmatpush1.bf16.msra.mxu0 %v311
  %411 = vmatprep.subr.bf16.mxu0 0
  %412 = vmatpush1.bf16.msra.mxu0 %v308
  %413 = vmatprep.subr.bf16.mxu0 0
  %414 = vmatpush1.bf16.msra.mxu0 %v305
  %415 = vmatprep.subr.bf16.mxu0 0
  %416 = vmatpush1.bf16.msra.mxu0 %v302
  %417 = vmatprep.subr.bf16.mxu0 0
  %418 = vmatpush2.bf16.msra.mxu0 0
  %419 = vmatprep.subr.bf16.mxu0 0
  %420 = vmatpush2.bf16.msra.mxu0 0
  %421 = vmatprep.subr.bf16.mxu0 0
  %422 = vmatpush2.bf16.msra.mxu0 0
  %423 = vmatprep.subr.bf16.mxu0 0
  %424 = vmatpush2.bf16.msra.mxu0 0
  %425 = vmatprep.subr.bf16.mxu0 0
  %426 = vmatpush2.bf16.msra.mxu0 0
  %427 = vmatprep.subr.bf16.mxu0 0
  %428 = vmatpush2.bf16.msra.mxu0 0
  %429 = vmatprep.subr.bf16.mxu0 0
  %430 = vmatpush2.bf16.msra.mxu0 0
  %431 = vmatprep.subr.bf16.mxu0 0
  %432 = vmatpush2.bf16.msra.mxu0 0
  %433 = vmatprep.mubr.bf16.mxu0 0
  %434 = vmatmul.mubr.bf16.gmra.mxu0 %v216
  %v435 = vpop.f32.mrf.mxu0
  %v436 = vadd.f32 0.0, %v435
  %v437 = vpop.f32.mrf.mxu0
  %v438 = vpop.f32.mrf.mxu0
  %v439 = vadd.f32 0.0, %v438
  %v440 = vpop.f32.mrf.mxu0
  %441 = vmatprep.mubr.bf16.mxu0 0
  %442 = vmatmul.mubr.bf16.gmra.mxu0 %v217
  %v443 = vpop.f32.mrf.mxu0
  %v444 = vadd.f32 0.0, %v443
  %v445 = vpop.f32.mrf.mxu0
  %v446 = vpop.f32.mrf.mxu0
  %v447 = vadd.f32 0.0, %v446
  %v448 = vpop.f32.mrf.mxu0
  %449 = vdwg.mxu0
  %v450 = vld [vmem:[%s4 + $0x18c] sm:$0xff]
  %v451 = vld [vmem:[%s4 + $0x194] sm:$0xf]
  %v452 = vld [vmem:[%s4 + $0x1a4] sm:$0xff]
  %v453 = vld [vmem:[%s4 + $0x1ac] sm:$0xf]
  %v454 = vld [vmem:[%s4 + $0x1bc] sm:$0xff]
  %v455 = vld [vmem:[%s4 + $0x1c4] sm:$0xf]
  %v456 = vld [vmem:[%s4 + $0x1d4] sm:$0xff]
  %v457 = vld [vmem:[%s4 + $0x1dc] sm:$0xf]
  %v458 = vld [vmem:[%s4 + $0x1ec] sm:$0xff]
  %v459 = vld [vmem:[%s4 + $0x1f4] sm:$0xf]
  %v460 = vld [vmem:[%s4 + $0x204] sm:$0xff]
  %v461 = vld [vmem:[%s4 + $0x20c] sm:$0xf]
  %v462 = vld [vmem:[%s4 + $0x21c] sm:$0xff]
  %v463 = vld [vmem:[%s4 + $0x224] sm:$0xf]
  %v464 = vld [vmem:[%s4 + $0x234] sm:$0xff]
  %v465 = vld [vmem:[%s4 + $0x23c] sm:$0xf]
  %v466 = vld [vmem:[%s4 + $0x24c] sm:$0xff]
  %v467 = vld [vmem:[%s4 + $0x254] sm:$0xf]
  %v468 = vld [vmem:[%s4 + $0x264] sm:$0xff]
  %v469 = vld [vmem:[%s4 + $0x26c] sm:$0xf]
  %v470 = vld [vmem:[%s4 + $0x27c] sm:$0xff]
  %v471 = vld [vmem:[%s4 + $0x284] sm:$0xf]
  %v472 = vld [vmem:[%s4 + $0x294] sm:$0xff]
  %v473 = vld [vmem:[%s4 + $0x29c] sm:$0xf]
  %v474 = vld [vmem:[%s4 + $0x2ac] sm:$0xff]
  %v475 = vld [vmem:[%s4 + $0x2b4] sm:$0xf]
  %v476 = vld [vmem:[%s4 + $0x2c4] sm:$0xff]
  %v477 = vld [vmem:[%s4 + $0x2cc] sm:$0xf]
  %v478 = vld [vmem:[%s4 + $0x2dc] sm:$0xff]
  %v479 = vld [vmem:[%s4 + $0x2e4] sm:$0xf]
  %v480 = vld [vmem:[%s4 + $0x2f4] sm:$0xff]
  %v481 = vld [vmem:[%s4 + $0x2fc] sm:$0xf]
  %v486 = vunpack.c.l.b16 %v172
  %v487 = vunpack.c.l.b16 %v173
  %v488 = vunpack.c.l.b16 %v174
  %v489 = vunpack.c.l.b16 %v175
  %v490 = vpack.c.b16 %v487, %v486
  %v491 = vpack.c.b16 %v489, %v488
  %v526 = vunpack.c.l.b16 %v450
  %v527 = vunpack.c.h.b16 %v450
  %v528 = vunpack.c.l.b16 %v451
  %v529 = vunpack.c.l.b16 %v452
  %v530 = vunpack.c.h.b16 %v452
  %v531 = vunpack.c.l.b16 %v453
  %v532 = vunpack.c.l.b16 %v454
  %v533 = vunpack.c.h.b16 %v454
  %v534 = vunpack.c.l.b16 %v455
  %v535 = vunpack.c.l.b16 %v456
  %v536 = vunpack.c.h.b16 %v456
  %v537 = vunpack.c.l.b16 %v457
  %v538 = vunpack.c.l.b16 %v458
  %v539 = vunpack.c.h.b16 %v458
  %v540 = vunpack.c.l.b16 %v459
  %v541 = vunpack.c.l.b16 %v460
  %v542 = vunpack.c.h.b16 %v460
  %v543 = vunpack.c.l.b16 %v461
  %v544 = vunpack.c.l.b16 %v462
  %v545 = vunpack.c.h.b16 %v462
  %v546 = vunpack.c.l.b16 %v463
  %v547 = vunpack.c.l.b16 %v464
  %v548 = vunpack.c.h.b16 %v464
  %v549 = vunpack.c.l.b16 %v465
  %v550 = vunpack.c.l.b16 %v466
  %v551 = vunpack.c.h.b16 %v466
  %v552 = vunpack.c.l.b16 %v467
  %v553 = vunpack.c.l.b16 %v468
  %v554 = vunpack.c.h.b16 %v468
  %v555 = vunpack.c.l.b16 %v469
  %v556 = vunpack.c.l.b16 %v470
  %v557 = vunpack.c.h.b16 %v470
  %v558 = vunpack.c.l.b16 %v471
  %v559 = vunpack.c.l.b16 %v472
  %v560 = vunpack.c.h.b16 %v472
  %v561 = vunpack.c.l.b16 %v473
  %v562 = vunpack.c.l.b16 %v474
  %v563 = vunpack.c.h.b16 %v474
  %v564 = vunpack.c.l.b16 %v475
  %v565 = vunpack.c.l.b16 %v476
  %v566 = vunpack.c.h.b16 %v476
  %v567 = vunpack.c.l.b16 %v477
  %v568 = vunpack.c.l.b16 %v478
  %v569 = vunpack.c.h.b16 %v478
  %v570 = vunpack.c.l.b16 %v479
  %v571 = vunpack.c.l.b16 %v480
  %v572 = vunpack.c.h.b16 %v480
  %v573 = vunpack.c.l.b16 %v481
  %v574 = vpack.c.b16 %v529, %v526
  %v575 = vpack.c.b16 %v530, %v527
  %v576 = vpack.c.b16 %v531, %v528
  %v577 = vpack.c.b16 %v535, %v532
  %v578 = vpack.c.b16 %v536, %v533
  %v579 = vpack.c.b16 %v537, %v534
  %v580 = vpack.c.b16 %v541, %v538
  %v581 = vpack.c.b16 %v542, %v539
  %v582 = vpack.c.b16 %v543, %v540
  %v583 = vpack.c.b16 %v547, %v544
  %v584 = vpack.c.b16 %v548, %v545
  %v585 = vpack.c.b16 %v549, %v546
  %v586 = vpack.c.b16 %v553, %v550
  %v587 = vpack.c.b16 %v554, %v551
  %v588 = vpack.c.b16 %v555, %v552
  %v589 = vpack.c.b16 %v559, %v556
  %v590 = vpack.c.b16 %v560, %v557
  %v591 = vpack.c.b16 %v561, %v558
  %v592 = vpack.c.b16 %v565, %v562
  %v593 = vpack.c.b16 %v566, %v563
  %v594 = vpack.c.b16 %v567, %v564
  %v595 = vpack.c.b16 %v571, %v568
  %v596 = vpack.c.b16 %v572, %v569
  %v597 = vpack.c.b16 %v573, %v570
  %622 = vmatprep.subr.bf16.mxu0 %v596
  %623 = vmatpush1.bf16.msra.mxu0 %v595
  %624 = vmatprep.subr.bf16.mxu0 %v593
  %625 = vmatpush1.bf16.msra.mxu0 %v592
  %626 = vmatprep.subr.bf16.mxu0 %v590
  %627 = vmatpush1.bf16.msra.mxu0 %v589
  %628 = vmatprep.subr.bf16.mxu0 %v587
  %629 = vmatpush1.bf16.msra.mxu0 %v586
  %630 = vmatprep.subr.bf16.mxu0 %v584
  %631 = vmatpush1.bf16.msra.mxu0 %v583
  %632 = vmatprep.subr.bf16.mxu0 %v581
  %633 = vmatpush1.bf16.msra.mxu0 %v580
  %634 = vmatprep.subr.bf16.mxu0 %v578
  %635 = vmatpush1.bf16.msra.mxu0 %v577
  %636 = vmatprep.subr.bf16.mxu0 %v575
  %637 = vmatpush1.bf16.msra.mxu0 %v574
  %638 = vmatprep.subr.bf16.mxu0 0
  %639 = vmatpush2.bf16.msra.mxu0 0
  %640 = vmatprep.subr.bf16.mxu0 0
  %641 = vmatpush2.bf16.msra.mxu0 0
  %642 = vmatprep.subr.bf16.mxu0 0
  %643 = vmatpush2.bf16.msra.mxu0 0
  %644 = vmatprep.subr.bf16.mxu0 0
  %645 = vmatpush2.bf16.msra.mxu0 0
  %646 = vmatprep.subr.bf16.mxu0 0
  %647 = vmatpush2.bf16.msra.mxu0 0
  %648 = vmatprep.subr.bf16.mxu0 0
  %649 = vmatpush2.bf16.msra.mxu0 0
  %650 = vmatprep.subr.bf16.mxu0 0
  %651 = vmatpush2.bf16.msra.mxu0 0
  %652 = vmatprep.subr.bf16.mxu0 0
  %653 = vmatpush2.bf16.msra.mxu0 0
  %654 = vmatprep.mubr.bf16.mxu0 0
  %655 = vmatmul.mubr.bf16.gmra.mxu0 %v490
  %v656 = vpop.f32.mrf.mxu0
  %v657 = vadd.f32 0.0, %v656
  %v658 = vpop.f32.mrf.mxu0
  %v659 = vadd.f32 0.0, %v658
  %v660 = vpop.f32.mrf.mxu0
  %v661 = vadd.f32 0.0, %v660
  %v662 = vpop.f32.mrf.mxu0
  %v663 = vadd.f32 0.0, %v662
  %664 = vmatprep.mubr.bf16.mxu0 0
  %665 = vmatmul.mubr.bf16.gmra.mxu0 %v491
  %v666 = vpop.f32.mrf.mxu0
  %v667 = vadd.f32 0.0, %v666
  %v668 = vpop.f32.mrf.mxu0
  %v669 = vadd.f32 0.0, %v668
  %v670 = vpop.f32.mrf.mxu0
  %v671 = vadd.f32 0.0, %v670
  %v672 = vpop.f32.mrf.mxu0
  %v673 = vadd.f32 0.0, %v672
  %674 = vdwg.mxu0
  %675 = vmatprep.subr.bf16.mxu0 0
  %676 = vmatpush1.bf16.msra.mxu0 %v597
  %677 = vmatprep.subr.bf16.mxu0 0
  %678 = vmatpush1.bf16.msra.mxu0 %v594
  %679 = vmatprep.subr.bf16.mxu0 0
  %680 = vmatpush1.bf16.msra.mxu0 %v591
  %681 = vmatprep.subr.bf16.mxu0 0
  %682 = vmatpush1.bf16.msra.mxu0 %v588
  %683 = vmatprep.subr.bf16.mxu0 0
  %684 = vmatpush1.bf16.msra.mxu0 %v585
  %685 = vmatprep.subr.bf16.mxu0 0
  %686 = vmatpush1.bf16.msra.mxu0 %v582
  %687 = vmatprep.subr.bf16.mxu0 0
  %688 = vmatpush1.bf16.msra.mxu0 %v579
  %689 = vmatprep.subr.bf16.mxu0 0
  %690 = vmatpush1.bf16.msra.mxu0 %v576
  %691 = vmatprep.subr.bf16.mxu0 0
  %692 = vmatpush2.bf16.msra.mxu0 0
  %693 = vmatprep.subr.bf16.mxu0 0
  %694 = vmatpush2.bf16.msra.mxu0 0
  %695 = vmatprep.subr.bf16.mxu0 0
  %696 = vmatpush2.bf16.msra.mxu0 0
  %697 = vmatprep.subr.bf16.mxu0 0
  %698 = vmatpush2.bf16.msra.mxu0 0
  %699 = vmatprep.subr.bf16.mxu0 0
  %700 = vmatpush2.bf16.msra.mxu0 0
  %701 = vmatprep.subr.bf16.mxu0 0
  %702 = vmatpush2.bf16.msra.mxu0 0
  %703 = vmatprep.subr.bf16.mxu0 0
  %704 = vmatpush2.bf16.msra.mxu0 0
  %705 = vmatprep.subr.bf16.mxu0 0
  %706 = vmatpush2.bf16.msra.mxu0 0
  %707 = vmatprep.mubr.bf16.mxu0 0
  %708 = vmatmul.mubr.bf16.gmra.mxu0 %v490
  %v709 = vpop.f32.mrf.mxu0
  %v710 = vadd.f32 0.0, %v709
  %v711 = vpop.f32.mrf.mxu0
  %v712 = vpop.f32.mrf.mxu0
  %v713 = vadd.f32 0.0, %v712
  %v714 = vpop.f32.mrf.mxu0
  %715 = vmatprep.mubr.bf16.mxu0 0
  %716 = vmatmul.mubr.bf16.gmra.mxu0 %v491
  %v717 = vpop.f32.mrf.mxu0
  %v718 = vadd.f32 0.0, %v717
  %v719 = vpop.f32.mrf.mxu0
  %v720 = vpop.f32.mrf.mxu0
  %v721 = vadd.f32 0.0, %v720
  %v722 = vpop.f32.mrf.mxu0
  %723 = vdwg.mxu0
  %v728 = vunpack.c.l.b16 %v96
  %v729 = vunpack.c.l.b16 %v97
  %v730 = vunpack.c.l.b16 %v98
  %v731 = vunpack.c.l.b16 %v99
  %v732 = vpack.c.b16 %v729, %v728
  %v733 = vpack.c.b16 %v731, %v730
  %v768 = vunpack.c.l.b16 %v104
  %v769 = vunpack.c.h.b16 %v104
  %v770 = vunpack.c.l.b16 %v105
  %v771 = vunpack.c.l.b16 %v106
  %v772 = vunpack.c.h.b16 %v106
  %v773 = vunpack.c.l.b16 %v107
  %v774 = vunpack.c.l.b16 %v108
  %v775 = vunpack.c.h.b16 %v108
  %v776 = vunpack.c.l.b16 %v109
  %v777 = vunpack.c.l.b16 %v110
  %v778 = vunpack.c.h.b16 %v110
  %v779 = vunpack.c.l.b16 %v111
  %v780 = vunpack.c.l.b16 %v112
  %v781 = vunpack.c.h.b16 %v112
  %v782 = vunpack.c.l.b16 %v113
  %v783 = vunpack.c.l.b16 %v114
  %v784 = vunpack.c.h.b16 %v114
  %v785 = vunpack.c.l.b16 %v115
  %v786 = vunpack.c.l.b16 %v116
  %v787 = vunpack.c.h.b16 %v116
  %v788 = vunpack.c.l.b16 %v117
  %v789 = vunpack.c.l.b16 %v118
  %v790 = vunpack.c.h.b16 %v118
  %v791 = vunpack.c.l.b16 %v119
  %v792 = vunpack.c.l.b16 %v120
  %v793 = vunpack.c.h.b16 %v120
  %v794 = vunpack.c.l.b16 %v121
  %v795 = vunpack.c.l.b16 %v122
  %v796 = vunpack.c.h.b16 %v122
  %v797 = vunpack.c.l.b16 %v123
  %v798 = vunpack.c.l.b16 %v124
  %v799 = vunpack.c.h.b16 %v124
  %v800 = vunpack.c.l.b16 %v125
  %v801 = vunpack.c.l.b16 %v126
  %v802 = vunpack.c.h.b16 %v126
  %v803 = vunpack.c.l.b16 %v127
  %v804 = vunpack.c.l.b16 %v128
  %v805 = vunpack.c.h.b16 %v128
  %v806 = vunpack.c.l.b16 %v129
  %v807 = vunpack.c.l.b16 %v130
  %v808 = vunpack.c.h.b16 %v130
  %v809 = vunpack.c.l.b16 %v131
  %v810 = vunpack.c.l.b16 %v132
  %v811 = vunpack.c.h.b16 %v132
  %v812 = vunpack.c.l.b16 %v133
  %v813 = vunpack.c.l.b16 %v134
  %v814 = vunpack.c.h.b16 %v134
  %v815 = vunpack.c.l.b16 %v135
  %v816 = vpack.c.b16 %v771, %v768
  %v817 = vpack.c.b16 %v772, %v769
  %v818 = vpack.c.b16 %v773, %v770
  %v819 = vpack.c.b16 %v777, %v774
  %v820 = vpack.c.b16 %v778, %v775
  %v821 = vpack.c.b16 %v779, %v776
  %v822 = vpack.c.b16 %v783, %v780
  %v823 = vpack.c.b16 %v784, %v781
  %v824 = vpack.c.b16 %v785, %v782
  %v825 = vpack.c.b16 %v789, %v786
  %v826 = vpack.c.b16 %v790, %v787
  %v827 = vpack.c.b16 %v791, %v788
  %v828 = vpack.c.b16 %v795, %v792
  %v829 = vpack.c.b16 %v796, %v793
  %v830 = vpack.c.b16 %v797, %v794
  %v831 = vpack.c.b16 %v801, %v798
  %v832 = vpack.c.b16 %v802, %v799
  %v833 = vpack.c.b16 %v803, %v800
  %v834 = vpack.c.b16 %v807, %v804
  %v835 = vpack.c.b16 %v808, %v805
  %v836 = vpack.c.b16 %v809, %v806
  %v837 = vpack.c.b16 %v813, %v810
  %v838 = vpack.c.b16 %v814, %v811
  %v839 = vpack.c.b16 %v815, %v812
  %864 = vmatprep.subr.bf16.mxu0 %v838
  %865 = vmatpush1.bf16.msra.mxu0 %v837
  %866 = vmatprep.subr.bf16.mxu0 %v835
  %867 = vmatpush1.bf16.msra.mxu0 %v834
  %868 = vmatprep.subr.bf16.mxu0 %v832
  %869 = vmatpush1.bf16.msra.mxu0 %v831
  %870 = vmatprep.subr.bf16.mxu0 %v829
  %871 = vmatpush1.bf16.msra.mxu0 %v828
  %872 = vmatprep.subr.bf16.mxu0 %v826
  %873 = vmatpush1.bf16.msra.mxu0 %v825
  %874 = vmatprep.subr.bf16.mxu0 %v823
  %875 = vmatpush1.bf16.msra.mxu0 %v822
  %876 = vmatprep.subr.bf16.mxu0 %v820
  %877 = vmatpush1.bf16.msra.mxu0 %v819
  %878 = vmatprep.subr.bf16.mxu0 %v817
  %879 = vmatpush1.bf16.msra.mxu0 %v816
  %880 = vmatprep.subr.bf16.mxu0 0
  %881 = vmatpush2.bf16.msra.mxu0 0
  %882 = vmatprep.subr.bf16.mxu0 0
  %883 = vmatpush2.bf16.msra.mxu0 0
  %884 = vmatprep.subr.bf16.mxu0 0
  %885 = vmatpush2.bf16.msra.mxu0 0
  %886 = vmatprep.subr.bf16.mxu0 0
  %887 = vmatpush2.bf16.msra.mxu0 0
  %888 = vmatprep.subr.bf16.mxu0 0
  %889 = vmatpush2.bf16.msra.mxu0 0
  %890 = vmatprep.subr.bf16.mxu0 0
  %891 = vmatpush2.bf16.msra.mxu0 0
  %892 = vmatprep.subr.bf16.mxu0 0
  %893 = vmatpush2.bf16.msra.mxu0 0
  %894 = vmatprep.subr.bf16.mxu0 0
  %895 = vmatpush2.bf16.msra.mxu0 0
  %896 = vmatprep.mubr.bf16.mxu0 0
  %897 = vmatmul.mubr.bf16.gmra.mxu0 %v732
  %v898 = vpop.f32.mrf.mxu0
  %v899 = vadd.f32 %v383, %v898
  %v900 = vpop.f32.mrf.mxu0
  %v901 = vadd.f32 %v385, %v900
  %v902 = vpop.f32.mrf.mxu0
  %v903 = vadd.f32 %v387, %v902
  %v904 = vpop.f32.mrf.mxu0
  %v905 = vadd.f32 %v389, %v904
  %906 = vmatprep.mubr.bf16.mxu0 0
  %907 = vmatmul.mubr.bf16.gmra.mxu0 %v733
  %v908 = vpop.f32.mrf.mxu0
  %v909 = vadd.f32 %v393, %v908
  %v910 = vpop.f32.mrf.mxu0
  %v911 = vadd.f32 %v395, %v910
  %v912 = vpop.f32.mrf.mxu0
  %v913 = vadd.f32 %v397, %v912
  %v914 = vpop.f32.mrf.mxu0
  %v915 = vadd.f32 %v399, %v914
  %916 = vdwg.mxu0
  %917 = vmatprep.subr.bf16.mxu0 0
  %918 = vmatpush1.bf16.msra.mxu0 %v839
  %919 = vmatprep.subr.bf16.mxu0 0
  %920 = vmatpush1.bf16.msra.mxu0 %v836
  %921 = vmatprep.subr.bf16.mxu0 0
  %922 = vmatpush1.bf16.msra.mxu0 %v833
  %923 = vmatprep.subr.bf16.mxu0 0
  %924 = vmatpush1.bf16.msra.mxu0 %v830
  %925 = vmatprep.subr.bf16.mxu0 0
  %926 = vmatpush1.bf16.msra.mxu0 %v827
  %927 = vmatprep.subr.bf16.mxu0 0
  %928 = vmatpush1.bf16.msra.mxu0 %v824
  %929 = vmatprep.subr.bf16.mxu0 0
  %930 = vmatpush1.bf16.msra.mxu0 %v821
  %931 = vmatprep.subr.bf16.mxu0 0
  %932 = vmatpush1.bf16.msra.mxu0 %v818
  %933 = vmatprep.subr.bf16.mxu0 0
  %934 = vmatpush2.bf16.msra.mxu0 0
  %935 = vmatprep.subr.bf16.mxu0 0
  %936 = vmatpush2.bf16.msra.mxu0 0
  %937 = vmatprep.subr.bf16.mxu0 0
  %938 = vmatpush2.bf16.msra.mxu0 0
  %939 = vmatprep.subr.bf16.mxu0 0
  %940 = vmatpush2.bf16.msra.mxu0 0
  %941 = vmatprep.subr.bf16.mxu0 0
  %942 = vmatpush2.bf16.msra.mxu0 0
  %943 = vmatprep.subr.bf16.mxu0 0
  %944 = vmatpush2.bf16.msra.mxu0 0
  %945 = vmatprep.subr.bf16.mxu0 0
  %946 = vmatpush2.bf16.msra.mxu0 0
  %947 = vmatprep.subr.bf16.mxu0 0
  %948 = vmatpush2.bf16.msra.mxu0 0
  %949 = vmatprep.mubr.bf16.mxu0 0
  %950 = vmatmul.mubr.bf16.gmra.mxu0 %v732
  %v951 = vpop.f32.mrf.mxu0
  %v952 = vadd.f32 %v436, %v951
  %v953 = vpop.f32.mrf.mxu0
  %v954 = vpop.f32.mrf.mxu0
  %v955 = vadd.f32 %v439, %v954
  %v956 = vpop.f32.mrf.mxu0
  %957 = vmatprep.mubr.bf16.mxu0 0
  %958 = vmatmul.mubr.bf16.gmra.mxu0 %v733
  %v959 = vpop.f32.mrf.mxu0
  %v960 = vadd.f32 %v444, %v959
  %v961 = vpop.f32.mrf.mxu0
  %v962 = vpop.f32.mrf.mxu0
  %v963 = vadd.f32 %v447, %v962
  %v964 = vpop.f32.mrf.mxu0
  %965 = vdwg.mxu0
  %v970 = vunpack.c.l.b16 %v100
  %v971 = vunpack.c.l.b16 %v101
  %v972 = vunpack.c.l.b16 %v102
  %v973 = vunpack.c.l.b16 %v103
  %v974 = vpack.c.b16 %v971, %v970
  %v975 = vpack.c.b16 %v973, %v972
  %v1010 = vunpack.c.l.b16 %v136
  %v1011 = vunpack.c.h.b16 %v136
  %v1012 = vunpack.c.l.b16 %v137
  %v1013 = vunpack.c.l.b16 %v138
  %v1014 = vunpack.c.h.b16 %v138
  %v1015 = vunpack.c.l.b16 %v139
  %v1016 = vunpack.c.l.b16 %v140
  %v1017 = vunpack.c.h.b16 %v140
  %v1018 = vunpack.c.l.b16 %v141
  %v1019 = vunpack.c.l.b16 %v142
  %v1020 = vunpack.c.h.b16 %v142
  %v1021 = vunpack.c.l.b16 %v143
  %v1022 = vunpack.c.l.b16 %v144
  %v1023 = vunpack.c.h.b16 %v144
  %v1024 = vunpack.c.l.b16 %v145
  %v1025 = vunpack.c.l.b16 %v146
  %v1026 = vunpack.c.h.b16 %v146
  %v1027 = vunpack.c.l.b16 %v147
  %v1028 = vunpack.c.l.b16 %v148
  %v1029 = vunpack.c.h.b16 %v148
  %v1030 = vunpack.c.l.b16 %v149
  %v1031 = vunpack.c.l.b16 %v150
  %v1032 = vunpack.c.h.b16 %v150
  %v1033 = vunpack.c.l.b16 %v151
  %v1034 = vunpack.c.l.b16 %v152
  %v1035 = vunpack.c.h.b16 %v152
  %v1036 = vunpack.c.l.b16 %v153
  %v1037 = vunpack.c.l.b16 %v154
  %v1038 = vunpack.c.h.b16 %v154
  %v1039 = vunpack.c.l.b16 %v155
  %v1040 = vunpack.c.l.b16 %v156
  %v1041 = vunpack.c.h.b16 %v156
  %v1042 = vunpack.c.l.b16 %v157
  %v1043 = vunpack.c.l.b16 %v158
  %v1044 = vunpack.c.h.b16 %v158
  %v1045 = vunpack.c.l.b16 %v159
  %v1046 = vunpack.c.l.b16 %v160
  %v1047 = vunpack.c.h.b16 %v160
  %v1048 = vunpack.c.l.b16 %v161
  %v1049 = vunpack.c.l.b16 %v162
  %v1050 = vunpack.c.h.b16 %v162
  %v1051 = vunpack.c.l.b16 %v163
  %v1052 = vunpack.c.l.b16 %v164
  %v1053 = vunpack.c.h.b16 %v164
  %v1054 = vunpack.c.l.b16 %v165
  %v1055 = vunpack.c.l.b16 %v166
  %v1056 = vunpack.c.h.b16 %v166
  %v1057 = vunpack.c.l.b16 %v167
  %v1058 = vpack.c.b16 %v1013, %v1010
  %v1059 = vpack.c.b16 %v1014, %v1011
  %v1060 = vpack.c.b16 %v1015, %v1012
  %v1061 = vpack.c.b16 %v1019, %v1016
  %v1062 = vpack.c.b16 %v1020, %v1017
  %v1063 = vpack.c.b16 %v1021, %v1018
  %v1064 = vpack.c.b16 %v1025, %v1022
  %v1065 = vpack.c.b16 %v1026, %v1023
  %v1066 = vpack.c.b16 %v1027, %v1024
  %v1067 = vpack.c.b16 %v1031, %v1028
  %v1068 = vpack.c.b16 %v1032, %v1029
  %v1069 = vpack.c.b16 %v1033, %v1030
  %v1070 = vpack.c.b16 %v1037, %v1034
  %v1071 = vpack.c.b16 %v1038, %v1035
  %v1072 = vpack.c.b16 %v1039, %v1036
  %v1073 = vpack.c.b16 %v1043, %v1040
  %v1074 = vpack.c.b16 %v1044, %v1041
  %v1075 = vpack.c.b16 %v1045, %v1042
  %v1076 = vpack.c.b16 %v1049, %v1046
  %v1077 = vpack.c.b16 %v1050, %v1047
  %v1078 = vpack.c.b16 %v1051, %v1048
  %v1079 = vpack.c.b16 %v1055, %v1052
  %v1080 = vpack.c.b16 %v1056, %v1053
  %v1081 = vpack.c.b16 %v1057, %v1054
  %1106 = vmatprep.subr.bf16.mxu0 %v1080
  %1107 = vmatpush1.bf16.msra.mxu0 %v1079
  %1108 = vmatprep.subr.bf16.mxu0 %v1077
  %1109 = vmatpush1.bf16.msra.mxu0 %v1076
  %1110 = vmatprep.subr.bf16.mxu0 %v1074
  %1111 = vmatpush1.bf16.msra.mxu0 %v1073
  %1112 = vmatprep.subr.bf16.mxu0 %v1071
  %1113 = vmatpush1.bf16.msra.mxu0 %v1070
  %1114 = vmatprep.subr.bf16.mxu0 %v1068
  %1115 = vmatpush1.bf16.msra.mxu0 %v1067
  %1116 = vmatprep.subr.bf16.mxu0 %v1065
  %1117 = vmatpush1.bf16.msra.mxu0 %v1064
  %1118 = vmatprep.subr.bf16.mxu0 %v1062
  %1119 = vmatpush1.bf16.msra.mxu0 %v1061
  %1120 = vmatprep.subr.bf16.mxu0 %v1059
  %1121 = vmatpush1.bf16.msra.mxu0 %v1058
  %1122 = vmatprep.subr.bf16.mxu0 0
  %1123 = vmatpush2.bf16.msra.mxu0 0
  %1124 = vmatprep.subr.bf16.mxu0 0
  %1125 = vmatpush2.bf16.msra.mxu0 0
  %1126 = vmatprep.subr.bf16.mxu0 0
  %1127 = vmatpush2.bf16.msra.mxu0 0
  %1128 = vmatprep.subr.bf16.mxu0 0
  %1129 = vmatpush2.bf16.msra.mxu0 0
  %1130 = vmatprep.subr.bf16.mxu0 0
  %1131 = vmatpush2.bf16.msra.mxu0 0
  %1132 = vmatprep.subr.bf16.mxu0 0
  %1133 = vmatpush2.bf16.msra.mxu0 0
  %1134 = vmatprep.subr.bf16.mxu0 0
  %1135 = vmatpush2.bf16.msra.mxu0 0
  %1136 = vmatprep.subr.bf16.mxu0 0
  %1137 = vmatpush2.bf16.msra.mxu0 0
  %1138 = vmatprep.mubr.bf16.mxu0 0
  %1139 = vmatmul.mubr.bf16.gmra.mxu0 %v974
  %v1140 = vpop.f32.mrf.mxu0
  %v1141 = vadd.f32 %v657, %v1140
  %v1142 = vpop.f32.mrf.mxu0
  %v1143 = vadd.f32 %v659, %v1142
  %v1144 = vpop.f32.mrf.mxu0
  %v1145 = vadd.f32 %v661, %v1144
  %v1146 = vpop.f32.mrf.mxu0
  %v1147 = vadd.f32 %v663, %v1146
  %1148 = vmatprep.mubr.bf16.mxu0 0
  %1149 = vmatmul.mubr.bf16.gmra.mxu0 %v975
  %v1150 = vpop.f32.mrf.mxu0
  %v1151 = vadd.f32 %v667, %v1150
  %v1152 = vpop.f32.mrf.mxu0
  %v1153 = vadd.f32 %v669, %v1152
  %v1154 = vpop.f32.mrf.mxu0
  %v1155 = vadd.f32 %v671, %v1154
  %v1156 = vpop.f32.mrf.mxu0
  %v1157 = vadd.f32 %v673, %v1156
  %1158 = vdwg.mxu0
  %1159 = vmatprep.subr.bf16.mxu0 0
  %1160 = vmatpush1.bf16.msra.mxu0 %v1081
  %1161 = vmatprep.subr.bf16.mxu0 0
  %1162 = vmatpush1.bf16.msra.mxu0 %v1078
  %1163 = vmatprep.subr.bf16.mxu0 0
  %1164 = vmatpush1.bf16.msra.mxu0 %v1075
  %1165 = vmatprep.subr.bf16.mxu0 0
  %1166 = vmatpush1.bf16.msra.mxu0 %v1072
  %1167 = vmatprep.subr.bf16.mxu0 0
  %1168 = vmatpush1.bf16.msra.mxu0 %v1069
  %1169 = vmatprep.subr.bf16.mxu0 0
  %1170 = vmatpush1.bf16.msra.mxu0 %v1066
  %1171 = vmatprep.subr.bf16.mxu0 0
  %1172 = vmatpush1.bf16.msra.mxu0 %v1063
  %1173 = vmatprep.subr.bf16.mxu0 0
  %1174 = vmatpush1.bf16.msra.mxu0 %v1060
  %1175 = vmatprep.subr.bf16.mxu0 0
  %1176 = vmatpush2.bf16.msra.mxu0 0
  %1177 = vmatprep.subr.bf16.mxu0 0
  %1178 = vmatpush2.bf16.msra.mxu0 0
  %1179 = vmatprep.subr.bf16.mxu0 0
  %1180 = vmatpush2.bf16.msra.mxu0 0
  %1181 = vmatprep.subr.bf16.mxu0 0
  %1182 = vmatpush2.bf16.msra.mxu0 0
  %1183 = vmatprep.subr.bf16.mxu0 0
  %1184 = vmatpush2.bf16.msra.mxu0 0
  %1185 = vmatprep.subr.bf16.mxu0 0
  %1186 = vmatpush2.bf16.msra.mxu0 0
  %1187 = vmatprep.subr.bf16.mxu0 0
  %1188 = vmatpush2.bf16.msra.mxu0 0
  %1189 = vmatprep.subr.bf16.mxu0 0
  %1190 = vmatpush2.bf16.msra.mxu0 0
  %1191 = vmatprep.mubr.bf16.mxu0 0
  %1192 = vmatmul.mubr.bf16.gmra.mxu0 %v974
  %v1193 = vpop.f32.mrf.mxu0
  %v1194 = vadd.f32 %v710, %v1193
  %v1195 = vpop.f32.mrf.mxu0
  %v1196 = vpop.f32.mrf.mxu0
  %v1197 = vadd.f32 %v713, %v1196
  %v1198 = vpop.f32.mrf.mxu0
  %1199 = vmatprep.mubr.bf16.mxu0 0
  %1200 = vmatmul.mubr.bf16.gmra.mxu0 %v975
  %v1201 = vpop.f32.mrf.mxu0
  %v1202 = vadd.f32 %v718, %v1201
  %v1203 = vpop.f32.mrf.mxu0
  %v1204 = vpop.f32.mrf.mxu0
  %v1205 = vadd.f32 %v721, %v1204
  %v1206 = vpop.f32.mrf.mxu0
  %1207 = vdwg.mxu0
  %v1208 = vld [vmem:[%s5] sm:$0x7]
  %v1210 = vlaneseq
  %v1211 = vshrl.u32 %v1210, 7
  %v1212 = vsub.s32 0, %v1211
  %v1213 = vrot.slane %v1208, %v1212
  %v1214 = vlaneseq
  %v1215 = vshrl.u32 %v1214, 7
  %v1216 = vsub.s32 1, %v1215
  %v1217 = vrot.slane %v1208, %v1216
  %v1218 = vlaneseq
  %v1219 = vshrl.u32 %v1218, 7
  %v1220 = vsub.s32 2, %v1219
  %v1221 = vrot.slane %v1208, %v1220
  %v1225 = vadd.f32 %v899, %v1213
  %v1226 = vadd.f32 %v901, %v1217
  %v1227 = vadd.f32 %v952, %v1221
  %v1228 = vadd.f32 %v903, %v1213
  %v1229 = vadd.f32 %v905, %v1217
  %v1230 = vadd.f32 %v955, %v1221
  %v1231 = vadd.f32 %v909, %v1213
  %v1232 = vadd.f32 %v911, %v1217
  %v1233 = vadd.f32 %v960, %v1221
  %v1234 = vadd.f32 %v913, %v1213
  %v1235 = vadd.f32 %v915, %v1217
  %v1236 = vadd.f32 %v963, %v1221
  %1237 = vst [vmem:[#allocation3] sm:$0xff] %v1225
  %1238 = vst [vmem:[#allocation3 + $0x8] sm:$0xff] %v1226
  %1239 = vst [vmem:[#allocation3 + $0x10] sm:$0xff] %v1227
  %1240 = vst [vmem:[#allocation3 + $0x18] sm:$0xff] %v1228
  %1241 = vst [vmem:[#allocation3 + $0x20] sm:$0xff] %v1229
  %1242 = vst [vmem:[#allocation3 + $0x28] sm:$0xff] %v1230
  %1243 = vst [vmem:[#allocation3 + $0x30] sm:$0xff] %v1231
  %1244 = vst [vmem:[#allocation3 + $0x38] sm:$0xff] %v1232
  %1245 = vst [vmem:[#allocation3 + $0x40] sm:$0xff] %v1233
  %1246 = vst [vmem:[#allocation3 + $0x48] sm:$0xff] %v1234
  %1247 = vst [vmem:[#allocation3 + $0x50] sm:$0xff] %v1235
  %1248 = vst [vmem:[#allocation3 + $0x58] sm:$0xff] %v1236
  %v1249 = vld [vmem:[%s5 + $0x3] sm:$0x7]
  %v1251 = vlaneseq
  %v1252 = vshrl.u32 %v1251, 7
  %v1253 = vsub.s32 0, %v1252
  %v1254 = vrot.slane %v1249, %v1253
  %v1255 = vlaneseq
  %v1256 = vshrl.u32 %v1255, 7
  %v1257 = vsub.s32 1, %v1256
  %v1258 = vrot.slane %v1249, %v1257
  %v1259 = vlaneseq
  %v1260 = vshrl.u32 %v1259, 7
  %v1261 = vsub.s32 2, %v1260
  %v1262 = vrot.slane %v1249, %v1261
  %v1266 = vadd.f32 %v1141, %v1254
  %v1267 = vadd.f32 %v1143, %v1258
  %v1268 = vadd.f32 %v1194, %v1262
  %v1269 = vadd.f32 %v1145, %v1254
  %v1270 = vadd.f32 %v1147, %v1258
  %v1271 = vadd.f32 %v1197, %v1262
  %v1272 = vadd.f32 %v1151, %v1254
  %v1273 = vadd.f32 %v1153, %v1258
  %v1274 = vadd.f32 %v1202, %v1262
  %v1275 = vadd.f32 %v1155, %v1254
  %v1276 = vadd.f32 %v1157, %v1258
  %v1277 = vadd.f32 %v1205, %v1262
  %1278 = vst [vmem:[#allocation4] sm:$0xff] %v1266
  %1279 = vst [vmem:[#allocation4 + $0x8] sm:$0xff] %v1267
  %1280 = vst [vmem:[#allocation4 + $0x10] sm:$0xff] %v1268
  %1281 = vst [vmem:[#allocation4 + $0x18] sm:$0xff] %v1269
  %1282 = vst [vmem:[#allocation4 + $0x20] sm:$0xff] %v1270
  %1283 = vst [vmem:[#allocation4 + $0x28] sm:$0xff] %v1271
  %1284 = vst [vmem:[#allocation4 + $0x30] sm:$0xff] %v1272
  %1285 = vst [vmem:[#allocation4 + $0x38] sm:$0xff] %v1273
  %1286 = vst [vmem:[#allocation4 + $0x40] sm:$0xff] %v1274
  %1287 = vst [vmem:[#allocation4 + $0x48] sm:$0xff] %v1275
  %1288 = vst [vmem:[#allocation4 + $0x50] sm:$0xff] %v1276
  %1289 = vst [vmem:[#allocation4 + $0x58] sm:$0xff] %v1277
  %v1290 = vld [vmem:[%s6] sm:$0xff]
  %v1291 = vld [vmem:[%s6 + $0x8] sm:$0xf]
  %v1292 = vld [vmem:[%s6 + $0xc] sm:$0xff]
  %v1293 = vld [vmem:[%s6 + $0x14] sm:$0xf]
  %v1294 = vld [vmem:[%s6 + $0x18] sm:$0xff]
  %v1295 = vld [vmem:[%s6 + $0x20] sm:$0xf]
  %v1296 = vld [vmem:[%s6 + $0x24] sm:$0xff]
  %v1297 = vld [vmem:[%s6 + $0x2c] sm:$0xf]
  %v1298 = vld [vmem:[%s6 + $0x30] sm:$0xff]
  %v1299 = vld [vmem:[%s6 + $0x38] sm:$0xf]
  %v1300 = vld [vmem:[%s6 + $0x3c] sm:$0xff]
  %v1301 = vld [vmem:[%s6 + $0x44] sm:$0xf]
  %v1302 = vld [vmem:[%s6 + $0x48] sm:$0xff]
  %v1303 = vld [vmem:[%s6 + $0x50] sm:$0xf]
  %v1304 = vld [vmem:[%s6 + $0x54] sm:$0xff]
  %v1305 = vld [vmem:[%s6 + $0x5c] sm:$0xf]
  %v1306 = vld [vmem:[%s6 + $0x60] sm:$0xff]
  %v1307 = vld [vmem:[%s6 + $0x68] sm:$0xf]
  %v1308 = vld [vmem:[%s6 + $0x6c] sm:$0xff]
  %v1309 = vld [vmem:[%s6 + $0x74] sm:$0xf]
  %v1310 = vld [vmem:[%s6 + $0x78] sm:$0xff]
  %v1311 = vld [vmem:[%s6 + $0x80] sm:$0xf]
  %v1312 = vld [vmem:[%s6 + $0x84] sm:$0xff]
  %v1313 = vld [vmem:[%s6 + $0x8c] sm:$0xf]
  %v1314 = vld [vmem:[%s6 + $0x90] sm:$0xff]
  %v1315 = vld [vmem:[%s6 + $0x98] sm:$0xf]
  %v1316 = vld [vmem:[%s6 + $0x9c] sm:$0xff]
  %v1317 = vld [vmem:[%s6 + $0xa4] sm:$0xf]
  %v1318 = vld [vmem:[%s6 + $0xa8] sm:$0xff]
  %v1319 = vld [vmem:[%s6 + $0xb0] sm:$0xf]
  %v1320 = vld [vmem:[%s6 + $0xb4] sm:$0xff]
  %v1321 = vld [vmem:[%s6 + $0xbc] sm:$0xf]
  %s1322 = scalar_lea.vmem %s6, 192
  %v1323 = vld [vmem:[%s1322] sm:$0xff]
  %v1324 = vld [vmem:[%s1322 + $0x8] sm:$0xf]
  %v1325 = vld [vmem:[%s1322 + $0xc] sm:$0xff]
  %v1326 = vld [vmem:[%s1322 + $0x14] sm:$0xf]
  %v1327 = vld [vmem:[%s1322 + $0x18] sm:$0xff]
  %v1328 = vld [vmem:[%s1322 + $0x20] sm:$0xf]
  %v1329 = vld [vmem:[%s1322 + $0x24] sm:$0xff]
  %v1330 = vld [vmem:[%s1322 + $0x2c] sm:$0xf]
  %v1331 = vld [vmem:[%s1322 + $0x30] sm:$0xff]
  %v1332 = vld [vmem:[%s1322 + $0x38] sm:$0xf]
  %v1333 = vld [vmem:[%s1322 + $0x3c] sm:$0xff]
  %v1334 = vld [vmem:[%s1322 + $0x44] sm:$0xf]
  %v1335 = vld [vmem:[%s1322 + $0x48] sm:$0xff]
  %v1336 = vld [vmem:[%s1322 + $0x50] sm:$0xf]
  %v1337 = vld [vmem:[%s1322 + $0x54] sm:$0xff]
  %v1338 = vld [vmem:[%s1322 + $0x5c] sm:$0xf]
  %v1339 = vld [vmem:[%s1322 + $0x60] sm:$0xff]
  %v1340 = vld [vmem:[%s1322 + $0x68] sm:$0xf]
  %v1341 = vld [vmem:[%s1322 + $0x6c] sm:$0xff]
  %v1342 = vld [vmem:[%s1322 + $0x74] sm:$0xf]
  %v1343 = vld [vmem:[%s1322 + $0x78] sm:$0xff]
  %v1344 = vld [vmem:[%s1322 + $0x80] sm:$0xf]
  %v1345 = vld [vmem:[%s1322 + $0x84] sm:$0xff]
  %v1346 = vld [vmem:[%s1322 + $0x8c] sm:$0xf]
  %v1347 = vld [vmem:[%s1322 + $0x90] sm:$0xff]
  %v1348 = vld [vmem:[%s1322 + $0x98] sm:$0xf]
  %v1349 = vld [vmem:[%s1322 + $0x9c] sm:$0xff]
  %v1350 = vld [vmem:[%s1322 + $0xa4] sm:$0xf]
  %v1351 = vld [vmem:[%s1322 + $0xa8] sm:$0xff]
  %v1352 = vld [vmem:[%s1322 + $0xb0] sm:$0xf]
  %v1353 = vld [vmem:[%s1322 + $0xb4] sm:$0xff]
  %v1354 = vld [vmem:[%s1322 + $0xbc] sm:$0xf]
  %v1355 = vld [vmem:[%s7] sm:$0x7]
  %s1356 = scalar_lea.vmem %s7, 3
  %v1357 = vld [vmem:[%s1356] sm:$0x7]
  %s1358 = smul.u32 0, 4
  %s1359 = ssub.s32 0, 0
  %s1360 = smul.u32 %s1359, 4
  %v1361 = vld [vmem:[#allocation2] sm:$0xff]
  %s1362 = scalar_lea.vmem [#allocation2], 8
  %v1363 = vld [vmem:[%s1362] sm:$0xff]
  %s1364 = smul.u32 0, 3
  %s1365 = smul.addr %s1364, 8
  %s1366 = scalar_lea.vmem [#allocation3], %s1365
  %v1367 = vld [vmem:[%s1366] sm:$0xff]
  %v1368 = vld [vmem:[%s1366 + $0x8] sm:$0xff]
  %v1369 = vld [vmem:[%s1366 + $0x10] sm:$0xff]
  %v1370 = vpack.c.bf16 %v1361, %v1361
  %v1372 = vlaneseq
  %v1373 = vshrl.u32 %v1372, 7
  %v1374 = vsub.s32 0, %v1373
  %v1375 = vrot.slane %v1355, %v1374
  %v1376 = vlaneseq
  %v1377 = vshrl.u32 %v1376, 7
  %v1378 = vsub.s32 1, %v1377
  %v1379 = vrot.slane %v1355, %v1378
  %v1380 = vlaneseq
  %v1381 = vshrl.u32 %v1380, 7
  %v1382 = vsub.s32 2, %v1381
  %v1383 = vrot.slane %v1355, %v1382
  %v1419 = vunpack.c.l.b16 %v1290
  %v1420 = vunpack.c.h.b16 %v1290
  %v1421 = vunpack.c.l.b16 %v1291
  %v1422 = vunpack.c.l.b16 %v1292
  %v1423 = vunpack.c.h.b16 %v1292
  %v1424 = vunpack.c.l.b16 %v1293
  %v1425 = vunpack.c.l.b16 %v1294
  %v1426 = vunpack.c.h.b16 %v1294
  %v1427 = vunpack.c.l.b16 %v1295
  %v1428 = vunpack.c.l.b16 %v1296
  %v1429 = vunpack.c.h.b16 %v1296
  %v1430 = vunpack.c.l.b16 %v1297
  %v1431 = vunpack.c.l.b16 %v1298
  %v1432 = vunpack.c.h.b16 %v1298
  %v1433 = vunpack.c.l.b16 %v1299
  %v1434 = vunpack.c.l.b16 %v1300
  %v1435 = vunpack.c.h.b16 %v1300
  %v1436 = vunpack.c.l.b16 %v1301
  %v1437 = vunpack.c.l.b16 %v1302
  %v1438 = vunpack.c.h.b16 %v1302
  %v1439 = vunpack.c.l.b16 %v1303
  %v1440 = vunpack.c.l.b16 %v1304
  %v1441 = vunpack.c.h.b16 %v1304
  %v1442 = vunpack.c.l.b16 %v1305
  %v1443 = vunpack.c.l.b16 %v1306
  %v1444 = vunpack.c.h.b16 %v1306
  %v1445 = vunpack.c.l.b16 %v1307
  %v1446 = vunpack.c.l.b16 %v1308
  %v1447 = vunpack.c.h.b16 %v1308
  %v1448 = vunpack.c.l.b16 %v1309
  %v1449 = vunpack.c.l.b16 %v1310
  %v1450 = vunpack.c.h.b16 %v1310
  %v1451 = vunpack.c.l.b16 %v1311
  %v1452 = vunpack.c.l.b16 %v1312
  %v1453 = vunpack.c.h.b16 %v1312
  %v1454 = vunpack.c.l.b16 %v1313
  %v1455 = vunpack.c.l.b16 %v1314
  %v1456 = vunpack.c.h.b16 %v1314
  %v1457 = vunpack.c.l.b16 %v1315
  %v1458 = vunpack.c.l.b16 %v1316
  %v1459 = vunpack.c.h.b16 %v1316
  %v1460 = vunpack.c.l.b16 %v1317
  %v1461 = vunpack.c.l.b16 %v1318
  %v1462 = vunpack.c.h.b16 %v1318
  %v1463 = vunpack.c.l.b16 %v1319
  %v1464 = vunpack.c.l.b16 %v1320
  %v1465 = vunpack.c.h.b16 %v1320
  %v1466 = vunpack.c.l.b16 %v1321
  %v1467 = vpack.c.b16 %v1422, %v1419
  %v1468 = vpack.c.b16 %v1423, %v1420
  %v1469 = vpack.c.b16 %v1424, %v1421
  %v1470 = vpack.c.b16 %v1428, %v1425
  %v1471 = vpack.c.b16 %v1429, %v1426
  %v1472 = vpack.c.b16 %v1430, %v1427
  %v1473 = vpack.c.b16 %v1434, %v1431
  %v1474 = vpack.c.b16 %v1435, %v1432
  %v1475 = vpack.c.b16 %v1436, %v1433
  %v1476 = vpack.c.b16 %v1440, %v1437
  %v1477 = vpack.c.b16 %v1441, %v1438
  %v1478 = vpack.c.b16 %v1442, %v1439
  %v1479 = vpack.c.b16 %v1446, %v1443
  %v1480 = vpack.c.b16 %v1447, %v1444
  %v1481 = vpack.c.b16 %v1448, %v1445
  %v1482 = vpack.c.b16 %v1452, %v1449
  %v1483 = vpack.c.b16 %v1453, %v1450
  %v1484 = vpack.c.b16 %v1454, %v1451
  %v1485 = vpack.c.b16 %v1458, %v1455
  %v1486 = vpack.c.b16 %v1459, %v1456
  %v1487 = vpack.c.b16 %v1460, %v1457
  %v1488 = vpack.c.b16 %v1464, %v1461
  %v1489 = vpack.c.b16 %v1465, %v1462
  %v1490 = vpack.c.b16 %v1466, %v1463
  %1515 = vmatprep.subr.bf16.mxu0 %v1489
  %1516 = vmatpush1.bf16.msra.mxu0 %v1488
  %1517 = vmatprep.subr.bf16.mxu0 %v1486
  %1518 = vmatpush1.bf16.msra.mxu0 %v1485
  %1519 = vmatprep.subr.bf16.mxu0 %v1483
  %1520 = vmatpush1.bf16.msra.mxu0 %v1482
  %1521 = vmatprep.subr.bf16.mxu0 %v1480
  %1522 = vmatpush1.bf16.msra.mxu0 %v1479
  %1523 = vmatprep.subr.bf16.mxu0 %v1477
  %1524 = vmatpush1.bf16.msra.mxu0 %v1476
  %1525 = vmatprep.subr.bf16.mxu0 %v1474
  %1526 = vmatpush1.bf16.msra.mxu0 %v1473
  %1527 = vmatprep.subr.bf16.mxu0 %v1471
  %1528 = vmatpush1.bf16.msra.mxu0 %v1470
  %1529 = vmatprep.subr.bf16.mxu0 %v1468
  %1530 = vmatpush1.bf16.msra.mxu0 %v1467
  %1531 = vmatprep.subr.bf16.mxu0 0
  %1532 = vmatpush2.bf16.msra.mxu0 0
  %1533 = vmatprep.subr.bf16.mxu0 0
  %1534 = vmatpush2.bf16.msra.mxu0 0
  %1535 = vmatprep.subr.bf16.mxu0 0
  %1536 = vmatpush2.bf16.msra.mxu0 0
  %1537 = vmatprep.subr.bf16.mxu0 0
  %1538 = vmatpush2.bf16.msra.mxu0 0
  %1539 = vmatprep.subr.bf16.mxu0 0
  %1540 = vmatpush2.bf16.msra.mxu0 0
  %1541 = vmatprep.subr.bf16.mxu0 0
  %1542 = vmatpush2.bf16.msra.mxu0 0
  %1543 = vmatprep.subr.bf16.mxu0 0
  %1544 = vmatpush2.bf16.msra.mxu0 0
  %1545 = vmatprep.subr.bf16.mxu0 0
  %1546 = vmatpush2.bf16.msra.mxu0 0
  %1547 = vmatprep.mubr.bf16.mxu0 0
  %1548 = vmatmul.mubr.bf16.gmra.mxu0 %v1370
  %v1549 = vpop.f32.mrf.mxu0
  %v1550 = vadd.f32 %v1375, %v1549
  %v1551 = vpop.f32.mrf.mxu0
  %v1552 = vadd.f32 %v1379, %v1551
  %v1553 = vpop.f32.mrf.mxu0
  %v1554 = vpop.f32.mrf.mxu0
  %1555 = vdwg.mxu0
  %1556 = vmatprep.subr.bf16.mxu0 0
  %1557 = vmatpush1.bf16.msra.mxu0 %v1490
  %1558 = vmatprep.subr.bf16.mxu0 0
  %1559 = vmatpush1.bf16.msra.mxu0 %v1487
  %1560 = vmatprep.subr.bf16.mxu0 0
  %1561 = vmatpush1.bf16.msra.mxu0 %v1484
  %1562 = vmatprep.subr.bf16.mxu0 0
  %1563 = vmatpush1.bf16.msra.mxu0 %v1481
  %1564 = vmatprep.subr.bf16.mxu0 0
  %1565 = vmatpush1.bf16.msra.mxu0 %v1478
  %1566 = vmatprep.subr.bf16.mxu0 0
  %1567 = vmatpush1.bf16.msra.mxu0 %v1475
  %1568 = vmatprep.subr.bf16.mxu0 0
  %1569 = vmatpush1.bf16.msra.mxu0 %v1472
  %1570 = vmatprep.subr.bf16.mxu0 0
  %1571 = vmatpush1.bf16.msra.mxu0 %v1469
  %1572 = vmatprep.subr.bf16.mxu0 0
  %1573 = vmatpush2.bf16.msra.mxu0 0
  %1574 = vmatprep.subr.bf16.mxu0 0
  %1575 = vmatpush2.bf16.msra.mxu0 0
  %1576 = vmatprep.subr.bf16.mxu0 0
  %1577 = vmatpush2.bf16.msra.mxu0 0
  %1578 = vmatprep.subr.bf16.mxu0 0
  %1579 = vmatpush2.bf16.msra.mxu0 0
  %1580 = vmatprep.subr.bf16.mxu0 0
  %1581 = vmatpush2.bf16.msra.mxu0 0
  %1582 = vmatprep.subr.bf16.mxu0 0
  %1583 = vmatpush2.bf16.msra.mxu0 0
  %1584 = vmatprep.subr.bf16.mxu0 0
  %1585 = vmatpush2.bf16.msra.mxu0 0
  %1586 = vmatprep.subr.bf16.mxu0 0
  %1587 = vmatpush2.bf16.msra.mxu0 0
  %1588 = vmatprep.mubr.bf16.mxu0 0
  %1589 = vmatmul.mubr.bf16.gmra.mxu0 %v1370
  %v1590 = vpop.f32.mrf.mxu0
  %v1591 = vadd.f32 %v1383, %v1590
  %v1592 = vpop.f32.mrf.mxu0
  %v1593 = vpop.f32.mrf.mxu0
  %v1594 = vpop.f32.mrf.mxu0
  %1595 = vdwg.mxu0
  %v1596 = vadd.f32 %v1367, %v1550
  %v1597 = vxor.u32 %v1596, 2147483648
  %v1598 = vmul.f32 %v1597, 1.442695
  %v1599 = vpow.pop %v1598
  %v1600 = vadd.f32 %v1599, 1.0
  %v1601 = vrcp.pop %v1600
  %v1602 = vmul.f32 1.0, %v1601
  %v1603 = vadd.f32 %v1368, %v1552
  %v1604 = vxor.u32 %v1603, 2147483648
  %v1605 = vmul.f32 %v1604, 1.442695
  %v1606 = vpow.pop %v1605
  %v1607 = vadd.f32 %v1606, 1.0
  %v1608 = vrcp.pop %v1607
  %v1609 = vmul.f32 1.0, %v1608
  %v1610 = vmul.f32 %v1602, %v1591
  %v1611 = vadd.f32 %v1369, %v1610
  %v1612 = vtanh.pop %v1611
  %v1613 = vsub.f32 1.0, %v1609
  %v1614 = vmul.f32 %v1613, %v1612
  %v1615 = vmul.f32 %v1609, %v1361
  %v1616 = vadd.f32 %v1614, %v1615
  %p1617 = scmp.lt.s32.totalorder %s1358, 4
  %s1618 = scalar_select %p1617, 1, 0
  %v1619 = vstv %s1618
  %vm1620 = vcmp.eq.s32.totalorder %v1619, 1
  %v1621 = vsel %vm1620, %v1616, %v1361
  %v1622 = vpack.c.bf16 %v1621, %v1621
  %1623 = vst [vmem:[%s8] sm:$0xf] %v1622
  %s1624 = smul.u32 3, 3
  %s1625 = smul.addr %s1624, 8
  %s1626 = scalar_lea.vmem [#allocation4], %s1625
  %v1627 = vld [vmem:[%s1626] sm:$0xff]
  %v1628 = vld [vmem:[%s1626 + $0x8] sm:$0xff]
  %v1629 = vld [vmem:[%s1626 + $0x10] sm:$0xff]
  %v1630 = vpack.c.bf16 %v1363, %v1363
  %v1632 = vlaneseq
  %v1633 = vshrl.u32 %v1632, 7
  %v1634 = vsub.s32 0, %v1633
  %v1635 = vrot.slane %v1357, %v1634
  %v1636 = vlaneseq
  %v1637 = vshrl.u32 %v1636, 7
  %v1638 = vsub.s32 1, %v1637
  %v1639 = vrot.slane %v1357, %v1638
  %v1640 = vlaneseq
  %v1641 = vshrl.u32 %v1640, 7
  %v1642 = vsub.s32 2, %v1641
  %v1643 = vrot.slane %v1357, %v1642
  %v1679 = vunpack.c.l.b16 %v1323
  %v1680 = vunpack.c.h.b16 %v1323
  %v1681 = vunpack.c.l.b16 %v1324
  %v1682 = vunpack.c.l.b16 %v1325
  %v1683 = vunpack.c.h.b16 %v1325
  %v1684 = vunpack.c.l.b16 %v1326
  %v1685 = vunpack.c.l.b16 %v1327
  %v1686 = vunpack.c.h.b16 %v1327
  %v1687 = vunpack.c.l.b16 %v1328
  %v1688 = vunpack.c.l.b16 %v1329
  %v1689 = vunpack.c.h.b16 %v1329
  %v1690 = vunpack.c.l.b16 %v1330
  %v1691 = vunpack.c.l.b16 %v1331
  %v1692 = vunpack.c.h.b16 %v1331
  %v1693 = vunpack.c.l.b16 %v1332
  %v1694 = vunpack.c.l.b16 %v1333
  %v1695 = vunpack.c.h.b16 %v1333
  %v1696 = vunpack.c.l.b16 %v1334
  %v1697 = vunpack.c.l.b16 %v1335
  %v1698 = vunpack.c.h.b16 %v1335
  %v1699 = vunpack.c.l.b16 %v1336
  %v1700 = vunpack.c.l.b16 %v1337
  %v1701 = vunpack.c.h.b16 %v1337
  %v1702 = vunpack.c.l.b16 %v1338
  %v1703 = vunpack.c.l.b16 %v1339
  %v1704 = vunpack.c.h.b16 %v1339
  %v1705 = vunpack.c.l.b16 %v1340
  %v1706 = vunpack.c.l.b16 %v1341
  %v1707 = vunpack.c.h.b16 %v1341
  %v1708 = vunpack.c.l.b16 %v1342
  %v1709 = vunpack.c.l.b16 %v1343
  %v1710 = vunpack.c.h.b16 %v1343
  %v1711 = vunpack.c.l.b16 %v1344
  %v1712 = vunpack.c.l.b16 %v1345
  %v1713 = vunpack.c.h.b16 %v1345
  %v1714 = vunpack.c.l.b16 %v1346
  %v1715 = vunpack.c.l.b16 %v1347
  %v1716 = vunpack.c.h.b16 %v1347
  %v1717 = vunpack.c.l.b16 %v1348
  %v1718 = vunpack.c.l.b16 %v1349
  %v1719 = vunpack.c.h.b16 %v1349
  %v1720 = vunpack.c.l.b16 %v1350
  %v1721 = vunpack.c.l.b16 %v1351
  %v1722 = vunpack.c.h.b16 %v1351
  %v1723 = vunpack.c.l.b16 %v1352
  %v1724 = vunpack.c.l.b16 %v1353
  %v1725 = vunpack.c.h.b16 %v1353
  %v1726 = vunpack.c.l.b16 %v1354
  %v1727 = vpack.c.b16 %v1682, %v1679
  %v1728 = vpack.c.b16 %v1683, %v1680
  %v1729 = vpack.c.b16 %v1684, %v1681
  %v1730 = vpack.c.b16 %v1688, %v1685
  %v1731 = vpack.c.b16 %v1689, %v1686
  %v1732 = vpack.c.b16 %v1690, %v1687
  %v1733 = vpack.c.b16 %v1694, %v1691
  %v1734 = vpack.c.b16 %v1695, %v1692
  %v1735 = vpack.c.b16 %v1696, %v1693
  %v1736 = vpack.c.b16 %v1700, %v1697
  %v1737 = vpack.c.b16 %v1701, %v1698
  %v1738 = vpack.c.b16 %v1702, %v1699
  %v1739 = vpack.c.b16 %v1706, %v1703
  %v1740 = vpack.c.b16 %v1707, %v1704
  %v1741 = vpack.c.b16 %v1708, %v1705
  %v1742 = vpack.c.b16 %v1712, %v1709
  %v1743 = vpack.c.b16 %v1713, %v1710
  %v1744 = vpack.c.b16 %v1714, %v1711
  %v1745 = vpack.c.b16 %v1718, %v1715
  %v1746 = vpack.c.b16 %v1719, %v1716
  %v1747 = vpack.c.b16 %v1720, %v1717
  %v1748 = vpack.c.b16 %v1724, %v1721
  %v1749 = vpack.c.b16 %v1725, %v1722
  %v1750 = vpack.c.b16 %v1726, %v1723
  %1775 = vmatprep.subr.bf16.mxu0 %v1749
  %1776 = vmatpush1.bf16.msra.mxu0 %v1748
  %1777 = vmatprep.subr.bf16.mxu0 %v1746
  %1778 = vmatpush1.bf16.msra.mxu0 %v1745
  %1779 = vmatprep.subr.bf16.mxu0 %v1743
  %1780 = vmatpush1.bf16.msra.mxu0 %v1742
  %1781 = vmatprep.subr.bf16.mxu0 %v1740
  %1782 = vmatpush1.bf16.msra.mxu0 %v1739
  %1783 = vmatprep.subr.bf16.mxu0 %v1737
  %1784 = vmatpush1.bf16.msra.mxu0 %v1736
  %1785 = vmatprep.subr.bf16.mxu0 %v1734
  %1786 = vmatpush1.bf16.msra.mxu0 %v1733
  %1787 = vmatprep.subr.bf16.mxu0 %v1731
  %1788 = vmatpush1.bf16.msra.mxu0 %v1730
  %1789 = vmatprep.subr.bf16.mxu0 %v1728
  %1790 = vmatpush1.bf16.msra.mxu0 %v1727
  %1791 = vmatprep.subr.bf16.mxu0 0
  %1792 = vmatpush2.bf16.msra.mxu0 0
  %1793 = vmatprep.subr.bf16.mxu0 0
  %1794 = vmatpush2.bf16.msra.mxu0 0
  %1795 = vmatprep.subr.bf16.mxu0 0
  %1796 = vmatpush2.bf16.msra.mxu0 0
  %1797 = vmatprep.subr.bf16.mxu0 0
  %1798 = vmatpush2.bf16.msra.mxu0 0
  %1799 = vmatprep.subr.bf16.mxu0 0
  %1800 = vmatpush2.bf16.msra.mxu0 0
  %1801 = vmatprep.subr.bf16.mxu0 0
  %1802 = vmatpush2.bf16.msra.mxu0 0
  %1803 = vmatprep.subr.bf16.mxu0 0
  %1804 = vmatpush2.bf16.msra.mxu0 0
  %1805 = vmatprep.subr.bf16.mxu0 0
  %1806 = vmatpush2.bf16.msra.mxu0 0
  %1807 = vmatprep.mubr.bf16.mxu0 0
  %1808 = vmatmul.mubr.bf16.gmra.mxu0 %v1630
  %v1809 = vpop.f32.mrf.mxu0
  %v1810 = vadd.f32 %v1635, %v1809
  %v1811 = vpop.f32.mrf.mxu0
  %v1812 = vadd.f32 %v1639, %v1811
  %v1813 = vpop.f32.mrf.mxu0
  %v1814 = vpop.f32.mrf.mxu0
  %1815 = vdwg.mxu0
  %1816 = vmatprep.subr.bf16.mxu0 0
  %1817 = vmatpush1.bf16.msra.mxu0 %v1750
  %1818 = vmatprep.subr.bf16.mxu0 0
  %1819 = vmatpush1.bf16.msra.mxu0 %v1747
  %1820 = vmatprep.subr.bf16.mxu0 0
  %1821 = vmatpush1.bf16.msra.mxu0 %v1744
  %1822 = vmatprep.subr.bf16.mxu0 0
  %1823 = vmatpush1.bf16.msra.mxu0 %v1741
  %1824 = vmatprep.subr.bf16.mxu0 0
  %1825 = vmatpush1.bf16.msra.mxu0 %v1738
  %1826 = vmatprep.subr.bf16.mxu0 0
  %1827 = vmatpush1.bf16.msra.mxu0 %v1735
  %1828 = vmatprep.subr.bf16.mxu0 0
  %1829 = vmatpush1.bf16.msra.mxu0 %v1732
  %1830 = vmatprep.subr.bf16.mxu0 0
  %1831 = vmatpush1.bf16.msra.mxu0 %v1729
  %1832 = vmatprep.subr.bf16.mxu0 0
  %1833 = vmatpush2.bf16.msra.mxu0 0
  %1834 = vmatprep.subr.bf16.mxu0 0
  %1835 = vmatpush2.bf16.msra.mxu0 0
  %1836 = vmatprep.subr.bf16.mxu0 0
  %1837 = vmatpush2.bf16.msra.mxu0 0
  %1838 = vmatprep.subr.bf16.mxu0 0
  %1839 = vmatpush2.bf16.msra.mxu0 0
  %1840 = vmatprep.subr.bf16.mxu0 0
  %1841 = vmatpush2.bf16.msra.mxu0 0
  %1842 = vmatprep.subr.bf16.mxu0 0
  %1843 = vmatpush2.bf16.msra.mxu0 0
  %1844 = vmatprep.subr.bf16.mxu0 0
  %1845 = vmatpush2.bf16.msra.mxu0 0
  %1846 = vmatprep.subr.bf16.mxu0 0
  %1847 = vmatpush2.bf16.msra.mxu0 0
  %1848 = vmatprep.mubr.bf16.mxu0 0
  %1849 = vmatmul.mubr.bf16.gmra.mxu0 %v1630
  %v1850 = vpop.f32.mrf.mxu0
  %v1851 = vadd.f32 %v1643, %v1850
  %v1852 = vpop.f32.mrf.mxu0
  %v1853 = vpop.f32.mrf.mxu0
  %v1854 = vpop.f32.mrf.mxu0
  %1855 = vdwg.mxu0
  %v1856 = vadd.f32 %v1627, %v1810
  %v1857 = vxor.u32 %v1856, 2147483648
  %v1858 = vmul.f32 %v1857, 1.442695
  %v1859 = vpow.pop %v1858
  %v1860 = vadd.f32 %v1859, 1.0
  %v1861 = vrcp.pop %v1860
  %v1862 = vmul.f32 1.0, %v1861
  %v1863 = vadd.f32 %v1628, %v1812
  %v1864 = vxor.u32 %v1863, 2147483648
  %v1865 = vmul.f32 %v1864, 1.442695
  %v1866 = vpow.pop %v1865
  %v1867 = vadd.f32 %v1866, 1.0
  %v1868 = vrcp.pop %v1867
  %v1869 = vmul.f32 1.0, %v1868
  %v1870 = vmul.f32 %v1862, %v1851
  %v1871 = vadd.f32 %v1629, %v1870
  %v1872 = vtanh.pop %v1871
  %v1873 = vsub.f32 1.0, %v1869
  %v1874 = vmul.f32 %v1873, %v1872
  %v1875 = vmul.f32 %v1869, %v1363
  %v1876 = vadd.f32 %v1874, %v1875
  %s1877 = sadd.s32 %s1360, 3
  %p1878 = scmp.lt.s32.totalorder %s1877, 4
  %s1879 = scalar_select %p1878, 1, 0
  %v1880 = vstv %s1879
  %vm1881 = vcmp.eq.s32.totalorder %v1880, 1
  %v1882 = vsel %vm1881, %v1876, %v1363
  %v1883 = vpack.c.bf16 %v1882, %v1882
  %s1884 = scalar_lea.vmem %s86, 12
  %1885 = vst [vmem:[%s1884] sm:$0xf] %v1883
  %s1886 = smul.u32 1, 3
  %s1887 = smul.addr %s1886, 8
  %s1888 = scalar_lea.vmem [#allocation3], %s1887
  %v1889 = vld [vmem:[%s1888] sm:$0xff]
  %v1890 = vld [vmem:[%s1888 + $0x8] sm:$0xff]
  %v1891 = vld [vmem:[%s1888 + $0x10] sm:$0xff]
  %1892 = vmatprep.subr.bf16.mxu0 %v1489
  %1893 = vmatpush1.bf16.msra.mxu0 %v1488
  %1894 = vmatprep.subr.bf16.mxu0 %v1486
  %1895 = vmatpush1.bf16.msra.mxu0 %v1485
  %1896 = vmatprep.subr.bf16.mxu0 %v1483
  %1897 = vmatpush1.bf16.msra.mxu0 %v1482
  %1898 = vmatprep.subr.bf16.mxu0 %v1480
  %1899 = vmatpush1.bf16.msra.mxu0 %v1479
  %1900 = vmatprep.subr.bf16.mxu0 %v1477
  %1901 = vmatpush1.bf16.msra.mxu0 %v1476
  %1902 = vmatprep.subr.bf16.mxu0 %v1474
  %1903 = vmatpush1.bf16.msra.mxu0 %v1473
  %1904 = vmatprep.subr.bf16.mxu0 %v1471
  %1905 = vmatpush1.bf16.msra.mxu0 %v1470
  %1906 = vmatprep.subr.bf16.mxu0 %v1468
  %1907 = vmatpush1.bf16.msra.mxu0 %v1467
  %1908 = vmatprep.subr.bf16.mxu0 0
  %1909 = vmatpush2.bf16.msra.mxu0 0
  %1910 = vmatprep.subr.bf16.mxu0 0
  %1911 = vmatpush2.bf16.msra.mxu0 0
  %1912 = vmatprep.subr.bf16.mxu0 0
  %1913 = vmatpush2.bf16.msra.mxu0 0
  %1914 = vmatprep.subr.bf16.mxu0 0
  %1915 = vmatpush2.bf16.msra.mxu0 0
  %1916 = vmatprep.subr.bf16.mxu0 0
  %1917 = vmatpush2.bf16.msra.mxu0 0
  %1918 = vmatprep.subr.bf16.mxu0 0
  %1919 = vmatpush2.bf16.msra.mxu0 0
  %1920 = vmatprep.subr.bf16.mxu0 0
  %1921 = vmatpush2.bf16.msra.mxu0 0
  %1922 = vmatprep.subr.bf16.mxu0 0
  %1923 = vmatpush2.bf16.msra.mxu0 0
  %1924 = vmatprep.mubr.bf16.mxu0 0
  %1925 = vmatmul.mubr.bf16.gmra.mxu0 %v1622
  %v1926 = vpop.f32.mrf.mxu0
  %v1927 = vadd.f32 %v1375, %v1926
  %v1928 = vpop.f32.mrf.mxu0
  %v1929 = vadd.f32 %v1379, %v1928
  %v1930 = vpop.f32.mrf.mxu0
  %v1931 = vpop.f32.mrf.mxu0
  %1932 = vdwg.mxu0
  %1933 = vmatprep.subr.bf16.mxu0 0
  %1934 = vmatpush1.bf16.msra.mxu0 %v1490
  %1935 = vmatprep.subr.bf16.mxu0 0
  %1936 = vmatpush1.bf16.msra.mxu0 %v1487
  %1937 = vmatprep.subr.bf16.mxu0 0
  %1938 = vmatpush1.bf16.msra.mxu0 %v1484
  %1939 = vmatprep.subr.bf16.mxu0 0
  %1940 = vmatpush1.bf16.msra.mxu0 %v1481
  %1941 = vmatprep.subr.bf16.mxu0 0
  %1942 = vmatpush1.bf16.msra.mxu0 %v1478
  %1943 = vmatprep.subr.bf16.mxu0 0
  %1944 = vmatpush1.bf16.msra.mxu0 %v1475
  %1945 = vmatprep.subr.bf16.mxu0 0
  %1946 = vmatpush1.bf16.msra.mxu0 %v1472
  %1947 = vmatprep.subr.bf16.mxu0 0
  %1948 = vmatpush1.bf16.msra.mxu0 %v1469
  %1949 = vmatprep.subr.bf16.mxu0 0
  %1950 = vmatpush2.bf16.msra.mxu0 0
  %1951 = vmatprep.subr.bf16.mxu0 0
  %1952 = vmatpush2.bf16.msra.mxu0 0
  %1953 = vmatprep.subr.bf16.mxu0 0
  %1954 = vmatpush2.bf16.msra.mxu0 0
  %1955 = vmatprep.subr.bf16.mxu0 0
  %1956 = vmatpush2.bf16.msra.mxu0 0
  %1957 = vmatprep.subr.bf16.mxu0 0
  %1958 = vmatpush2.bf16.msra.mxu0 0
  %1959 = vmatprep.subr.bf16.mxu0 0
  %1960 = vmatpush2.bf16.msra.mxu0 0
  %1961 = vmatprep.subr.bf16.mxu0 0
  %1962 = vmatpush2.bf16.msra.mxu0 0
  %1963 = vmatprep.subr.bf16.mxu0 0
  %1964 = vmatpush2.bf16.msra.mxu0 0
  %1965 = vmatprep.mubr.bf16.mxu0 0
  %1966 = vmatmul.mubr.bf16.gmra.mxu0 %v1622
  %v1967 = vpop.f32.mrf.mxu0
  %v1968 = vadd.f32 %v1383, %v1967
  %v1969 = vpop.f32.mrf.mxu0
  %v1970 = vpop.f32.mrf.mxu0
  %v1971 = vpop.f32.mrf.mxu0
  %1972 = vdwg.mxu0
  %v1973 = vadd.f32 %v1889, %v1927
  %v1974 = vxor.u32 %v1973, 2147483648
  %v1975 = vmul.f32 %v1974, 1.442695
  %v1976 = vpow.pop %v1975
  %v1977 = vadd.f32 %v1976, 1.0
  %v1978 = vrcp.pop %v1977
  %v1979 = vmul.f32 1.0, %v1978
  %v1980 = vadd.f32 %v1890, %v1929
  %v1981 = vxor.u32 %v1980, 2147483648
  %v1982 = vmul.f32 %v1981, 1.442695
  %v1983 = vpow.pop %v1982
  %v1984 = vadd.f32 %v1983, 1.0
  %v1985 = vrcp.pop %v1984
  %v1986 = vmul.f32 1.0, %v1985
  %v1987 = vmul.f32 %v1979, %v1968
  %v1988 = vadd.f32 %v1891, %v1987
  %v1989 = vtanh.pop %v1988
  %v1990 = vsub.f32 1.0, %v1986
  %v1991 = vmul.f32 %v1990, %v1989
  %v1992 = vmul.f32 %v1986, %v1621
  %v1993 = vadd.f32 %v1991, %v1992
  %s1994 = sadd.s32 %s1358, 1
  %p1995 = scmp.lt.s32.totalorder %s1994, 4
  %s1996 = scalar_select %p1995, 1, 0
  %v1997 = vstv %s1996
  %vm1998 = vcmp.eq.s32.totalorder %v1997, 1
  %v1999 = vsel %vm1998, %v1993, %v1621
  %v2000 = vpack.c.bf16 %v1999, %v1999
  %s2001 = scalar_lea.vmem %s8, 4
  %2002 = vst [vmem:[%s2001] sm:$0xf] %v2000
  %s2003 = smul.u32 2, 3
  %s2004 = smul.addr %s2003, 8
  %s2005 = scalar_lea.vmem [#allocation4], %s2004
  %v2006 = vld [vmem:[%s2005] sm:$0xff]
  %v2007 = vld [vmem:[%s2005 + $0x8] sm:$0xff]
  %v2008 = vld [vmem:[%s2005 + $0x10] sm:$0xff]
  %2009 = vmatprep.subr.bf16.mxu0 %v1749
  %2010 = vmatpush1.bf16.msra.mxu0 %v1748
  %2011 = vmatprep.subr.bf16.mxu0 %v1746
  %2012 = vmatpush1.bf16.msra.mxu0 %v1745
  %2013 = vmatprep.subr.bf16.mxu0 %v1743
  %2014 = vmatpush1.bf16.msra.mxu0 %v1742
  %2015 = vmatprep.subr.bf16.mxu0 %v1740
  %2016 = vmatpush1.bf16.msra.mxu0 %v1739
  %2017 = vmatprep.subr.bf16.mxu0 %v1737
  %2018 = vmatpush1.bf16.msra.mxu0 %v1736
  %2019 = vmatprep.subr.bf16.mxu0 %v1734
  %2020 = vmatpush1.bf16.msra.mxu0 %v1733
  %2021 = vmatprep.subr.bf16.mxu0 %v1731
  %2022 = vmatpush1.bf16.msra.mxu0 %v1730
  %2023 = vmatprep.subr.bf16.mxu0 %v1728
  %2024 = vmatpush1.bf16.msra.mxu0 %v1727
  %2025 = vmatprep.subr.bf16.mxu0 0
  %2026 = vmatpush2.bf16.msra.mxu0 0
  %2027 = vmatprep.subr.bf16.mxu0 0
  %2028 = vmatpush2.bf16.msra.mxu0 0
  %2029 = vmatprep.subr.bf16.mxu0 0
  %2030 = vmatpush2.bf16.msra.mxu0 0
  %2031 = vmatprep.subr.bf16.mxu0 0
  %2032 = vmatpush2.bf16.msra.mxu0 0
  %2033 = vmatprep.subr.bf16.mxu0 0
  %2034 = vmatpush2.bf16.msra.mxu0 0
  %2035 = vmatprep.subr.bf16.mxu0 0
  %2036 = vmatpush2.bf16.msra.mxu0 0
  %2037 = vmatprep.subr.bf16.mxu0 0
  %2038 = vmatpush2.bf16.msra.mxu0 0
  %2039 = vmatprep.subr.bf16.mxu0 0
  %2040 = vmatpush2.bf16.msra.mxu0 0
  %2041 = vmatprep.mubr.bf16.mxu0 0
  %2042 = vmatmul.mubr.bf16.gmra.mxu0 %v1883
  %v2043 = vpop.f32.mrf.mxu0
  %v2044 = vadd.f32 %v1635, %v2043
  %v2045 = vpop.f32.mrf.mxu0
  %v2046 = vadd.f32 %v1639, %v2045
  %v2047 = vpop.f32.mrf.mxu0
  %v2048 = vpop.f32.mrf.mxu0
  %2049 = vdwg.mxu0
  %2050 = vmatprep.subr.bf16.mxu0 0
  %2051 = vmatpush1.bf16.msra.mxu0 %v1750
  %2052 = vmatprep.subr.bf16.mxu0 0
  %2053 = vmatpush1.bf16.msra.mxu0 %v1747
  %2054 = vmatprep.subr.bf16.mxu0 0
  %2055 = vmatpush1.bf16.msra.mxu0 %v1744
  %2056 = vmatprep.subr.bf16.mxu0 0
  %2057 = vmatpush1.bf16.msra.mxu0 %v1741
  %2058 = vmatprep.subr.bf16.mxu0 0
  %2059 = vmatpush1.bf16.msra.mxu0 %v1738
  %2060 = vmatprep.subr.bf16.mxu0 0
  %2061 = vmatpush1.bf16.msra.mxu0 %v1735
  %2062 = vmatprep.subr.bf16.mxu0 0
  %2063 = vmatpush1.bf16.msra.mxu0 %v1732
  %2064 = vmatprep.subr.bf16.mxu0 0
  %2065 = vmatpush1.bf16.msra.mxu0 %v1729
  %2066 = vmatprep.subr.bf16.mxu0 0
  %2067 = vmatpush2.bf16.msra.mxu0 0
  %2068 = vmatprep.subr.bf16.mxu0 0
  %2069 = vmatpush2.bf16.msra.mxu0 0
  %2070 = vmatprep.subr.bf16.mxu0 0
  %2071 = vmatpush2.bf16.msra.mxu0 0
  %2072 = vmatprep.subr.bf16.mxu0 0
  %2073 = vmatpush2.bf16.msra.mxu0 0
  %2074 = vmatprep.subr.bf16.mxu0 0
  %2075 = vmatpush2.bf16.msra.mxu0 0
  %2076 = vmatprep.subr.bf16.mxu0 0
  %2077 = vmatpush2.bf16.msra.mxu0 0
  %2078 = vmatprep.subr.bf16.mxu0 0
  %2079 = vmatpush2.bf16.msra.mxu0 0
  %2080 = vmatprep.subr.bf16.mxu0 0
  %2081 = vmatpush2.bf16.msra.mxu0 0
  %2082 = vmatprep.mubr.bf16.mxu0 0
  %2083 = vmatmul.mubr.bf16.gmra.mxu0 %v1883
  %v2084 = vpop.f32.mrf.mxu0
  %v2085 = vadd.f32 %v1643, %v2084
  %v2086 = vpop.f32.mrf.mxu0
  %v2087 = vpop.f32.mrf.mxu0
  %v2088 = vpop.f32.mrf.mxu0
  %2089 = vdwg.mxu0
  %v2090 = vadd.f32 %v2006, %v2044
  %v2091 = vxor.u32 %v2090, 2147483648
  %v2092 = vmul.f32 %v2091, 1.442695
  %v2093 = vpow.pop %v2092
  %v2094 = vadd.f32 %v2093, 1.0
  %v2095 = vrcp.pop %v2094
  %v2096 = vmul.f32 1.0, %v2095
  %v2097 = vadd.f32 %v2007, %v2046
  %v2098 = vxor.u32 %v2097, 2147483648
  %v2099 = vmul.f32 %v2098, 1.442695
  %v2100 = vpow.pop %v2099
  %v2101 = vadd.f32 %v2100, 1.0
  %v2102 = vrcp.pop %v2101
  %v2103 = vmul.f32 1.0, %v2102
  %v2104 = vmul.f32 %v2096, %v2085
  %v2105 = vadd.f32 %v2008, %v2104
  %v2106 = vtanh.pop %v2105
  %v2107 = vsub.f32 1.0, %v2103
  %v2108 = vmul.f32 %v2107, %v2106
  %v2109 = vmul.f32 %v2103, %v1882
  %v2110 = vadd.f32 %v2108, %v2109
  %s2111 = sadd.s32 %s1360, 2
  %p2112 = scmp.lt.s32.totalorder %s2111, 4
  %s2113 = scalar_select %p2112, 1, 0
  %v2114 = vstv %s2113
  %vm2115 = vcmp.eq.s32.totalorder %v2114, 1
  %v2116 = vsel %vm2115, %v2110, %v1882
  %v2117 = vpack.c.bf16 %v2116, %v2116
  %s2118 = scalar_lea.vmem %s86, 8
  %2119 = vst [vmem:[%s2118] sm:$0xf] %v2117
  %s2120 = smul.addr %s2003, 8
  %s2121 = scalar_lea.vmem [#allocation3], %s2120
  %v2122 = vld [vmem:[%s2121] sm:$0xff]
  %v2123 = vld [vmem:[%s2121 + $0x8] sm:$0xff]
  %v2124 = vld [vmem:[%s2121 + $0x10] sm:$0xff]
  %2125 = vmatprep.subr.bf16.mxu0 %v1489
  %2126 = vmatpush1.bf16.msra.mxu0 %v1488
  %2127 = vmatprep.subr.bf16.mxu0 %v1486
  %2128 = vmatpush1.bf16.msra.mxu0 %v1485
  %2129 = vmatprep.subr.bf16.mxu0 %v1483
  %2130 = vmatpush1.bf16.msra.mxu0 %v1482
  %2131 = vmatprep.subr.bf16.mxu0 %v1480
  %2132 = vmatpush1.bf16.msra.mxu0 %v1479
  %2133 = vmatprep.subr.bf16.mxu0 %v1477
  %2134 = vmatpush1.bf16.msra.mxu0 %v1476
  %2135 = vmatprep.subr.bf16.mxu0 %v1474
  %2136 = vmatpush1.bf16.msra.mxu0 %v1473
  %2137 = vmatprep.subr.bf16.mxu0 %v1471
  %2138 = vmatpush1.bf16.msra.mxu0 %v1470
  %2139 = vmatprep.subr.bf16.mxu0 %v1468
  %2140 = vmatpush1.bf16.msra.mxu0 %v1467
  %2141 = vmatprep.subr.bf16.mxu0 0
  %2142 = vmatpush2.bf16.msra.mxu0 0
  %2143 = vmatprep.subr.bf16.mxu0 0
  %2144 = vmatpush2.bf16.msra.mxu0 0
  %2145 = vmatprep.subr.bf16.mxu0 0
  %2146 = vmatpush2.bf16.msra.mxu0 0
  %2147 = vmatprep.subr.bf16.mxu0 0
  %2148 = vmatpush2.bf16.msra.mxu0 0
  %2149 = vmatprep.subr.bf16.mxu0 0
  %2150 = vmatpush2.bf16.msra.mxu0 0
  %2151 = vmatprep.subr.bf16.mxu0 0
  %2152 = vmatpush2.bf16.msra.mxu0 0
  %2153 = vmatprep.subr.bf16.mxu0 0
  %2154 = vmatpush2.bf16.msra.mxu0 0
  %2155 = vmatprep.subr.bf16.mxu0 0
  %2156 = vmatpush2.bf16.msra.mxu0 0
  %2157 = vmatprep.mubr.bf16.mxu0 0
  %2158 = vmatmul.mubr.bf16.gmra.mxu0 %v2000
  %v2159 = vpop.f32.mrf.mxu0
  %v2160 = vadd.f32 %v1375, %v2159
  %v2161 = vpop.f32.mrf.mxu0
  %v2162 = vadd.f32 %v1379, %v2161
  %v2163 = vpop.f32.mrf.mxu0
  %v2164 = vpop.f32.mrf.mxu0
  %2165 = vdwg.mxu0
  %2166 = vmatprep.subr.bf16.mxu0 0
  %2167 = vmatpush1.bf16.msra.mxu0 %v1490
  %2168 = vmatprep.subr.bf16.mxu0 0
  %2169 = vmatpush1.bf16.msra.mxu0 %v1487
  %2170 = vmatprep.subr.bf16.mxu0 0
  %2171 = vmatpush1.bf16.msra.mxu0 %v1484
  %2172 = vmatprep.subr.bf16.mxu0 0
  %2173 = vmatpush1.bf16.msra.mxu0 %v1481
  %2174 = vmatprep.subr.bf16.mxu0 0
  %2175 = vmatpush1.bf16.msra.mxu0 %v1478
  %2176 = vmatprep.subr.bf16.mxu0 0
  %2177 = vmatpush1.bf16.msra.mxu0 %v1475
  %2178 = vmatprep.subr.bf16.mxu0 0
  %2179 = vmatpush1.bf16.msra.mxu0 %v1472
  %2180 = vmatprep.subr.bf16.mxu0 0
  %2181 = vmatpush1.bf16.msra.mxu0 %v1469
  %2182 = vmatprep.subr.bf16.mxu0 0
  %2183 = vmatpush2.bf16.msra.mxu0 0
  %2184 = vmatprep.subr.bf16.mxu0 0
  %2185 = vmatpush2.bf16.msra.mxu0 0
  %2186 = vmatprep.subr.bf16.mxu0 0
  %2187 = vmatpush2.bf16.msra.mxu0 0
  %2188 = vmatprep.subr.bf16.mxu0 0
  %2189 = vmatpush2.bf16.msra.mxu0 0
  %2190 = vmatprep.subr.bf16.mxu0 0
  %2191 = vmatpush2.bf16.msra.mxu0 0
  %2192 = vmatprep.subr.bf16.mxu0 0
  %2193 = vmatpush2.bf16.msra.mxu0 0
  %2194 = vmatprep.subr.bf16.mxu0 0
  %2195 = vmatpush2.bf16.msra.mxu0 0
  %2196 = vmatprep.subr.bf16.mxu0 0
  %2197 = vmatpush2.bf16.msra.mxu0 0
  %2198 = vmatprep.mubr.bf16.mxu0 0
  %2199 = vmatmul.mubr.bf16.gmra.mxu0 %v2000
  %v2200 = vpop.f32.mrf.mxu0
  %v2201 = vadd.f32 %v1383, %v2200
  %v2202 = vpop.f32.mrf.mxu0
  %v2203 = vpop.f32.mrf.mxu0
  %v2204 = vpop.f32.mrf.mxu0
  %2205 = vdwg.mxu0
  %v2206 = vadd.f32 %v2122, %v2160
  %v2207 = vxor.u32 %v2206, 2147483648
  %v2208 = vmul.f32 %v2207, 1.442695
  %v2209 = vpow.pop %v2208
  %v2210 = vadd.f32 %v2209, 1.0
  %v2211 = vrcp.pop %v2210
  %v2212 = vmul.f32 1.0, %v2211
  %v2213 = vadd.f32 %v2123, %v2162
  %v2214 = vxor.u32 %v2213, 2147483648
  %v2215 = vmul.f32 %v2214, 1.442695
  %v2216 = vpow.pop %v2215
  %v2217 = vadd.f32 %v2216, 1.0
  %v2218 = vrcp.pop %v2217
  %v2219 = vmul.f32 1.0, %v2218
  %v2220 = vmul.f32 %v2212, %v2201
  %v2221 = vadd.f32 %v2124, %v2220
  %v2222 = vtanh.pop %v2221
  %v2223 = vsub.f32 1.0, %v2219
  %v2224 = vmul.f32 %v2223, %v2222
  %v2225 = vmul.f32 %v2219, %v1999
  %v2226 = vadd.f32 %v2224, %v2225
  %s2227 = sadd.s32 %s1358, 2
  %p2228 = scmp.lt.s32.totalorder %s2227, 4
  %s2229 = scalar_select %p2228, 1, 0
  %v2230 = vstv %s2229
  %vm2231 = vcmp.eq.s32.totalorder %v2230, 1
  %v2232 = vsel %vm2231, %v2226, %v1999
  %v2233 = vpack.c.bf16 %v2232, %v2232
  %s2234 = scalar_lea.vmem %s8, 8
  %2235 = vst [vmem:[%s2234] sm:$0xf] %v2233
  %s2236 = smul.addr %s1886, 8
  %s2237 = scalar_lea.vmem [#allocation4], %s2236
  %v2238 = vld [vmem:[%s2237] sm:$0xff]
  %v2239 = vld [vmem:[%s2237 + $0x8] sm:$0xff]
  %v2240 = vld [vmem:[%s2237 + $0x10] sm:$0xff]
  %2241 = vmatprep.subr.bf16.mxu0 %v1749
  %2242 = vmatpush1.bf16.msra.mxu0 %v1748
  %2243 = vmatprep.subr.bf16.mxu0 %v1746
  %2244 = vmatpush1.bf16.msra.mxu0 %v1745
  %2245 = vmatprep.subr.bf16.mxu0 %v1743
  %2246 = vmatpush1.bf16.msra.mxu0 %v1742
  %2247 = vmatprep.subr.bf16.mxu0 %v1740
  %2248 = vmatpush1.bf16.msra.mxu0 %v1739
  %2249 = vmatprep.subr.bf16.mxu0 %v1737
  %2250 = vmatpush1.bf16.msra.mxu0 %v1736
  %2251 = vmatprep.subr.bf16.mxu0 %v1734
  %2252 = vmatpush1.bf16.msra.mxu0 %v1733
  %2253 = vmatprep.subr.bf16.mxu0 %v1731
  %2254 = vmatpush1.bf16.msra.mxu0 %v1730
  %2255 = vmatprep.subr.bf16.mxu0 %v1728
  %2256 = vmatpush1.bf16.msra.mxu0 %v1727
  %2257 = vmatprep.subr.bf16.mxu0 0
  %2258 = vmatpush2.bf16.msra.mxu0 0
  %2259 = vmatprep.subr.bf16.mxu0 0
  %2260 = vmatpush2.bf16.msra.mxu0 0
  %2261 = vmatprep.subr.bf16.mxu0 0
  %2262 = vmatpush2.bf16.msra.mxu0 0
  %2263 = vmatprep.subr.bf16.mxu0 0
  %2264 = vmatpush2.bf16.msra.mxu0 0
  %2265 = vmatprep.subr.bf16.mxu0 0
  %2266 = vmatpush2.bf16.msra.mxu0 0
  %2267 = vmatprep.subr.bf16.mxu0 0
  %2268 = vmatpush2.bf16.msra.mxu0 0
  %2269 = vmatprep.subr.bf16.mxu0 0
  %2270 = vmatpush2.bf16.msra.mxu0 0
  %2271 = vmatprep.subr.bf16.mxu0 0
  %2272 = vmatpush2.bf16.msra.mxu0 0
  %2273 = vmatprep.mubr.bf16.mxu0 0
  %2274 = vmatmul.mubr.bf16.gmra.mxu0 %v2117
  %v2275 = vpop.f32.mrf.mxu0
  %v2276 = vadd.f32 %v1635, %v2275
  %v2277 = vpop.f32.mrf.mxu0
  %v2278 = vadd.f32 %v1639, %v2277
  %v2279 = vpop.f32.mrf.mxu0
  %v2280 = vpop.f32.mrf.mxu0
  %2281 = vdwg.mxu0
  %2282 = vmatprep.subr.bf16.mxu0 0
  %2283 = vmatpush1.bf16.msra.mxu0 %v1750
  %2284 = vmatprep.subr.bf16.mxu0 0
  %2285 = vmatpush1.bf16.msra.mxu0 %v1747
  %2286 = vmatprep.subr.bf16.mxu0 0
  %2287 = vmatpush1.bf16.msra.mxu0 %v1744
  %2288 = vmatprep.subr.bf16.mxu0 0
  %2289 = vmatpush1.bf16.msra.mxu0 %v1741
  %2290 = vmatprep.subr.bf16.mxu0 0
  %2291 = vmatpush1.bf16.msra.mxu0 %v1738
  %2292 = vmatprep.subr.bf16.mxu0 0
  %2293 = vmatpush1.bf16.msra.mxu0 %v1735
  %2294 = vmatprep.subr.bf16.mxu0 0
  %2295 = vmatpush1.bf16.msra.mxu0 %v1732
  %2296 = vmatprep.subr.bf16.mxu0 0
  %2297 = vmatpush1.bf16.msra.mxu0 %v1729
  %2298 = vmatprep.subr.bf16.mxu0 0
  %2299 = vmatpush2.bf16.msra.mxu0 0
  %2300 = vmatprep.subr.bf16.mxu0 0
  %2301 = vmatpush2.bf16.msra.mxu0 0
  %2302 = vmatprep.subr.bf16.mxu0 0
  %2303 = vmatpush2.bf16.msra.mxu0 0
  %2304 = vmatprep.subr.bf16.mxu0 0
  %2305 = vmatpush2.bf16.msra.mxu0 0
  %2306 = vmatprep.subr.bf16.mxu0 0
  %2307 = vmatpush2.bf16.msra.mxu0 0
  %2308 = vmatprep.subr.bf16.mxu0 0
  %2309 = vmatpush2.bf16.msra.mxu0 0
  %2310 = vmatprep.subr.bf16.mxu0 0
  %2311 = vmatpush2.bf16.msra.mxu0 0
  %2312 = vmatprep.subr.bf16.mxu0 0
  %2313 = vmatpush2.bf16.msra.mxu0 0
  %2314 = vmatprep.mubr.bf16.mxu0 0
  %2315 = vmatmul.mubr.bf16.gmra.mxu0 %v2117
  %v2316 = vpop.f32.mrf.mxu0
  %v2317 = vadd.f32 %v1643, %v2316
  %v2318 = vpop.f32.mrf.mxu0
  %v2319 = vpop.f32.mrf.mxu0
  %v2320 = vpop.f32.mrf.mxu0
  %2321 = vdwg.mxu0
  %v2322 = vadd.f32 %v2238, %v2276
  %v2323 = vxor.u32 %v2322, 2147483648
  %v2324 = vmul.f32 %v2323, 1.442695
  %v2325 = vpow.pop %v2324
  %v2326 = vadd.f32 %v2325, 1.0
  %v2327 = vrcp.pop %v2326
  %v2328 = vmul.f32 1.0, %v2327
  %v2329 = vadd.f32 %v2239, %v2278
  %v2330 = vxor.u32 %v2329, 2147483648
  %v2331 = vmul.f32 %v2330, 1.442695
  %v2332 = vpow.pop %v2331
  %v2333 = vadd.f32 %v2332, 1.0
  %v2334 = vrcp.pop %v2333
  %v2335 = vmul.f32 1.0, %v2334
  %v2336 = vmul.f32 %v2328, %v2317
  %v2337 = vadd.f32 %v2240, %v2336
  %v2338 = vtanh.pop %v2337
  %v2339 = vsub.f32 1.0, %v2335
  %v2340 = vmul.f32 %v2339, %v2338
  %v2341 = vmul.f32 %v2335, %v2116
  %v2342 = vadd.f32 %v2340, %v2341
  %s2343 = sadd.s32 %s1360, 1
  %p2344 = scmp.lt.s32.totalorder %s2343, 4
  %s2345 = scalar_select %p2344, 1, 0
  %v2346 = vstv %s2345
  %vm2347 = vcmp.eq.s32.totalorder %v2346, 1
  %v2348 = vsel %vm2347, %v2342, %v2116
  %v2349 = vpack.c.bf16 %v2348, %v2348
  %s2350 = scalar_lea.vmem %s86, 4
  %2351 = vst [vmem:[%s2350] sm:$0xf] %v2349
  %s2352 = smul.addr %s1624, 8
  %s2353 = scalar_lea.vmem [#allocation3], %s2352
  %v2354 = vld [vmem:[%s2353] sm:$0xff]
  %v2355 = vld [vmem:[%s2353 + $0x8] sm:$0xff]
  %v2356 = vld [vmem:[%s2353 + $0x10] sm:$0xff]
  %2357 = vmatprep.subr.bf16.mxu0 %v1489
  %2358 = vmatpush1.bf16.msra.mxu0 %v1488
  %2359 = vmatprep.subr.bf16.mxu0 %v1486
  %2360 = vmatpush1.bf16.msra.mxu0 %v1485
  %2361 = vmatprep.subr.bf16.mxu0 %v1483
  %2362 = vmatpush1.bf16.msra.mxu0 %v1482
  %2363 = vmatprep.subr.bf16.mxu0 %v1480
  %2364 = vmatpush1.bf16.msra.mxu0 %v1479
  %2365 = vmatprep.subr.bf16.mxu0 %v1477
  %2366 = vmatpush1.bf16.msra.mxu0 %v1476
  %2367 = vmatprep.subr.bf16.mxu0 %v1474
  %2368 = vmatpush1.bf16.msra.mxu0 %v1473
  %2369 = vmatprep.subr.bf16.mxu0 %v1471
  %2370 = vmatpush1.bf16.msra.mxu0 %v1470
  %2371 = vmatprep.subr.bf16.mxu0 %v1468
  %2372 = vmatpush1.bf16.msra.mxu0 %v1467
  %2373 = vmatprep.subr.bf16.mxu0 0
  %2374 = vmatpush2.bf16.msra.mxu0 0
  %2375 = vmatprep.subr.bf16.mxu0 0
  %2376 = vmatpush2.bf16.msra.mxu0 0
  %2377 = vmatprep.subr.bf16.mxu0 0
  %2378 = vmatpush2.bf16.msra.mxu0 0
  %2379 = vmatprep.subr.bf16.mxu0 0
  %2380 = vmatpush2.bf16.msra.mxu0 0
  %2381 = vmatprep.subr.bf16.mxu0 0
  %2382 = vmatpush2.bf16.msra.mxu0 0
  %2383 = vmatprep.subr.bf16.mxu0 0
  %2384 = vmatpush2.bf16.msra.mxu0 0
  %2385 = vmatprep.subr.bf16.mxu0 0
  %2386 = vmatpush2.bf16.msra.mxu0 0
  %2387 = vmatprep.subr.bf16.mxu0 0
  %2388 = vmatpush2.bf16.msra.mxu0 0
  %2389 = vmatprep.mubr.bf16.mxu0 0
  %2390 = vmatmul.mubr.bf16.gmra.mxu0 %v2233
  %v2391 = vpop.f32.mrf.mxu0
  %v2392 = vadd.f32 %v1375, %v2391
  %v2393 = vpop.f32.mrf.mxu0
  %v2394 = vadd.f32 %v1379, %v2393
  %v2395 = vpop.f32.mrf.mxu0
  %v2396 = vpop.f32.mrf.mxu0
  %2397 = vdwg.mxu0
  %2398 = vmatprep.subr.bf16.mxu0 0
  %2399 = vmatpush1.bf16.msra.mxu0 %v1490
  %2400 = vmatprep.subr.bf16.mxu0 0
  %2401 = vmatpush1.bf16.msra.mxu0 %v1487
  %2402 = vmatprep.subr.bf16.mxu0 0
  %2403 = vmatpush1.bf16.msra.mxu0 %v1484
  %2404 = vmatprep.subr.bf16.mxu0 0
  %2405 = vmatpush1.bf16.msra.mxu0 %v1481
  %2406 = vmatprep.subr.bf16.mxu0 0
  %2407 = vmatpush1.bf16.msra.mxu0 %v1478
  %2408 = vmatprep.subr.bf16.mxu0 0
  %2409 = vmatpush1.bf16.msra.mxu0 %v1475
  %2410 = vmatprep.subr.bf16.mxu0 0
  %2411 = vmatpush1.bf16.msra.mxu0 %v1472
  %2412 = vmatprep.subr.bf16.mxu0 0
  %2413 = vmatpush1.bf16.msra.mxu0 %v1469
  %2414 = vmatprep.subr.bf16.mxu0 0
  %2415 = vmatpush2.bf16.msra.mxu0 0
  %2416 = vmatprep.subr.bf16.mxu0 0
  %2417 = vmatpush2.bf16.msra.mxu0 0
  %2418 = vmatprep.subr.bf16.mxu0 0
  %2419 = vmatpush2.bf16.msra.mxu0 0
  %2420 = vmatprep.subr.bf16.mxu0 0
  %2421 = vmatpush2.bf16.msra.mxu0 0
  %2422 = vmatprep.subr.bf16.mxu0 0
  %2423 = vmatpush2.bf16.msra.mxu0 0
  %2424 = vmatprep.subr.bf16.mxu0 0
  %2425 = vmatpush2.bf16.msra.mxu0 0
  %2426 = vmatprep.subr.bf16.mxu0 0
  %2427 = vmatpush2.bf16.msra.mxu0 0
  %2428 = vmatprep.subr.bf16.mxu0 0
  %2429 = vmatpush2.bf16.msra.mxu0 0
  %2430 = vmatprep.mubr.bf16.mxu0 0
  %2431 = vmatmul.mubr.bf16.gmra.mxu0 %v2233
  %v2432 = vpop.f32.mrf.mxu0
  %v2433 = vadd.f32 %v1383, %v2432
  %v2434 = vpop.f32.mrf.mxu0
  %v2435 = vpop.f32.mrf.mxu0
  %v2436 = vpop.f32.mrf.mxu0
  %2437 = vdwg.mxu0
  %v2438 = vadd.f32 %v2354, %v2392
  %v2439 = vxor.u32 %v2438, 2147483648
  %v2440 = vmul.f32 %v2439, 1.442695
  %v2441 = vpow.pop %v2440
  %v2442 = vadd.f32 %v2441, 1.0
  %v2443 = vrcp.pop %v2442
  %v2444 = vmul.f32 1.0, %v2443
  %v2445 = vadd.f32 %v2355, %v2394
  %v2446 = vxor.u32 %v2445, 2147483648
  %v2447 = vmul.f32 %v2446, 1.442695
  %v2448 = vpow.pop %v2447
  %v2449 = vadd.f32 %v2448, 1.0
  %v2450 = vrcp.pop %v2449
  %v2451 = vmul.f32 1.0, %v2450
  %v2452 = vmul.f32 %v2444, %v2433
  %v2453 = vadd.f32 %v2356, %v2452
  %v2454 = vtanh.pop %v2453
  %v2455 = vsub.f32 1.0, %v2451
  %v2456 = vmul.f32 %v2455, %v2454
  %v2457 = vmul.f32 %v2451, %v2232
  %v2458 = vadd.f32 %v2456, %v2457
  %s2459 = sadd.s32 %s1358, 3
  %p2460 = scmp.lt.s32.totalorder %s2459, 4
  %s2461 = scalar_select %p2460, 1, 0
  %v2462 = vstv %s2461
  %vm2463 = vcmp.eq.s32.totalorder %v2462, 1
  %v2464 = vsel %vm2463, %v2458, %v2232
  %v2465 = vpack.c.bf16 %v2464, %v2464
  %s2466 = scalar_lea.vmem %s8, 12
  %2467 = vst [vmem:[%s2466] sm:$0xf] %v2465
  %s2468 = smul.addr %s1364, 8
  %s2469 = scalar_lea.vmem [#allocation4], %s2468
  %v2470 = vld [vmem:[%s2469] sm:$0xff]
  %v2471 = vld [vmem:[%s2469 + $0x8] sm:$0xff]
  %v2472 = vld [vmem:[%s2469 + $0x10] sm:$0xff]
  %2473 = vmatprep.subr.bf16.mxu0 %v1749
  %2474 = vmatpush1.bf16.msra.mxu0 %v1748
  %2475 = vmatprep.subr.bf16.mxu0 %v1746
  %2476 = vmatpush1.bf16.msra.mxu0 %v1745
  %2477 = vmatprep.subr.bf16.mxu0 %v1743
  %2478 = vmatpush1.bf16.msra.mxu0 %v1742
  %2479 = vmatprep.subr.bf16.mxu0 %v1740
  %2480 = vmatpush1.bf16.msra.mxu0 %v1739
  %2481 = vmatprep.subr.bf16.mxu0 %v1737
  %2482 = vmatpush1.bf16.msra.mxu0 %v1736
  %2483 = vmatprep.subr.bf16.mxu0 %v1734
  %2484 = vmatpush1.bf16.msra.mxu0 %v1733
  %2485 = vmatprep.subr.bf16.mxu0 %v1731
  %2486 = vmatpush1.bf16.msra.mxu0 %v1730
  %2487 = vmatprep.subr.bf16.mxu0 %v1728
  %2488 = vmatpush1.bf16.msra.mxu0 %v1727
  %2489 = vmatprep.subr.bf16.mxu0 0
  %2490 = vmatpush2.bf16.msra.mxu0 0
  %2491 = vmatprep.subr.bf16.mxu0 0
  %2492 = vmatpush2.bf16.msra.mxu0 0
  %2493 = vmatprep.subr.bf16.mxu0 0
  %2494 = vmatpush2.bf16.msra.mxu0 0
  %2495 = vmatprep.subr.bf16.mxu0 0
  %2496 = vmatpush2.bf16.msra.mxu0 0
  %2497 = vmatprep.subr.bf16.mxu0 0
  %2498 = vmatpush2.bf16.msra.mxu0 0
  %2499 = vmatprep.subr.bf16.mxu0 0
  %2500 = vmatpush2.bf16.msra.mxu0 0
  %2501 = vmatprep.subr.bf16.mxu0 0
  %2502 = vmatpush2.bf16.msra.mxu0 0
  %2503 = vmatprep.subr.bf16.mxu0 0
  %2504 = vmatpush2.bf16.msra.mxu0 0
  %2505 = vmatprep.mubr.bf16.mxu0 0
  %2506 = vmatmul.mubr.bf16.gmra.mxu0 %v2349
  %v2507 = vpop.f32.mrf.mxu0
  %v2508 = vadd.f32 %v1635, %v2507
  %v2509 = vpop.f32.mrf.mxu0
  %v2510 = vadd.f32 %v1639, %v2509
  %v2511 = vpop.f32.mrf.mxu0
  %v2512 = vpop.f32.mrf.mxu0
  %2513 = vdwg.mxu0
  %2514 = vmatprep.subr.bf16.mxu0 0
  %2515 = vmatpush1.bf16.msra.mxu0 %v1750
  %2516 = vmatprep.subr.bf16.mxu0 0
  %2517 = vmatpush1.bf16.msra.mxu0 %v1747
  %2518 = vmatprep.subr.bf16.mxu0 0
  %2519 = vmatpush1.bf16.msra.mxu0 %v1744
  %2520 = vmatprep.subr.bf16.mxu0 0
  %2521 = vmatpush1.bf16.msra.mxu0 %v1741
  %2522 = vmatprep.subr.bf16.mxu0 0
  %2523 = vmatpush1.bf16.msra.mxu0 %v1738
  %2524 = vmatprep.subr.bf16.mxu0 0
  %2525 = vmatpush1.bf16.msra.mxu0 %v1735
  %2526 = vmatprep.subr.bf16.mxu0 0
  %2527 = vmatpush1.bf16.msra.mxu0 %v1732
  %2528 = vmatprep.subr.bf16.mxu0 0
  %2529 = vmatpush1.bf16.msra.mxu0 %v1729
  %2530 = vmatprep.subr.bf16.mxu0 0
  %2531 = vmatpush2.bf16.msra.mxu0 0
  %2532 = vmatprep.subr.bf16.mxu0 0
  %2533 = vmatpush2.bf16.msra.mxu0 0
  %2534 = vmatprep.subr.bf16.mxu0 0
  %2535 = vmatpush2.bf16.msra.mxu0 0
  %2536 = vmatprep.subr.bf16.mxu0 0
  %2537 = vmatpush2.bf16.msra.mxu0 0
  %2538 = vmatprep.subr.bf16.mxu0 0
  %2539 = vmatpush2.bf16.msra.mxu0 0
  %2540 = vmatprep.subr.bf16.mxu0 0
  %2541 = vmatpush2.bf16.msra.mxu0 0
  %2542 = vmatprep.subr.bf16.mxu0 0
  %2543 = vmatpush2.bf16.msra.mxu0 0
  %2544 = vmatprep.subr.bf16.mxu0 0
  %2545 = vmatpush2.bf16.msra.mxu0 0
  %2546 = vmatprep.mubr.bf16.mxu0 0
  %2547 = vmatmul.mubr.bf16.gmra.mxu0 %v2349
  %v2548 = vpop.f32.mrf.mxu0
  %v2549 = vadd.f32 %v1643, %v2548
  %v2550 = vpop.f32.mrf.mxu0
  %v2551 = vpop.f32.mrf.mxu0
  %v2552 = vpop.f32.mrf.mxu0
  %2553 = vdwg.mxu0
  %v2554 = vadd.f32 %v2470, %v2508
  %v2555 = vxor.u32 %v2554, 2147483648
  %v2556 = vmul.f32 %v2555, 1.442695
  %v2557 = vpow.pop %v2556
  %v2558 = vadd.f32 %v2557, 1.0
  %v2559 = vrcp.pop %v2558
  %v2560 = vmul.f32 1.0, %v2559
  %v2561 = vadd.f32 %v2471, %v2510
  %v2562 = vxor.u32 %v2561, 2147483648
  %v2563 = vmul.f32 %v2562, 1.442695
  %v2564 = vpow.pop %v2563
  %v2565 = vadd.f32 %v2564, 1.0
  %v2566 = vrcp.pop %v2565
  %v2567 = vmul.f32 1.0, %v2566
  %v2568 = vmul.f32 %v2560, %v2549
  %v2569 = vadd.f32 %v2472, %v2568
  %v2570 = vtanh.pop %v2569
  %v2571 = vsub.f32 1.0, %v2567
  %v2572 = vmul.f32 %v2571, %v2570
  %v2573 = vmul.f32 %v2567, %v2348
  %v2574 = vadd.f32 %v2572, %v2573
  %p2575 = scmp.lt.s32.totalorder %s1360, 4
  %s2576 = scalar_select %p2575, 1, 0
  %v2577 = vstv %s2576
  %vm2578 = vcmp.eq.s32.totalorder %v2577, 1
  %v2579 = vsel %vm2578, %v2574, %v2348
  %v2580 = vpack.c.bf16 %v2579, %v2579
  %2581 = vst [vmem:[%s86] sm:$0xf] %v2580
  %2582 = vst [vmem:[#allocation2] sm:$0xff] %v2464
  %2583 = vst [vmem:[%s1362] sm:$0xff] %v2579
  %s2584 = ssub.s32 0, 0
  %s2585 = smul.u32 4, %s2584
  %p2586 = scmp.lt.s32.totalorder %s2585, 3
  %s2587 = scalar_select %p2586, %s2585, 3
  %s2588 = smul.addr %s2587, 4
  %s2589 = scalar_lea.vmem %s9, %s2588
  // Predicated region
  $region38: #{deepspeech2_forward.10} parent=0 // pred_check
    _
  $region39: #{deepspeech2_forward.10} parent=0 // pred_check_branch
    %2591 = sbr.rel (0) target = $region41
  $region40: #{deepspeech2_forward.10} parent=0 // pred_region
    _
  $region41: #{deepspeech2_forward.10} parent=0 // pred_fallthru
    _
  // Predicated region
  $region42: #{deepspeech2_forward.10} parent=0 // pred_check
    _
  $region43: #{deepspeech2_forward.10} parent=0 // pred_check_branch
    %2593 = sbr.rel (0) target = $region45
  $region44: #{deepspeech2_forward.10} parent=0 // pred_region
    %s2594 = ssub.s32 0, 0
    %s2595 = smul.u32 4, %s2594
  $region45: #{deepspeech2_forward.10} parent=0 // pred_fallthru
    _
  // Predicated region
  $region46: #{deepspeech2_forward.10} parent=0 // pred_check
    _
  $region47: #{deepspeech2_forward.10} parent=0 // pred_check_branch
    %2597 = sbr.rel (0) target = $region49
  $region48: #{deepspeech2_forward.10} parent=0 // pred_region
    _
  $region49: #{deepspeech2_forward.10} parent=0 // pred_fallthru
    _
  // Predicated region
  $region50: #{deepspeech2_forward.10} parent=0 // pred_check
    _
  $region51: #{deepspeech2_forward.10} parent=0 // pred_check_branch
    %2599 = sbr.rel (0) target = $region53
  $region52: #{deepspeech2_forward.10} parent=0 // pred_region
    %s2600 = ssub.s32 0, 0
    %s2601 = smul.u32 4, %s2600
    %p2602 = scmp.lt.s32.totalorder %s2601, 3
    %s2603 = scalar_select %p2602, %s2601, 3
    %s2604 = smul.addr %s2603, 4
    %s2605 = scalar_lea.vmem %s9, %s2604
  $region53: #{deepspeech2_forward.10} parent=0 // pred_fallthru
    _

</llo_original>
